<compile_context>
chip_gen: v7x
topology: tpu7x:2x2x1
jax: 0.10.0
libtpu: 0.0.40
codegen_flags: <defaults>
</compile_context>

<pallas_src>
import functools
import math

import jax
import jax.numpy as jnp
import numpy as np
from jax.experimental import pallas as pl
from jax.experimental.pallas import tpu as pltpu

LANES = 128
BN_EPS = 1e-5
BN_SCALE = 1.0 / math.sqrt(1.0 + BN_EPS)   # folded eval-mode BN (running mean=0, var=1)
TM_MAX = 512                                # M block cap (single block at demo shapes)
ASPP_RATES = (12, 24, 36)


def _round_up(x, m):
    return (x + m - 1) // m * m


# --------------------------------------------------------------------------------------
# Pallas kernels
# --------------------------------------------------------------------------------------
def _mm_kernel(a_ref, b_ref, t_ref, o_ref, *, relu):
    # Whole contraction in one MXU dot (single K/N block); bias/BN-shift + ReLU fused.
    y = jnp.dot(a_ref[...].astype(jnp.bfloat16), b_ref[...],
                preferred_element_type=jnp.float32)
    y = y + t_ref[...]
    if relu:
        y = jnp.maximum(y, 0.0)
    o_ref[...] = y


def _aspp_tail_kernel(c5_ref, wb_ref, tb_ref, wpl_ref, tp_ref,
                      wpa_ref, wpb_ref, tj_ref, wpo_ref, to_ref, o_ref):
    # Entire ASPP tail on the (h5*w5)-position stride-16 map, in per-batch row layout.
    x = c5_ref[...].astype(jnp.bfloat16)                                   # (n, P*128)
    # 4 atrous branches fused (block-diagonal 1x1 over positions), BN+ReLU
    br = jnp.dot(x, wb_ref[...], preferred_element_type=jnp.float32) + tb_ref[...]
    br = jnp.maximum(br, 0.0)                                              # (n, P*128)
    # global-average-pool branch (GAP folded into tiled/averaged 1x1 weights), BN+ReLU
    gp = jnp.dot(x, wpl_ref[...], preferred_element_type=jnp.float32) + tp_ref[...]
    gp = jnp.maximum(gp, 0.0)                                              # (n, 128)
    # 1x1 projection over the 160-ch concat, expressed as two matmuls (gp is spatially
    # constant so its term is shared across positions), BN+ReLU
    pj = (jnp.dot(br.astype(jnp.bfloat16), wpa_ref[...], preferred_element_type=jnp.float32)
          + jnp.dot(gp.astype(jnp.bfloat16), wpb_ref[...], preferred_element_type=jnp.float32)
          + tj_ref[...])
    pj = jnp.maximum(pj, 0.0)                                              # (n, P*32)
    # 3x3 pad-1 conv on the tiny map as one precomputed "big" matrix, BN+ReLU
    po = jnp.dot(pj.astype(jnp.bfloat16), wpo_ref[...], preferred_element_type=jnp.float32)
    o_ref[...] = jnp.maximum(po + to_ref[...], 0.0)                        # (n, P*128)


def _head_upsample_kernel(d_ref, wh_ref, bh_ref, up_ref, o_ref):
    # 3x3 segmentation head (as a big matrix) + x4 bilinear upsample (kron matrix) + sigmoid.
    d = d_ref[...].astype(jnp.bfloat16)                                    # (n, hs*ws*32)
    y = jnp.dot(d, wh_ref[...], preferred_element_type=jnp.float32) + bh_ref[...]
    z = jnp.dot(y.astype(jnp.bfloat16), up_ref[...], preferred_element_type=jnp.float32)
    # numerically stable sigmoid: 0.5 * (tanh(z/2) + 1)
    o_ref[...] = 0.5 * (jnp.tanh(0.5 * z) + 1.0)                           # (n, H*W)


# --------------------------------------------------------------------------------------
# Pallas wrappers
# --------------------------------------------------------------------------------------
def _matmul_fused(a, b, shift, relu=True):
    """relu?( a @ b + shift ).  a: (M, K) f32; b: (K, N) pre-packed bf16 (N % 128 == 0);
    shift: (1, N) f32.  Single K/N block; M tiled with pl.cdiv (single block at demo M)."""
    M, K = a.shape
    Kb, N = b.shape
    assert K == Kb and N % LANES == 0
    bm = M if M <= TM_MAX else TM_MAX
    return pl.pallas_call(
        functools.partial(_mm_kernel, relu=relu),
        out_shape=jax.ShapeDtypeStruct((M, N), jnp.float32),
        grid=(pl.cdiv(M, bm),),
        in_specs=[
            pl.BlockSpec((bm, K), lambda i: (i, 0)),
            pl.BlockSpec((K, N), lambda i: (0, 0)),
            pl.BlockSpec((1, N), lambda i: (0, 0)),
        ],
        out_specs=pl.BlockSpec((bm, N), lambda i: (i, 0)),
        compiler_params=pltpu.CompilerParams(dimension_semantics=("parallel",)),
    )(a, b, shift)


def aspp_tail(c5, pk):
    """Fused ASPP branches + pool + projection + post conv in ONE pallas_call."""
    n, h5, w5, c = c5.shape
    assert c == LANES
    x = c5.reshape(n, h5 * w5 * c)
    args = (x, pk["wb"], pk["tb"], pk["wpool"], pk["tp"],
            pk["wpa"], pk["wpb"], pk["tj"], pk["wpo"], pk["to"])
    out = pl.pallas_call(
        _aspp_tail_kernel,
        out_shape=jax.ShapeDtypeStruct((n, h5 * w5 * LANES), jnp.float32),
        grid=(1,),
        in_specs=[pl.BlockSpec(t.shape, lambda i: (0, 0)) for t in args],
        out_specs=pl.BlockSpec((n, h5 * w5 * LANES), lambda i: (0, 0)),
        compiler_params=pltpu.CompilerParams(dimension_semantics=("arbitrary",)),
    )(*args)
    return out.reshape(n, h5, w5, LANES)


def head_upsample_sigmoid(d, pk, oh, ow):
    """Fused seg head (3x3, classes=1) + x4 bilinear upsample + sigmoid -> NCHW output."""
    n, hs, ws, _ = d.shape
    x = d[..., :32].reshape(n, hs * ws * 32)       # only slice at the head (32 real ch)
    args = (x, pk["w"], pk["b"], pk["up"])
    out = pl.pallas_call(
        _head_upsample_kernel,
        out_shape=jax.ShapeDtypeStruct((n, oh * ow), jnp.float32),
        grid=(1,),
        in_specs=[pl.BlockSpec(t.shape, lambda i: (0, 0)) for t in args],
        out_specs=pl.BlockSpec((n, oh * ow), lambda i: (0, 0)),
        compiler_params=pltpu.CompilerParams(dimension_semantics=("arbitrary",)),
    )(*args)
    return out.reshape(n, 1, oh, ow)


# --------------------------------------------------------------------------------------
# Glue (im2col, conv wrapper, bilinear matrices)
# --------------------------------------------------------------------------------------
def _im2col_nhwc(x, k, stride, padding):
    n, h, w, c = x.shape
    oh = (h + 2 * padding - k) // stride + 1
    ow = (w + 2 * padding - k) // stride + 1
    if padding:
        x = jnp.pad(x, ((0, 0), (padding, padding), (padding, padding), (0, 0)))
    cols = []
    for i in range(k):
        for j in range(k):
            cols.append(x[:, i:i + stride * (oh - 1) + 1:stride,
                          j:j + stride * (ow - 1) + 1:stride, :])
    pat = jnp.stack(cols, axis=3)                          # (n, oh, ow, k*k, c)
    return pat.reshape(n * oh * ow, k * k * c), oh, ow


def conv2d_packed(x, layer, *, k, stride=1, padding=0, relu=True):
    """NHWC conv via im2col + fused Pallas matmul with pre-packed (K, 128) bf16 weight."""
    n, h, w, c = x.shape
    if k == 1 and stride == 1 and padding == 0:
        a, oh, ow = x.reshape(n * h * w, c), h, w
    else:
        a, oh, ow = _im2col_nhwc(x, k, stride, padding)
    Kb = layer["w"].shape[0]
    if a.shape[1] != Kb:                                   # stem only: pad K 27 -> 32
        a = jnp.pad(a, ((0, 0), (0, Kb - a.shape[1])))
    out = _matmul_fused(a, layer["w"], layer["t"], relu)
    return out.reshape(n, oh, ow, LANES)


def _bilinear_matrix_np(out_size, in_size):
    """1-D bilinear resize matrix, align_corners=True (numpy -> compile-time constant)."""
    if in_size == 1:
        return np.ones((out_size, 1), np.float32)
    if out_size == 1:
        m = np.zeros((1, in_size), np.float32)
        m[0, 0] = 1.0
        return m
    src = np.arange(out_size, dtype=np.float64) * (in_size - 1) / (out_size - 1)
    lo = np.clip(np.floor(src).astype(np.int64), 0, in_size - 2)
    frac = (src - lo).astype(np.float32)
    m = np.zeros((out_size, in_size), np.float32)
    rows = np.arange(out_size)
    m[rows, lo] += 1.0 - frac
    m[rows, lo + 1] += frac
    return m


# --------------------------------------------------------------------------------------
# One-time weight packing (numpy, outside the traced forward)
# --------------------------------------------------------------------------------------
def _bn_fold_np(cout):
    # TODO(synk): eval-mode BN folded with fresh-init running stats (mean=0, var=1,
    # identity affine); trained checkpoints are not reproduced.
    scale = np.zeros((LANES,), np.float32)
    scale[:cout] = BN_SCALE
    shift = np.zeros((1, LANES), np.float32)
    return scale, shift


def _pack_conv(w, c_in_pad, k_pad=None):
    """(cout,cin,kh,kw) conv + folded BN -> bf16 (K,128) matmul operand + f32 (1,128) shift.
    Row order = (kh, kw, cin padded to c_in_pad); BN scale folded into the columns."""
    w = np.asarray(w, np.float32)
    cout, cin, kh, kw = w.shape
    scale, shift = _bn_fold_np(cout)
    K = kh * kw * c_in_pad
    B = np.zeros((K, LANES), np.float32)
    for i in range(kh):
        for j in range(kw):
            r0 = (i * kw + j) * c_in_pad
            B[r0:r0 + cin, :cout] = w[:, :, i, j].T
    B *= scale[None, :]
    if k_pad is not None and k_pad > K:
        B = np.pad(B, ((0, k_pad - K), (0, 0)))
    return {"w": jnp.asarray(B, jnp.bfloat16), "t": jnp.asarray(shift)}


def _pack_aspp(p, h5, w5):
    P = h5 * w5
    S = BN_SCALE
    # 4 branches: 1x1 plus three dilated 3x3 collapsed bit-exactly to their centre tap
    # (valid because the smallest rate >= feature-map extent), fused to 128 output lanes.
    wb = np.zeros((LANES, LANES), np.float32)
    wb[:64, 0:32] = np.asarray(p["aspp_b0"], np.float32)[:, :, 0, 0].T
    for k, name in enumerate(("aspp_b1", "aspp_b2", "aspp_b3"), start=1):
        wb[:64, k * 32:(k + 1) * 32] = np.asarray(p[name], np.float32)[:, :, 1, 1].T
    wb *= S
    wb_bd = np.zeros((P * LANES, P * LANES), np.float32)     # block-diag over positions
    for q in range(P):
        wb_bd[q * LANES:(q + 1) * LANES, q * LANES:(q + 1) * LANES] = wb

    # global-average-pool + 1x1 conv folded into one matmul (tiled & averaged weights)
    wpool = np.asarray(p["aspp_pool"], np.float32)[:, :, 0, 0]           # (32, 64)
    wpool_g = np.zeros((P * LANES, LANES), np.float32)
    for q in range(P):
        wpool_g[q * LANES:q * LANES + 64, 0:32] = wpool.T * (S / P)

    # projection 1x1 over [128 branch channels, 32 pool channels] -> 32
    wproj = np.asarray(p["aspp_proj"], np.float32)[:, :, 0, 0]           # (32, 160)
    wproj_a = np.zeros((P * LANES, P * 32), np.float32)
    wproj_b = np.zeros((LANES, P * 32), np.float32)
    for q in range(P):
        wproj_a[q * LANES:(q + 1) * LANES, q * 32:(q + 1) * 32] = wproj[:, :128].T * S
        wproj_b[0:32, q * 32:(q + 1) * 32] = wproj[:, 128:].T * S

    # 3x3 pad-1 conv on the (h5, w5) map as one (P*32, P*128) matrix; output re-padded
    # to 128 lanes so the decoder stays 128-channel aligned.
    wpost = np.asarray(p["aspp_post"], np.float32)                       # (32, 32, 3, 3)
    wpost_big = np.zeros((P * 32, P * LANES), np.float32)
    for po_i in range(h5):
        for po_j in range(w5):
            po = po_i * w5 + po_j
            for kh in range(3):
                for kw in range(3):
                    pi_i, pi_j = po_i + kh - 1, po_j + kw - 1
                    if 0 <= pi_i < h5 and 0 <= pi_j < w5:
                        pi = pi_i * w5 + pi_j
                        wpost_big[pi * 32:(pi + 1) * 32,
                                  po * LANES:po * LANES + 32] = wpost[:, :, kh, kw].T * S

    zeros = lambda n: jnp.zeros((1, n), jnp.float32)
    return {
        "wb": jnp.asarray(wb_bd, jnp.bfloat16), "tb": zeros(P * LANES),
        "wpool": jnp.asarray(wpool_g, jnp.bfloat16), "tp": zeros(LANES),
        "wpa": jnp.asarray(wproj_a, jnp.bfloat16),
        "wpb": jnp.asarray(wproj_b, jnp.bfloat16), "tj": zeros(P * 32),
        "wpo": jnp.asarray(wpost_big, jnp.bfloat16), "to": zeros(P * LANES),
    }


def _pack_head(p, hs, ws, oh, ow):
    wh = np.asarray(p["head_w"], np.float32)                  # (1, 32, 3, 3)
    bh = float(np.asarray(p["head_b"]).reshape(-1)[0])
    npos = hs * ws
    ncol = _round_up(npos, LANES)
    # 3x3 pad-1 head conv on the (hs, ws) decoder map as one (hs*ws*32, ncol) matrix.
    W = np.zeros((npos * 32, ncol), np.float32)
    for po_i in range(hs):
        for po_j in range(ws):
            col = po_i * ws + po_j
            for kh in range(3):
                for kw in range(3):
                    pi_i, pi_j = po_i + kh - 1, po_j + kw - 1
                    if 0 <= pi_i < hs and 0 <= pi_j < ws:
                        row0 = (pi_i * ws + pi_j) * 32
                        W[row0:row0 + 32, col] = wh[0, :, kh, kw]
    bias = np.full((1, ncol), bh, np.float32)
    # x4 bilinear upsample (align_corners=True) as kron(Uh, Uw)^T, rows padded to ncol.
    up = np.kron(_bilinear_matrix_np(oh, hs), _bilinear_matrix_np(ow, ws)).T
    up = np.pad(up, ((0, ncol - npos), (0, 0)))               # (ncol, oh*ow)
    return {"w": jnp.asarray(W, jnp.bfloat16),
            "b": jnp.asarray(bias),
            "up": jnp.asarray(up, jnp.bfloat16)}


def pack_params(params, input_hw):
    """Pre-pack every weight once (transpose / pad / BN-fold / bf16) for a fixed resolution."""
    H, W = input_hw
    assert H % 16 == 0 and W % 16 == 0, "input spatial dims must be divisible by 16"
    # TODO(synk): ASPP / head packings are resolution-specialised (block-diag and kron
    # matrices grow with H*W); demo resolutions up to 64x64 only.
    assert H <= 64 and W <= 64
    h5, w5 = H // 16, W // 16
    # dilated-3x3 -> centre-tap collapse requires smallest atrous rate >= feature extent
    assert min(ASPP_RATES) >= h5 and min(ASPP_RATES) >= w5, \
        "ASPP dilated->1x1 collapse invalid for this input resolution"
    packed = {
        "stem": _pack_conv(params["stem"], c_in_pad=3, k_pad=32),
        "s1": _pack_conv(params["s1"], c_in_pad=LANES),
        "s2": _pack_conv(params["s2"], c_in_pad=LANES),
        "s3": _pack_conv(params["s3"], c_in_pad=LANES),
        "aspp": _pack_aspp(params, h5, w5),
        "dec_low": _pack_conv(params["dec_low"], c_in_pad=LANES),
        "head": _pack_head(params, H // 4, W // 4, H, W),
    }
    # decoder fuse conv: cin order = [ASPP out (32 real of 128), low-level (48 real of 128)]
    w_fuse = np.asarray(params["dec_fuse"], np.float32)       # (32, 80, 3, 3)
    w_exp = np.zeros((w_fuse.shape[0], 2 * LANES, 3, 3), np.float32)
    w_exp[:, 0:32] = w_fuse[:, :32]
    w_exp[:, LANES:LANES + 48] = w_fuse[:, 32:80]
    packed["dec_fuse"] = _pack_conv(w_exp, c_in_pad=2 * LANES)
    return packed


# --------------------------------------------------------------------------------------
# Deterministic parameters (DeepLabV3Plus, in_channels=3, classes=1)
# --------------------------------------------------------------------------------------
def _init_conv(key, cout, cin, kh, kw):
    std = math.sqrt(2.0 / (cin * kh * kw))
    return jax.random.normal(key, (cout, cin, kh, kw), jnp.float32) * std


def init_params(key):
    ks = jax.random.split(key, 16)
    p = {}
    # TODO(synk): full ResNet-34 encoder reduced to one conv/BN/ReLU per downsampling stage.
    p["stem"] = _init_conv(ks[0], 16, 3, 3, 3)      # stride 2
    p["s1"] = _init_conv(ks[1], 24, 16, 3, 3)       # stride 4  (low-level features)
    p["s2"] = _init_conv(ks[2], 32, 24, 3, 3)       # stride 8
    p["s3"] = _init_conv(ks[3], 64, 32, 3, 3)       # stride 16 (high-level features)
    # ASPP (TODO(synk): separable atrous convs of smp replaced by dense atrous convs)
    p["aspp_b0"] = _init_conv(ks[4], 32, 64, 1, 1)
    p["aspp_b1"] = _init_conv(ks[5], 32, 64, 3, 3)  # rate 12
    p["aspp_b2"] = _init_conv(ks[6], 32, 64, 3, 3)  # rate 24
    p["aspp_b3"] = _init_conv(ks[7], 32, 64, 3, 3)  # rate 36
    p["aspp_pool"] = _init_conv(ks[8], 32, 64, 1, 1)
    p["aspp_proj"] = _init_conv(ks[9], 32, 160, 1, 1)
    p["aspp_post"] = _init_conv(ks[10], 32, 32, 3, 3)
    # Decoder
    p["dec_low"] = _init_conv(ks[11], 48, 24, 1, 1)
    p["dec_fuse"] = _init_conv(ks[12], 32, 80, 3, 3)
    # Segmentation head (classes=1, activation='sigmoid')
    p["head_w"] = _init_conv(ks[13], 1, 32, 3, 3)
    p["head_b"] = jnp.zeros((1,), jnp.float32)
    return p


# --------------------------------------------------------------------------------------
# SegDiscriminator forward
# --------------------------------------------------------------------------------------
def seg_discriminator_forward(packed, mask, noise_key):
    n, _, H, W = mask.shape
    # mask + normal(0, 0.1)
    # TODO(synk): noise generated with jax.random (not pltpu PRNG) — see module docstring.
    x = mask + 0.1 * jax.random.normal(noise_key, mask.shape, jnp.float32)
    x = jnp.transpose(x, (0, 2, 3, 1))                                 # NCHW -> NHWC once

    # ----- encoder -----
    x = conv2d_packed(x, packed["stem"], k=3, stride=2, padding=1)     # stride 2
    c2 = conv2d_packed(x, packed["s1"], k=3, stride=2, padding=1)      # stride 4 (low-level)
    x = conv2d_packed(c2, packed["s2"], k=3, stride=2, padding=1)      # stride 8
    c5 = conv2d_packed(x, packed["s3"], k=3, stride=2, padding=1)      # stride 16

    # ----- ASPP branches + pool + projection + post conv: ONE fused Pallas call -----
    # TODO(synk): Dropout(p=0.5) after the ASPP projection omitted (inference semantics).
    a = aspp_tail(c5, packed["aspp"])                                  # (n, H/16, W/16, 128)

    # ----- decoder -----
    uh = _bilinear_matrix_np(c2.shape[1], a.shape[1])                  # numpy constants
    uw = _bilinear_matrix_np(c2.shape[2], a.shape[2])
    a_up = jnp.einsum("oh,pw,nhwc->nopc", uh, uw, a)                   # stride 16 -> 4
    low = conv2d_packed(c2, packed["dec_low"], k=1)
    d = jnp.concatenate([a_up, low], axis=-1)                          # (n, H/4, W/4, 256)
    d = conv2d_packed(d, packed["dec_fuse"], k=3, padding=1)

    # ----- seg head + x4 bilinear upsample + sigmoid: ONE fused Pallas call -----
    return head_upsample_sigmoid(d, packed["head"], H, W)              # NCHW in [0, 1]


# --------------------------------------------------------------------------------------
if __name__ == "__main__":
    key = jax.random.PRNGKey(0)
    pkey, nkey, xkey = jax.random.split(key, 3)
    params = init_params(pkey)

    # "mask" input: batch=2, 3 channels, 32x32 spatial (divisible by output stride 16)
    mask = jax.random.uniform(xkey, (2, 3, 32, 32), dtype=jnp.float32)

    packed = pack_params(params, input_hw=(32, 32))    # one-time weight pre-packing

    fwd = jax.jit(seg_discriminator_forward)
    out = jax.block_until_ready(fwd(packed, mask, nkey))

    assert out.shape == (2, 1, 32, 32), out.shape
    assert out.dtype == jnp.float32
    assert bool(jnp.all(jnp.isfinite(out))), "non-finite output"
    assert bool(jnp.all((out >= 0.0) & (out <= 1.0))), "sigmoid output out of range"
    print("KERNEL_OK")
</pallas_src>

<mosaic_0001>
module attributes {stable_mosaic.version = 11 : i64} {
  func.func @_mm_kernel(%arg0: i32, %arg1: memref<512x32xf32, #tpu.memory_space<vmem>>, %arg2: memref<32x128xbf16, #tpu.memory_space<vmem>>, %arg3: memref<1x128xf32, #tpu.memory_space<vmem>>, %arg4: memref<512x128xf32, #tpu.memory_space<vmem>>) attributes {dimension_semantics = [#tpu.dimension_semantics<parallel>], iteration_bounds = array<i64: 1>, scalar_prefetch = 0 : i64, scratch_operands = 0 : i64, tpu.core_type = #tpu.core_type<tc>, window_params = [{transform_indices = @transform_0, window_bounds = array<i64: 512, 32>}, {pipeline_mode = #tpu.pipeline_mode<synchronous>, transform_indices = @transform_1, window_bounds = array<i64: 32, 128>}, {pipeline_mode = #tpu.pipeline_mode<synchronous>, transform_indices = @transform_2, window_bounds = array<i64: 1, 128>}, {transform_indices = @transform_3, window_bounds = array<i64: 512, 128>}]} {
    %c0 = arith.constant 0 : index
    %c0_0 = arith.constant 0 : index
    %0 = vector.load %arg1[%c0, %c0_0] : memref<512x32xf32, #tpu.memory_space<vmem>>, vector<512x32xf32>
    %1 = arith.truncf %0 : vector<512x32xf32> to vector<512x32xbf16>
    %c0_1 = arith.constant 0 : index
    %c0_2 = arith.constant 0 : index
    %2 = vector.load %arg2[%c0_1, %c0_2] : memref<32x128xbf16, #tpu.memory_space<vmem>>, vector<32x128xbf16>
    %cst = arith.constant dense<0.000000e+00> : vector<512x128xf32>
    %3 = tpu.matmul %1, %2, %cst {dimension_numbers = #tpu.dot_dimension_numbers<[1], [0], [0], [1], [0, 0, 1, 1], [], []>} : vector<512x32xbf16>, vector<32x128xbf16>, vector<512x128xf32> -> vector<512x128xf32>
    %c0_3 = arith.constant 0 : index
    %c0_4 = arith.constant 0 : index
    %4 = vector.load %arg3[%c0_3, %c0_4] : memref<1x128xf32, #tpu.memory_space<vmem>>, vector<1x128xf32>
    %5 = vector.broadcast %4 : vector<1x128xf32> to vector<512x128xf32>
    %6 = arith.addf %3, %5 : vector<512x128xf32>
    %cst_5 = arith.constant 0.000000e+00 : f32
    %7 = vector.broadcast %cst_5 : f32 to vector<512x128xf32>
    %8 = arith.maximumf %6, %7 : vector<512x128xf32>
    %c0_6 = arith.constant 0 : index
    %c0_7 = arith.constant 0 : index
    %9 = vector.load %arg4[%c0_6, %c0_7] : memref<512x128xf32, #tpu.memory_space<vmem>>, vector<512x128xf32>
    tpu.vector_store %arg4[%c0_6, %c0_7], %8 {strides = array<i32>} : memref<512x128xf32, #tpu.memory_space<vmem>>, vector<512x128xf32>,
    return
  }
  func.func @transform_0(%arg0: i32) -> (i32, i32) {
    %c0_i32 = arith.constant 0 : i32
    %c0_i32_0 = arith.constant 0 : i32
    return %arg0, %c0_i32 : i32, i32
  }
  func.func @transform_1(%arg0: i32) -> (i32, i32) {
    %c0_i32 = arith.constant 0 : i32
    %c0_i32_0 = arith.constant 0 : i32
    %c0_i32_1 = arith.constant 0 : i32
    return %c0_i32, %c0_i32_0 : i32, i32
  }
  func.func @transform_2(%arg0: i32) -> (i32, i32) {
    %c0_i32 = arith.constant 0 : i32
    %c0_i32_0 = arith.constant 0 : i32
    %c0_i32_1 = arith.constant 0 : i32
    return %c0_i32, %c0_i32_0 : i32, i32
  }
  func.func @transform_3(%arg0: i32) -> (i32, i32) {
    %c0_i32 = arith.constant 0 : i32
    %c0_i32_0 = arith.constant 0 : i32
    return %arg0, %c0_i32 : i32, i32
  }
}

module attributes {stable_mosaic.version = 11 : i64} {
  func.func @_mm_kernel(%arg0: i32, %arg1: memref<128x128xf32, #tpu.memory_space<vmem>>, %arg2: memref<128x128xbf16, #tpu.memory_space<vmem>>, %arg3: memref<1x128xf32, #tpu.memory_space<vmem>>, %arg4: memref<128x128xf32, #tpu.memory_space<vmem>>) attributes {dimension_semantics = [#tpu.dimension_semantics<parallel>], iteration_bounds = array<i64: 1>, scalar_prefetch = 0 : i64, scratch_operands = 0 : i64, tpu.core_type = #tpu.core_type<tc>, window_params = [{transform_indices = @transform_0, window_bounds = array<i64: 128, 128>}, {pipeline_mode = #tpu.pipeline_mode<synchronous>, transform_indices = @transform_1, window_bounds = array<i64: 128, 128>}, {pipeline_mode = #tpu.pipeline_mode<synchronous>, transform_indices = @transform_2, window_bounds = array<i64: 1, 128>}, {transform_indices = @transform_3, window_bounds = array<i64: 128, 128>}]} {
    %c0 = arith.constant 0 : index
    %c0_0 = arith.constant 0 : index
    %0 = vector.load %arg1[%c0, %c0_0] : memref<128x128xf32, #tpu.memory_space<vmem>>, vector<128x128xf32>
    %1 = arith.truncf %0 : vector<128x128xf32> to vector<128x128xbf16>
    %c0_1 = arith.constant 0 : index
    %c0_2 = arith.constant 0 : index
    %2 = vector.load %arg2[%c0_1, %c0_2] : memref<128x128xbf16, #tpu.memory_space<vmem>>, vector<128x128xbf16>
    %cst = arith.constant dense<0.000000e+00> : vector<128x128xf32>
    %3 = tpu.matmul %1, %2, %cst {dimension_numbers = #tpu.dot_dimension_numbers<[1], [0], [0], [1], [0, 0, 1, 1], [], []>} : vector<128x128xbf16>, vector<128x128xbf16>, vector<128x128xf32> -> vector<128x128xf32>
    %c0_3 = arith.constant 0 : index
    %c0_4 = arith.constant 0 : index
    %4 = vector.load %arg3[%c0_3, %c0_4] : memref<1x128xf32, #tpu.memory_space<vmem>>, vector<1x128xf32>
    %5 = vector.broadcast %4 : vector<1x128xf32> to vector<128x128xf32>
    %6 = arith.addf %3, %5 : vector<128x128xf32>
    %cst_5 = arith.constant 0.000000e+00 : f32
    %7 = vector.broadcast %cst_5 : f32 to vector<128x128xf32>
    %8 = arith.maximumf %6, %7 : vector<128x128xf32>
    %c0_6 = arith.constant 0 : index
    %c0_7 = arith.constant 0 : index
    %9 = vector.load %arg4[%c0_6, %c0_7] : memref<128x128xf32, #tpu.memory_space<vmem>>, vector<128x128xf32>
    tpu.vector_store %arg4[%c0_6, %c0_7], %8 {strides = array<i32>} : memref<128x128xf32, #tpu.memory_space<vmem>>, vector<128x128xf32>,
    return
  }
  func.func @transform_0(%arg0: i32) -> (i32, i32) {
    %c0_i32 = arith.constant 0 : i32
    %c0_i32_0 = arith.constant 0 : i32
    return %arg0, %c0_i32 : i32, i32
  }
  func.func @transform_1(%arg0: i32) -> (i32, i32) {
    %c0_i32 = arith.constant 0 : i32
    %c0_i32_0 = arith.constant 0 : i32
    %c0_i32_1 = arith.constant 0 : i32
    return %c0_i32, %c0_i32_0 : i32, i32
  }
  func.func @transform_2(%arg0: i32) -> (i32, i32) {
    %c0_i32 = arith.constant 0 : i32
    %c0_i32_0 = arith.constant 0 : i32
    %c0_i32_1 = arith.constant 0 : i32
    return %c0_i32, %c0_i32_0 : i32, i32
  }
  func.func @transform_3(%arg0: i32) -> (i32, i32) {
    %c0_i32 = arith.constant 0 : i32
    %c0_i32_0 = arith.constant 0 : i32
    return %arg0, %c0_i32 : i32, i32
  }
}

module attributes {stable_mosaic.version = 11 : i64} {
  func.func @_mm_kernel(%arg0: i32, %arg1: memref<128x1152xf32, #tpu.memory_space<vmem>>, %arg2: memref<1152x128xbf16, #tpu.memory_space<vmem>>, %arg3: memref<1x128xf32, #tpu.memory_space<vmem>>, %arg4: memref<128x128xf32, #tpu.memory_space<vmem>>) attributes {dimension_semantics = [#tpu.dimension_semantics<parallel>], iteration_bounds = array<i64: 1>, scalar_prefetch = 0 : i64, scratch_operands = 0 : i64, tpu.core_type = #tpu.core_type<tc>, window_params = [{transform_indices = @transform_0, window_bounds = array<i64: 128, 1152>}, {pipeline_mode = #tpu.pipeline_mode<synchronous>, transform_indices = @transform_1, window_bounds = array<i64: 1152, 128>}, {pipeline_mode = #tpu.pipeline_mode<synchronous>, transform_indices = @transform_2, window_bounds = array<i64: 1, 128>}, {transform_indices = @transform_3, window_bounds = array<i64: 128, 128>}]} {
    %c0 = arith.constant 0 : index
    %c0_0 = arith.constant 0 : index
    %0 = vector.load %arg1[%c0, %c0_0] : memref<128x1152xf32, #tpu.memory_space<vmem>>, vector<128x1152xf32>
    %1 = arith.truncf %0 : vector<128x1152xf32> to vector<128x1152xbf16>
    %c0_1 = arith.constant 0 : index
    %c0_2 = arith.constant 0 : index
    %2 = vector.load %arg2[%c0_1, %c0_2] : memref<1152x128xbf16, #tpu.memory_space<vmem>>, vector<1152x128xbf16>
    %cst = arith.constant dense<0.000000e+00> : vector<128x128xf32>
    %3 = tpu.matmul %1, %2, %cst {dimension_numbers = #tpu.dot_dimension_numbers<[1], [0], [0], [1], [0, 0, 1, 1], [], []>} : vector<128x1152xbf16>, vector<1152x128xbf16>, vector<128x128xf32> -> vector<128x128xf32>
    %c0_3 = arith.constant 0 : index
    %c0_4 = arith.constant 0 : index
    %4 = vector.load %arg3[%c0_3, %c0_4] : memref<1x128xf32, #tpu.memory_space<vmem>>, vector<1x128xf32>
    %5 = vector.broadcast %4 : vector<1x128xf32> to vector<128x128xf32>
    %6 = arith.addf %3, %5 : vector<128x128xf32>
    %cst_5 = arith.constant 0.000000e+00 : f32
    %7 = vector.broadcast %cst_5 : f32 to vector<128x128xf32>
    %8 = arith.maximumf %6, %7 : vector<128x128xf32>
    %c0_6 = arith.constant 0 : index
    %c0_7 = arith.constant 0 : index
    %9 = vector.load %arg4[%c0_6, %c0_7] : memref<128x128xf32, #tpu.memory_space<vmem>>, vector<128x128xf32>
    tpu.vector_store %arg4[%c0_6, %c0_7], %8 {strides = array<i32>} : memref<128x128xf32, #tpu.memory_space<vmem>>, vector<128x128xf32>,
    return
  }
  func.func @transform_0(%arg0: i32) -> (i32, i32) {
    %c0_i32 = arith.constant 0 : i32
    %c0_i32_0 = arith.constant 0 : i32
    return %arg0, %c0_i32 : i32, i32
  }
  func.func @transform_1(%arg0: i32) -> (i32, i32) {
    %c0_i32 = arith.constant 0 : i32
    %c0_i32_0 = arith.constant 0 : i32
    %c0_i32_1 = arith.constant 0 : i32
    return %c0_i32, %c0_i32_0 : i32, i32
  }
  func.func @transform_2(%arg0: i32) -> (i32, i32) {
    %c0_i32 = arith.constant 0 : i32
    %c0_i32_0 = arith.constant 0 : i32
    %c0_i32_1 = arith.constant 0 : i32
    return %c0_i32, %c0_i32_0 : i32, i32
  }
  func.func @transform_3(%arg0: i32) -> (i32, i32) {
    %c0_i32 = arith.constant 0 : i32
    %c0_i32_0 = arith.constant 0 : i32
    return %arg0, %c0_i32 : i32, i32
  }
}

module attributes {stable_mosaic.version = 11 : i64} {
  func.func @_mm_kernel(%arg0: i32, %arg1: memref<32x1152xf32, #tpu.memory_space<vmem>>, %arg2: memref<1152x128xbf16, #tpu.memory_space<vmem>>, %arg3: memref<1x128xf32, #tpu.memory_space<vmem>>, %arg4: memref<32x128xf32, #tpu.memory_space<vmem>>) attributes {dimension_semantics = [#tpu.dimension_semantics<parallel>], iteration_bounds = array<i64: 1>, scalar_prefetch = 0 : i64, scratch_operands = 0 : i64, tpu.core_type = #tpu.core_type<tc>, window_params = [{transform_indices = @transform_0, window_bounds = array<i64: 32, 1152>}, {pipeline_mode = #tpu.pipeline_mode<synchronous>, transform_indices = @transform_1, window_bounds = array<i64: 1152, 128>}, {pipeline_mode = #tpu.pipeline_mode<synchronous>, transform_indices = @transform_2, window_bounds = array<i64: 1, 128>}, {transform_indices = @transform_3, window_bounds = array<i64: 32, 128>}]} {
    %c0 = arith.constant 0 : index
    %c0_0 = arith.constant 0 : index
    %0 = vector.load %arg1[%c0, %c0_0] : memref<32x1152xf32, #tpu.memory_space<vmem>>, vector<32x1152xf32>
    %1 = arith.truncf %0 : vector<32x1152xf32> to vector<32x1152xbf16>
    %c0_1 = arith.constant 0 : index
    %c0_2 = arith.constant 0 : index
    %2 = vector.load %arg2[%c0_1, %c0_2] : memref<1152x128xbf16, #tpu.memory_space<vmem>>, vector<1152x128xbf16>
    %cst = arith.constant dense<0.000000e+00> : vector<32x128xf32>
    %3 = tpu.matmul %1, %2, %cst {dimension_numbers = #tpu.dot_dimension_numbers<[1], [0], [0], [1], [0, 0, 1, 1], [], []>} : vector<32x1152xbf16>, vector<1152x128xbf16>, vector<32x128xf32> -> vector<32x128xf32>
    %c0_3 = arith.constant 0 : index
    %c0_4 = arith.constant 0 : index
    %4 = vector.load %arg3[%c0_3, %c0_4] : memref<1x128xf32, #tpu.memory_space<vmem>>, vector<1x128xf32>
    %5 = vector.broadcast %4 : vector<1x128xf32> to vector<32x128xf32>
    %6 = arith.addf %3, %5 : vector<32x128xf32>
    %cst_5 = arith.constant 0.000000e+00 : f32
    %7 = vector.broadcast %cst_5 : f32 to vector<32x128xf32>
    %8 = arith.maximumf %6, %7 : vector<32x128xf32>
    %c0_6 = arith.constant 0 : index
    %c0_7 = arith.constant 0 : index
    %9 = vector.load %arg4[%c0_6, %c0_7] : memref<32x128xf32, #tpu.memory_space<vmem>>, vector<32x128xf32>
    tpu.vector_store %arg4[%c0_6, %c0_7], %8 {strides = array<i32>} : memref<32x128xf32, #tpu.memory_space<vmem>>, vector<32x128xf32>,
    return
  }
  func.func @transform_0(%arg0: i32) -> (i32, i32) {
    %c0_i32 = arith.constant 0 : i32
    %c0_i32_0 = arith.constant 0 : i32
    return %arg0, %c0_i32 : i32, i32
  }
  func.func @transform_1(%arg0: i32) -> (i32, i32) {
    %c0_i32 = arith.constant 0 : i32
    %c0_i32_0 = arith.constant 0 : i32
    %c0_i32_1 = arith.constant 0 : i32
    return %c0_i32, %c0_i32_0 : i32, i32
  }
  func.func @transform_2(%arg0: i32) -> (i32, i32) {
    %c0_i32 = arith.constant 0 : i32
    %c0_i32_0 = arith.constant 0 : i32
    %c0_i32_1 = arith.constant 0 : i32
    return %c0_i32, %c0_i32_0 : i32, i32
  }
  func.func @transform_3(%arg0: i32) -> (i32, i32) {
    %c0_i32 = arith.constant 0 : i32
    %c0_i32_0 = arith.constant 0 : i32
    return %arg0, %c0_i32 : i32, i32
  }
}

module attributes {stable_mosaic.version = 11 : i64} {
  func.func @_aspp_tail_kernel(%arg0: i32, %arg1: memref<2x512xf32, #tpu.memory_space<vmem>>, %arg2: memref<512x512xbf16, #tpu.memory_space<vmem>>, %arg3: memref<1x512xf32, #tpu.memory_space<vmem>>, %arg4: memref<512x128xbf16, #tpu.memory_space<vmem>>, %arg5: memref<1x128xf32, #tpu.memory_space<vmem>>, %arg6: memref<512x128xbf16, #tpu.memory_space<vmem>>, %arg7: memref<128x128xbf16, #tpu.memory_space<vmem>>, %arg8: memref<1x128xf32, #tpu.memory_space<vmem>>, %arg9: memref<128x512xbf16, #tpu.memory_space<vmem>>, %arg10: memref<1x512xf32, #tpu.memory_space<vmem>>, %arg11: memref<2x512xf32, #tpu.memory_space<vmem>>) attributes {dimension_semantics = [#tpu.dimension_semantics<arbitrary>], iteration_bounds = array<i64: 1>, scalar_prefetch = 0 : i64, scratch_operands = 0 : i64, tpu.core_type = #tpu.core_type<tc>, window_params = [{pipeline_mode = #tpu.pipeline_mode<synchronous>, transform_indices = @transform_0, window_bounds = array<i64: 2, 512>}, {pipeline_mode = #tpu.pipeline_mode<synchronous>, transform_indices = @transform_1, window_bounds = array<i64: 512, 512>}, {pipeline_mode = #tpu.pipeline_mode<synchronous>, transform_indices = @transform_2, window_bounds = array<i64: 1, 512>}, {pipeline_mode = #tpu.pipeline_mode<synchronous>, transform_indices = @transform_3, window_bounds = array<i64: 512, 128>}, {pipeline_mode = #tpu.pipeline_mode<synchronous>, transform_indices = @transform_4, window_bounds = array<i64: 1, 128>}, {pipeline_mode = #tpu.pipeline_mode<synchronous>, transform_indices = @transform_5, window_bounds = array<i64: 512, 128>}, {pipeline_mode = #tpu.pipeline_mode<synchronous>, transform_indices = @transform_6, window_bounds = array<i64: 128, 128>}, {pipeline_mode = #tpu.pipeline_mode<synchronous>, transform_indices = @transform_7, window_bounds = array<i64: 1, 128>}, {pipeline_mode = #tpu.pipeline_mode<synchronous>, transform_indices = @transform_8, window_bounds = array<i64: 128, 512>}, {pipeline_mode = #tpu.pipeline_mode<synchronous>, transform_indices = @transform_9, window_bounds = array<i64: 1, 512>}, {pipeline_mode = #tpu.pipeline_mode<synchronous>, transform_indices = @transform_10, window_bounds = array<i64: 2, 512>}]} {
    %c0 = arith.constant 0 : index
    %c0_0 = arith.constant 0 : index
    %0 = vector.load %arg1[%c0, %c0_0] : memref<2x512xf32, #tpu.memory_space<vmem>>, vector<2x512xf32>
    %1 = arith.truncf %0 : vector<2x512xf32> to vector<2x512xbf16>
    %c0_1 = arith.constant 0 : index
    %c0_2 = arith.constant 0 : index
    %2 = vector.load %arg2[%c0_1, %c0_2] : memref<512x512xbf16, #tpu.memory_space<vmem>>, vector<512x512xbf16>
    %cst = arith.constant dense<0.000000e+00> : vector<2x512xf32>
    %3 = tpu.matmul %1, %2, %cst {dimension_numbers = #tpu.dot_dimension_numbers<[1], [0], [0], [1], [0, 0, 1, 1], [], []>} : vector<2x512xbf16>, vector<512x512xbf16>, vector<2x512xf32> -> vector<2x512xf32>
    %c0_3 = arith.constant 0 : index
    %c0_4 = arith.constant 0 : index
    %4 = vector.load %arg3[%c0_3, %c0_4] : memref<1x512xf32, #tpu.memory_space<vmem>>, vector<1x512xf32>
    %5 = vector.broadcast %4 : vector<1x512xf32> to vector<2x512xf32>
    %6 = arith.addf %3, %5 : vector<2x512xf32>
    %cst_5 = arith.constant 0.000000e+00 : f32
    %7 = vector.broadcast %cst_5 : f32 to vector<2x512xf32>
    %8 = arith.maximumf %6, %7 : vector<2x512xf32>
    %c0_6 = arith.constant 0 : index
    %c0_7 = arith.constant 0 : index
    %9 = vector.load %arg4[%c0_6, %c0_7] : memref<512x128xbf16, #tpu.memory_space<vmem>>, vector<512x128xbf16>
    %cst_8 = arith.constant dense<0.000000e+00> : vector<2x128xf32>
    %10 = tpu.matmul %1, %9, %cst_8 {dimension_numbers = #tpu.dot_dimension_numbers<[1], [0], [0], [1], [0, 0, 1, 1], [], []>} : vector<2x512xbf16>, vector<512x128xbf16>, vector<2x128xf32> -> vector<2x128xf32>
    %c0_9 = arith.constant 0 : index
    %c0_10 = arith.constant 0 : index
    %11 = vector.load %arg5[%c0_9, %c0_10] : memref<1x128xf32, #tpu.memory_space<vmem>>, vector<1x128xf32>
    %12 = vector.broadcast %11 : vector<1x128xf32> to vector<2x128xf32>
    %13 = arith.addf %10, %12 : vector<2x128xf32>
    %cst_11 = arith.constant 0.000000e+00 : f32
    %14 = vector.broadcast %cst_11 : f32 to vector<2x128xf32>
    %15 = arith.maximumf %13, %14 : vector<2x128xf32>
    %16 = arith.truncf %8 : vector<2x512xf32> to vector<2x512xbf16>
    %c0_12 = arith.constant 0 : index
    %c0_13 = arith.constant 0 : index
    %17 = vector.load %arg6[%c0_12, %c0_13] : memref<512x128xbf16, #tpu.memory_space<vmem>>, vector<512x128xbf16>
    %cst_14 = arith.constant dense<0.000000e+00> : vector<2x128xf32>
    %18 = tpu.matmul %16, %17, %cst_14 {dimension_numbers = #tpu.dot_dimension_numbers<[1], [0], [0], [1], [0, 0, 1, 1], [], []>} : vector<2x512xbf16>, vector<512x128xbf16>, vector<2x128xf32> -> vector<2x128xf32>
    %19 = arith.truncf %15 : vector<2x128xf32> to vector<2x128xbf16>
    %c0_15 = arith.constant 0 : index
    %c0_16 = arith.constant 0 : index
    %20 = vector.load %arg7[%c0_15, %c0_16] : memref<128x128xbf16, #tpu.memory_space<vmem>>, vector<128x128xbf16>
    %cst_17 = arith.constant dense<0.000000e+00> : vector<2x128xf32>
    %21 = tpu.matmul %19, %20, %cst_17 {dimension_numbers = #tpu.dot_dimension_numbers<[1], [0], [0], [1], [0, 0, 1, 1], [], []>} : vector<2x128xbf16>, vector<128x128xbf16>, vector<2x128xf32> -> vector<2x128xf32>
    %22 = arith.addf %18, %21 : vector<2x128xf32>
    %c0_18 = arith.constant 0 : index
    %c0_19 = arith.constant 0 : index
    %23 = vector.load %arg8[%c0_18, %c0_19] : memref<1x128xf32, #tpu.memory_space<vmem>>, vector<1x128xf32>
    %24 = vector.broadcast %23 : vector<1x128xf32> to vector<2x128xf32>
    %25 = arith.addf %22, %24 : vector<2x128xf32>
    %cst_20 = arith.constant 0.000000e+00 : f32
    %26 = vector.broadcast %cst_20 : f32 to vector<2x128xf32>
    %27 = arith.maximumf %25, %26 : vector<2x128xf32>
    %28 = arith.truncf %27 : vector<2x128xf32> to vector<2x128xbf16>
    %c0_21 = arith.constant 0 : index
    %c0_22 = arith.constant 0 : index
    %29 = vector.load %arg9[%c0_21, %c0_22] : memref<128x512xbf16, #tpu.memory_space<vmem>>, vector<128x512xbf16>
    %cst_23 = arith.constant dense<0.000000e+00> : vector<2x512xf32>
    %30 = tpu.matmul %28, %29, %cst_23 {dimension_numbers = #tpu.dot_dimension_numbers<[1], [0], [0], [1], [0, 0, 1, 1], [], []>} : vector<2x128xbf16>, vector<128x512xbf16>, vector<2x512xf32> -> vector<2x512xf32>
    %c0_24 = arith.constant 0 : index
    %c0_25 = arith.constant 0 : index
    %31 = vector.load %arg10[%c0_24, %c0_25] : memref<1x512xf32, #tpu.memory_space<vmem>>, vector<1x512xf32>
    %32 = vector.broadcast %31 : vector<1x512xf32> to vector<2x512xf32>
    %33 = arith.addf %30, %32 : vector<2x512xf32>
    %cst_26 = arith.constant 0.000000e+00 : f32
    %34 = vector.broadcast %cst_26 : f32 to vector<2x512xf32>
    %35 = arith.maximumf %33, %34 : vector<2x512xf32>
    %c0_27 = arith.constant 0 : index
    %c0_28 = arith.constant 0 : index
    %36 = vector.load %arg11[%c0_27, %c0_28] : memref<2x512xf32, #tpu.memory_space<vmem>>, vector<2x512xf32>
    tpu.vector_store %arg11[%c0_27, %c0_28], %35 {strides = array<i32>} : memref<2x512xf32, #tpu.memory_space<vmem>>, vector<2x512xf32>,
    return
  }
  func.func @transform_0(%arg0: i32) -> (i32, i32) {
    %c0_i32 = arith.constant 0 : i32
    %c0_i32_0 = arith.constant 0 : i32
    %c0_i32_1 = arith.constant 0 : i32
    return %c0_i32, %c0_i32_0 : i32, i32
  }
  func.func @transform_1(%arg0: i32) -> (i32, i32) {
    %c0_i32 = arith.constant 0 : i32
    %c0_i32_0 = arith.constant 0 : i32
    %c0_i32_1 = arith.constant 0 : i32
    return %c0_i32, %c0_i32_0 : i32, i32
  }
  func.func @transform_2(%arg0: i32) -> (i32, i32) {
    %c0_i32 = arith.constant 0 : i32
    %c0_i32_0 = arith.constant 0 : i32
    %c0_i32_1 = arith.constant 0 : i32
    return %c0_i32, %c0_i32_0 : i32, i32
  }
  func.func @transform_3(%arg0: i32) -> (i32, i32) {
    %c0_i32 = arith.constant 0 : i32
    %c0_i32_0 = arith.constant 0 : i32
    %c0_i32_1 = arith.constant 0 : i32
    return %c0_i32, %c0_i32_0 : i32, i32
  }
  func.func @transform_4(%arg0: i32) -> (i32, i32) {
    %c0_i32 = arith.constant 0 : i32
    %c0_i32_0 = arith.constant 0 : i32
    %c0_i32_1 = arith.constant 0 : i32
    return %c0_i32, %c0_i32_0 : i32, i32
  }
  func.func @transform_5(%arg0: i32) -> (i32, i32) {
    %c0_i32 = arith.constant 0 : i32
    %c0_i32_0 = arith.constant 0 : i32
    %c0_i32_1 = arith.constant 0 : i32
    return %c0_i32, %c0_i32_0 : i32, i32
  }
  func.func @transform_6(%arg0: i32) -> (i32, i32) {
    %c0_i32 = arith.constant 0 : i32
    %c0_i32_0 = arith.constant 0 : i32
    %c0_i32_1 = arith.constant 0 : i32
    return %c0_i32, %c0_i32_0 : i32, i32
  }
  func.func @transform_7(%arg0: i32) -> (i32, i32) {
    %c0_i32 = arith.constant 0 : i32
    %c0_i32_0 = arith.constant 0 : i32
    %c0_i32_1 = arith.constant 0 : i32
    return %c0_i32, %c0_i32_0 : i32, i32
  }
  func.func @transform_8(%arg0: i32) -> (i32, i32) {
    %c0_i32 = arith.constant 0 : i32
    %c0_i32_0 = arith.constant 0 : i32
    %c0_i32_1 = arith.constant 0 : i32
    return %c0_i32, %c0_i32_0 : i32, i32
  }
  func.func @transform_9(%arg0: i32) -> (i32, i32) {
    %c0_i32 = arith.constant 0 : i32
    %c0_i32_0 = arith.constant 0 : i32
    %c0_i32_1 = arith.constant 0 : i32
    return %c0_i32, %c0_i32_0 : i32, i32
  }
  func.func @transform_10(%arg0: i32) -> (i32, i32) {
    %c0_i32 = arith.constant 0 : i32
    %c0_i32_0 = arith.constant 0 : i32
    %c0_i32_1 = arith.constant 0 : i32
    return %c0_i32, %c0_i32_0 : i32, i32
  }
}

module attributes {stable_mosaic.version = 11 : i64} {
  func.func @_mm_kernel(%arg0: i32, %arg1: memref<8x1152xf32, #tpu.memory_space<vmem>>, %arg2: memref<1152x128xbf16, #tpu.memory_space<vmem>>, %arg3: memref<1x128xf32, #tpu.memory_space<vmem>>, %arg4: memref<8x128xf32, #tpu.memory_space<vmem>>) attributes {dimension_semantics = [#tpu.dimension_semantics<parallel>], iteration_bounds = array<i64: 1>, scalar_prefetch = 0 : i64, scratch_operands = 0 : i64, tpu.core_type = #tpu.core_type<tc>, window_params = [{transform_indices = @transform_0, window_bounds = array<i64: 8, 1152>}, {pipeline_mode = #tpu.pipeline_mode<synchronous>, transform_indices = @transform_1, window_bounds = array<i64: 1152, 128>}, {pipeline_mode = #tpu.pipeline_mode<synchronous>, transform_indices = @transform_2, window_bounds = array<i64: 1, 128>}, {transform_indices = @transform_3, window_bounds = array<i64: 8, 128>}]} {
    %c0 = arith.constant 0 : index
    %c0_0 = arith.constant 0 : index
    %0 = vector.load %arg1[%c0, %c0_0] : memref<8x1152xf32, #tpu.memory_space<vmem>>, vector<8x1152xf32>
    %1 = arith.truncf %0 : vector<8x1152xf32> to vector<8x1152xbf16>
    %c0_1 = arith.constant 0 : index
    %c0_2 = arith.constant 0 : index
    %2 = vector.load %arg2[%c0_1, %c0_2] : memref<1152x128xbf16, #tpu.memory_space<vmem>>, vector<1152x128xbf16>
    %cst = arith.constant dense<0.000000e+00> : vector<8x128xf32>
    %3 = tpu.matmul %1, %2, %cst {dimension_numbers = #tpu.dot_dimension_numbers<[1], [0], [0], [1], [0, 0, 1, 1], [], []>} : vector<8x1152xbf16>, vector<1152x128xbf16>, vector<8x128xf32> -> vector<8x128xf32>
    %c0_3 = arith.constant 0 : index
    %c0_4 = arith.constant 0 : index
    %4 = vector.load %arg3[%c0_3, %c0_4] : memref<1x128xf32, #tpu.memory_space<vmem>>, vector<1x128xf32>
    %5 = vector.broadcast %4 : vector<1x128xf32> to vector<8x128xf32>
    %6 = arith.addf %3, %5 : vector<8x128xf32>
    %cst_5 = arith.constant 0.000000e+00 : f32
    %7 = vector.broadcast %cst_5 : f32 to vector<8x128xf32>
    %8 = arith.maximumf %6, %7 : vector<8x128xf32>
    %c0_6 = arith.constant 0 : index
    %c0_7 = arith.constant 0 : index
    %9 = vector.load %arg4[%c0_6, %c0_7] : memref<8x128xf32, #tpu.memory_space<vmem>>, vector<8x128xf32>
    tpu.vector_store %arg4[%c0_6, %c0_7], %8 {strides = array<i32>} : memref<8x128xf32, #tpu.memory_space<vmem>>, vector<8x128xf32>,
    return
  }
  func.func @transform_0(%arg0: i32) -> (i32, i32) {
    %c0_i32 = arith.constant 0 : i32
    %c0_i32_0 = arith.constant 0 : i32
    return %arg0, %c0_i32 : i32, i32
  }
  func.func @transform_1(%arg0: i32) -> (i32, i32) {
    %c0_i32 = arith.constant 0 : i32
    %c0_i32_0 = arith.constant 0 : i32
    %c0_i32_1 = arith.constant 0 : i32
    return %c0_i32, %c0_i32_0 : i32, i32
  }
  func.func @transform_2(%arg0: i32) -> (i32, i32) {
    %c0_i32 = arith.constant 0 : i32
    %c0_i32_0 = arith.constant 0 : i32
    %c0_i32_1 = arith.constant 0 : i32
    return %c0_i32, %c0_i32_0 : i32, i32
  }
  func.func @transform_3(%arg0: i32) -> (i32, i32) {
    %c0_i32 = arith.constant 0 : i32
    %c0_i32_0 = arith.constant 0 : i32
    return %arg0, %c0_i32 : i32, i32
  }
}

module attributes {stable_mosaic.version = 11 : i64} {
  func.func @_mm_kernel(%arg0: i32, %arg1: memref<128x2304xf32, #tpu.memory_space<vmem>>, %arg2: memref<2304x128xbf16, #tpu.memory_space<vmem>>, %arg3: memref<1x128xf32, #tpu.memory_space<vmem>>, %arg4: memref<128x128xf32, #tpu.memory_space<vmem>>) attributes {dimension_semantics = [#tpu.dimension_semantics<parallel>], iteration_bounds = array<i64: 1>, scalar_prefetch = 0 : i64, scratch_operands = 0 : i64, tpu.core_type = #tpu.core_type<tc>, window_params = [{transform_indices = @transform_0, window_bounds = array<i64: 128, 2304>}, {pipeline_mode = #tpu.pipeline_mode<synchronous>, transform_indices = @transform_1, window_bounds = array<i64: 2304, 128>}, {pipeline_mode = #tpu.pipeline_mode<synchronous>, transform_indices = @transform_2, window_bounds = array<i64: 1, 128>}, {transform_indices = @transform_3, window_bounds = array<i64: 128, 128>}]} {
    %c0 = arith.constant 0 : index
    %c0_0 = arith.constant 0 : index
    %0 = vector.load %arg1[%c0, %c0_0] : memref<128x2304xf32, #tpu.memory_space<vmem>>, vector<128x2304xf32>
    %1 = arith.truncf %0 : vector<128x2304xf32> to vector<128x2304xbf16>
    %c0_1 = arith.constant 0 : index
    %c0_2 = arith.constant 0 : index
    %2 = vector.load %arg2[%c0_1, %c0_2] : memref<2304x128xbf16, #tpu.memory_space<vmem>>, vector<2304x128xbf16>
    %cst = arith.constant dense<0.000000e+00> : vector<128x128xf32>
    %3 = tpu.matmul %1, %2, %cst {dimension_numbers = #tpu.dot_dimension_numbers<[1], [0], [0], [1], [0, 0, 1, 1], [], []>} : vector<128x2304xbf16>, vector<2304x128xbf16>, vector<128x128xf32> -> vector<128x128xf32>
    %c0_3 = arith.constant 0 : index
    %c0_4 = arith.constant 0 : index
    %4 = vector.load %arg3[%c0_3, %c0_4] : memref<1x128xf32, #tpu.memory_space<vmem>>, vector<1x128xf32>
    %5 = vector.broadcast %4 : vector<1x128xf32> to vector<128x128xf32>
    %6 = arith.addf %3, %5 : vector<128x128xf32>
    %cst_5 = arith.constant 0.000000e+00 : f32
    %7 = vector.broadcast %cst_5 : f32 to vector<128x128xf32>
    %8 = arith.maximumf %6, %7 : vector<128x128xf32>
    %c0_6 = arith.constant 0 : index
    %c0_7 = arith.constant 0 : index
    %9 = vector.load %arg4[%c0_6, %c0_7] : memref<128x128xf32, #tpu.memory_space<vmem>>, vector<128x128xf32>
    tpu.vector_store %arg4[%c0_6, %c0_7], %8 {strides = array<i32>} : memref<128x128xf32, #tpu.memory_space<vmem>>, vector<128x128xf32>,
    return
  }
  func.func @transform_0(%arg0: i32) -> (i32, i32) {
    %c0_i32 = arith.constant 0 : i32
    %c0_i32_0 = arith.constant 0 : i32
    return %arg0, %c0_i32 : i32, i32
  }
  func.func @transform_1(%arg0: i32) -> (i32, i32) {
    %c0_i32 = arith.constant 0 : i32
    %c0_i32_0 = arith.constant 0 : i32
    %c0_i32_1 = arith.constant 0 : i32
    return %c0_i32, %c0_i32_0 : i32, i32
  }
  func.func @transform_2(%arg0: i32) -> (i32, i32) {
    %c0_i32 = arith.constant 0 : i32
    %c0_i32_0 = arith.constant 0 : i32
    %c0_i32_1 = arith.constant 0 : i32
    return %c0_i32, %c0_i32_0 : i32, i32
  }
  func.func @transform_3(%arg0: i32) -> (i32, i32) {
    %c0_i32 = arith.constant 0 : i32
    %c0_i32_0 = arith.constant 0 : i32
    return %arg0, %c0_i32 : i32, i32
  }
}

module attributes {stable_mosaic.version = 11 : i64} {
  func.func @_head_upsample_kernel(%arg0: i32, %arg1: memref<2x2048xf32, #tpu.memory_space<vmem>>, %arg2: memref<2048x128xbf16, #tpu.memory_space<vmem>>, %arg3: memref<1x128xf32, #tpu.memory_space<vmem>>, %arg4: memref<128x1024xbf16, #tpu.memory_space<vmem>>, %arg5: memref<2x1024xf32, #tpu.memory_space<vmem>>) attributes {dimension_semantics = [#tpu.dimension_semantics<arbitrary>], iteration_bounds = array<i64: 1>, scalar_prefetch = 0 : i64, scratch_operands = 0 : i64, tpu.core_type = #tpu.core_type<tc>, window_params = [{pipeline_mode = #tpu.pipeline_mode<synchronous>, transform_indices = @transform_0, window_bounds = array<i64: 2, 2048>}, {pipeline_mode = #tpu.pipeline_mode<synchronous>, transform_indices = @transform_1, window_bounds = array<i64: 2048, 128>}, {pipeline_mode = #tpu.pipeline_mode<synchronous>, transform_indices = @transform_2, window_bounds = array<i64: 1, 128>}, {pipeline_mode = #tpu.pipeline_mode<synchronous>, transform_indices = @transform_3, window_bounds = array<i64: 128, 1024>}, {pipeline_mode = #tpu.pipeline_mode<synchronous>, transform_indices = @transform_4, window_bounds = array<i64: 2, 1024>}]} {
    %c0 = arith.constant 0 : index
    %c0_0 = arith.constant 0 : index
    %0 = vector.load %arg1[%c0, %c0_0] : memref<2x2048xf32, #tpu.memory_space<vmem>>, vector<2x2048xf32>
    %1 = arith.truncf %0 : vector<2x2048xf32> to vector<2x2048xbf16>
    %c0_1 = arith.constant 0 : index
    %c0_2 = arith.constant 0 : index
    %2 = vector.load %arg2[%c0_1, %c0_2] : memref<2048x128xbf16, #tpu.memory_space<vmem>>, vector<2048x128xbf16>
    %cst = arith.constant dense<0.000000e+00> : vector<2x128xf32>
    %3 = tpu.matmul %1, %2, %cst {dimension_numbers = #tpu.dot_dimension_numbers<[1], [0], [0], [1], [0, 0, 1, 1], [], []>} : vector<2x2048xbf16>, vector<2048x128xbf16>, vector<2x128xf32> -> vector<2x128xf32>
    %c0_3 = arith.constant 0 : index
    %c0_4 = arith.constant 0 : index
    %4 = vector.load %arg3[%c0_3, %c0_4] : memref<1x128xf32, #tpu.memory_space<vmem>>, vector<1x128xf32>
    %5 = vector.broadcast %4 : vector<1x128xf32> to vector<2x128xf32>
    %6 = arith.addf %3, %5 : vector<2x128xf32>
    %7 = arith.truncf %6 : vector<2x128xf32> to vector<2x128xbf16>
    %c0_5 = arith.constant 0 : index
    %c0_6 = arith.constant 0 : index
    %8 = vector.load %arg4[%c0_5, %c0_6] : memref<128x1024xbf16, #tpu.memory_space<vmem>>, vector<128x1024xbf16>
    %cst_7 = arith.constant dense<0.000000e+00> : vector<2x1024xf32>
    %9 = tpu.matmul %7, %8, %cst_7 {dimension_numbers = #tpu.dot_dimension_numbers<[1], [0], [0], [1], [0, 0, 1, 1], [], []>} : vector<2x128xbf16>, vector<128x1024xbf16>, vector<2x1024xf32> -> vector<2x1024xf32>
    %cst_8 = arith.constant 5.000000e-01 : f32
    %10 = vector.broadcast %cst_8 : f32 to vector<2x1024xf32>
    %11 = arith.mulf %10, %9 : vector<2x1024xf32>
    %12 = math.tanh %11 : vector<2x1024xf32>
    %cst_9 = arith.constant 1.000000e+00 : f32
    %13 = vector.broadcast %cst_9 : f32 to vector<2x1024xf32>
    %14 = arith.addf %12, %13 : vector<2x1024xf32>
    %cst_10 = arith.constant 5.000000e-01 : f32
    %15 = vector.broadcast %cst_10 : f32 to vector<2x1024xf32>
    %16 = arith.mulf %15, %14 : vector<2x1024xf32>
    %c0_11 = arith.constant 0 : index
    %c0_12 = arith.constant 0 : index
    %17 = vector.load %arg5[%c0_11, %c0_12] : memref<2x1024xf32, #tpu.memory_space<vmem>>, vector<2x1024xf32>
    tpu.vector_store %arg5[%c0_11, %c0_12], %16 {strides = array<i32>} : memref<2x1024xf32, #tpu.memory_space<vmem>>, vector<2x1024xf32>,
    return
  }
  func.func @transform_0(%arg0: i32) -> (i32, i32) {
    %c0_i32 = arith.constant 0 : i32
    %c0_i32_0 = arith.constant 0 : i32
    %c0_i32_1 = arith.constant 0 : i32
    return %c0_i32, %c0_i32_0 : i32, i32
  }
  func.func @transform_1(%arg0: i32) -> (i32, i32) {
    %c0_i32 = arith.constant 0 : i32
    %c0_i32_0 = arith.constant 0 : i32
    %c0_i32_1 = arith.constant 0 : i32
    return %c0_i32, %c0_i32_0 : i32, i32
  }
  func.func @transform_2(%arg0: i32) -> (i32, i32) {
    %c0_i32 = arith.constant 0 : i32
    %c0_i32_0 = arith.constant 0 : i32
    %c0_i32_1 = arith.constant 0 : i32
    return %c0_i32, %c0_i32_0 : i32, i32
  }
  func.func @transform_3(%arg0: i32) -> (i32, i32) {
    %c0_i32 = arith.constant 0 : i32
    %c0_i32_0 = arith.constant 0 : i32
    %c0_i32_1 = arith.constant 0 : i32
    return %c0_i32, %c0_i32_0 : i32, i32
  }
  func.func @transform_4(%arg0: i32) -> (i32, i32) {
    %c0_i32 = arith.constant 0 : i32
    %c0_i32_0 = arith.constant 0 : i32
    %c0_i32_1 = arith.constant 0 : i32
    return %c0_i32, %c0_i32_0 : i32, i32
  }
}

</mosaic_0001>

<llo_original>
// kernel: seg_discriminator_forward.8
$region0: #{seg_discriminator_forward.8}
  #allocation0 [shape = 'u32[]', space=smem, size = 0x4, offset = 0x4, fixed_abs, tag = 'smem constant byte address 0x4 - core index']
  #allocation1 [shape = 'u32[144,128]{1,0:T(1,128)}', space=vmem, size = 0x12000, scoped, tag = 'internal scratch']
  %s0 = inlined_call_operand.vmem [shape: f32[512,32], index: 0, kind: input, shape index: {}]
  %s1 = inlined_call_operand.vmem [shape: bf16[32,128], index: 1, kind: input, shape index: {}]
  %s2 = inlined_call_operand.vmem [shape: f32[1,128], index: 2, kind: input, shape index: {}]
  %s3 = inlined_call_operand.vmem [shape: f32[512,128], index: 3, kind: output, shape index: {}]
  %s4 = sld [smem:[#allocation0]]
  $region22: #{seg_discriminator_forward.8} parent=0
    _
  %s6 = ssub.s32 1, %s4
  %s7 = scalar_select 0, %s6, %s4
  // Predicated region
  $region2: #{seg_discriminator_forward.8} parent=0 // pred_check
    _
  $region3: #{seg_discriminator_forward.8} parent=0 // pred_check_branch
    %9 = sbr.rel (0) target = $region5
  $region4: #{seg_discriminator_forward.8} parent=0 // pred_region
    _
  $region5: #{seg_discriminator_forward.8} parent=0 // pred_fallthru
    _
  // Predicated region
  $region6: #{seg_discriminator_forward.8} parent=0 // pred_check
    _
  $region7: #{seg_discriminator_forward.8} parent=0 // pred_check_branch
    %11 = sbr.rel (0) target = $region9
  $region8: #{seg_discriminator_forward.8} parent=0 // pred_region
    _
  $region9: #{seg_discriminator_forward.8} parent=0 // pred_fallthru
    _
  // Predicated region
  $region10: #{seg_discriminator_forward.8} parent=0 // pred_check
    _
  $region11: #{seg_discriminator_forward.8} parent=0 // pred_check_branch
    %13 = sbr.rel (0) target = $region13
  $region12: #{seg_discriminator_forward.8} parent=0 // pred_region
    _
  $region13: #{seg_discriminator_forward.8} parent=0 // pred_fallthru
    _
  %v15 = vld [vmem:[%s0] sm:$0xff]
  %v16 = vld [vmem:[%s0 + $0x8] sm:$0xff]
  %v17 = vld [vmem:[%s0 + $0x10] sm:$0xff]
  %v18 = vld [vmem:[%s0 + $0x18] sm:$0xff]
  %v19 = vld [vmem:[%s0 + $0x20] sm:$0xff]
  %v20 = vld [vmem:[%s0 + $0x28] sm:$0xff]
  %v21 = vld [vmem:[%s0 + $0x30] sm:$0xff]
  %v22 = vld [vmem:[%s0 + $0x38] sm:$0xff]
  %v23 = vld [vmem:[%s0 + $0x40] sm:$0xff]
  %v24 = vld [vmem:[%s0 + $0x48] sm:$0xff]
  %v25 = vld [vmem:[%s0 + $0x50] sm:$0xff]
  %v26 = vld [vmem:[%s0 + $0x58] sm:$0xff]
  %v27 = vld [vmem:[%s0 + $0x60] sm:$0xff]
  %v28 = vld [vmem:[%s0 + $0x68] sm:$0xff]
  %v29 = vld [vmem:[%s0 + $0x70] sm:$0xff]
  %v30 = vld [vmem:[%s0 + $0x78] sm:$0xff]
  %v31 = vld [vmem:[%s0 + $0x80] sm:$0xff]
  %v32 = vld [vmem:[%s0 + $0x88] sm:$0xff]
  %v33 = vld [vmem:[%s0 + $0x90] sm:$0xff]
  %v34 = vld [vmem:[%s0 + $0x98] sm:$0xff]
  %v35 = vld [vmem:[%s0 + $0xa0] sm:$0xff]
  %v36 = vld [vmem:[%s0 + $0xa8] sm:$0xff]
  %v37 = vld [vmem:[%s0 + $0xb0] sm:$0xff]
  %v38 = vld [vmem:[%s0 + $0xb8] sm:$0xff]
  %v39 = vld [vmem:[%s0 + $0xc0] sm:$0xff]
  %v40 = vld [vmem:[%s0 + $0xc8] sm:$0xff]
  %v41 = vld [vmem:[%s0 + $0xd0] sm:$0xff]
  %v42 = vld [vmem:[%s0 + $0xd8] sm:$0xff]
  %v43 = vld [vmem:[%s0 + $0xe0] sm:$0xff]
  %v44 = vld [vmem:[%s0 + $0xe8] sm:$0xff]
  %v45 = vld [vmem:[%s0 + $0xf0] sm:$0xff]
  %v46 = vld [vmem:[%s0 + $0xf8] sm:$0xff]
  %v47 = vld [vmem:[%s0 + $0x100] sm:$0xff]
  %v48 = vld [vmem:[%s0 + $0x108] sm:$0xff]
  %v49 = vld [vmem:[%s0 + $0x110] sm:$0xff]
  %v50 = vld [vmem:[%s0 + $0x118] sm:$0xff]
  %v51 = vld [vmem:[%s0 + $0x120] sm:$0xff]
  %v52 = vld [vmem:[%s0 + $0x128] sm:$0xff]
  %v53 = vld [vmem:[%s0 + $0x130] sm:$0xff]
  %v54 = vld [vmem:[%s0 + $0x138] sm:$0xff]
  %v55 = vld [vmem:[%s0 + $0x140] sm:$0xff]
  %v56 = vld [vmem:[%s0 + $0x148] sm:$0xff]
  %v57 = vld [vmem:[%s0 + $0x150] sm:$0xff]
  %v58 = vld [vmem:[%s0 + $0x158] sm:$0xff]
  %v59 = vld [vmem:[%s0 + $0x160] sm:$0xff]
  %v60 = vld [vmem:[%s0 + $0x168] sm:$0xff]
  %v61 = vld [vmem:[%s0 + $0x170] sm:$0xff]
  %v62 = vld [vmem:[%s0 + $0x178] sm:$0xff]
  %v63 = vld [vmem:[%s0 + $0x180] sm:$0xff]
  %v64 = vld [vmem:[%s0 + $0x188] sm:$0xff]
  %v65 = vld [vmem:[%s0 + $0x190] sm:$0xff]
  %v66 = vld [vmem:[%s0 + $0x198] sm:$0xff]
  %v67 = vld [vmem:[%s0 + $0x1a0] sm:$0xff]
  %v68 = vld [vmem:[%s0 + $0x1a8] sm:$0xff]
  %v69 = vld [vmem:[%s0 + $0x1b0] sm:$0xff]
  %v70 = vld [vmem:[%s0 + $0x1b8] sm:$0xff]
  %v71 = vld [vmem:[%s0 + $0x1c0] sm:$0xff]
  %v72 = vld [vmem:[%s0 + $0x1c8] sm:$0xff]
  %v73 = vld [vmem:[%s0 + $0x1d0] sm:$0xff]
  %v74 = vld [vmem:[%s0 + $0x1d8] sm:$0xff]
  %v75 = vld [vmem:[%s0 + $0x1e0] sm:$0xff]
  %v76 = vld [vmem:[%s0 + $0x1e8] sm:$0xff]
  %v77 = vld [vmem:[%s0 + $0x1f0] sm:$0xff]
  %v78 = vld [vmem:[%s0 + $0x1f8] sm:$0xff]
  %v79 = vpack.c.bf16 %v16, %v15
  %v80 = vpack.c.bf16 %v18, %v17
  %v81 = vpack.c.bf16 %v20, %v19
  %v82 = vpack.c.bf16 %v22, %v21
  %v83 = vpack.c.bf16 %v24, %v23
  %v84 = vpack.c.bf16 %v26, %v25
  %v85 = vpack.c.bf16 %v28, %v27
  %v86 = vpack.c.bf16 %v30, %v29
  %v87 = vpack.c.bf16 %v32, %v31
  %v88 = vpack.c.bf16 %v34, %v33
  %v89 = vpack.c.bf16 %v36, %v35
  %v90 = vpack.c.bf16 %v38, %v37
  %v91 = vpack.c.bf16 %v40, %v39
  %v92 = vpack.c.bf16 %v42, %v41
  %v93 = vpack.c.bf16 %v44, %v43
  %v94 = vpack.c.bf16 %v46, %v45
  %v95 = vpack.c.bf16 %v48, %v47
  %v96 = vpack.c.bf16 %v50, %v49
  %v97 = vpack.c.bf16 %v52, %v51
  %v98 = vpack.c.bf16 %v54, %v53
  %v99 = vpack.c.bf16 %v56, %v55
  %v100 = vpack.c.bf16 %v58, %v57
  %v101 = vpack.c.bf16 %v60, %v59
  %v102 = vpack.c.bf16 %v62, %v61
  %v103 = vpack.c.bf16 %v64, %v63
  %v104 = vpack.c.bf16 %v66, %v65
  %v105 = vpack.c.bf16 %v68, %v67
  %v106 = vpack.c.bf16 %v70, %v69
  %v107 = vpack.c.bf16 %v72, %v71
  %v108 = vpack.c.bf16 %v74, %v73
  %v109 = vpack.c.bf16 %v76, %v75
  %v110 = vpack.c.bf16 %v78, %v77
  %v111 = vld [vmem:[%s1] sm:$0xf]
  %v112 = vld [vmem:[%s1 + $0x4] sm:$0xf]
  %v113 = vld [vmem:[%s1 + $0x8] sm:$0xf]
  %v114 = vld [vmem:[%s1 + $0xc] sm:$0xf]
  %v115 = vld [vmem:[%s2] sm:$0x1]
  %v117 = vlaneseq
  %v118 = vshrl.u32 %v117, 7
  %v119 = vsub.s32 0, %v118
  %v120 = vrot.slane %v115, %v119
  %v126 = vunpack.c.l.b16 %v111
  %v127 = vunpack.c.l.b16 %v112
  %v128 = vunpack.c.l.b16 %v113
  %v129 = vunpack.c.l.b16 %v114
  %v130 = vpack.c.b16 %v127, %v126
  %v131 = vpack.c.b16 %v129, %v128
  %vm134 = vcmask 261120
  %v136 = vsel %vm134, %v79, 0
  %v139 = vsel %vm134, %v80, 0
  %v142 = vsel %vm134, %v81, 0
  %v145 = vsel %vm134, %v82, 0
  %v148 = vsel %vm134, %v83, 0
  %v151 = vsel %vm134, %v84, 0
  %v154 = vsel %vm134, %v85, 0
  %v157 = vsel %vm134, %v86, 0
  %v160 = vsel %vm134, %v87, 0
  %v163 = vsel %vm134, %v88, 0
  %v166 = vsel %vm134, %v89, 0
  %v169 = vsel %vm134, %v90, 0
  %v172 = vsel %vm134, %v91, 0
  %v175 = vsel %vm134, %v92, 0
  %v178 = vsel %vm134, %v93, 0
  %v181 = vsel %vm134, %v94, 0
  %v184 = vsel %vm134, %v95, 0
  %v187 = vsel %vm134, %v96, 0
  %v190 = vsel %vm134, %v97, 0
  %v193 = vsel %vm134, %v98, 0
  %v196 = vsel %vm134, %v99, 0
  %v199 = vsel %vm134, %v100, 0
  %v202 = vsel %vm134, %v101, 0
  %v205 = vsel %vm134, %v102, 0
  %v208 = vsel %vm134, %v103, 0
  %v211 = vsel %vm134, %v104, 0
  %v214 = vsel %vm134, %v105, 0
  %v217 = vsel %vm134, %v106, 0
  %v220 = vsel %vm134, %v107, 0
  %v223 = vsel %vm134, %v108, 0
  %v226 = vsel %vm134, %v109, 0
  %v229 = vsel %vm134, %v110, 0
  %231 = vmatprep.subr.bf16.mxu0 0
  %232 = vmatpush1.bf16.msra.mxu0 %v130
  %233 = vmatprep.subr.bf16.mxu0 0
  %234 = vmatpush1.bf16.msra.mxu0 %v131
  %235 = vmatprep.subr.bf16.mxu0 0
  %236 = vmatpush1.bf16.msra.mxu0 0
  %237 = vmatprep.subr.bf16.mxu0 0
  %238 = vmatpush1.bf16.msra.mxu0 0
  %239 = vmatprep.subr.bf16.mxu0 0
  %240 = vmatpush1.bf16.msra.mxu0 0
  %241 = vmatprep.subr.bf16.mxu0 0
  %242 = vmatpush1.bf16.msra.mxu0 0
  %243 = vmatprep.subr.bf16.mxu0 0
  %244 = vmatpush1.bf16.msra.mxu0 0
  %245 = vmatprep.subr.bf16.mxu0 0
  %246 = vmatpush1.bf16.msra.mxu0 0
  %247 = vmatprep.subr.bf16.mxu0 0
  %248 = vmatpush1.bf16.msra.mxu0 0
  %249 = vmatprep.subr.bf16.mxu0 0
  %250 = vmatpush1.bf16.msra.mxu0 0
  %251 = vmatprep.subr.bf16.mxu0 0
  %252 = vmatpush1.bf16.msra.mxu0 0
  %253 = vmatprep.subr.bf16.mxu0 0
  %254 = vmatpush1.bf16.msra.mxu0 0
  %255 = vmatprep.subr.bf16.mxu0 0
  %256 = vmatpush1.bf16.msra.mxu0 0
  %257 = vmatprep.subr.bf16.mxu0 0
  %258 = vmatpush1.bf16.msra.mxu0 0
  %259 = vmatprep.subr.bf16.mxu0 0
  %260 = vmatpush1.bf16.msra.mxu0 0
  %261 = vmatprep.subr.bf16.mxu0 0
  %262 = vmatpush1.bf16.msra.mxu0 0
  %263 = vmatprep.mubr.bf16.mxu0 0
  %264 = vmatmul.mubr.bf16.gmra.mrb[0].mxu0 %v136
  %v265 = vpop.f32.mrb[0].mxu0
  %v266 = vadd.f32 %v120, %v265
  %v267 = vpop.f32.mrb[0].mxu0
  %v268 = vpop.f32.mrb[0].mxu0
  %v269 = vadd.f32 %v120, %v268
  %v270 = vpop.f32.mrb[0].mxu0
  %271 = vmatprep.mubr.bf16.mxu0 0
  %272 = vmatmul.mubr.bf16.gmra.mrb[0].mxu0 %v139
  %v273 = vpop.f32.mrb[0].mxu0
  %v274 = vadd.f32 %v120, %v273
  %v275 = vpop.f32.mrb[0].mxu0
  %v276 = vpop.f32.mrb[0].mxu0
  %v277 = vadd.f32 %v120, %v276
  %v278 = vpop.f32.mrb[0].mxu0
  %279 = vmatprep.mubr.bf16.mxu0 0
  %280 = vmatmul.mubr.bf16.gmra.mrb[0].mxu0 %v142
  %v281 = vpop.f32.mrb[0].mxu0
  %v282 = vadd.f32 %v120, %v281
  %v283 = vpop.f32.mrb[0].mxu0
  %v284 = vpop.f32.mrb[0].mxu0
  %v285 = vadd.f32 %v120, %v284
  %v286 = vpop.f32.mrb[0].mxu0
  %287 = vmatprep.mubr.bf16.mxu0 0
  %288 = vmatmul.mubr.bf16.gmra.mrb[0].mxu0 %v145
  %v289 = vpop.f32.mrb[0].mxu0
  %v290 = vadd.f32 %v120, %v289
  %v291 = vpop.f32.mrb[0].mxu0
  %v292 = vpop.f32.mrb[0].mxu0
  %v293 = vadd.f32 %v120, %v292
  %v294 = vpop.f32.mrb[0].mxu0
  %295 = vmatprep.mubr.bf16.mxu0 0
  %296 = vmatmul.mubr.bf16.gmra.mrb[0].mxu0 %v148
  %v297 = vpop.f32.mrb[0].mxu0
  %v298 = vadd.f32 %v120, %v297
  %v299 = vpop.f32.mrb[0].mxu0
  %v300 = vpop.f32.mrb[0].mxu0
  %v301 = vadd.f32 %v120, %v300
  %v302 = vpop.f32.mrb[0].mxu0
  %303 = vmatprep.mubr.bf16.mxu0 0
  %304 = vmatmul.mubr.bf16.gmra.mrb[0].mxu0 %v151
  %v305 = vpop.f32.mrb[0].mxu0
  %v306 = vadd.f32 %v120, %v305
  %v307 = vpop.f32.mrb[0].mxu0
  %v308 = vpop.f32.mrb[0].mxu0
  %v309 = vadd.f32 %v120, %v308
  %v310 = vpop.f32.mrb[0].mxu0
  %311 = vmatprep.mubr.bf16.mxu0 0
  %312 = vmatmul.mubr.bf16.gmra.mrb[0].mxu0 %v154
  %v313 = vpop.f32.mrb[0].mxu0
  %v314 = vadd.f32 %v120, %v313
  %v315 = vpop.f32.mrb[0].mxu0
  %v316 = vpop.f32.mrb[0].mxu0
  %v317 = vadd.f32 %v120, %v316
  %v318 = vpop.f32.mrb[0].mxu0
  %319 = vmatprep.mubr.bf16.mxu0 0
  %320 = vmatmul.mubr.bf16.gmra.mrb[0].mxu0 %v157
  %v321 = vpop.f32.mrb[0].mxu0
  %v322 = vadd.f32 %v120, %v321
  %v323 = vpop.f32.mrb[0].mxu0
  %v324 = vpop.f32.mrb[0].mxu0
  %v325 = vadd.f32 %v120, %v324
  %v326 = vpop.f32.mrb[0].mxu0
  %327 = vmatprep.mubr.bf16.mxu0 0
  %328 = vmatmul.mubr.bf16.gmra.mrb[0].mxu0 %v160
  %v329 = vpop.f32.mrb[0].mxu0
  %v330 = vadd.f32 %v120, %v329
  %v331 = vpop.f32.mrb[0].mxu0
  %v332 = vpop.f32.mrb[0].mxu0
  %v333 = vadd.f32 %v120, %v332
  %v334 = vpop.f32.mrb[0].mxu0
  %335 = vmatprep.mubr.bf16.mxu0 0
  %336 = vmatmul.mubr.bf16.gmra.mrb[0].mxu0 %v163
  %v337 = vpop.f32.mrb[0].mxu0
  %v338 = vadd.f32 %v120, %v337
  %v339 = vpop.f32.mrb[0].mxu0
  %v340 = vpop.f32.mrb[0].mxu0
  %v341 = vadd.f32 %v120, %v340
  %v342 = vpop.f32.mrb[0].mxu0
  %343 = vmatprep.mubr.bf16.mxu0 0
  %344 = vmatmul.mubr.bf16.gmra.mrb[0].mxu0 %v166
  %v345 = vpop.f32.mrb[0].mxu0
  %v346 = vadd.f32 %v120, %v345
  %v347 = vpop.f32.mrb[0].mxu0
  %v348 = vpop.f32.mrb[0].mxu0
  %v349 = vadd.f32 %v120, %v348
  %v350 = vpop.f32.mrb[0].mxu0
  %351 = vmatprep.mubr.bf16.mxu0 0
  %352 = vmatmul.mubr.bf16.gmra.mrb[0].mxu0 %v169
  %v353 = vpop.f32.mrb[0].mxu0
  %v354 = vadd.f32 %v120, %v353
  %v355 = vpop.f32.mrb[0].mxu0
  %v356 = vpop.f32.mrb[0].mxu0
  %v357 = vadd.f32 %v120, %v356
  %v358 = vpop.f32.mrb[0].mxu0
  %359 = vmatprep.mubr.bf16.mxu0 0
  %360 = vmatmul.mubr.bf16.gmra.mrb[0].mxu0 %v172
  %v361 = vpop.f32.mrb[0].mxu0
  %v362 = vadd.f32 %v120, %v361
  %v363 = vpop.f32.mrb[0].mxu0
  %v364 = vpop.f32.mrb[0].mxu0
  %v365 = vadd.f32 %v120, %v364
  %v366 = vpop.f32.mrb[0].mxu0
  %367 = vmatprep.mubr.bf16.mxu0 0
  %368 = vmatmul.mubr.bf16.gmra.mrb[0].mxu0 %v175
  %v369 = vpop.f32.mrb[0].mxu0
  %v370 = vadd.f32 %v120, %v369
  %v371 = vpop.f32.mrb[0].mxu0
  %v372 = vpop.f32.mrb[0].mxu0
  %v373 = vadd.f32 %v120, %v372
  %v374 = vpop.f32.mrb[0].mxu0
  %375 = vmatprep.mubr.bf16.mxu0 0
  %376 = vmatmul.mubr.bf16.gmra.mrb[0].mxu0 %v178
  %v377 = vpop.f32.mrb[0].mxu0
  %v378 = vadd.f32 %v120, %v377
  %v379 = vpop.f32.mrb[0].mxu0
  %v380 = vpop.f32.mrb[0].mxu0
  %v381 = vadd.f32 %v120, %v380
  %v382 = vpop.f32.mrb[0].mxu0
  %383 = vmatprep.mubr.bf16.mxu0 0
  %384 = vmatmul.mubr.bf16.gmra.mrb[0].mxu0 %v181
  %v385 = vpop.f32.mrb[0].mxu0
  %v386 = vadd.f32 %v120, %v385
  %v387 = vpop.f32.mrb[0].mxu0
  %v388 = vpop.f32.mrb[0].mxu0
  %v389 = vadd.f32 %v120, %v388
  %v390 = vpop.f32.mrb[0].mxu0
  %391 = vmatprep.mubr.bf16.mxu0 0
  %392 = vmatmul.mubr.bf16.gmra.mrb[0].mxu0 %v184
  %v393 = vpop.f32.mrb[0].mxu0
  %v394 = vadd.f32 %v120, %v393
  %v395 = vpop.f32.mrb[0].mxu0
  %v396 = vpop.f32.mrb[0].mxu0
  %v397 = vadd.f32 %v120, %v396
  %v398 = vpop.f32.mrb[0].mxu0
  %399 = vmatprep.mubr.bf16.mxu0 0
  %400 = vmatmul.mubr.bf16.gmra.mrb[0].mxu0 %v187
  %v401 = vpop.f32.mrb[0].mxu0
  %v402 = vadd.f32 %v120, %v401
  %v403 = vpop.f32.mrb[0].mxu0
  %v404 = vpop.f32.mrb[0].mxu0
  %v405 = vadd.f32 %v120, %v404
  %v406 = vpop.f32.mrb[0].mxu0
  %407 = vmatprep.mubr.bf16.mxu0 0
  %408 = vmatmul.mubr.bf16.gmra.mrb[0].mxu0 %v190
  %v409 = vpop.f32.mrb[0].mxu0
  %v410 = vadd.f32 %v120, %v409
  %v411 = vpop.f32.mrb[0].mxu0
  %v412 = vpop.f32.mrb[0].mxu0
  %v413 = vadd.f32 %v120, %v412
  %v414 = vpop.f32.mrb[0].mxu0
  %415 = vmatprep.mubr.bf16.mxu0 0
  %416 = vmatmul.mubr.bf16.gmra.mrb[0].mxu0 %v193
  %v417 = vpop.f32.mrb[0].mxu0
  %v418 = vadd.f32 %v120, %v417
  %v419 = vpop.f32.mrb[0].mxu0
  %v420 = vpop.f32.mrb[0].mxu0
  %v421 = vadd.f32 %v120, %v420
  %v422 = vpop.f32.mrb[0].mxu0
  %423 = vmatprep.mubr.bf16.mxu0 0
  %424 = vmatmul.mubr.bf16.gmra.mrb[0].mxu0 %v196
  %v425 = vpop.f32.mrb[0].mxu0
  %v426 = vadd.f32 %v120, %v425
  %v427 = vpop.f32.mrb[0].mxu0
  %v428 = vpop.f32.mrb[0].mxu0
  %v429 = vadd.f32 %v120, %v428
  %v430 = vpop.f32.mrb[0].mxu0
  %431 = vmatprep.mubr.bf16.mxu0 0
  %432 = vmatmul.mubr.bf16.gmra.mrb[0].mxu0 %v199
  %v433 = vpop.f32.mrb[0].mxu0
  %v434 = vadd.f32 %v120, %v433
  %v435 = vpop.f32.mrb[0].mxu0
  %v436 = vpop.f32.mrb[0].mxu0
  %v437 = vadd.f32 %v120, %v436
  %v438 = vpop.f32.mrb[0].mxu0
  %439 = vmatprep.mubr.bf16.mxu0 0
  %440 = vmatmul.mubr.bf16.gmra.mrb[0].mxu0 %v202
  %v441 = vpop.f32.mrb[0].mxu0
  %v442 = vadd.f32 %v120, %v441
  %v443 = vpop.f32.mrb[0].mxu0
  %v444 = vpop.f32.mrb[0].mxu0
  %v445 = vadd.f32 %v120, %v444
  %v446 = vpop.f32.mrb[0].mxu0
  %447 = vmatprep.mubr.bf16.mxu0 0
  %448 = vmatmul.mubr.bf16.gmra.mrb[0].mxu0 %v205
  %v449 = vpop.f32.mrb[0].mxu0
  %v450 = vadd.f32 %v120, %v449
  %v451 = vpop.f32.mrb[0].mxu0
  %v452 = vpop.f32.mrb[0].mxu0
  %v453 = vadd.f32 %v120, %v452
  %v454 = vpop.f32.mrb[0].mxu0
  %455 = vmatprep.mubr.bf16.mxu0 0
  %456 = vmatmul.mubr.bf16.gmra.mrb[0].mxu0 %v208
  %v457 = vpop.f32.mrb[0].mxu0
  %v458 = vadd.f32 %v120, %v457
  %v459 = vpop.f32.mrb[0].mxu0
  %v460 = vpop.f32.mrb[0].mxu0
  %v461 = vadd.f32 %v120, %v460
  %v462 = vpop.f32.mrb[0].mxu0
  %463 = vmatprep.mubr.bf16.mxu0 0
  %464 = vmatmul.mubr.bf16.gmra.mrb[0].mxu0 %v211
  %v465 = vpop.f32.mrb[0].mxu0
  %v466 = vadd.f32 %v120, %v465
  %v467 = vpop.f32.mrb[0].mxu0
  %v468 = vpop.f32.mrb[0].mxu0
  %v469 = vadd.f32 %v120, %v468
  %v470 = vpop.f32.mrb[0].mxu0
  %471 = vmatprep.mubr.bf16.mxu0 0
  %472 = vmatmul.mubr.bf16.gmra.mrb[0].mxu0 %v214
  %v473 = vpop.f32.mrb[0].mxu0
  %v474 = vadd.f32 %v120, %v473
  %v475 = vpop.f32.mrb[0].mxu0
  %v476 = vpop.f32.mrb[0].mxu0
  %v477 = vadd.f32 %v120, %v476
  %v478 = vpop.f32.mrb[0].mxu0
  %479 = vmatprep.mubr.bf16.mxu0 0
  %480 = vmatmul.mubr.bf16.gmra.mrb[0].mxu0 %v217
  %v481 = vpop.f32.mrb[0].mxu0
  %v482 = vadd.f32 %v120, %v481
  %v483 = vpop.f32.mrb[0].mxu0
  %v484 = vpop.f32.mrb[0].mxu0
  %v485 = vadd.f32 %v120, %v484
  %v486 = vpop.f32.mrb[0].mxu0
  %487 = vmatprep.mubr.bf16.mxu0 0
  %488 = vmatmul.mubr.bf16.gmra.mrb[0].mxu0 %v220
  %v489 = vpop.f32.mrb[0].mxu0
  %v490 = vadd.f32 %v120, %v489
  %v491 = vpop.f32.mrb[0].mxu0
  %v492 = vpop.f32.mrb[0].mxu0
  %v493 = vadd.f32 %v120, %v492
  %v494 = vpop.f32.mrb[0].mxu0
  %495 = vmatprep.mubr.bf16.mxu0 0
  %496 = vmatmul.mubr.bf16.gmra.mrb[0].mxu0 %v223
  %v497 = vpop.f32.mrb[0].mxu0
  %v498 = vadd.f32 %v120, %v497
  %v499 = vpop.f32.mrb[0].mxu0
  %v500 = vpop.f32.mrb[0].mxu0
  %v501 = vadd.f32 %v120, %v500
  %v502 = vpop.f32.mrb[0].mxu0
  %503 = vmatprep.mubr.bf16.mxu0 0
  %504 = vmatmul.mubr.bf16.gmra.mrb[0].mxu0 %v226
  %v505 = vpop.f32.mrb[0].mxu0
  %v506 = vadd.f32 %v120, %v505
  %v507 = vpop.f32.mrb[0].mxu0
  %v508 = vpop.f32.mrb[0].mxu0
  %v509 = vadd.f32 %v120, %v508
  %v510 = vpop.f32.mrb[0].mxu0
  %511 = vmatprep.mubr.bf16.mxu0 0
  %512 = vmatmul.mubr.bf16.gmra.mrb[0].mxu0 %v229
  %v513 = vpop.f32.mrb[0].mxu0
  %v514 = vadd.f32 %v120, %v513
  %v515 = vpop.f32.mrb[0].mxu0
  %v516 = vpop.f32.mrb[0].mxu0
  %v517 = vadd.f32 %v120, %v516
  %v518 = vpop.f32.mrb[0].mxu0
  %519 = vdwg.mxu0
  %v520 = vmax.f32 %v266, 0.0
  %v521 = vmax.f32 %v269, 0.0
  %v522 = vmax.f32 %v274, 0.0
  %v523 = vmax.f32 %v277, 0.0
  %v524 = vmax.f32 %v282, 0.0
  %v525 = vmax.f32 %v285, 0.0
  %v526 = vmax.f32 %v290, 0.0
  %v527 = vmax.f32 %v293, 0.0
  %v528 = vmax.f32 %v298, 0.0
  %v529 = vmax.f32 %v301, 0.0
  %v530 = vmax.f32 %v306, 0.0
  %v531 = vmax.f32 %v309, 0.0
  %v532 = vmax.f32 %v314, 0.0
  %v533 = vmax.f32 %v317, 0.0
  %v534 = vmax.f32 %v322, 0.0
  %v535 = vmax.f32 %v325, 0.0
  %v536 = vmax.f32 %v330, 0.0
  %v537 = vmax.f32 %v333, 0.0
  %v538 = vmax.f32 %v338, 0.0
  %v539 = vmax.f32 %v341, 0.0
  %v540 = vmax.f32 %v346, 0.0
  %v541 = vmax.f32 %v349, 0.0
  %v542 = vmax.f32 %v354, 0.0
  %v543 = vmax.f32 %v357, 0.0
  %v544 = vmax.f32 %v362, 0.0
  %v545 = vmax.f32 %v365, 0.0
  %v546 = vmax.f32 %v370, 0.0
  %v547 = vmax.f32 %v373, 0.0
  %v548 = vmax.f32 %v378, 0.0
  %v549 = vmax.f32 %v381, 0.0
  %v550 = vmax.f32 %v386, 0.0
  %v551 = vmax.f32 %v389, 0.0
  %v552 = vmax.f32 %v394, 0.0
  %v553 = vmax.f32 %v397, 0.0
  %v554 = vmax.f32 %v402, 0.0
  %v555 = vmax.f32 %v405, 0.0
  %v556 = vmax.f32 %v410, 0.0
  %v557 = vmax.f32 %v413, 0.0
  %v558 = vmax.f32 %v418, 0.0
  %v559 = vmax.f32 %v421, 0.0
  %v560 = vmax.f32 %v426, 0.0
  %v561 = vmax.f32 %v429, 0.0
  %v562 = vmax.f32 %v434, 0.0
  %v563 = vmax.f32 %v437, 0.0
  %v564 = vmax.f32 %v442, 0.0
  %v565 = vmax.f32 %v445, 0.0
  %v566 = vmax.f32 %v450, 0.0
  %v567 = vmax.f32 %v453, 0.0
  %v568 = vmax.f32 %v458, 0.0
  %v569 = vmax.f32 %v461, 0.0
  %v570 = vmax.f32 %v466, 0.0
  %v571 = vmax.f32 %v469, 0.0
  %v572 = vmax.f32 %v474, 0.0
  %v573 = vmax.f32 %v477, 0.0
  %v574 = vmax.f32 %v482, 0.0
  %v575 = vmax.f32 %v485, 0.0
  %v576 = vmax.f32 %v490, 0.0
  %v577 = vmax.f32 %v493, 0.0
  %v578 = vmax.f32 %v498, 0.0
  %v579 = vmax.f32 %v501, 0.0
  %v580 = vmax.f32 %v506, 0.0
  %v581 = vmax.f32 %v509, 0.0
  %v582 = vmax.f32 %v514, 0.0
  %v583 = vmax.f32 %v517, 0.0
  %584 = vst [vmem:[%s3] sm:$0xff] %v520
  %585 = vst [vmem:[%s3 + $0x8] sm:$0xff] %v521
  %586 = vst [vmem:[%s3 + $0x10] sm:$0xff] %v522
  %587 = vst [vmem:[%s3 + $0x18] sm:$0xff] %v523
  %588 = vst [vmem:[%s3 + $0x20] sm:$0xff] %v524
  %589 = vst [vmem:[%s3 + $0x28] sm:$0xff] %v525
  %590 = vst [vmem:[%s3 + $0x30] sm:$0xff] %v526
  %591 = vst [vmem:[%s3 + $0x38] sm:$0xff] %v527
  %592 = vst [vmem:[%s3 + $0x40] sm:$0xff] %v528
  %593 = vst [vmem:[%s3 + $0x48] sm:$0xff] %v529
  %594 = vst [vmem:[%s3 + $0x50] sm:$0xff] %v530
  %595 = vst [vmem:[%s3 + $0x58] sm:$0xff] %v531
  %596 = vst [vmem:[%s3 + $0x60] sm:$0xff] %v532
  %597 = vst [vmem:[%s3 + $0x68] sm:$0xff] %v533
  %598 = vst [vmem:[%s3 + $0x70] sm:$0xff] %v534
  %599 = vst [vmem:[%s3 + $0x78] sm:$0xff] %v535
  %600 = vst [vmem:[%s3 + $0x80] sm:$0xff] %v536
  %601 = vst [vmem:[%s3 + $0x88] sm:$0xff] %v537
  %602 = vst [vmem:[%s3 + $0x90] sm:$0xff] %v538
  %603 = vst [vmem:[%s3 + $0x98] sm:$0xff] %v539
  %604 = vst [vmem:[%s3 + $0xa0] sm:$0xff] %v540
  %605 = vst [vmem:[%s3 + $0xa8] sm:$0xff] %v541
  %606 = vst [vmem:[%s3 + $0xb0] sm:$0xff] %v542
  %607 = vst [vmem:[%s3 + $0xb8] sm:$0xff] %v543
  %608 = vst [vmem:[%s3 + $0xc0] sm:$0xff] %v544
  %609 = vst [vmem:[%s3 + $0xc8] sm:$0xff] %v545
  %610 = vst [vmem:[%s3 + $0xd0] sm:$0xff] %v546
  %611 = vst [vmem:[%s3 + $0xd8] sm:$0xff] %v547
  %612 = vst [vmem:[%s3 + $0xe0] sm:$0xff] %v548
  %613 = vst [vmem:[%s3 + $0xe8] sm:$0xff] %v549
  %614 = vst [vmem:[%s3 + $0xf0] sm:$0xff] %v550
  %615 = vst [vmem:[%s3 + $0xf8] sm:$0xff] %v551
  %616 = vst [vmem:[%s3 + $0x100] sm:$0xff] %v552
  %617 = vst [vmem:[%s3 + $0x108] sm:$0xff] %v553
  %618 = vst [vmem:[%s3 + $0x110] sm:$0xff] %v554
  %619 = vst [vmem:[%s3 + $0x118] sm:$0xff] %v555
  %620 = vst [vmem:[%s3 + $0x120] sm:$0xff] %v556
  %621 = vst [vmem:[%s3 + $0x128] sm:$0xff] %v557
  %622 = vst [vmem:[%s3 + $0x130] sm:$0xff] %v558
  %623 = vst [vmem:[%s3 + $0x138] sm:$0xff] %v559
  %624 = vst [vmem:[%s3 + $0x140] sm:$0xff] %v560
  %625 = vst [vmem:[%s3 + $0x148] sm:$0xff] %v561
  %626 = vst [vmem:[%s3 + $0x150] sm:$0xff] %v562
  %627 = vst [vmem:[%s3 + $0x158] sm:$0xff] %v563
  %628 = vst [vmem:[%s3 + $0x160] sm:$0xff] %v564
  %629 = vst [vmem:[%s3 + $0x168] sm:$0xff] %v565
  %630 = vst [vmem:[%s3 + $0x170] sm:$0xff] %v566
  %631 = vst [vmem:[%s3 + $0x178] sm:$0xff] %v567
  %632 = vst [vmem:[%s3 + $0x180] sm:$0xff] %v568
  %633 = vst [vmem:[%s3 + $0x188] sm:$0xff] %v569
  %634 = vst [vmem:[%s3 + $0x190] sm:$0xff] %v570
  %635 = vst [vmem:[%s3 + $0x198] sm:$0xff] %v571
  %636 = vst [vmem:[%s3 + $0x1a0] sm:$0xff] %v572
  %637 = vst [vmem:[%s3 + $0x1a8] sm:$0xff] %v573
  %638 = vst [vmem:[%s3 + $0x1b0] sm:$0xff] %v574
  %639 = vst [vmem:[%s3 + $0x1b8] sm:$0xff] %v575
  %640 = vst [vmem:[%s3 + $0x1c0] sm:$0xff] %v576
  %641 = vst [vmem:[%s3 + $0x1c8] sm:$0xff] %v577
  %642 = vst [vmem:[%s3 + $0x1d0] sm:$0xff] %v578
  %643 = vst [vmem:[%s3 + $0x1d8] sm:$0xff] %v579
  %644 = vst [vmem:[%s3 + $0x1e0] sm:$0xff] %v580
  %645 = vst [vmem:[%s3 + $0x1e8] sm:$0xff] %v581
  %646 = vst [vmem:[%s3 + $0x1f0] sm:$0xff] %v582
  %647 = vst [vmem:[%s3 + $0x1f8] sm:$0xff] %v583
  // Predicated region
  $region14: #{seg_discriminator_forward.8} parent=0 // pred_check
    _
  $region15: #{seg_discriminator_forward.8} parent=0 // pred_check_branch
    %649 = sbr.rel (0) target = $region17
  $region16: #{seg_discriminator_forward.8} parent=0 // pred_region
    _
  $region17: #{seg_discriminator_forward.8} parent=0 // pred_fallthru
    _
  // Predicated region
  $region18: #{seg_discriminator_forward.8} parent=0 // pred_check
    _
  $region19: #{seg_discriminator_forward.8} parent=0 // pred_check_branch
    %651 = sbr.rel (0) target = $region21
  $region20: #{seg_discriminator_forward.8} parent=0 // pred_region
    _
  $region21: #{seg_discriminator_forward.8} parent=0 // pred_fallthru
    _

// kernel: seg_discriminator_forward.13
$region0: #{seg_discriminator_forward.13}
  #allocation0 [shape = 'u32[]', space=smem, size = 0x4, offset = 0x4, fixed_abs, tag = 'smem constant byte address 0x4 - core index']
  #allocation1 [shape = 'u32[144,128]{1,0:T(1,128)}', space=vmem, size = 0x12000, scoped, tag = 'internal scratch']
  %s0 = inlined_call_operand.vmem [shape: f32[128,128], index: 0, kind: input, shape index: {}]
  %s1 = inlined_call_operand.vmem [shape: bf16[128,128], index: 1, kind: input, shape index: {}]
  %s2 = inlined_call_operand.vmem [shape: f32[1,128], index: 2, kind: input, shape index: {}]
  %s3 = inlined_call_operand.vmem [shape: f32[128,128], index: 3, kind: output, shape index: {}]
  %s4 = sld [smem:[#allocation0]]
  $region22: #{seg_discriminator_forward.13} parent=0
    _
  %s6 = ssub.s32 1, %s4
  %s7 = scalar_select 0, %s6, %s4
  // Predicated region
  $region2: #{seg_discriminator_forward.13} parent=0 // pred_check
    _
  $region3: #{seg_discriminator_forward.13} parent=0 // pred_check_branch
    %9 = sbr.rel (0) target = $region5
  $region4: #{seg_discriminator_forward.13} parent=0 // pred_region
    _
  $region5: #{seg_discriminator_forward.13} parent=0 // pred_fallthru
    _
  // Predicated region
  $region6: #{seg_discriminator_forward.13} parent=0 // pred_check
    _
  $region7: #{seg_discriminator_forward.13} parent=0 // pred_check_branch
    %11 = sbr.rel (0) target = $region9
  $region8: #{seg_discriminator_forward.13} parent=0 // pred_region
    _
  $region9: #{seg_discriminator_forward.13} parent=0 // pred_fallthru
    _
  // Predicated region
  $region10: #{seg_discriminator_forward.13} parent=0 // pred_check
    _
  $region11: #{seg_discriminator_forward.13} parent=0 // pred_check_branch
    %13 = sbr.rel (0) target = $region13
  $region12: #{seg_discriminator_forward.13} parent=0 // pred_region
    _
  $region13: #{seg_discriminator_forward.13} parent=0 // pred_fallthru
    _
  %v15 = vld [vmem:[%s0] sm:$0xff]
  %v16 = vld [vmem:[%s0 + $0x8] sm:$0xff]
  %v17 = vld [vmem:[%s0 + $0x10] sm:$0xff]
  %v18 = vld [vmem:[%s0 + $0x18] sm:$0xff]
  %v19 = vld [vmem:[%s0 + $0x20] sm:$0xff]
  %v20 = vld [vmem:[%s0 + $0x28] sm:$0xff]
  %v21 = vld [vmem:[%s0 + $0x30] sm:$0xff]
  %v22 = vld [vmem:[%s0 + $0x38] sm:$0xff]
  %v23 = vld [vmem:[%s0 + $0x40] sm:$0xff]
  %v24 = vld [vmem:[%s0 + $0x48] sm:$0xff]
  %v25 = vld [vmem:[%s0 + $0x50] sm:$0xff]
  %v26 = vld [vmem:[%s0 + $0x58] sm:$0xff]
  %v27 = vld [vmem:[%s0 + $0x60] sm:$0xff]
  %v28 = vld [vmem:[%s0 + $0x68] sm:$0xff]
  %v29 = vld [vmem:[%s0 + $0x70] sm:$0xff]
  %v30 = vld [vmem:[%s0 + $0x78] sm:$0xff]
  %v31 = vpack.c.bf16 %v16, %v15
  %v32 = vpack.c.bf16 %v18, %v17
  %v33 = vpack.c.bf16 %v20, %v19
  %v34 = vpack.c.bf16 %v22, %v21
  %v35 = vpack.c.bf16 %v24, %v23
  %v36 = vpack.c.bf16 %v26, %v25
  %v37 = vpack.c.bf16 %v28, %v27
  %v38 = vpack.c.bf16 %v30, %v29
  %v39 = vld [vmem:[%s1] sm:$0xf]
  %v40 = vld [vmem:[%s1 + $0x4] sm:$0xf]
  %v41 = vld [vmem:[%s1 + $0x8] sm:$0xf]
  %v42 = vld [vmem:[%s1 + $0xc] sm:$0xf]
  %v43 = vld [vmem:[%s1 + $0x10] sm:$0xf]
  %v44 = vld [vmem:[%s1 + $0x14] sm:$0xf]
  %v45 = vld [vmem:[%s1 + $0x18] sm:$0xf]
  %v46 = vld [vmem:[%s1 + $0x1c] sm:$0xf]
  %v47 = vld [vmem:[%s1 + $0x20] sm:$0xf]
  %v48 = vld [vmem:[%s1 + $0x24] sm:$0xf]
  %v49 = vld [vmem:[%s1 + $0x28] sm:$0xf]
  %v50 = vld [vmem:[%s1 + $0x2c] sm:$0xf]
  %v51 = vld [vmem:[%s1 + $0x30] sm:$0xf]
  %v52 = vld [vmem:[%s1 + $0x34] sm:$0xf]
  %v53 = vld [vmem:[%s1 + $0x38] sm:$0xf]
  %v54 = vld [vmem:[%s1 + $0x3c] sm:$0xf]
  %v55 = vld [vmem:[%s2] sm:$0x1]
  %v57 = vlaneseq
  %v58 = vshrl.u32 %v57, 7
  %v59 = vsub.s32 0, %v58
  %v60 = vrot.slane %v55, %v59
  %v78 = vunpack.c.l.b16 %v39
  %v79 = vunpack.c.l.b16 %v40
  %v80 = vunpack.c.l.b16 %v41
  %v81 = vunpack.c.l.b16 %v42
  %v82 = vunpack.c.l.b16 %v43
  %v83 = vunpack.c.l.b16 %v44
  %v84 = vunpack.c.l.b16 %v45
  %v85 = vunpack.c.l.b16 %v46
  %v86 = vunpack.c.l.b16 %v47
  %v87 = vunpack.c.l.b16 %v48
  %v88 = vunpack.c.l.b16 %v49
  %v89 = vunpack.c.l.b16 %v50
  %v90 = vunpack.c.l.b16 %v51
  %v91 = vunpack.c.l.b16 %v52
  %v92 = vunpack.c.l.b16 %v53
  %v93 = vunpack.c.l.b16 %v54
  %v94 = vpack.c.b16 %v79, %v78
  %v95 = vpack.c.b16 %v81, %v80
  %v96 = vpack.c.b16 %v83, %v82
  %v97 = vpack.c.b16 %v85, %v84
  %v98 = vpack.c.b16 %v87, %v86
  %v99 = vpack.c.b16 %v89, %v88
  %v100 = vpack.c.b16 %v91, %v90
  %v101 = vpack.c.b16 %v93, %v92
  %110 = vmatprep.subr.bf16.mxu0 0
  %111 = vmatpush1.bf16.msra.mxu0 %v94
  %112 = vmatprep.subr.bf16.mxu0 0
  %113 = vmatpush1.bf16.msra.mxu0 %v95
  %114 = vmatprep.subr.bf16.mxu0 0
  %115 = vmatpush1.bf16.msra.mxu0 %v96
  %116 = vmatprep.subr.bf16.mxu0 0
  %117 = vmatpush1.bf16.msra.mxu0 %v97
  %118 = vmatprep.subr.bf16.mxu0 0
  %119 = vmatpush1.bf16.msra.mxu0 %v98
  %120 = vmatprep.subr.bf16.mxu0 0
  %121 = vmatpush1.bf16.msra.mxu0 %v99
  %122 = vmatprep.subr.bf16.mxu0 0
  %123 = vmatpush1.bf16.msra.mxu0 %v100
  %124 = vmatprep.subr.bf16.mxu0 0
  %125 = vmatpush1.bf16.msra.mxu0 %v101
  %126 = vmatprep.subr.bf16.mxu0 0
  %127 = vmatpush1.bf16.msra.mxu0 0
  %128 = vmatprep.subr.bf16.mxu0 0
  %129 = vmatpush1.bf16.msra.mxu0 0
  %130 = vmatprep.subr.bf16.mxu0 0
  %131 = vmatpush1.bf16.msra.mxu0 0
  %132 = vmatprep.subr.bf16.mxu0 0
  %133 = vmatpush1.bf16.msra.mxu0 0
  %134 = vmatprep.subr.bf16.mxu0 0
  %135 = vmatpush1.bf16.msra.mxu0 0
  %136 = vmatprep.subr.bf16.mxu0 0
  %137 = vmatpush1.bf16.msra.mxu0 0
  %138 = vmatprep.subr.bf16.mxu0 0
  %139 = vmatpush1.bf16.msra.mxu0 0
  %140 = vmatprep.subr.bf16.mxu0 0
  %141 = vmatpush1.bf16.msra.mxu0 0
  %142 = vmatprep.mubr.bf16.mxu0 0
  %143 = vmatmul.mubr.bf16.gmra.mrb[0].mxu0 %v31
  %v144 = vpop.f32.mrb[0].mxu0
  %v145 = vadd.f32 %v60, %v144
  %v146 = vpop.f32.mrb[0].mxu0
  %v147 = vpop.f32.mrb[0].mxu0
  %v148 = vadd.f32 %v60, %v147
  %v149 = vpop.f32.mrb[0].mxu0
  %150 = vmatprep.mubr.bf16.mxu0 0
  %151 = vmatmul.mubr.bf16.gmra.mrb[0].mxu0 %v32
  %v152 = vpop.f32.mrb[0].mxu0
  %v153 = vadd.f32 %v60, %v152
  %v154 = vpop.f32.mrb[0].mxu0
  %v155 = vpop.f32.mrb[0].mxu0
  %v156 = vadd.f32 %v60, %v155
  %v157 = vpop.f32.mrb[0].mxu0
  %158 = vmatprep.mubr.bf16.mxu0 0
  %159 = vmatmul.mubr.bf16.gmra.mrb[0].mxu0 %v33
  %v160 = vpop.f32.mrb[0].mxu0
  %v161 = vadd.f32 %v60, %v160
  %v162 = vpop.f32.mrb[0].mxu0
  %v163 = vpop.f32.mrb[0].mxu0
  %v164 = vadd.f32 %v60, %v163
  %v165 = vpop.f32.mrb[0].mxu0
  %166 = vmatprep.mubr.bf16.mxu0 0
  %167 = vmatmul.mubr.bf16.gmra.mrb[0].mxu0 %v34
  %v168 = vpop.f32.mrb[0].mxu0
  %v169 = vadd.f32 %v60, %v168
  %v170 = vpop.f32.mrb[0].mxu0
  %v171 = vpop.f32.mrb[0].mxu0
  %v172 = vadd.f32 %v60, %v171
  %v173 = vpop.f32.mrb[0].mxu0
  %174 = vmatprep.mubr.bf16.mxu0 0
  %175 = vmatmul.mubr.bf16.gmra.mrb[0].mxu0 %v35
  %v176 = vpop.f32.mrb[0].mxu0
  %v177 = vadd.f32 %v60, %v176
  %v178 = vpop.f32.mrb[0].mxu0
  %v179 = vpop.f32.mrb[0].mxu0
  %v180 = vadd.f32 %v60, %v179
  %v181 = vpop.f32.mrb[0].mxu0
  %182 = vmatprep.mubr.bf16.mxu0 0
  %183 = vmatmul.mubr.bf16.gmra.mrb[0].mxu0 %v36
  %v184 = vpop.f32.mrb[0].mxu0
  %v185 = vadd.f32 %v60, %v184
  %v186 = vpop.f32.mrb[0].mxu0
  %v187 = vpop.f32.mrb[0].mxu0
  %v188 = vadd.f32 %v60, %v187
  %v189 = vpop.f32.mrb[0].mxu0
  %190 = vmatprep.mubr.bf16.mxu0 0
  %191 = vmatmul.mubr.bf16.gmra.mrb[0].mxu0 %v37
  %v192 = vpop.f32.mrb[0].mxu0
  %v193 = vadd.f32 %v60, %v192
  %v194 = vpop.f32.mrb[0].mxu0
  %v195 = vpop.f32.mrb[0].mxu0
  %v196 = vadd.f32 %v60, %v195
  %v197 = vpop.f32.mrb[0].mxu0
  %198 = vmatprep.mubr.bf16.mxu0 0
  %199 = vmatmul.mubr.bf16.gmra.mrb[0].mxu0 %v38
  %v200 = vpop.f32.mrb[0].mxu0
  %v201 = vadd.f32 %v60, %v200
  %v202 = vpop.f32.mrb[0].mxu0
  %v203 = vpop.f32.mrb[0].mxu0
  %v204 = vadd.f32 %v60, %v203
  %v205 = vpop.f32.mrb[0].mxu0
  %206 = vdwg.mxu0
  %v207 = vmax.f32 %v145, 0.0
  %v208 = vmax.f32 %v148, 0.0
  %v209 = vmax.f32 %v153, 0.0
  %v210 = vmax.f32 %v156, 0.0
  %v211 = vmax.f32 %v161, 0.0
  %v212 = vmax.f32 %v164, 0.0
  %v213 = vmax.f32 %v169, 0.0
  %v214 = vmax.f32 %v172, 0.0
  %v215 = vmax.f32 %v177, 0.0
  %v216 = vmax.f32 %v180, 0.0
  %v217 = vmax.f32 %v185, 0.0
  %v218 = vmax.f32 %v188, 0.0
  %v219 = vmax.f32 %v193, 0.0
  %v220 = vmax.f32 %v196, 0.0
  %v221 = vmax.f32 %v201, 0.0
  %v222 = vmax.f32 %v204, 0.0
  %223 = vst [vmem:[%s3] sm:$0xff] %v207
  %224 = vst [vmem:[%s3 + $0x8] sm:$0xff] %v208
  %225 = vst [vmem:[%s3 + $0x10] sm:$0xff] %v209
  %226 = vst [vmem:[%s3 + $0x18] sm:$0xff] %v210
  %227 = vst [vmem:[%s3 + $0x20] sm:$0xff] %v211
  %228 = vst [vmem:[%s3 + $0x28] sm:$0xff] %v212
  %229 = vst [vmem:[%s3 + $0x30] sm:$0xff] %v213
  %230 = vst [vmem:[%s3 + $0x38] sm:$0xff] %v214
  %231 = vst [vmem:[%s3 + $0x40] sm:$0xff] %v215
  %232 = vst [vmem:[%s3 + $0x48] sm:$0xff] %v216
  %233 = vst [vmem:[%s3 + $0x50] sm:$0xff] %v217
  %234 = vst [vmem:[%s3 + $0x58] sm:$0xff] %v218
  %235 = vst [vmem:[%s3 + $0x60] sm:$0xff] %v219
  %236 = vst [vmem:[%s3 + $0x68] sm:$0xff] %v220
  %237 = vst [vmem:[%s3 + $0x70] sm:$0xff] %v221
  %238 = vst [vmem:[%s3 + $0x78] sm:$0xff] %v222
  // Predicated region
  $region14: #{seg_discriminator_forward.13} parent=0 // pred_check
    _
  $region15: #{seg_discriminator_forward.13} parent=0 // pred_check_branch
    %240 = sbr.rel (0) target = $region17
  $region16: #{seg_discriminator_forward.13} parent=0 // pred_region
    _
  $region17: #{seg_discriminator_forward.13} parent=0 // pred_fallthru
    _
  // Predicated region
  $region18: #{seg_discriminator_forward.13} parent=0 // pred_check
    _
  $region19: #{seg_discriminator_forward.13} parent=0 // pred_check_branch
    %242 = sbr.rel (0) target = $region21
  $region20: #{seg_discriminator_forward.13} parent=0 // pred_region
    _
  $region21: #{seg_discriminator_forward.13} parent=0 // pred_fallthru
    _

// kernel: seg_discriminator_forward.9
$region0: #{seg_discriminator_forward.9}
  #allocation0 [shape = 'u32[]', space=smem, size = 0x4, offset = 0x4, fixed_abs, tag = 'smem constant byte address 0x4 - core index']
  #allocation1 [shape = 'u32[144,128]{1,0:T(1,128)}', space=vmem, size = 0x12000, scoped, tag = 'internal scratch']
  %s0 = inlined_call_operand.vmem [shape: f32[128,1152], index: 0, kind: input, shape index: {}]
  %s1 = inlined_call_operand.vmem [shape: bf16[1152,128], index: 1, kind: input, shape index: {}]
  %s2 = inlined_call_operand.vmem [shape: f32[1,128], index: 2, kind: input, shape index: {}]
  %s3 = inlined_call_operand.vmem [shape: f32[128,128], index: 3, kind: output, shape index: {}]
  %s4 = sld [smem:[#allocation0]]
  $region22: #{seg_discriminator_forward.9} parent=0
    _
  %s6 = ssub.s32 1, %s4
  %s7 = scalar_select 0, %s6, %s4
  // Predicated region
  $region2: #{seg_discriminator_forward.9} parent=0 // pred_check
    _
  $region3: #{seg_discriminator_forward.9} parent=0 // pred_check_branch
    %9 = sbr.rel (0) target = $region5
  $region4: #{seg_discriminator_forward.9} parent=0 // pred_region
    _
  $region5: #{seg_discriminator_forward.9} parent=0 // pred_fallthru
    _
  // Predicated region
  $region6: #{seg_discriminator_forward.9} parent=0 // pred_check
    _
  $region7: #{seg_discriminator_forward.9} parent=0 // pred_check_branch
    %11 = sbr.rel (0) target = $region9
  $region8: #{seg_discriminator_forward.9} parent=0 // pred_region
    _
  $region9: #{seg_discriminator_forward.9} parent=0 // pred_fallthru
    _
  // Predicated region
  $region10: #{seg_discriminator_forward.9} parent=0 // pred_check
    _
  $region11: #{seg_discriminator_forward.9} parent=0 // pred_check_branch
    %13 = sbr.rel (0) target = $region13
  $region12: #{seg_discriminator_forward.9} parent=0 // pred_region
    _
  $region13: #{seg_discriminator_forward.9} parent=0 // pred_fallthru
    _
  %v15 = vld [vmem:[%s0] sm:$0xff]
  %v16 = vld [vmem:[%s0 + $0x8] sm:$0xff]
  %v17 = vld [vmem:[%s0 + $0x10] sm:$0xff]
  %v18 = vld [vmem:[%s0 + $0x18] sm:$0xff]
  %v19 = vld [vmem:[%s0 + $0x20] sm:$0xff]
  %v20 = vld [vmem:[%s0 + $0x28] sm:$0xff]
  %v21 = vld [vmem:[%s0 + $0x30] sm:$0xff]
  %v22 = vld [vmem:[%s0 + $0x38] sm:$0xff]
  %v23 = vld [vmem:[%s0 + $0x40] sm:$0xff]
  %v24 = vld [vmem:[%s0 + $0x48] sm:$0xff]
  %v25 = vld [vmem:[%s0 + $0x50] sm:$0xff]
  %v26 = vld [vmem:[%s0 + $0x58] sm:$0xff]
  %v27 = vld [vmem:[%s0 + $0x60] sm:$0xff]
  %v28 = vld [vmem:[%s0 + $0x68] sm:$0xff]
  %v29 = vld [vmem:[%s0 + $0x70] sm:$0xff]
  %v30 = vld [vmem:[%s0 + $0x78] sm:$0xff]
  %v31 = vld [vmem:[%s0 + $0x80] sm:$0xff]
  %v32 = vld [vmem:[%s0 + $0x88] sm:$0xff]
  %v33 = vld [vmem:[%s0 + $0x90] sm:$0xff]
  %v34 = vld [vmem:[%s0 + $0x98] sm:$0xff]
  %v35 = vld [vmem:[%s0 + $0xa0] sm:$0xff]
  %v36 = vld [vmem:[%s0 + $0xa8] sm:$0xff]
  %v37 = vld [vmem:[%s0 + $0xb0] sm:$0xff]
  %v38 = vld [vmem:[%s0 + $0xb8] sm:$0xff]
  %v39 = vld [vmem:[%s0 + $0xc0] sm:$0xff]
  %v40 = vld [vmem:[%s0 + $0xc8] sm:$0xff]
  %v41 = vld [vmem:[%s0 + $0xd0] sm:$0xff]
  %v42 = vld [vmem:[%s0 + $0xd8] sm:$0xff]
  %v43 = vld [vmem:[%s0 + $0xe0] sm:$0xff]
  %v44 = vld [vmem:[%s0 + $0xe8] sm:$0xff]
  %v45 = vld [vmem:[%s0 + $0xf0] sm:$0xff]
  %v46 = vld [vmem:[%s0 + $0xf8] sm:$0xff]
  %v47 = vld [vmem:[%s0 + $0x100] sm:$0xff]
  %v48 = vld [vmem:[%s0 + $0x108] sm:$0xff]
  %v49 = vld [vmem:[%s0 + $0x110] sm:$0xff]
  %v50 = vld [vmem:[%s0 + $0x118] sm:$0xff]
  %v51 = vld [vmem:[%s0 + $0x120] sm:$0xff]
  %v52 = vld [vmem:[%s0 + $0x128] sm:$0xff]
  %v53 = vld [vmem:[%s0 + $0x130] sm:$0xff]
  %v54 = vld [vmem:[%s0 + $0x138] sm:$0xff]
  %v55 = vld [vmem:[%s0 + $0x140] sm:$0xff]
  %v56 = vld [vmem:[%s0 + $0x148] sm:$0xff]
  %v57 = vld [vmem:[%s0 + $0x150] sm:$0xff]
  %v58 = vld [vmem:[%s0 + $0x158] sm:$0xff]
  %v59 = vld [vmem:[%s0 + $0x160] sm:$0xff]
  %v60 = vld [vmem:[%s0 + $0x168] sm:$0xff]
  %v61 = vld [vmem:[%s0 + $0x170] sm:$0xff]
  %v62 = vld [vmem:[%s0 + $0x178] sm:$0xff]
  %v63 = vld [vmem:[%s0 + $0x180] sm:$0xff]
  %v64 = vld [vmem:[%s0 + $0x188] sm:$0xff]
  %v65 = vld [vmem:[%s0 + $0x190] sm:$0xff]
  %v66 = vld [vmem:[%s0 + $0x198] sm:$0xff]
  %v67 = vld [vmem:[%s0 + $0x1a0] sm:$0xff]
  %v68 = vld [vmem:[%s0 + $0x1a8] sm:$0xff]
  %v69 = vld [vmem:[%s0 + $0x1b0] sm:$0xff]
  %v70 = vld [vmem:[%s0 + $0x1b8] sm:$0xff]
  %v71 = vld [vmem:[%s0 + $0x1c0] sm:$0xff]
  %v72 = vld [vmem:[%s0 + $0x1c8] sm:$0xff]
  %v73 = vld [vmem:[%s0 + $0x1d0] sm:$0xff]
  %v74 = vld [vmem:[%s0 + $0x1d8] sm:$0xff]
  %v75 = vld [vmem:[%s0 + $0x1e0] sm:$0xff]
  %v76 = vld [vmem:[%s0 + $0x1e8] sm:$0xff]
  %v77 = vld [vmem:[%s0 + $0x1f0] sm:$0xff]
  %v78 = vld [vmem:[%s0 + $0x1f8] sm:$0xff]
  %v79 = vld [vmem:[%s0 + $0x200] sm:$0xff]
  %v80 = vld [vmem:[%s0 + $0x208] sm:$0xff]
  %v81 = vld [vmem:[%s0 + $0x210] sm:$0xff]
  %v82 = vld [vmem:[%s0 + $0x218] sm:$0xff]
  %v83 = vld [vmem:[%s0 + $0x220] sm:$0xff]
  %v84 = vld [vmem:[%s0 + $0x228] sm:$0xff]
  %v85 = vld [vmem:[%s0 + $0x230] sm:$0xff]
  %v86 = vld [vmem:[%s0 + $0x238] sm:$0xff]
  %v87 = vld [vmem:[%s0 + $0x240] sm:$0xff]
  %v88 = vld [vmem:[%s0 + $0x248] sm:$0xff]
  %v89 = vld [vmem:[%s0 + $0x250] sm:$0xff]
  %v90 = vld [vmem:[%s0 + $0x258] sm:$0xff]
  %v91 = vld [vmem:[%s0 + $0x260] sm:$0xff]
  %v92 = vld [vmem:[%s0 + $0x268] sm:$0xff]
  %v93 = vld [vmem:[%s0 + $0x270] sm:$0xff]
  %v94 = vld [vmem:[%s0 + $0x278] sm:$0xff]
  %v95 = vld [vmem:[%s0 + $0x280] sm:$0xff]
  %v96 = vld [vmem:[%s0 + $0x288] sm:$0xff]
  %v97 = vld [vmem:[%s0 + $0x290] sm:$0xff]
  %v98 = vld [vmem:[%s0 + $0x298] sm:$0xff]
  %v99 = vld [vmem:[%s0 + $0x2a0] sm:$0xff]
  %v100 = vld [vmem:[%s0 + $0x2a8] sm:$0xff]
  %v101 = vld [vmem:[%s0 + $0x2b0] sm:$0xff]
  %v102 = vld [vmem:[%s0 + $0x2b8] sm:$0xff]
  %v103 = vld [vmem:[%s0 + $0x2c0] sm:$0xff]
  %v104 = vld [vmem:[%s0 + $0x2c8] sm:$0xff]
  %v105 = vld [vmem:[%s0 + $0x2d0] sm:$0xff]
  %v106 = vld [vmem:[%s0 + $0x2d8] sm:$0xff]
  %v107 = vld [vmem:[%s0 + $0x2e0] sm:$0xff]
  %v108 = vld [vmem:[%s0 + $0x2e8] sm:$0xff]
  %v109 = vld [vmem:[%s0 + $0x2f0] sm:$0xff]
  %v110 = vld [vmem:[%s0 + $0x2f8] sm:$0xff]
  %v111 = vld [vmem:[%s0 + $0x300] sm:$0xff]
  %v112 = vld [vmem:[%s0 + $0x308] sm:$0xff]
  %v113 = vld [vmem:[%s0 + $0x310] sm:$0xff]
  %v114 = vld [vmem:[%s0 + $0x318] sm:$0xff]
  %v115 = vld [vmem:[%s0 + $0x320] sm:$0xff]
  %v116 = vld [vmem:[%s0 + $0x328] sm:$0xff]
  %v117 = vld [vmem:[%s0 + $0x330] sm:$0xff]
  %v118 = vld [vmem:[%s0 + $0x338] sm:$0xff]
  %v119 = vld [vmem:[%s0 + $0x340] sm:$0xff]
  %v120 = vld [vmem:[%s0 + $0x348] sm:$0xff]
  %v121 = vld [vmem:[%s0 + $0x350] sm:$0xff]
  %v122 = vld [vmem:[%s0 + $0x358] sm:$0xff]
  %v123 = vld [vmem:[%s0 + $0x360] sm:$0xff]
  %v124 = vld [vmem:[%s0 + $0x368] sm:$0xff]
  %v125 = vld [vmem:[%s0 + $0x370] sm:$0xff]
  %v126 = vld [vmem:[%s0 + $0x378] sm:$0xff]
  %v127 = vld [vmem:[%s0 + $0x380] sm:$0xff]
  %v128 = vld [vmem:[%s0 + $0x388] sm:$0xff]
  %v129 = vld [vmem:[%s0 + $0x390] sm:$0xff]
  %v130 = vld [vmem:[%s0 + $0x398] sm:$0xff]
  %v131 = vld [vmem:[%s0 + $0x3a0] sm:$0xff]
  %v132 = vld [vmem:[%s0 + $0x3a8] sm:$0xff]
  %v133 = vld [vmem:[%s0 + $0x3b0] sm:$0xff]
  %v134 = vld [vmem:[%s0 + $0x3b8] sm:$0xff]
  %v135 = vld [vmem:[%s0 + $0x3c0] sm:$0xff]
  %v136 = vld [vmem:[%s0 + $0x3c8] sm:$0xff]
  %v137 = vld [vmem:[%s0 + $0x3d0] sm:$0xff]
  %v138 = vld [vmem:[%s0 + $0x3d8] sm:$0xff]
  %v139 = vld [vmem:[%s0 + $0x3e0] sm:$0xff]
  %v140 = vld [vmem:[%s0 + $0x3e8] sm:$0xff]
  %v141 = vld [vmem:[%s0 + $0x3f0] sm:$0xff]
  %v142 = vld [vmem:[%s0 + $0x3f8] sm:$0xff]
  %v143 = vld [vmem:[%s0 + $0x400] sm:$0xff]
  %v144 = vld [vmem:[%s0 + $0x408] sm:$0xff]
  %v145 = vld [vmem:[%s0 + $0x410] sm:$0xff]
  %v146 = vld [vmem:[%s0 + $0x418] sm:$0xff]
  %v147 = vld [vmem:[%s0 + $0x420] sm:$0xff]
  %v148 = vld [vmem:[%s0 + $0x428] sm:$0xff]
  %v149 = vld [vmem:[%s0 + $0x430] sm:$0xff]
  %v150 = vld [vmem:[%s0 + $0x438] sm:$0xff]
  %v151 = vld [vmem:[%s0 + $0x440] sm:$0xff]
  %v152 = vld [vmem:[%s0 + $0x448] sm:$0xff]
  %v153 = vld [vmem:[%s0 + $0x450] sm:$0xff]
  %v154 = vld [vmem:[%s0 + $0x458] sm:$0xff]
  %v155 = vld [vmem:[%s0 + $0x460] sm:$0xff]
  %v156 = vld [vmem:[%s0 + $0x468] sm:$0xff]
  %v157 = vld [vmem:[%s0 + $0x470] sm:$0xff]
  %v158 = vld [vmem:[%s0 + $0x478] sm:$0xff]
  %v159 = vpack.c.bf16 %v24, %v15
  %v160 = vpack.c.bf16 %v25, %v16
  %v161 = vpack.c.bf16 %v26, %v17
  %v162 = vpack.c.bf16 %v27, %v18
  %v163 = vpack.c.bf16 %v28, %v19
  %v164 = vpack.c.bf16 %v29, %v20
  %v165 = vpack.c.bf16 %v30, %v21
  %v166 = vpack.c.bf16 %v31, %v22
  %v167 = vpack.c.bf16 %v32, %v23
  %v168 = vpack.c.bf16 %v42, %v33
  %v169 = vpack.c.bf16 %v43, %v34
  %v170 = vpack.c.bf16 %v44, %v35
  %v171 = vpack.c.bf16 %v45, %v36
  %v172 = vpack.c.bf16 %v46, %v37
  %v173 = vpack.c.bf16 %v47, %v38
  %v174 = vpack.c.bf16 %v48, %v39
  %v175 = vpack.c.bf16 %v49, %v40
  %v176 = vpack.c.bf16 %v50, %v41
  %v177 = vpack.c.bf16 %v60, %v51
  %v178 = vpack.c.bf16 %v61, %v52
  %v179 = vpack.c.bf16 %v62, %v53
  %v180 = vpack.c.bf16 %v63, %v54
  %v181 = vpack.c.bf16 %v64, %v55
  %v182 = vpack.c.bf16 %v65, %v56
  %v183 = vpack.c.bf16 %v66, %v57
  %v184 = vpack.c.bf16 %v67, %v58
  %v185 = vpack.c.bf16 %v68, %v59
  %v186 = vpack.c.bf16 %v78, %v69
  %v187 = vpack.c.bf16 %v79, %v70
  %v188 = vpack.c.bf16 %v80, %v71
  %v189 = vpack.c.bf16 %v81, %v72
  %v190 = vpack.c.bf16 %v82, %v73
  %v191 = vpack.c.bf16 %v83, %v74
  %v192 = vpack.c.bf16 %v84, %v75
  %v193 = vpack.c.bf16 %v85, %v76
  %v194 = vpack.c.bf16 %v86, %v77
  %v195 = vpack.c.bf16 %v96, %v87
  %v196 = vpack.c.bf16 %v97, %v88
  %v197 = vpack.c.bf16 %v98, %v89
  %v198 = vpack.c.bf16 %v99, %v90
  %v199 = vpack.c.bf16 %v100, %v91
  %v200 = vpack.c.bf16 %v101, %v92
  %v201 = vpack.c.bf16 %v102, %v93
  %v202 = vpack.c.bf16 %v103, %v94
  %v203 = vpack.c.bf16 %v104, %v95
  %v204 = vpack.c.bf16 %v114, %v105
  %v205 = vpack.c.bf16 %v115, %v106
  %v206 = vpack.c.bf16 %v116, %v107
  %v207 = vpack.c.bf16 %v117, %v108
  %v208 = vpack.c.bf16 %v118, %v109
  %v209 = vpack.c.bf16 %v119, %v110
  %v210 = vpack.c.bf16 %v120, %v111
  %v211 = vpack.c.bf16 %v121, %v112
  %v212 = vpack.c.bf16 %v122, %v113
  %v213 = vpack.c.bf16 %v132, %v123
  %v214 = vpack.c.bf16 %v133, %v124
  %v215 = vpack.c.bf16 %v134, %v125
  %v216 = vpack.c.bf16 %v135, %v126
  %v217 = vpack.c.bf16 %v136, %v127
  %v218 = vpack.c.bf16 %v137, %v128
  %v219 = vpack.c.bf16 %v138, %v129
  %v220 = vpack.c.bf16 %v139, %v130
  %v221 = vpack.c.bf16 %v140, %v131
  %v222 = vpack.c.bf16 %v150, %v141
  %v223 = vpack.c.bf16 %v151, %v142
  %v224 = vpack.c.bf16 %v152, %v143
  %v225 = vpack.c.bf16 %v153, %v144
  %v226 = vpack.c.bf16 %v154, %v145
  %v227 = vpack.c.bf16 %v155, %v146
  %v228 = vpack.c.bf16 %v156, %v147
  %v229 = vpack.c.bf16 %v157, %v148
  %v230 = vpack.c.bf16 %v158, %v149
  %v231 = vld [vmem:[%s1] sm:$0xf]
  %v232 = vld [vmem:[%s1 + $0x4] sm:$0xf]
  %v233 = vld [vmem:[%s1 + $0x8] sm:$0xf]
  %v234 = vld [vmem:[%s1 + $0xc] sm:$0xf]
  %v235 = vld [vmem:[%s1 + $0x10] sm:$0xf]
  %v236 = vld [vmem:[%s1 + $0x14] sm:$0xf]
  %v237 = vld [vmem:[%s1 + $0x18] sm:$0xf]
  %v238 = vld [vmem:[%s1 + $0x1c] sm:$0xf]
  %v239 = vld [vmem:[%s1 + $0x20] sm:$0xf]
  %v240 = vld [vmem:[%s1 + $0x24] sm:$0xf]
  %v241 = vld [vmem:[%s1 + $0x28] sm:$0xf]
  %v242 = vld [vmem:[%s1 + $0x2c] sm:$0xf]
  %v243 = vld [vmem:[%s1 + $0x30] sm:$0xf]
  %v244 = vld [vmem:[%s1 + $0x34] sm:$0xf]
  %v245 = vld [vmem:[%s1 + $0x38] sm:$0xf]
  %v246 = vld [vmem:[%s1 + $0x3c] sm:$0xf]
  %v247 = vld [vmem:[%s1 + $0x40] sm:$0xf]
  %v248 = vld [vmem:[%s1 + $0x44] sm:$0xf]
  %v249 = vld [vmem:[%s1 + $0x48] sm:$0xf]
  %v250 = vld [vmem:[%s1 + $0x4c] sm:$0xf]
  %v251 = vld [vmem:[%s1 + $0x50] sm:$0xf]
  %v252 = vld [vmem:[%s1 + $0x54] sm:$0xf]
  %v253 = vld [vmem:[%s1 + $0x58] sm:$0xf]
  %v254 = vld [vmem:[%s1 + $0x5c] sm:$0xf]
  %v255 = vld [vmem:[%s1 + $0x60] sm:$0xf]
  %v256 = vld [vmem:[%s1 + $0x64] sm:$0xf]
  %v257 = vld [vmem:[%s1 + $0x68] sm:$0xf]
  %v258 = vld [vmem:[%s1 + $0x6c] sm:$0xf]
  %v259 = vld [vmem:[%s1 + $0x70] sm:$0xf]
  %v260 = vld [vmem:[%s1 + $0x74] sm:$0xf]
  %v261 = vld [vmem:[%s1 + $0x78] sm:$0xf]
  %v262 = vld [vmem:[%s1 + $0x7c] sm:$0xf]
  %v263 = vld [vmem:[%s1 + $0x80] sm:$0xf]
  %v264 = vld [vmem:[%s1 + $0x84] sm:$0xf]
  %v265 = vld [vmem:[%s1 + $0x88] sm:$0xf]
  %v266 = vld [vmem:[%s1 + $0x8c] sm:$0xf]
  %v267 = vld [vmem:[%s1 + $0x90] sm:$0xf]
  %v268 = vld [vmem:[%s1 + $0x94] sm:$0xf]
  %v269 = vld [vmem:[%s1 + $0x98] sm:$0xf]
  %v270 = vld [vmem:[%s1 + $0x9c] sm:$0xf]
  %v271 = vld [vmem:[%s1 + $0xa0] sm:$0xf]
  %v272 = vld [vmem:[%s1 + $0xa4] sm:$0xf]
  %v273 = vld [vmem:[%s1 + $0xa8] sm:$0xf]
  %v274 = vld [vmem:[%s1 + $0xac] sm:$0xf]
  %v275 = vld [vmem:[%s1 + $0xb0] sm:$0xf]
  %v276 = vld [vmem:[%s1 + $0xb4] sm:$0xf]
  %v277 = vld [vmem:[%s1 + $0xb8] sm:$0xf]
  %v278 = vld [vmem:[%s1 + $0xbc] sm:$0xf]
  %v279 = vld [vmem:[%s1 + $0xc0] sm:$0xf]
  %v280 = vld [vmem:[%s1 + $0xc4] sm:$0xf]
  %v281 = vld [vmem:[%s1 + $0xc8] sm:$0xf]
  %v282 = vld [vmem:[%s1 + $0xcc] sm:$0xf]
  %v283 = vld [vmem:[%s1 + $0xd0] sm:$0xf]
  %v284 = vld [vmem:[%s1 + $0xd4] sm:$0xf]
  %v285 = vld [vmem:[%s1 + $0xd8] sm:$0xf]
  %v286 = vld [vmem:[%s1 + $0xdc] sm:$0xf]
  %v287 = vld [vmem:[%s1 + $0xe0] sm:$0xf]
  %v288 = vld [vmem:[%s1 + $0xe4] sm:$0xf]
  %v289 = vld [vmem:[%s1 + $0xe8] sm:$0xf]
  %v290 = vld [vmem:[%s1 + $0xec] sm:$0xf]
  %v291 = vld [vmem:[%s1 + $0xf0] sm:$0xf]
  %v292 = vld [vmem:[%s1 + $0xf4] sm:$0xf]
  %v293 = vld [vmem:[%s1 + $0xf8] sm:$0xf]
  %v294 = vld [vmem:[%s1 + $0xfc] sm:$0xf]
  %v295 = vld [vmem:[%s1 + $0x100] sm:$0xf]
  %v296 = vld [vmem:[%s1 + $0x104] sm:$0xf]
  %v297 = vld [vmem:[%s1 + $0x108] sm:$0xf]
  %v298 = vld [vmem:[%s1 + $0x10c] sm:$0xf]
  %v299 = vld [vmem:[%s1 + $0x110] sm:$0xf]
  %v300 = vld [vmem:[%s1 + $0x114] sm:$0xf]
  %v301 = vld [vmem:[%s1 + $0x118] sm:$0xf]
  %v302 = vld [vmem:[%s1 + $0x11c] sm:$0xf]
  %v303 = vld [vmem:[%s1 + $0x120] sm:$0xf]
  %v304 = vld [vmem:[%s1 + $0x124] sm:$0xf]
  %v305 = vld [vmem:[%s1 + $0x128] sm:$0xf]
  %v306 = vld [vmem:[%s1 + $0x12c] sm:$0xf]
  %v307 = vld [vmem:[%s1 + $0x130] sm:$0xf]
  %v308 = vld [vmem:[%s1 + $0x134] sm:$0xf]
  %v309 = vld [vmem:[%s1 + $0x138] sm:$0xf]
  %v310 = vld [vmem:[%s1 + $0x13c] sm:$0xf]
  %v311 = vld [vmem:[%s1 + $0x140] sm:$0xf]
  %v312 = vld [vmem:[%s1 + $0x144] sm:$0xf]
  %v313 = vld [vmem:[%s1 + $0x148] sm:$0xf]
  %v314 = vld [vmem:[%s1 + $0x14c] sm:$0xf]
  %v315 = vld [vmem:[%s1 + $0x150] sm:$0xf]
  %v316 = vld [vmem:[%s1 + $0x154] sm:$0xf]
  %v317 = vld [vmem:[%s1 + $0x158] sm:$0xf]
  %v318 = vld [vmem:[%s1 + $0x15c] sm:$0xf]
  %v319 = vld [vmem:[%s1 + $0x160] sm:$0xf]
  %v320 = vld [vmem:[%s1 + $0x164] sm:$0xf]
  %v321 = vld [vmem:[%s1 + $0x168] sm:$0xf]
  %v322 = vld [vmem:[%s1 + $0x16c] sm:$0xf]
  %v323 = vld [vmem:[%s1 + $0x170] sm:$0xf]
  %v324 = vld [vmem:[%s1 + $0x174] sm:$0xf]
  %v325 = vld [vmem:[%s1 + $0x178] sm:$0xf]
  %v326 = vld [vmem:[%s1 + $0x17c] sm:$0xf]
  %v327 = vld [vmem:[%s1 + $0x180] sm:$0xf]
  %v328 = vld [vmem:[%s1 + $0x184] sm:$0xf]
  %v329 = vld [vmem:[%s1 + $0x188] sm:$0xf]
  %v330 = vld [vmem:[%s1 + $0x18c] sm:$0xf]
  %v331 = vld [vmem:[%s1 + $0x190] sm:$0xf]
  %v332 = vld [vmem:[%s1 + $0x194] sm:$0xf]
  %v333 = vld [vmem:[%s1 + $0x198] sm:$0xf]
  %v334 = vld [vmem:[%s1 + $0x19c] sm:$0xf]
  %v335 = vld [vmem:[%s1 + $0x1a0] sm:$0xf]
  %v336 = vld [vmem:[%s1 + $0x1a4] sm:$0xf]
  %v337 = vld [vmem:[%s1 + $0x1a8] sm:$0xf]
  %v338 = vld [vmem:[%s1 + $0x1ac] sm:$0xf]
  %v339 = vld [vmem:[%s1 + $0x1b0] sm:$0xf]
  %v340 = vld [vmem:[%s1 + $0x1b4] sm:$0xf]
  %v341 = vld [vmem:[%s1 + $0x1b8] sm:$0xf]
  %v342 = vld [vmem:[%s1 + $0x1bc] sm:$0xf]
  %v343 = vld [vmem:[%s1 + $0x1c0] sm:$0xf]
  %v344 = vld [vmem:[%s1 + $0x1c4] sm:$0xf]
  %v345 = vld [vmem:[%s1 + $0x1c8] sm:$0xf]
  %v346 = vld [vmem:[%s1 + $0x1cc] sm:$0xf]
  %v347 = vld [vmem:[%s1 + $0x1d0] sm:$0xf]
  %v348 = vld [vmem:[%s1 + $0x1d4] sm:$0xf]
  %v349 = vld [vmem:[%s1 + $0x1d8] sm:$0xf]
  %v350 = vld [vmem:[%s1 + $0x1dc] sm:$0xf]
  %v351 = vld [vmem:[%s1 + $0x1e0] sm:$0xf]
  %v352 = vld [vmem:[%s1 + $0x1e4] sm:$0xf]
  %v353 = vld [vmem:[%s1 + $0x1e8] sm:$0xf]
  %v354 = vld [vmem:[%s1 + $0x1ec] sm:$0xf]
  %v355 = vld [vmem:[%s1 + $0x1f0] sm:$0xf]
  %v356 = vld [vmem:[%s1 + $0x1f4] sm:$0xf]
  %v357 = vld [vmem:[%s1 + $0x1f8] sm:$0xf]
  %v358 = vld [vmem:[%s1 + $0x1fc] sm:$0xf]
  %v359 = vld [vmem:[%s1 + $0x200] sm:$0xf]
  %v360 = vld [vmem:[%s1 + $0x204] sm:$0xf]
  %v361 = vld [vmem:[%s1 + $0x208] sm:$0xf]
  %v362 = vld [vmem:[%s1 + $0x20c] sm:$0xf]
  %v363 = vld [vmem:[%s1 + $0x210] sm:$0xf]
  %v364 = vld [vmem:[%s1 + $0x214] sm:$0xf]
  %v365 = vld [vmem:[%s1 + $0x218] sm:$0xf]
  %v366 = vld [vmem:[%s1 + $0x21c] sm:$0xf]
  %v367 = vld [vmem:[%s1 + $0x220] sm:$0xf]
  %v368 = vld [vmem:[%s1 + $0x224] sm:$0xf]
  %v369 = vld [vmem:[%s1 + $0x228] sm:$0xf]
  %v370 = vld [vmem:[%s1 + $0x22c] sm:$0xf]
  %v371 = vld [vmem:[%s1 + $0x230] sm:$0xf]
  %v372 = vld [vmem:[%s1 + $0x234] sm:$0xf]
  %v373 = vld [vmem:[%s1 + $0x238] sm:$0xf]
  %v374 = vld [vmem:[%s1 + $0x23c] sm:$0xf]
  %v375 = vld [vmem:[%s2] sm:$0x1]
  %v377 = vlaneseq
  %v378 = vshrl.u32 %v377, 7
  %v379 = vsub.s32 0, %v378
  %v380 = vrot.slane %v375, %v379
  %v526 = vunpack.c.l.b16 %v231
  %v527 = vunpack.c.l.b16 %v232
  %v528 = vunpack.c.l.b16 %v233
  %v529 = vunpack.c.l.b16 %v234
  %v530 = vunpack.c.l.b16 %v235
  %v531 = vunpack.c.l.b16 %v236
  %v532 = vunpack.c.l.b16 %v237
  %v533 = vunpack.c.l.b16 %v238
  %v534 = vunpack.c.l.b16 %v239
  %v535 = vunpack.c.l.b16 %v240
  %v536 = vunpack.c.l.b16 %v241
  %v537 = vunpack.c.l.b16 %v242
  %v538 = vunpack.c.l.b16 %v243
  %v539 = vunpack.c.l.b16 %v244
  %v540 = vunpack.c.l.b16 %v245
  %v541 = vunpack.c.l.b16 %v246
  %v542 = vunpack.c.l.b16 %v247
  %v543 = vunpack.c.l.b16 %v248
  %v544 = vunpack.c.l.b16 %v249
  %v545 = vunpack.c.l.b16 %v250
  %v546 = vunpack.c.l.b16 %v251
  %v547 = vunpack.c.l.b16 %v252
  %v548 = vunpack.c.l.b16 %v253
  %v549 = vunpack.c.l.b16 %v254
  %v550 = vunpack.c.l.b16 %v255
  %v551 = vunpack.c.l.b16 %v256
  %v552 = vunpack.c.l.b16 %v257
  %v553 = vunpack.c.l.b16 %v258
  %v554 = vunpack.c.l.b16 %v259
  %v555 = vunpack.c.l.b16 %v260
  %v556 = vunpack.c.l.b16 %v261
  %v557 = vunpack.c.l.b16 %v262
  %v558 = vunpack.c.l.b16 %v263
  %v559 = vunpack.c.l.b16 %v264
  %v560 = vunpack.c.l.b16 %v265
  %v561 = vunpack.c.l.b16 %v266
  %v562 = vunpack.c.l.b16 %v267
  %v563 = vunpack.c.l.b16 %v268
  %v564 = vunpack.c.l.b16 %v269
  %v565 = vunpack.c.l.b16 %v270
  %v566 = vunpack.c.l.b16 %v271
  %v567 = vunpack.c.l.b16 %v272
  %v568 = vunpack.c.l.b16 %v273
  %v569 = vunpack.c.l.b16 %v274
  %v570 = vunpack.c.l.b16 %v275
  %v571 = vunpack.c.l.b16 %v276
  %v572 = vunpack.c.l.b16 %v277
  %v573 = vunpack.c.l.b16 %v278
  %v574 = vunpack.c.l.b16 %v279
  %v575 = vunpack.c.l.b16 %v280
  %v576 = vunpack.c.l.b16 %v281
  %v577 = vunpack.c.l.b16 %v282
  %v578 = vunpack.c.l.b16 %v283
  %v579 = vunpack.c.l.b16 %v284
  %v580 = vunpack.c.l.b16 %v285
  %v581 = vunpack.c.l.b16 %v286
  %v582 = vunpack.c.l.b16 %v287
  %v583 = vunpack.c.l.b16 %v288
  %v584 = vunpack.c.l.b16 %v289
  %v585 = vunpack.c.l.b16 %v290
  %v586 = vunpack.c.l.b16 %v291
  %v587 = vunpack.c.l.b16 %v292
  %v588 = vunpack.c.l.b16 %v293
  %v589 = vunpack.c.l.b16 %v294
  %v590 = vunpack.c.l.b16 %v295
  %v591 = vunpack.c.l.b16 %v296
  %v592 = vunpack.c.l.b16 %v297
  %v593 = vunpack.c.l.b16 %v298
  %v594 = vunpack.c.l.b16 %v299
  %v595 = vunpack.c.l.b16 %v300
  %v596 = vunpack.c.l.b16 %v301
  %v597 = vunpack.c.l.b16 %v302
  %v598 = vunpack.c.l.b16 %v303
  %v599 = vunpack.c.l.b16 %v304
  %v600 = vunpack.c.l.b16 %v305
  %v601 = vunpack.c.l.b16 %v306
  %v602 = vunpack.c.l.b16 %v307
  %v603 = vunpack.c.l.b16 %v308
  %v604 = vunpack.c.l.b16 %v309
  %v605 = vunpack.c.l.b16 %v310
  %v606 = vunpack.c.l.b16 %v311
  %v607 = vunpack.c.l.b16 %v312
  %v608 = vunpack.c.l.b16 %v313
  %v609 = vunpack.c.l.b16 %v314
  %v610 = vunpack.c.l.b16 %v315
  %v611 = vunpack.c.l.b16 %v316
  %v612 = vunpack.c.l.b16 %v317
  %v613 = vunpack.c.l.b16 %v318
  %v614 = vunpack.c.l.b16 %v319
  %v615 = vunpack.c.l.b16 %v320
  %v616 = vunpack.c.l.b16 %v321
  %v617 = vunpack.c.l.b16 %v322
  %v618 = vunpack.c.l.b16 %v323
  %v619 = vunpack.c.l.b16 %v324
  %v620 = vunpack.c.l.b16 %v325
  %v621 = vunpack.c.l.b16 %v326
  %v622 = vunpack.c.l.b16 %v327
  %v623 = vunpack.c.l.b16 %v328
  %v624 = vunpack.c.l.b16 %v329
  %v625 = vunpack.c.l.b16 %v330
  %v626 = vunpack.c.l.b16 %v331
  %v627 = vunpack.c.l.b16 %v332
  %v628 = vunpack.c.l.b16 %v333
  %v629 = vunpack.c.l.b16 %v334
  %v630 = vunpack.c.l.b16 %v335
  %v631 = vunpack.c.l.b16 %v336
  %v632 = vunpack.c.l.b16 %v337
  %v633 = vunpack.c.l.b16 %v338
  %v634 = vunpack.c.l.b16 %v339
  %v635 = vunpack.c.l.b16 %v340
  %v636 = vunpack.c.l.b16 %v341
  %v637 = vunpack.c.l.b16 %v342
  %v638 = vunpack.c.l.b16 %v343
  %v639 = vunpack.c.l.b16 %v344
  %v640 = vunpack.c.l.b16 %v345
  %v641 = vunpack.c.l.b16 %v346
  %v642 = vunpack.c.l.b16 %v347
  %v643 = vunpack.c.l.b16 %v348
  %v644 = vunpack.c.l.b16 %v349
  %v645 = vunpack.c.l.b16 %v350
  %v646 = vunpack.c.l.b16 %v351
  %v647 = vunpack.c.l.b16 %v352
  %v648 = vunpack.c.l.b16 %v353
  %v649 = vunpack.c.l.b16 %v354
  %v650 = vunpack.c.l.b16 %v355
  %v651 = vunpack.c.l.b16 %v356
  %v652 = vunpack.c.l.b16 %v357
  %v653 = vunpack.c.l.b16 %v358
  %v654 = vunpack.c.l.b16 %v359
  %v655 = vunpack.c.l.b16 %v360
  %v656 = vunpack.c.l.b16 %v361
  %v657 = vunpack.c.l.b16 %v362
  %v658 = vunpack.c.l.b16 %v363
  %v659 = vunpack.c.l.b16 %v364
  %v660 = vunpack.c.l.b16 %v365
  %v661 = vunpack.c.l.b16 %v366
  %v662 = vunpack.c.l.b16 %v367
  %v663 = vunpack.c.l.b16 %v368
  %v664 = vunpack.c.l.b16 %v369
  %v665 = vunpack.c.l.b16 %v370
  %v666 = vunpack.c.l.b16 %v371
  %v667 = vunpack.c.l.b16 %v372
  %v668 = vunpack.c.l.b16 %v373
  %v669 = vunpack.c.l.b16 %v374
  %v670 = vpack.c.b16 %v527, %v526
  %v671 = vpack.c.b16 %v529, %v528
  %v672 = vpack.c.b16 %v531, %v530
  %v673 = vpack.c.b16 %v533, %v532
  %v674 = vpack.c.b16 %v535, %v534
  %v675 = vpack.c.b16 %v537, %v536
  %v676 = vpack.c.b16 %v539, %v538
  %v677 = vpack.c.b16 %v541, %v540
  %v678 = vpack.c.b16 %v543, %v542
  %v679 = vpack.c.b16 %v545, %v544
  %v680 = vpack.c.b16 %v547, %v546
  %v681 = vpack.c.b16 %v549, %v548
  %v682 = vpack.c.b16 %v551, %v550
  %v683 = vpack.c.b16 %v553, %v552
  %v684 = vpack.c.b16 %v555, %v554
  %v685 = vpack.c.b16 %v557, %v556
  %v686 = vpack.c.b16 %v559, %v558
  %v687 = vpack.c.b16 %v561, %v560
  %v688 = vpack.c.b16 %v563, %v562
  %v689 = vpack.c.b16 %v565, %v564
  %v690 = vpack.c.b16 %v567, %v566
  %v691 = vpack.c.b16 %v569, %v568
  %v692 = vpack.c.b16 %v571, %v570
  %v693 = vpack.c.b16 %v573, %v572
  %v694 = vpack.c.b16 %v575, %v574
  %v695 = vpack.c.b16 %v577, %v576
  %v696 = vpack.c.b16 %v579, %v578
  %v697 = vpack.c.b16 %v581, %v580
  %v698 = vpack.c.b16 %v583, %v582
  %v699 = vpack.c.b16 %v585, %v584
  %v700 = vpack.c.b16 %v587, %v586
  %v701 = vpack.c.b16 %v589, %v588
  %v702 = vpack.c.b16 %v591, %v590
  %v703 = vpack.c.b16 %v593, %v592
  %v704 = vpack.c.b16 %v595, %v594
  %v705 = vpack.c.b16 %v597, %v596
  %v706 = vpack.c.b16 %v599, %v598
  %v707 = vpack.c.b16 %v601, %v600
  %v708 = vpack.c.b16 %v603, %v602
  %v709 = vpack.c.b16 %v605, %v604
  %v710 = vpack.c.b16 %v607, %v606
  %v711 = vpack.c.b16 %v609, %v608
  %v712 = vpack.c.b16 %v611, %v610
  %v713 = vpack.c.b16 %v613, %v612
  %v714 = vpack.c.b16 %v615, %v614
  %v715 = vpack.c.b16 %v617, %v616
  %v716 = vpack.c.b16 %v619, %v618
  %v717 = vpack.c.b16 %v621, %v620
  %v718 = vpack.c.b16 %v623, %v622
  %v719 = vpack.c.b16 %v625, %v624
  %v720 = vpack.c.b16 %v627, %v626
  %v721 = vpack.c.b16 %v629, %v628
  %v722 = vpack.c.b16 %v631, %v630
  %v723 = vpack.c.b16 %v633, %v632
  %v724 = vpack.c.b16 %v635, %v634
  %v725 = vpack.c.b16 %v637, %v636
  %v726 = vpack.c.b16 %v639, %v638
  %v727 = vpack.c.b16 %v641, %v640
  %v728 = vpack.c.b16 %v643, %v642
  %v729 = vpack.c.b16 %v645, %v644
  %v730 = vpack.c.b16 %v647, %v646
  %v731 = vpack.c.b16 %v649, %v648
  %v732 = vpack.c.b16 %v651, %v650
  %v733 = vpack.c.b16 %v653, %v652
  %v734 = vpack.c.b16 %v655, %v654
  %v735 = vpack.c.b16 %v657, %v656
  %v736 = vpack.c.b16 %v659, %v658
  %v737 = vpack.c.b16 %v661, %v660
  %v738 = vpack.c.b16 %v663, %v662
  %v739 = vpack.c.b16 %v665, %v664
  %v740 = vpack.c.b16 %v667, %v666
  %v741 = vpack.c.b16 %v669, %v668
  %814 = vmatprep.subr.bf16.mxu0 0
  %815 = vmatpush1.bf16.msra.mxu0 %v670
  %816 = vmatprep.subr.bf16.mxu0 0
  %817 = vmatpush1.bf16.msra.mxu0 %v671
  %818 = vmatprep.subr.bf16.mxu0 0
  %819 = vmatpush1.bf16.msra.mxu0 %v672
  %820 = vmatprep.subr.bf16.mxu0 0
  %821 = vmatpush1.bf16.msra.mxu0 %v673
  %822 = vmatprep.subr.bf16.mxu0 0
  %823 = vmatpush1.bf16.msra.mxu0 %v674
  %824 = vmatprep.subr.bf16.mxu0 0
  %825 = vmatpush1.bf16.msra.mxu0 %v675
  %826 = vmatprep.subr.bf16.mxu0 0
  %827 = vmatpush1.bf16.msra.mxu0 %v676
  %828 = vmatprep.subr.bf16.mxu0 0
  %829 = vmatpush1.bf16.msra.mxu0 %v677
  %830 = vmatprep.subr.bf16.mxu0 0
  %831 = vmatpush1.bf16.msra.mxu0 %v678
  %832 = vmatprep.subr.bf16.mxu0 0
  %833 = vmatpush1.bf16.msra.mxu0 %v679
  %834 = vmatprep.subr.bf16.mxu0 0
  %835 = vmatpush1.bf16.msra.mxu0 %v680
  %836 = vmatprep.subr.bf16.mxu0 0
  %837 = vmatpush1.bf16.msra.mxu0 %v681
  %838 = vmatprep.subr.bf16.mxu0 0
  %839 = vmatpush1.bf16.msra.mxu0 %v682
  %840 = vmatprep.subr.bf16.mxu0 0
  %841 = vmatpush1.bf16.msra.mxu0 %v683
  %842 = vmatprep.subr.bf16.mxu0 0
  %843 = vmatpush1.bf16.msra.mxu0 %v684
  %844 = vmatprep.subr.bf16.mxu0 0
  %845 = vmatpush1.bf16.msra.mxu0 %v685
  %846 = vmatprep.mubr.bf16.mxu0 %v160
  %847 = vmatmul.mubr.bf16.gmra.mrb[0].mxu0 %v159
  %v848 = vpop.f32.mrb[0].mxu0
  %v849 = vadd.f32 %v380, %v848
  %v850 = vpop.f32.mrb[0].mxu0
  %v851 = vpop.f32.mrb[0].mxu0
  %v852 = vadd.f32 %v380, %v851
  %v853 = vpop.f32.mrb[0].mxu0
  %854 = vmatprep.mubr.bf16.mxu0 %v169
  %855 = vmatmul.mubr.bf16.gmra.mrb[0].mxu0 %v168
  %v856 = vpop.f32.mrb[0].mxu0
  %v857 = vadd.f32 %v380, %v856
  %v858 = vpop.f32.mrb[0].mxu0
  %v859 = vpop.f32.mrb[0].mxu0
  %v860 = vadd.f32 %v380, %v859
  %v861 = vpop.f32.mrb[0].mxu0
  %862 = vmatprep.mubr.bf16.mxu0 %v178
  %863 = vmatmul.mubr.bf16.gmra.mrb[0].mxu0 %v177
  %v864 = vpop.f32.mrb[0].mxu0
  %v865 = vadd.f32 %v380, %v864
  %v866 = vpop.f32.mrb[0].mxu0
  %v867 = vpop.f32.mrb[0].mxu0
  %v868 = vadd.f32 %v380, %v867
  %v869 = vpop.f32.mrb[0].mxu0
  %870 = vmatprep.mubr.bf16.mxu0 %v187
  %871 = vmatmul.mubr.bf16.gmra.mrb[0].mxu0 %v186
  %v872 = vpop.f32.mrb[0].mxu0
  %v873 = vadd.f32 %v380, %v872
  %v874 = vpop.f32.mrb[0].mxu0
  %v875 = vpop.f32.mrb[0].mxu0
  %v876 = vadd.f32 %v380, %v875
  %v877 = vpop.f32.mrb[0].mxu0
  %878 = vmatprep.mubr.bf16.mxu0 %v196
  %879 = vmatmul.mubr.bf16.gmra.mrb[0].mxu0 %v195
  %v880 = vpop.f32.mrb[0].mxu0
  %v881 = vadd.f32 %v380, %v880
  %v882 = vpop.f32.mrb[0].mxu0
  %v883 = vpop.f32.mrb[0].mxu0
  %v884 = vadd.f32 %v380, %v883
  %v885 = vpop.f32.mrb[0].mxu0
  %886 = vmatprep.mubr.bf16.mxu0 %v205
  %887 = vmatmul.mubr.bf16.gmra.mrb[0].mxu0 %v204
  %v888 = vpop.f32.mrb[0].mxu0
  %v889 = vadd.f32 %v380, %v888
  %v890 = vpop.f32.mrb[0].mxu0
  %v891 = vpop.f32.mrb[0].mxu0
  %v892 = vadd.f32 %v380, %v891
  %v893 = vpop.f32.mrb[0].mxu0
  %894 = vmatprep.mubr.bf16.mxu0 %v214
  %895 = vmatmul.mubr.bf16.gmra.mrb[0].mxu0 %v213
  %v896 = vpop.f32.mrb[0].mxu0
  %v897 = vadd.f32 %v380, %v896
  %v898 = vpop.f32.mrb[0].mxu0
  %v899 = vpop.f32.mrb[0].mxu0
  %v900 = vadd.f32 %v380, %v899
  %v901 = vpop.f32.mrb[0].mxu0
  %902 = vmatprep.mubr.bf16.mxu0 %v223
  %903 = vmatmul.mubr.bf16.gmra.mrb[0].mxu0 %v222
  %v904 = vpop.f32.mrb[0].mxu0
  %v905 = vadd.f32 %v380, %v904
  %v906 = vpop.f32.mrb[0].mxu0
  %v907 = vpop.f32.mrb[0].mxu0
  %v908 = vadd.f32 %v380, %v907
  %v909 = vpop.f32.mrb[0].mxu0
  %910 = vdwg.mxu0
  %911 = vmatprep.subr.bf16.mxu0 0
  %912 = vmatpush1.bf16.msra.mxu0 %v686
  %913 = vmatprep.subr.bf16.mxu0 0
  %914 = vmatpush1.bf16.msra.mxu0 %v687
  %915 = vmatprep.subr.bf16.mxu0 0
  %916 = vmatpush1.bf16.msra.mxu0 %v688
  %917 = vmatprep.subr.bf16.mxu0 0
  %918 = vmatpush1.bf16.msra.mxu0 %v689
  %919 = vmatprep.subr.bf16.mxu0 0
  %920 = vmatpush1.bf16.msra.mxu0 %v690
  %921 = vmatprep.subr.bf16.mxu0 0
  %922 = vmatpush1.bf16.msra.mxu0 %v691
  %923 = vmatprep.subr.bf16.mxu0 0
  %924 = vmatpush1.bf16.msra.mxu0 %v692
  %925 = vmatprep.subr.bf16.mxu0 0
  %926 = vmatpush1.bf16.msra.mxu0 %v693
  %927 = vmatprep.subr.bf16.mxu0 0
  %928 = vmatpush1.bf16.msra.mxu0 %v694
  %929 = vmatprep.subr.bf16.mxu0 0
  %930 = vmatpush1.bf16.msra.mxu0 %v695
  %931 = vmatprep.subr.bf16.mxu0 0
  %932 = vmatpush1.bf16.msra.mxu0 %v696
  %933 = vmatprep.subr.bf16.mxu0 0
  %934 = vmatpush1.bf16.msra.mxu0 %v697
  %935 = vmatprep.subr.bf16.mxu0 0
  %936 = vmatpush1.bf16.msra.mxu0 %v698
  %937 = vmatprep.subr.bf16.mxu0 0
  %938 = vmatpush1.bf16.msra.mxu0 %v699
  %939 = vmatprep.subr.bf16.mxu0 0
  %940 = vmatpush1.bf16.msra.mxu0 %v700
  %941 = vmatprep.subr.bf16.mxu0 0
  %942 = vmatpush1.bf16.msra.mxu0 %v701
  %943 = vmatprep.mubr.bf16.mxu0 %v162
  %944 = vmatmul.mubr.bf16.gmra.mrb[0].mxu0 %v161
  %v945 = vpop.f32.mrb[0].mxu0
  %v946 = vadd.f32 %v849, %v945
  %v947 = vpop.f32.mrb[0].mxu0
  %v948 = vpop.f32.mrb[0].mxu0
  %v949 = vadd.f32 %v852, %v948
  %v950 = vpop.f32.mrb[0].mxu0
  %951 = vmatprep.mubr.bf16.mxu0 %v171
  %952 = vmatmul.mubr.bf16.gmra.mrb[0].mxu0 %v170
  %v953 = vpop.f32.mrb[0].mxu0
  %v954 = vadd.f32 %v857, %v953
  %v955 = vpop.f32.mrb[0].mxu0
  %v956 = vpop.f32.mrb[0].mxu0
  %v957 = vadd.f32 %v860, %v956
  %v958 = vpop.f32.mrb[0].mxu0
  %959 = vmatprep.mubr.bf16.mxu0 %v180
  %960 = vmatmul.mubr.bf16.gmra.mrb[0].mxu0 %v179
  %v961 = vpop.f32.mrb[0].mxu0
  %v962 = vadd.f32 %v865, %v961
  %v963 = vpop.f32.mrb[0].mxu0
  %v964 = vpop.f32.mrb[0].mxu0
  %v965 = vadd.f32 %v868, %v964
  %v966 = vpop.f32.mrb[0].mxu0
  %967 = vmatprep.mubr.bf16.mxu0 %v189
  %968 = vmatmul.mubr.bf16.gmra.mrb[0].mxu0 %v188
  %v969 = vpop.f32.mrb[0].mxu0
  %v970 = vadd.f32 %v873, %v969
  %v971 = vpop.f32.mrb[0].mxu0
  %v972 = vpop.f32.mrb[0].mxu0
  %v973 = vadd.f32 %v876, %v972
  %v974 = vpop.f32.mrb[0].mxu0
  %975 = vmatprep.mubr.bf16.mxu0 %v198
  %976 = vmatmul.mubr.bf16.gmra.mrb[0].mxu0 %v197
  %v977 = vpop.f32.mrb[0].mxu0
  %v978 = vadd.f32 %v881, %v977
  %v979 = vpop.f32.mrb[0].mxu0
  %v980 = vpop.f32.mrb[0].mxu0
  %v981 = vadd.f32 %v884, %v980
  %v982 = vpop.f32.mrb[0].mxu0
  %983 = vmatprep.mubr.bf16.mxu0 %v207
  %984 = vmatmul.mubr.bf16.gmra.mrb[0].mxu0 %v206
  %v985 = vpop.f32.mrb[0].mxu0
  %v986 = vadd.f32 %v889, %v985
  %v987 = vpop.f32.mrb[0].mxu0
  %v988 = vpop.f32.mrb[0].mxu0
  %v989 = vadd.f32 %v892, %v988
  %v990 = vpop.f32.mrb[0].mxu0
  %991 = vmatprep.mubr.bf16.mxu0 %v216
  %992 = vmatmul.mubr.bf16.gmra.mrb[0].mxu0 %v215
  %v993 = vpop.f32.mrb[0].mxu0
  %v994 = vadd.f32 %v897, %v993
  %v995 = vpop.f32.mrb[0].mxu0
  %v996 = vpop.f32.mrb[0].mxu0
  %v997 = vadd.f32 %v900, %v996
  %v998 = vpop.f32.mrb[0].mxu0
  %999 = vmatprep.mubr.bf16.mxu0 %v225
  %1000 = vmatmul.mubr.bf16.gmra.mrb[0].mxu0 %v224
  %v1001 = vpop.f32.mrb[0].mxu0
  %v1002 = vadd.f32 %v905, %v1001
  %v1003 = vpop.f32.mrb[0].mxu0
  %v1004 = vpop.f32.mrb[0].mxu0
  %v1005 = vadd.f32 %v908, %v1004
  %v1006 = vpop.f32.mrb[0].mxu0
  %1007 = vdwg.mxu0
  %1008 = vmatprep.subr.bf16.mxu0 0
  %1009 = vmatpush1.bf16.msra.mxu0 %v702
  %1010 = vmatprep.subr.bf16.mxu0 0
  %1011 = vmatpush1.bf16.msra.mxu0 %v703
  %1012 = vmatprep.subr.bf16.mxu0 0
  %1013 = vmatpush1.bf16.msra.mxu0 %v704
  %1014 = vmatprep.subr.bf16.mxu0 0
  %1015 = vmatpush1.bf16.msra.mxu0 %v705
  %1016 = vmatprep.subr.bf16.mxu0 0
  %1017 = vmatpush1.bf16.msra.mxu0 %v706
  %1018 = vmatprep.subr.bf16.mxu0 0
  %1019 = vmatpush1.bf16.msra.mxu0 %v707
  %1020 = vmatprep.subr.bf16.mxu0 0
  %1021 = vmatpush1.bf16.msra.mxu0 %v708
  %1022 = vmatprep.subr.bf16.mxu0 0
  %1023 = vmatpush1.bf16.msra.mxu0 %v709
  %1024 = vmatprep.subr.bf16.mxu0 0
  %1025 = vmatpush1.bf16.msra.mxu0 %v710
  %1026 = vmatprep.subr.bf16.mxu0 0
  %1027 = vmatpush1.bf16.msra.mxu0 %v711
  %1028 = vmatprep.subr.bf16.mxu0 0
  %1029 = vmatpush1.bf16.msra.mxu0 %v712
  %1030 = vmatprep.subr.bf16.mxu0 0
  %1031 = vmatpush1.bf16.msra.mxu0 %v713
  %1032 = vmatprep.subr.bf16.mxu0 0
  %1033 = vmatpush1.bf16.msra.mxu0 %v714
  %1034 = vmatprep.subr.bf16.mxu0 0
  %1035 = vmatpush1.bf16.msra.mxu0 %v715
  %1036 = vmatprep.subr.bf16.mxu0 0
  %1037 = vmatpush1.bf16.msra.mxu0 %v716
  %1038 = vmatprep.subr.bf16.mxu0 0
  %1039 = vmatpush1.bf16.msra.mxu0 %v717
  %1040 = vmatprep.mubr.bf16.mxu0 %v164
  %1041 = vmatmul.mubr.bf16.gmra.mrb[0].mxu0 %v163
  %v1042 = vpop.f32.mrb[0].mxu0
  %v1043 = vadd.f32 %v946, %v1042
  %v1044 = vpop.f32.mrb[0].mxu0
  %v1045 = vpop.f32.mrb[0].mxu0
  %v1046 = vadd.f32 %v949, %v1045
  %v1047 = vpop.f32.mrb[0].mxu0
  %1048 = vmatprep.mubr.bf16.mxu0 %v173
  %1049 = vmatmul.mubr.bf16.gmra.mrb[0].mxu0 %v172
  %v1050 = vpop.f32.mrb[0].mxu0
  %v1051 = vadd.f32 %v954, %v1050
  %v1052 = vpop.f32.mrb[0].mxu0
  %v1053 = vpop.f32.mrb[0].mxu0
  %v1054 = vadd.f32 %v957, %v1053
  %v1055 = vpop.f32.mrb[0].mxu0
  %1056 = vmatprep.mubr.bf16.mxu0 %v182
  %1057 = vmatmul.mubr.bf16.gmra.mrb[0].mxu0 %v181
  %v1058 = vpop.f32.mrb[0].mxu0
  %v1059 = vadd.f32 %v962, %v1058
  %v1060 = vpop.f32.mrb[0].mxu0
  %v1061 = vpop.f32.mrb[0].mxu0
  %v1062 = vadd.f32 %v965, %v1061
  %v1063 = vpop.f32.mrb[0].mxu0
  %1064 = vmatprep.mubr.bf16.mxu0 %v191
  %1065 = vmatmul.mubr.bf16.gmra.mrb[0].mxu0 %v190
  %v1066 = vpop.f32.mrb[0].mxu0
  %v1067 = vadd.f32 %v970, %v1066
  %v1068 = vpop.f32.mrb[0].mxu0
  %v1069 = vpop.f32.mrb[0].mxu0
  %v1070 = vadd.f32 %v973, %v1069
  %v1071 = vpop.f32.mrb[0].mxu0
  %1072 = vmatprep.mubr.bf16.mxu0 %v200
  %1073 = vmatmul.mubr.bf16.gmra.mrb[0].mxu0 %v199
  %v1074 = vpop.f32.mrb[0].mxu0
  %v1075 = vadd.f32 %v978, %v1074
  %v1076 = vpop.f32.mrb[0].mxu0
  %v1077 = vpop.f32.mrb[0].mxu0
  %v1078 = vadd.f32 %v981, %v1077
  %v1079 = vpop.f32.mrb[0].mxu0
  %1080 = vmatprep.mubr.bf16.mxu0 %v209
  %1081 = vmatmul.mubr.bf16.gmra.mrb[0].mxu0 %v208
  %v1082 = vpop.f32.mrb[0].mxu0
  %v1083 = vadd.f32 %v986, %v1082
  %v1084 = vpop.f32.mrb[0].mxu0
  %v1085 = vpop.f32.mrb[0].mxu0
  %v1086 = vadd.f32 %v989, %v1085
  %v1087 = vpop.f32.mrb[0].mxu0
  %1088 = vmatprep.mubr.bf16.mxu0 %v218
  %1089 = vmatmul.mubr.bf16.gmra.mrb[0].mxu0 %v217
  %v1090 = vpop.f32.mrb[0].mxu0
  %v1091 = vadd.f32 %v994, %v1090
  %v1092 = vpop.f32.mrb[0].mxu0
  %v1093 = vpop.f32.mrb[0].mxu0
  %v1094 = vadd.f32 %v997, %v1093
  %v1095 = vpop.f32.mrb[0].mxu0
  %1096 = vmatprep.mubr.bf16.mxu0 %v227
  %1097 = vmatmul.mubr.bf16.gmra.mrb[0].mxu0 %v226
  %v1098 = vpop.f32.mrb[0].mxu0
  %v1099 = vadd.f32 %v1002, %v1098
  %v1100 = vpop.f32.mrb[0].mxu0
  %v1101 = vpop.f32.mrb[0].mxu0
  %v1102 = vadd.f32 %v1005, %v1101
  %v1103 = vpop.f32.mrb[0].mxu0
  %1104 = vdwg.mxu0
  %1105 = vmatprep.subr.bf16.mxu0 0
  %1106 = vmatpush1.bf16.msra.mxu0 %v718
  %1107 = vmatprep.subr.bf16.mxu0 0
  %1108 = vmatpush1.bf16.msra.mxu0 %v719
  %1109 = vmatprep.subr.bf16.mxu0 0
  %1110 = vmatpush1.bf16.msra.mxu0 %v720
  %1111 = vmatprep.subr.bf16.mxu0 0
  %1112 = vmatpush1.bf16.msra.mxu0 %v721
  %1113 = vmatprep.subr.bf16.mxu0 0
  %1114 = vmatpush1.bf16.msra.mxu0 %v722
  %1115 = vmatprep.subr.bf16.mxu0 0
  %1116 = vmatpush1.bf16.msra.mxu0 %v723
  %1117 = vmatprep.subr.bf16.mxu0 0
  %1118 = vmatpush1.bf16.msra.mxu0 %v724
  %1119 = vmatprep.subr.bf16.mxu0 0
  %1120 = vmatpush1.bf16.msra.mxu0 %v725
  %1121 = vmatprep.subr.bf16.mxu0 0
  %1122 = vmatpush1.bf16.msra.mxu0 %v726
  %1123 = vmatprep.subr.bf16.mxu0 0
  %1124 = vmatpush1.bf16.msra.mxu0 %v727
  %1125 = vmatprep.subr.bf16.mxu0 0
  %1126 = vmatpush1.bf16.msra.mxu0 %v728
  %1127 = vmatprep.subr.bf16.mxu0 0
  %1128 = vmatpush1.bf16.msra.mxu0 %v729
  %1129 = vmatprep.subr.bf16.mxu0 0
  %1130 = vmatpush1.bf16.msra.mxu0 %v730
  %1131 = vmatprep.subr.bf16.mxu0 0
  %1132 = vmatpush1.bf16.msra.mxu0 %v731
  %1133 = vmatprep.subr.bf16.mxu0 0
  %1134 = vmatpush1.bf16.msra.mxu0 %v732
  %1135 = vmatprep.subr.bf16.mxu0 0
  %1136 = vmatpush1.bf16.msra.mxu0 %v733
  %1137 = vmatprep.mubr.bf16.mxu0 %v166
  %1138 = vmatmul.mubr.bf16.gmra.mrb[0].mxu0 %v165
  %v1139 = vpop.f32.mrb[0].mxu0
  %v1140 = vadd.f32 %v1043, %v1139
  %v1141 = vpop.f32.mrb[0].mxu0
  %v1142 = vpop.f32.mrb[0].mxu0
  %v1143 = vadd.f32 %v1046, %v1142
  %v1144 = vpop.f32.mrb[0].mxu0
  %1145 = vmatprep.mubr.bf16.mxu0 %v175
  %1146 = vmatmul.mubr.bf16.gmra.mrb[0].mxu0 %v174
  %v1147 = vpop.f32.mrb[0].mxu0
  %v1148 = vadd.f32 %v1051, %v1147
  %v1149 = vpop.f32.mrb[0].mxu0
  %v1150 = vpop.f32.mrb[0].mxu0
  %v1151 = vadd.f32 %v1054, %v1150
  %v1152 = vpop.f32.mrb[0].mxu0
  %1153 = vmatprep.mubr.bf16.mxu0 %v184
  %1154 = vmatmul.mubr.bf16.gmra.mrb[0].mxu0 %v183
  %v1155 = vpop.f32.mrb[0].mxu0
  %v1156 = vadd.f32 %v1059, %v1155
  %v1157 = vpop.f32.mrb[0].mxu0
  %v1158 = vpop.f32.mrb[0].mxu0
  %v1159 = vadd.f32 %v1062, %v1158
  %v1160 = vpop.f32.mrb[0].mxu0
  %1161 = vmatprep.mubr.bf16.mxu0 %v193
  %1162 = vmatmul.mubr.bf16.gmra.mrb[0].mxu0 %v192
  %v1163 = vpop.f32.mrb[0].mxu0
  %v1164 = vadd.f32 %v1067, %v1163
  %v1165 = vpop.f32.mrb[0].mxu0
  %v1166 = vpop.f32.mrb[0].mxu0
  %v1167 = vadd.f32 %v1070, %v1166
  %v1168 = vpop.f32.mrb[0].mxu0
  %1169 = vmatprep.mubr.bf16.mxu0 %v202
  %1170 = vmatmul.mubr.bf16.gmra.mrb[0].mxu0 %v201
  %v1171 = vpop.f32.mrb[0].mxu0
  %v1172 = vadd.f32 %v1075, %v1171
  %v1173 = vpop.f32.mrb[0].mxu0
  %v1174 = vpop.f32.mrb[0].mxu0
  %v1175 = vadd.f32 %v1078, %v1174
  %v1176 = vpop.f32.mrb[0].mxu0
  %1177 = vmatprep.mubr.bf16.mxu0 %v211
  %1178 = vmatmul.mubr.bf16.gmra.mrb[0].mxu0 %v210
  %v1179 = vpop.f32.mrb[0].mxu0
  %v1180 = vadd.f32 %v1083, %v1179
  %v1181 = vpop.f32.mrb[0].mxu0
  %v1182 = vpop.f32.mrb[0].mxu0
  %v1183 = vadd.f32 %v1086, %v1182
  %v1184 = vpop.f32.mrb[0].mxu0
  %1185 = vmatprep.mubr.bf16.mxu0 %v220
  %1186 = vmatmul.mubr.bf16.gmra.mrb[0].mxu0 %v219
  %v1187 = vpop.f32.mrb[0].mxu0
  %v1188 = vadd.f32 %v1091, %v1187
  %v1189 = vpop.f32.mrb[0].mxu0
  %v1190 = vpop.f32.mrb[0].mxu0
  %v1191 = vadd.f32 %v1094, %v1190
  %v1192 = vpop.f32.mrb[0].mxu0
  %1193 = vmatprep.mubr.bf16.mxu0 %v229
  %1194 = vmatmul.mubr.bf16.gmra.mrb[0].mxu0 %v228
  %v1195 = vpop.f32.mrb[0].mxu0
  %v1196 = vadd.f32 %v1099, %v1195
  %v1197 = vpop.f32.mrb[0].mxu0
  %v1198 = vpop.f32.mrb[0].mxu0
  %v1199 = vadd.f32 %v1102, %v1198
  %v1200 = vpop.f32.mrb[0].mxu0
  %1201 = vdwg.mxu0
  %1202 = vmatprep.subr.bf16.mxu0 0
  %1203 = vmatpush1.bf16.msra.mxu0 %v734
  %1204 = vmatprep.subr.bf16.mxu0 0
  %1205 = vmatpush1.bf16.msra.mxu0 %v735
  %1206 = vmatprep.subr.bf16.mxu0 0
  %1207 = vmatpush1.bf16.msra.mxu0 %v736
  %1208 = vmatprep.subr.bf16.mxu0 0
  %1209 = vmatpush1.bf16.msra.mxu0 %v737
  %1210 = vmatprep.subr.bf16.mxu0 0
  %1211 = vmatpush1.bf16.msra.mxu0 %v738
  %1212 = vmatprep.subr.bf16.mxu0 0
  %1213 = vmatpush1.bf16.msra.mxu0 %v739
  %1214 = vmatprep.subr.bf16.mxu0 0
  %1215 = vmatpush1.bf16.msra.mxu0 %v740
  %1216 = vmatprep.subr.bf16.mxu0 0
  %1217 = vmatpush1.bf16.msra.mxu0 %v741
  %1218 = vmatprep.subr.bf16.mxu0 0
  %1219 = vmatpush1.bf16.msra.mxu0 0
  %1220 = vmatprep.subr.bf16.mxu0 0
  %1221 = vmatpush1.bf16.msra.mxu0 0
  %1222 = vmatprep.subr.bf16.mxu0 0
  %1223 = vmatpush1.bf16.msra.mxu0 0
  %1224 = vmatprep.subr.bf16.mxu0 0
  %1225 = vmatpush1.bf16.msra.mxu0 0
  %1226 = vmatprep.subr.bf16.mxu0 0
  %1227 = vmatpush1.bf16.msra.mxu0 0
  %1228 = vmatprep.subr.bf16.mxu0 0
  %1229 = vmatpush1.bf16.msra.mxu0 0
  %1230 = vmatprep.subr.bf16.mxu0 0
  %1231 = vmatpush1.bf16.msra.mxu0 0
  %1232 = vmatprep.subr.bf16.mxu0 0
  %1233 = vmatpush1.bf16.msra.mxu0 0
  %1234 = vmatprep.mubr.bf16.mxu0 0
  %1235 = vmatmul.mubr.bf16.gmra.mrb[0].mxu0 %v167
  %v1236 = vpop.f32.mrb[0].mxu0
  %v1237 = vadd.f32 %v1140, %v1236
  %v1238 = vpop.f32.mrb[0].mxu0
  %v1239 = vpop.f32.mrb[0].mxu0
  %v1240 = vadd.f32 %v1143, %v1239
  %v1241 = vpop.f32.mrb[0].mxu0
  %1242 = vmatprep.mubr.bf16.mxu0 0
  %1243 = vmatmul.mubr.bf16.gmra.mrb[0].mxu0 %v176
  %v1244 = vpop.f32.mrb[0].mxu0
  %v1245 = vadd.f32 %v1148, %v1244
  %v1246 = vpop.f32.mrb[0].mxu0
  %v1247 = vpop.f32.mrb[0].mxu0
  %v1248 = vadd.f32 %v1151, %v1247
  %v1249 = vpop.f32.mrb[0].mxu0
  %1250 = vmatprep.mubr.bf16.mxu0 0
  %1251 = vmatmul.mubr.bf16.gmra.mrb[0].mxu0 %v185
  %v1252 = vpop.f32.mrb[0].mxu0
  %v1253 = vadd.f32 %v1156, %v1252
  %v1254 = vpop.f32.mrb[0].mxu0
  %v1255 = vpop.f32.mrb[0].mxu0
  %v1256 = vadd.f32 %v1159, %v1255
  %v1257 = vpop.f32.mrb[0].mxu0
  %1258 = vmatprep.mubr.bf16.mxu0 0
  %1259 = vmatmul.mubr.bf16.gmra.mrb[0].mxu0 %v194
  %v1260 = vpop.f32.mrb[0].mxu0
  %v1261 = vadd.f32 %v1164, %v1260
  %v1262 = vpop.f32.mrb[0].mxu0
  %v1263 = vpop.f32.mrb[0].mxu0
  %v1264 = vadd.f32 %v1167, %v1263
  %v1265 = vpop.f32.mrb[0].mxu0
  %1266 = vmatprep.mubr.bf16.mxu0 0
  %1267 = vmatmul.mubr.bf16.gmra.mrb[0].mxu0 %v203
  %v1268 = vpop.f32.mrb[0].mxu0
  %v1269 = vadd.f32 %v1172, %v1268
  %v1270 = vpop.f32.mrb[0].mxu0
  %v1271 = vpop.f32.mrb[0].mxu0
  %v1272 = vadd.f32 %v1175, %v1271
  %v1273 = vpop.f32.mrb[0].mxu0
  %1274 = vmatprep.mubr.bf16.mxu0 0
  %1275 = vmatmul.mubr.bf16.gmra.mrb[0].mxu0 %v212
  %v1276 = vpop.f32.mrb[0].mxu0
  %v1277 = vadd.f32 %v1180, %v1276
  %v1278 = vpop.f32.mrb[0].mxu0
  %v1279 = vpop.f32.mrb[0].mxu0
  %v1280 = vadd.f32 %v1183, %v1279
  %v1281 = vpop.f32.mrb[0].mxu0
  %1282 = vmatprep.mubr.bf16.mxu0 0
  %1283 = vmatmul.mubr.bf16.gmra.mrb[0].mxu0 %v221
  %v1284 = vpop.f32.mrb[0].mxu0
  %v1285 = vadd.f32 %v1188, %v1284
  %v1286 = vpop.f32.mrb[0].mxu0
  %v1287 = vpop.f32.mrb[0].mxu0
  %v1288 = vadd.f32 %v1191, %v1287
  %v1289 = vpop.f32.mrb[0].mxu0
  %1290 = vmatprep.mubr.bf16.mxu0 0
  %1291 = vmatmul.mubr.bf16.gmra.mrb[0].mxu0 %v230
  %v1292 = vpop.f32.mrb[0].mxu0
  %v1293 = vadd.f32 %v1196, %v1292
  %v1294 = vpop.f32.mrb[0].mxu0
  %v1295 = vpop.f32.mrb[0].mxu0
  %v1296 = vadd.f32 %v1199, %v1295
  %v1297 = vpop.f32.mrb[0].mxu0
  %1298 = vdwg.mxu0
  %v1299 = vmax.f32 %v1237, 0.0
  %v1300 = vmax.f32 %v1240, 0.0
  %v1301 = vmax.f32 %v1245, 0.0
  %v1302 = vmax.f32 %v1248, 0.0
  %v1303 = vmax.f32 %v1253, 0.0
  %v1304 = vmax.f32 %v1256, 0.0
  %v1305 = vmax.f32 %v1261, 0.0
  %v1306 = vmax.f32 %v1264, 0.0
  %v1307 = vmax.f32 %v1269, 0.0
  %v1308 = vmax.f32 %v1272, 0.0
  %v1309 = vmax.f32 %v1277, 0.0
  %v1310 = vmax.f32 %v1280, 0.0
  %v1311 = vmax.f32 %v1285, 0.0
  %v1312 = vmax.f32 %v1288, 0.0
  %v1313 = vmax.f32 %v1293, 0.0
  %v1314 = vmax.f32 %v1296, 0.0
  %1315 = vst [vmem:[%s3] sm:$0xff] %v1299
  %1316 = vst [vmem:[%s3 + $0x8] sm:$0xff] %v1300
  %1317 = vst [vmem:[%s3 + $0x10] sm:$0xff] %v1301
  %1318 = vst [vmem:[%s3 + $0x18] sm:$0xff] %v1302
  %1319 = vst [vmem:[%s3 + $0x20] sm:$0xff] %v1303
  %1320 = vst [vmem:[%s3 + $0x28] sm:$0xff] %v1304
  %1321 = vst [vmem:[%s3 + $0x30] sm:$0xff] %v1305
  %1322 = vst [vmem:[%s3 + $0x38] sm:$0xff] %v1306
  %1323 = vst [vmem:[%s3 + $0x40] sm:$0xff] %v1307
  %1324 = vst [vmem:[%s3 + $0x48] sm:$0xff] %v1308
  %1325 = vst [vmem:[%s3 + $0x50] sm:$0xff] %v1309
  %1326 = vst [vmem:[%s3 + $0x58] sm:$0xff] %v1310
  %1327 = vst [vmem:[%s3 + $0x60] sm:$0xff] %v1311
  %1328 = vst [vmem:[%s3 + $0x68] sm:$0xff] %v1312
  %1329 = vst [vmem:[%s3 + $0x70] sm:$0xff] %v1313
  %1330 = vst [vmem:[%s3 + $0x78] sm:$0xff] %v1314
  // Predicated region
  $region14: #{seg_discriminator_forward.9} parent=0 // pred_check
    _
  $region15: #{seg_discriminator_forward.9} parent=0 // pred_check_branch
    %1332 = sbr.rel (0) target = $region17
  $region16: #{seg_discriminator_forward.9} parent=0 // pred_region
    _
  $region17: #{seg_discriminator_forward.9} parent=0 // pred_fallthru
    _
  // Predicated region
  $region18: #{seg_discriminator_forward.9} parent=0 // pred_check
    _
  $region19: #{seg_discriminator_forward.9} parent=0 // pred_check_branch
    %1334 = sbr.rel (0) target = $region21
  $region20: #{seg_discriminator_forward.9} parent=0 // pred_region
    _
  $region21: #{seg_discriminator_forward.9} parent=0 // pred_fallthru
    _

// kernel: seg_discriminator_forward.10
$region0: #{seg_discriminator_forward.10}
  #allocation0 [shape = 'u32[]', space=smem, size = 0x4, offset = 0x4, fixed_abs, tag = 'smem constant byte address 0x4 - core index']
  #allocation1 [shape = 'u32[144,128]{1,0:T(1,128)}', space=vmem, size = 0x12000, scoped, tag = 'internal scratch']
  %s0 = inlined_call_operand.vmem [shape: f32[32,1152], index: 0, kind: input, shape index: {}]
  %s1 = inlined_call_operand.vmem [shape: bf16[1152,128], index: 1, kind: input, shape index: {}]
  %s2 = inlined_call_operand.vmem [shape: f32[1,128], index: 2, kind: input, shape index: {}]
  %s3 = inlined_call_operand.vmem [shape: f32[32,128], index: 3, kind: output, shape index: {}]
  %s4 = sld [smem:[#allocation0]]
  $region22: #{seg_discriminator_forward.10} parent=0
    _
  %s6 = ssub.s32 1, %s4
  %s7 = scalar_select 0, %s6, %s4
  // Predicated region
  $region2: #{seg_discriminator_forward.10} parent=0 // pred_check
    _
  $region3: #{seg_discriminator_forward.10} parent=0 // pred_check_branch
    %9 = sbr.rel (0) target = $region5
  $region4: #{seg_discriminator_forward.10} parent=0 // pred_region
    _
  $region5: #{seg_discriminator_forward.10} parent=0 // pred_fallthru
    _
  // Predicated region
  $region6: #{seg_discriminator_forward.10} parent=0 // pred_check
    _
  $region7: #{seg_discriminator_forward.10} parent=0 // pred_check_branch
    %11 = sbr.rel (0) target = $region9
  $region8: #{seg_discriminator_forward.10} parent=0 // pred_region
    _
  $region9: #{seg_discriminator_forward.10} parent=0 // pred_fallthru
    _
  // Predicated region
  $region10: #{seg_discriminator_forward.10} parent=0 // pred_check
    _
  $region11: #{seg_discriminator_forward.10} parent=0 // pred_check_branch
    %13 = sbr.rel (0) target = $region13
  $region12: #{seg_discriminator_forward.10} parent=0 // pred_region
    _
  $region13: #{seg_discriminator_forward.10} parent=0 // pred_fallthru
    _
  %v15 = vld [vmem:[%s0] sm:$0xff]
  %v16 = vld [vmem:[%s0 + $0x8] sm:$0xff]
  %v17 = vld [vmem:[%s0 + $0x10] sm:$0xff]
  %v18 = vld [vmem:[%s0 + $0x18] sm:$0xff]
  %v19 = vld [vmem:[%s0 + $0x20] sm:$0xff]
  %v20 = vld [vmem:[%s0 + $0x28] sm:$0xff]
  %v21 = vld [vmem:[%s0 + $0x30] sm:$0xff]
  %v22 = vld [vmem:[%s0 + $0x38] sm:$0xff]
  %v23 = vld [vmem:[%s0 + $0x40] sm:$0xff]
  %v24 = vld [vmem:[%s0 + $0x48] sm:$0xff]
  %v25 = vld [vmem:[%s0 + $0x50] sm:$0xff]
  %v26 = vld [vmem:[%s0 + $0x58] sm:$0xff]
  %v27 = vld [vmem:[%s0 + $0x60] sm:$0xff]
  %v28 = vld [vmem:[%s0 + $0x68] sm:$0xff]
  %v29 = vld [vmem:[%s0 + $0x70] sm:$0xff]
  %v30 = vld [vmem:[%s0 + $0x78] sm:$0xff]
  %v31 = vld [vmem:[%s0 + $0x80] sm:$0xff]
  %v32 = vld [vmem:[%s0 + $0x88] sm:$0xff]
  %v33 = vld [vmem:[%s0 + $0x90] sm:$0xff]
  %v34 = vld [vmem:[%s0 + $0x98] sm:$0xff]
  %v35 = vld [vmem:[%s0 + $0xa0] sm:$0xff]
  %v36 = vld [vmem:[%s0 + $0xa8] sm:$0xff]
  %v37 = vld [vmem:[%s0 + $0xb0] sm:$0xff]
  %v38 = vld [vmem:[%s0 + $0xb8] sm:$0xff]
  %v39 = vld [vmem:[%s0 + $0xc0] sm:$0xff]
  %v40 = vld [vmem:[%s0 + $0xc8] sm:$0xff]
  %v41 = vld [vmem:[%s0 + $0xd0] sm:$0xff]
  %v42 = vld [vmem:[%s0 + $0xd8] sm:$0xff]
  %v43 = vld [vmem:[%s0 + $0xe0] sm:$0xff]
  %v44 = vld [vmem:[%s0 + $0xe8] sm:$0xff]
  %v45 = vld [vmem:[%s0 + $0xf0] sm:$0xff]
  %v46 = vld [vmem:[%s0 + $0xf8] sm:$0xff]
  %v47 = vld [vmem:[%s0 + $0x100] sm:$0xff]
  %v48 = vld [vmem:[%s0 + $0x108] sm:$0xff]
  %v49 = vld [vmem:[%s0 + $0x110] sm:$0xff]
  %v50 = vld [vmem:[%s0 + $0x118] sm:$0xff]
  %v51 = vpack.c.bf16 %v24, %v15
  %v52 = vpack.c.bf16 %v25, %v16
  %v53 = vpack.c.bf16 %v26, %v17
  %v54 = vpack.c.bf16 %v27, %v18
  %v55 = vpack.c.bf16 %v28, %v19
  %v56 = vpack.c.bf16 %v29, %v20
  %v57 = vpack.c.bf16 %v30, %v21
  %v58 = vpack.c.bf16 %v31, %v22
  %v59 = vpack.c.bf16 %v32, %v23
  %v60 = vpack.c.bf16 %v42, %v33
  %v61 = vpack.c.bf16 %v43, %v34
  %v62 = vpack.c.bf16 %v44, %v35
  %v63 = vpack.c.bf16 %v45, %v36
  %v64 = vpack.c.bf16 %v46, %v37
  %v65 = vpack.c.bf16 %v47, %v38
  %v66 = vpack.c.bf16 %v48, %v39
  %v67 = vpack.c.bf16 %v49, %v40
  %v68 = vpack.c.bf16 %v50, %v41
  %v69 = vld [vmem:[%s1] sm:$0xf]
  %v70 = vld [vmem:[%s1 + $0x4] sm:$0xf]
  %v71 = vld [vmem:[%s1 + $0x8] sm:$0xf]
  %v72 = vld [vmem:[%s1 + $0xc] sm:$0xf]
  %v73 = vld [vmem:[%s1 + $0x10] sm:$0xf]
  %v74 = vld [vmem:[%s1 + $0x14] sm:$0xf]
  %v75 = vld [vmem:[%s1 + $0x18] sm:$0xf]
  %v76 = vld [vmem:[%s1 + $0x1c] sm:$0xf]
  %v77 = vld [vmem:[%s1 + $0x20] sm:$0xf]
  %v78 = vld [vmem:[%s1 + $0x24] sm:$0xf]
  %v79 = vld [vmem:[%s1 + $0x28] sm:$0xf]
  %v80 = vld [vmem:[%s1 + $0x2c] sm:$0xf]
  %v81 = vld [vmem:[%s1 + $0x30] sm:$0xf]
  %v82 = vld [vmem:[%s1 + $0x34] sm:$0xf]
  %v83 = vld [vmem:[%s1 + $0x38] sm:$0xf]
  %v84 = vld [vmem:[%s1 + $0x3c] sm:$0xf]
  %v85 = vld [vmem:[%s1 + $0x40] sm:$0xf]
  %v86 = vld [vmem:[%s1 + $0x44] sm:$0xf]
  %v87 = vld [vmem:[%s1 + $0x48] sm:$0xf]
  %v88 = vld [vmem:[%s1 + $0x4c] sm:$0xf]
  %v89 = vld [vmem:[%s1 + $0x50] sm:$0xf]
  %v90 = vld [vmem:[%s1 + $0x54] sm:$0xf]
  %v91 = vld [vmem:[%s1 + $0x58] sm:$0xf]
  %v92 = vld [vmem:[%s1 + $0x5c] sm:$0xf]
  %v93 = vld [vmem:[%s1 + $0x60] sm:$0xf]
  %v94 = vld [vmem:[%s1 + $0x64] sm:$0xf]
  %v95 = vld [vmem:[%s1 + $0x68] sm:$0xf]
  %v96 = vld [vmem:[%s1 + $0x6c] sm:$0xf]
  %v97 = vld [vmem:[%s1 + $0x70] sm:$0xf]
  %v98 = vld [vmem:[%s1 + $0x74] sm:$0xf]
  %v99 = vld [vmem:[%s1 + $0x78] sm:$0xf]
  %v100 = vld [vmem:[%s1 + $0x7c] sm:$0xf]
  %v101 = vld [vmem:[%s1 + $0x80] sm:$0xf]
  %v102 = vld [vmem:[%s1 + $0x84] sm:$0xf]
  %v103 = vld [vmem:[%s1 + $0x88] sm:$0xf]
  %v104 = vld [vmem:[%s1 + $0x8c] sm:$0xf]
  %v105 = vld [vmem:[%s1 + $0x90] sm:$0xf]
  %v106 = vld [vmem:[%s1 + $0x94] sm:$0xf]
  %v107 = vld [vmem:[%s1 + $0x98] sm:$0xf]
  %v108 = vld [vmem:[%s1 + $0x9c] sm:$0xf]
  %v109 = vld [vmem:[%s1 + $0xa0] sm:$0xf]
  %v110 = vld [vmem:[%s1 + $0xa4] sm:$0xf]
  %v111 = vld [vmem:[%s1 + $0xa8] sm:$0xf]
  %v112 = vld [vmem:[%s1 + $0xac] sm:$0xf]
  %v113 = vld [vmem:[%s1 + $0xb0] sm:$0xf]
  %v114 = vld [vmem:[%s1 + $0xb4] sm:$0xf]
  %v115 = vld [vmem:[%s1 + $0xb8] sm:$0xf]
  %v116 = vld [vmem:[%s1 + $0xbc] sm:$0xf]
  %v117 = vld [vmem:[%s1 + $0xc0] sm:$0xf]
  %v118 = vld [vmem:[%s1 + $0xc4] sm:$0xf]
  %v119 = vld [vmem:[%s1 + $0xc8] sm:$0xf]
  %v120 = vld [vmem:[%s1 + $0xcc] sm:$0xf]
  %v121 = vld [vmem:[%s1 + $0xd0] sm:$0xf]
  %v122 = vld [vmem:[%s1 + $0xd4] sm:$0xf]
  %v123 = vld [vmem:[%s1 + $0xd8] sm:$0xf]
  %v124 = vld [vmem:[%s1 + $0xdc] sm:$0xf]
  %v125 = vld [vmem:[%s1 + $0xe0] sm:$0xf]
  %v126 = vld [vmem:[%s1 + $0xe4] sm:$0xf]
  %v127 = vld [vmem:[%s1 + $0xe8] sm:$0xf]
  %v128 = vld [vmem:[%s1 + $0xec] sm:$0xf]
  %v129 = vld [vmem:[%s1 + $0xf0] sm:$0xf]
  %v130 = vld [vmem:[%s1 + $0xf4] sm:$0xf]
  %v131 = vld [vmem:[%s1 + $0xf8] sm:$0xf]
  %v132 = vld [vmem:[%s1 + $0xfc] sm:$0xf]
  %v133 = vld [vmem:[%s1 + $0x100] sm:$0xf]
  %v134 = vld [vmem:[%s1 + $0x104] sm:$0xf]
  %v135 = vld [vmem:[%s1 + $0x108] sm:$0xf]
  %v136 = vld [vmem:[%s1 + $0x10c] sm:$0xf]
  %v137 = vld [vmem:[%s1 + $0x110] sm:$0xf]
  %v138 = vld [vmem:[%s1 + $0x114] sm:$0xf]
  %v139 = vld [vmem:[%s1 + $0x118] sm:$0xf]
  %v140 = vld [vmem:[%s1 + $0x11c] sm:$0xf]
  %v141 = vld [vmem:[%s1 + $0x120] sm:$0xf]
  %v142 = vld [vmem:[%s1 + $0x124] sm:$0xf]
  %v143 = vld [vmem:[%s1 + $0x128] sm:$0xf]
  %v144 = vld [vmem:[%s1 + $0x12c] sm:$0xf]
  %v145 = vld [vmem:[%s1 + $0x130] sm:$0xf]
  %v146 = vld [vmem:[%s1 + $0x134] sm:$0xf]
  %v147 = vld [vmem:[%s1 + $0x138] sm:$0xf]
  %v148 = vld [vmem:[%s1 + $0x13c] sm:$0xf]
  %v149 = vld [vmem:[%s1 + $0x140] sm:$0xf]
  %v150 = vld [vmem:[%s1 + $0x144] sm:$0xf]
  %v151 = vld [vmem:[%s1 + $0x148] sm:$0xf]
  %v152 = vld [vmem:[%s1 + $0x14c] sm:$0xf]
  %v153 = vld [vmem:[%s1 + $0x150] sm:$0xf]
  %v154 = vld [vmem:[%s1 + $0x154] sm:$0xf]
  %v155 = vld [vmem:[%s1 + $0x158] sm:$0xf]
  %v156 = vld [vmem:[%s1 + $0x15c] sm:$0xf]
  %v157 = vld [vmem:[%s1 + $0x160] sm:$0xf]
  %v158 = vld [vmem:[%s1 + $0x164] sm:$0xf]
  %v159 = vld [vmem:[%s1 + $0x168] sm:$0xf]
  %v160 = vld [vmem:[%s1 + $0x16c] sm:$0xf]
  %v161 = vld [vmem:[%s1 + $0x170] sm:$0xf]
  %v162 = vld [vmem:[%s1 + $0x174] sm:$0xf]
  %v163 = vld [vmem:[%s1 + $0x178] sm:$0xf]
  %v164 = vld [vmem:[%s1 + $0x17c] sm:$0xf]
  %v165 = vld [vmem:[%s1 + $0x180] sm:$0xf]
  %v166 = vld [vmem:[%s1 + $0x184] sm:$0xf]
  %v167 = vld [vmem:[%s1 + $0x188] sm:$0xf]
  %v168 = vld [vmem:[%s1 + $0x18c] sm:$0xf]
  %v169 = vld [vmem:[%s1 + $0x190] sm:$0xf]
  %v170 = vld [vmem:[%s1 + $0x194] sm:$0xf]
  %v171 = vld [vmem:[%s1 + $0x198] sm:$0xf]
  %v172 = vld [vmem:[%s1 + $0x19c] sm:$0xf]
  %v173 = vld [vmem:[%s1 + $0x1a0] sm:$0xf]
  %v174 = vld [vmem:[%s1 + $0x1a4] sm:$0xf]
  %v175 = vld [vmem:[%s1 + $0x1a8] sm:$0xf]
  %v176 = vld [vmem:[%s1 + $0x1ac] sm:$0xf]
  %v177 = vld [vmem:[%s1 + $0x1b0] sm:$0xf]
  %v178 = vld [vmem:[%s1 + $0x1b4] sm:$0xf]
  %v179 = vld [vmem:[%s1 + $0x1b8] sm:$0xf]
  %v180 = vld [vmem:[%s1 + $0x1bc] sm:$0xf]
  %v181 = vld [vmem:[%s1 + $0x1c0] sm:$0xf]
  %v182 = vld [vmem:[%s1 + $0x1c4] sm:$0xf]
  %v183 = vld [vmem:[%s1 + $0x1c8] sm:$0xf]
  %v184 = vld [vmem:[%s1 + $0x1cc] sm:$0xf]
  %v185 = vld [vmem:[%s1 + $0x1d0] sm:$0xf]
  %v186 = vld [vmem:[%s1 + $0x1d4] sm:$0xf]
  %v187 = vld [vmem:[%s1 + $0x1d8] sm:$0xf]
  %v188 = vld [vmem:[%s1 + $0x1dc] sm:$0xf]
  %v189 = vld [vmem:[%s1 + $0x1e0] sm:$0xf]
  %v190 = vld [vmem:[%s1 + $0x1e4] sm:$0xf]
  %v191 = vld [vmem:[%s1 + $0x1e8] sm:$0xf]
  %v192 = vld [vmem:[%s1 + $0x1ec] sm:$0xf]
  %v193 = vld [vmem:[%s1 + $0x1f0] sm:$0xf]
  %v194 = vld [vmem:[%s1 + $0x1f4] sm:$0xf]
  %v195 = vld [vmem:[%s1 + $0x1f8] sm:$0xf]
  %v196 = vld [vmem:[%s1 + $0x1fc] sm:$0xf]
  %v197 = vld [vmem:[%s1 + $0x200] sm:$0xf]
  %v198 = vld [vmem:[%s1 + $0x204] sm:$0xf]
  %v199 = vld [vmem:[%s1 + $0x208] sm:$0xf]
  %v200 = vld [vmem:[%s1 + $0x20c] sm:$0xf]
  %v201 = vld [vmem:[%s1 + $0x210] sm:$0xf]
  %v202 = vld [vmem:[%s1 + $0x214] sm:$0xf]
  %v203 = vld [vmem:[%s1 + $0x218] sm:$0xf]
  %v204 = vld [vmem:[%s1 + $0x21c] sm:$0xf]
  %v205 = vld [vmem:[%s1 + $0x220] sm:$0xf]
  %v206 = vld [vmem:[%s1 + $0x224] sm:$0xf]
  %v207 = vld [vmem:[%s1 + $0x228] sm:$0xf]
  %v208 = vld [vmem:[%s1 + $0x22c] sm:$0xf]
  %v209 = vld [vmem:[%s1 + $0x230] sm:$0xf]
  %v210 = vld [vmem:[%s1 + $0x234] sm:$0xf]
  %v211 = vld [vmem:[%s1 + $0x238] sm:$0xf]
  %v212 = vld [vmem:[%s1 + $0x23c] sm:$0xf]
  %v213 = vld [vmem:[%s2] sm:$0x1]
  %v215 = vlaneseq
  %v216 = vshrl.u32 %v215, 7
  %v217 = vsub.s32 0, %v216
  %v218 = vrot.slane %v213, %v217
  %v364 = vunpack.c.l.b16 %v69
  %v365 = vunpack.c.l.b16 %v70
  %v366 = vunpack.c.l.b16 %v71
  %v367 = vunpack.c.l.b16 %v72
  %v368 = vunpack.c.l.b16 %v73
  %v369 = vunpack.c.l.b16 %v74
  %v370 = vunpack.c.l.b16 %v75
  %v371 = vunpack.c.l.b16 %v76
  %v372 = vunpack.c.l.b16 %v77
  %v373 = vunpack.c.l.b16 %v78
  %v374 = vunpack.c.l.b16 %v79
  %v375 = vunpack.c.l.b16 %v80
  %v376 = vunpack.c.l.b16 %v81
  %v377 = vunpack.c.l.b16 %v82
  %v378 = vunpack.c.l.b16 %v83
  %v379 = vunpack.c.l.b16 %v84
  %v380 = vunpack.c.l.b16 %v85
  %v381 = vunpack.c.l.b16 %v86
  %v382 = vunpack.c.l.b16 %v87
  %v383 = vunpack.c.l.b16 %v88
  %v384 = vunpack.c.l.b16 %v89
  %v385 = vunpack.c.l.b16 %v90
  %v386 = vunpack.c.l.b16 %v91
  %v387 = vunpack.c.l.b16 %v92
  %v388 = vunpack.c.l.b16 %v93
  %v389 = vunpack.c.l.b16 %v94
  %v390 = vunpack.c.l.b16 %v95
  %v391 = vunpack.c.l.b16 %v96
  %v392 = vunpack.c.l.b16 %v97
  %v393 = vunpack.c.l.b16 %v98
  %v394 = vunpack.c.l.b16 %v99
  %v395 = vunpack.c.l.b16 %v100
  %v396 = vunpack.c.l.b16 %v101
  %v397 = vunpack.c.l.b16 %v102
  %v398 = vunpack.c.l.b16 %v103
  %v399 = vunpack.c.l.b16 %v104
  %v400 = vunpack.c.l.b16 %v105
  %v401 = vunpack.c.l.b16 %v106
  %v402 = vunpack.c.l.b16 %v107
  %v403 = vunpack.c.l.b16 %v108
  %v404 = vunpack.c.l.b16 %v109
  %v405 = vunpack.c.l.b16 %v110
  %v406 = vunpack.c.l.b16 %v111
  %v407 = vunpack.c.l.b16 %v112
  %v408 = vunpack.c.l.b16 %v113
  %v409 = vunpack.c.l.b16 %v114
  %v410 = vunpack.c.l.b16 %v115
  %v411 = vunpack.c.l.b16 %v116
  %v412 = vunpack.c.l.b16 %v117
  %v413 = vunpack.c.l.b16 %v118
  %v414 = vunpack.c.l.b16 %v119
  %v415 = vunpack.c.l.b16 %v120
  %v416 = vunpack.c.l.b16 %v121
  %v417 = vunpack.c.l.b16 %v122
  %v418 = vunpack.c.l.b16 %v123
  %v419 = vunpack.c.l.b16 %v124
  %v420 = vunpack.c.l.b16 %v125
  %v421 = vunpack.c.l.b16 %v126
  %v422 = vunpack.c.l.b16 %v127
  %v423 = vunpack.c.l.b16 %v128
  %v424 = vunpack.c.l.b16 %v129
  %v425 = vunpack.c.l.b16 %v130
  %v426 = vunpack.c.l.b16 %v131
  %v427 = vunpack.c.l.b16 %v132
  %v428 = vunpack.c.l.b16 %v133
  %v429 = vunpack.c.l.b16 %v134
  %v430 = vunpack.c.l.b16 %v135
  %v431 = vunpack.c.l.b16 %v136
  %v432 = vunpack.c.l.b16 %v137
  %v433 = vunpack.c.l.b16 %v138
  %v434 = vunpack.c.l.b16 %v139
  %v435 = vunpack.c.l.b16 %v140
  %v436 = vunpack.c.l.b16 %v141
  %v437 = vunpack.c.l.b16 %v142
  %v438 = vunpack.c.l.b16 %v143
  %v439 = vunpack.c.l.b16 %v144
  %v440 = vunpack.c.l.b16 %v145
  %v441 = vunpack.c.l.b16 %v146
  %v442 = vunpack.c.l.b16 %v147
  %v443 = vunpack.c.l.b16 %v148
  %v444 = vunpack.c.l.b16 %v149
  %v445 = vunpack.c.l.b16 %v150
  %v446 = vunpack.c.l.b16 %v151
  %v447 = vunpack.c.l.b16 %v152
  %v448 = vunpack.c.l.b16 %v153
  %v449 = vunpack.c.l.b16 %v154
  %v450 = vunpack.c.l.b16 %v155
  %v451 = vunpack.c.l.b16 %v156
  %v452 = vunpack.c.l.b16 %v157
  %v453 = vunpack.c.l.b16 %v158
  %v454 = vunpack.c.l.b16 %v159
  %v455 = vunpack.c.l.b16 %v160
  %v456 = vunpack.c.l.b16 %v161
  %v457 = vunpack.c.l.b16 %v162
  %v458 = vunpack.c.l.b16 %v163
  %v459 = vunpack.c.l.b16 %v164
  %v460 = vunpack.c.l.b16 %v165
  %v461 = vunpack.c.l.b16 %v166
  %v462 = vunpack.c.l.b16 %v167
  %v463 = vunpack.c.l.b16 %v168
  %v464 = vunpack.c.l.b16 %v169
  %v465 = vunpack.c.l.b16 %v170
  %v466 = vunpack.c.l.b16 %v171
  %v467 = vunpack.c.l.b16 %v172
  %v468 = vunpack.c.l.b16 %v173
  %v469 = vunpack.c.l.b16 %v174
  %v470 = vunpack.c.l.b16 %v175
  %v471 = vunpack.c.l.b16 %v176
  %v472 = vunpack.c.l.b16 %v177
  %v473 = vunpack.c.l.b16 %v178
  %v474 = vunpack.c.l.b16 %v179
  %v475 = vunpack.c.l.b16 %v180
  %v476 = vunpack.c.l.b16 %v181
  %v477 = vunpack.c.l.b16 %v182
  %v478 = vunpack.c.l.b16 %v183
  %v479 = vunpack.c.l.b16 %v184
  %v480 = vunpack.c.l.b16 %v185
  %v481 = vunpack.c.l.b16 %v186
  %v482 = vunpack.c.l.b16 %v187
  %v483 = vunpack.c.l.b16 %v188
  %v484 = vunpack.c.l.b16 %v189
  %v485 = vunpack.c.l.b16 %v190
  %v486 = vunpack.c.l.b16 %v191
  %v487 = vunpack.c.l.b16 %v192
  %v488 = vunpack.c.l.b16 %v193
  %v489 = vunpack.c.l.b16 %v194
  %v490 = vunpack.c.l.b16 %v195
  %v491 = vunpack.c.l.b16 %v196
  %v492 = vunpack.c.l.b16 %v197
  %v493 = vunpack.c.l.b16 %v198
  %v494 = vunpack.c.l.b16 %v199
  %v495 = vunpack.c.l.b16 %v200
  %v496 = vunpack.c.l.b16 %v201
  %v497 = vunpack.c.l.b16 %v202
  %v498 = vunpack.c.l.b16 %v203
  %v499 = vunpack.c.l.b16 %v204
  %v500 = vunpack.c.l.b16 %v205
  %v501 = vunpack.c.l.b16 %v206
  %v502 = vunpack.c.l.b16 %v207
  %v503 = vunpack.c.l.b16 %v208
  %v504 = vunpack.c.l.b16 %v209
  %v505 = vunpack.c.l.b16 %v210
  %v506 = vunpack.c.l.b16 %v211
  %v507 = vunpack.c.l.b16 %v212
  %v508 = vpack.c.b16 %v365, %v364
  %v509 = vpack.c.b16 %v367, %v366
  %v510 = vpack.c.b16 %v369, %v368
  %v511 = vpack.c.b16 %v371, %v370
  %v512 = vpack.c.b16 %v373, %v372
  %v513 = vpack.c.b16 %v375, %v374
  %v514 = vpack.c.b16 %v377, %v376
  %v515 = vpack.c.b16 %v379, %v378
  %v516 = vpack.c.b16 %v381, %v380
  %v517 = vpack.c.b16 %v383, %v382
  %v518 = vpack.c.b16 %v385, %v384
  %v519 = vpack.c.b16 %v387, %v386
  %v520 = vpack.c.b16 %v389, %v388
  %v521 = vpack.c.b16 %v391, %v390
  %v522 = vpack.c.b16 %v393, %v392
  %v523 = vpack.c.b16 %v395, %v394
  %v524 = vpack.c.b16 %v397, %v396
  %v525 = vpack.c.b16 %v399, %v398
  %v526 = vpack.c.b16 %v401, %v400
  %v527 = vpack.c.b16 %v403, %v402
  %v528 = vpack.c.b16 %v405, %v404
  %v529 = vpack.c.b16 %v407, %v406
  %v530 = vpack.c.b16 %v409, %v408
  %v531 = vpack.c.b16 %v411, %v410
  %v532 = vpack.c.b16 %v413, %v412
  %v533 = vpack.c.b16 %v415, %v414
  %v534 = vpack.c.b16 %v417, %v416
  %v535 = vpack.c.b16 %v419, %v418
  %v536 = vpack.c.b16 %v421, %v420
  %v537 = vpack.c.b16 %v423, %v422
  %v538 = vpack.c.b16 %v425, %v424
  %v539 = vpack.c.b16 %v427, %v426
  %v540 = vpack.c.b16 %v429, %v428
  %v541 = vpack.c.b16 %v431, %v430
  %v542 = vpack.c.b16 %v433, %v432
  %v543 = vpack.c.b16 %v435, %v434
  %v544 = vpack.c.b16 %v437, %v436
  %v545 = vpack.c.b16 %v439, %v438
  %v546 = vpack.c.b16 %v441, %v440
  %v547 = vpack.c.b16 %v443, %v442
  %v548 = vpack.c.b16 %v445, %v444
  %v549 = vpack.c.b16 %v447, %v446
  %v550 = vpack.c.b16 %v449, %v448
  %v551 = vpack.c.b16 %v451, %v450
  %v552 = vpack.c.b16 %v453, %v452
  %v553 = vpack.c.b16 %v455, %v454
  %v554 = vpack.c.b16 %v457, %v456
  %v555 = vpack.c.b16 %v459, %v458
  %v556 = vpack.c.b16 %v461, %v460
  %v557 = vpack.c.b16 %v463, %v462
  %v558 = vpack.c.b16 %v465, %v464
  %v559 = vpack.c.b16 %v467, %v466
  %v560 = vpack.c.b16 %v469, %v468
  %v561 = vpack.c.b16 %v471, %v470
  %v562 = vpack.c.b16 %v473, %v472
  %v563 = vpack.c.b16 %v475, %v474
  %v564 = vpack.c.b16 %v477, %v476
  %v565 = vpack.c.b16 %v479, %v478
  %v566 = vpack.c.b16 %v481, %v480
  %v567 = vpack.c.b16 %v483, %v482
  %v568 = vpack.c.b16 %v485, %v484
  %v569 = vpack.c.b16 %v487, %v486
  %v570 = vpack.c.b16 %v489, %v488
  %v571 = vpack.c.b16 %v491, %v490
  %v572 = vpack.c.b16 %v493, %v492
  %v573 = vpack.c.b16 %v495, %v494
  %v574 = vpack.c.b16 %v497, %v496
  %v575 = vpack.c.b16 %v499, %v498
  %v576 = vpack.c.b16 %v501, %v500
  %v577 = vpack.c.b16 %v503, %v502
  %v578 = vpack.c.b16 %v505, %v504
  %v579 = vpack.c.b16 %v507, %v506
  %652 = vmatprep.subr.bf16.mxu0 0
  %653 = vmatpush1.bf16.msra.mxu0 %v508
  %654 = vmatprep.subr.bf16.mxu0 0
  %655 = vmatpush1.bf16.msra.mxu0 %v509
  %656 = vmatprep.subr.bf16.mxu0 0
  %657 = vmatpush1.bf16.msra.mxu0 %v510
  %658 = vmatprep.subr.bf16.mxu0 0
  %659 = vmatpush1.bf16.msra.mxu0 %v511
  %660 = vmatprep.subr.bf16.mxu0 0
  %661 = vmatpush1.bf16.msra.mxu0 %v512
  %662 = vmatprep.subr.bf16.mxu0 0
  %663 = vmatpush1.bf16.msra.mxu0 %v513
  %664 = vmatprep.subr.bf16.mxu0 0
  %665 = vmatpush1.bf16.msra.mxu0 %v514
  %666 = vmatprep.subr.bf16.mxu0 0
  %667 = vmatpush1.bf16.msra.mxu0 %v515
  %668 = vmatprep.subr.bf16.mxu0 0
  %669 = vmatpush1.bf16.msra.mxu0 %v516
  %670 = vmatprep.subr.bf16.mxu0 0
  %671 = vmatpush1.bf16.msra.mxu0 %v517
  %672 = vmatprep.subr.bf16.mxu0 0
  %673 = vmatpush1.bf16.msra.mxu0 %v518
  %674 = vmatprep.subr.bf16.mxu0 0
  %675 = vmatpush1.bf16.msra.mxu0 %v519
  %676 = vmatprep.subr.bf16.mxu0 0
  %677 = vmatpush1.bf16.msra.mxu0 %v520
  %678 = vmatprep.subr.bf16.mxu0 0
  %679 = vmatpush1.bf16.msra.mxu0 %v521
  %680 = vmatprep.subr.bf16.mxu0 0
  %681 = vmatpush1.bf16.msra.mxu0 %v522
  %682 = vmatprep.subr.bf16.mxu0 0
  %683 = vmatpush1.bf16.msra.mxu0 %v523
  %684 = vmatprep.mubr.bf16.mxu0 %v52
  %685 = vmatmul.mubr.bf16.gmra.mrb[0].mxu0 %v51
  %v686 = vpop.f32.mrb[0].mxu0
  %v687 = vadd.f32 %v218, %v686
  %v688 = vpop.f32.mrb[0].mxu0
  %v689 = vpop.f32.mrb[0].mxu0
  %v690 = vadd.f32 %v218, %v689
  %v691 = vpop.f32.mrb[0].mxu0
  %692 = vmatprep.mubr.bf16.mxu0 %v61
  %693 = vmatmul.mubr.bf16.gmra.mrb[0].mxu0 %v60
  %v694 = vpop.f32.mrb[0].mxu0
  %v695 = vadd.f32 %v218, %v694
  %v696 = vpop.f32.mrb[0].mxu0
  %v697 = vpop.f32.mrb[0].mxu0
  %v698 = vadd.f32 %v218, %v697
  %v699 = vpop.f32.mrb[0].mxu0
  %700 = vdwg.mxu0
  %701 = vmatprep.subr.bf16.mxu0 0
  %702 = vmatpush1.bf16.msra.mxu0 %v524
  %703 = vmatprep.subr.bf16.mxu0 0
  %704 = vmatpush1.bf16.msra.mxu0 %v525
  %705 = vmatprep.subr.bf16.mxu0 0
  %706 = vmatpush1.bf16.msra.mxu0 %v526
  %707 = vmatprep.subr.bf16.mxu0 0
  %708 = vmatpush1.bf16.msra.mxu0 %v527
  %709 = vmatprep.subr.bf16.mxu0 0
  %710 = vmatpush1.bf16.msra.mxu0 %v528
  %711 = vmatprep.subr.bf16.mxu0 0
  %712 = vmatpush1.bf16.msra.mxu0 %v529
  %713 = vmatprep.subr.bf16.mxu0 0
  %714 = vmatpush1.bf16.msra.mxu0 %v530
  %715 = vmatprep.subr.bf16.mxu0 0
  %716 = vmatpush1.bf16.msra.mxu0 %v531
  %717 = vmatprep.subr.bf16.mxu0 0
  %718 = vmatpush1.bf16.msra.mxu0 %v532
  %719 = vmatprep.subr.bf16.mxu0 0
  %720 = vmatpush1.bf16.msra.mxu0 %v533
  %721 = vmatprep.subr.bf16.mxu0 0
  %722 = vmatpush1.bf16.msra.mxu0 %v534
  %723 = vmatprep.subr.bf16.mxu0 0
  %724 = vmatpush1.bf16.msra.mxu0 %v535
  %725 = vmatprep.subr.bf16.mxu0 0
  %726 = vmatpush1.bf16.msra.mxu0 %v536
  %727 = vmatprep.subr.bf16.mxu0 0
  %728 = vmatpush1.bf16.msra.mxu0 %v537
  %729 = vmatprep.subr.bf16.mxu0 0
  %730 = vmatpush1.bf16.msra.mxu0 %v538
  %731 = vmatprep.subr.bf16.mxu0 0
  %732 = vmatpush1.bf16.msra.mxu0 %v539
  %733 = vmatprep.mubr.bf16.mxu0 %v54
  %734 = vmatmul.mubr.bf16.gmra.mrb[0].mxu0 %v53
  %v735 = vpop.f32.mrb[0].mxu0
  %v736 = vadd.f32 %v687, %v735
  %v737 = vpop.f32.mrb[0].mxu0
  %v738 = vpop.f32.mrb[0].mxu0
  %v739 = vadd.f32 %v690, %v738
  %v740 = vpop.f32.mrb[0].mxu0
  %741 = vmatprep.mubr.bf16.mxu0 %v63
  %742 = vmatmul.mubr.bf16.gmra.mrb[0].mxu0 %v62
  %v743 = vpop.f32.mrb[0].mxu0
  %v744 = vadd.f32 %v695, %v743
  %v745 = vpop.f32.mrb[0].mxu0
  %v746 = vpop.f32.mrb[0].mxu0
  %v747 = vadd.f32 %v698, %v746
  %v748 = vpop.f32.mrb[0].mxu0
  %749 = vdwg.mxu0
  %750 = vmatprep.subr.bf16.mxu0 0
  %751 = vmatpush1.bf16.msra.mxu0 %v540
  %752 = vmatprep.subr.bf16.mxu0 0
  %753 = vmatpush1.bf16.msra.mxu0 %v541
  %754 = vmatprep.subr.bf16.mxu0 0
  %755 = vmatpush1.bf16.msra.mxu0 %v542
  %756 = vmatprep.subr.bf16.mxu0 0
  %757 = vmatpush1.bf16.msra.mxu0 %v543
  %758 = vmatprep.subr.bf16.mxu0 0
  %759 = vmatpush1.bf16.msra.mxu0 %v544
  %760 = vmatprep.subr.bf16.mxu0 0
  %761 = vmatpush1.bf16.msra.mxu0 %v545
  %762 = vmatprep.subr.bf16.mxu0 0
  %763 = vmatpush1.bf16.msra.mxu0 %v546
  %764 = vmatprep.subr.bf16.mxu0 0
  %765 = vmatpush1.bf16.msra.mxu0 %v547
  %766 = vmatprep.subr.bf16.mxu0 0
  %767 = vmatpush1.bf16.msra.mxu0 %v548
  %768 = vmatprep.subr.bf16.mxu0 0
  %769 = vmatpush1.bf16.msra.mxu0 %v549
  %770 = vmatprep.subr.bf16.mxu0 0
  %771 = vmatpush1.bf16.msra.mxu0 %v550
  %772 = vmatprep.subr.bf16.mxu0 0
  %773 = vmatpush1.bf16.msra.mxu0 %v551
  %774 = vmatprep.subr.bf16.mxu0 0
  %775 = vmatpush1.bf16.msra.mxu0 %v552
  %776 = vmatprep.subr.bf16.mxu0 0
  %777 = vmatpush1.bf16.msra.mxu0 %v553
  %778 = vmatprep.subr.bf16.mxu0 0
  %779 = vmatpush1.bf16.msra.mxu0 %v554
  %780 = vmatprep.subr.bf16.mxu0 0
  %781 = vmatpush1.bf16.msra.mxu0 %v555
  %782 = vmatprep.mubr.bf16.mxu0 %v56
  %783 = vmatmul.mubr.bf16.gmra.mrb[0].mxu0 %v55
  %v784 = vpop.f32.mrb[0].mxu0
  %v785 = vadd.f32 %v736, %v784
  %v786 = vpop.f32.mrb[0].mxu0
  %v787 = vpop.f32.mrb[0].mxu0
  %v788 = vadd.f32 %v739, %v787
  %v789 = vpop.f32.mrb[0].mxu0
  %790 = vmatprep.mubr.bf16.mxu0 %v65
  %791 = vmatmul.mubr.bf16.gmra.mrb[0].mxu0 %v64
  %v792 = vpop.f32.mrb[0].mxu0
  %v793 = vadd.f32 %v744, %v792
  %v794 = vpop.f32.mrb[0].mxu0
  %v795 = vpop.f32.mrb[0].mxu0
  %v796 = vadd.f32 %v747, %v795
  %v797 = vpop.f32.mrb[0].mxu0
  %798 = vdwg.mxu0
  %799 = vmatprep.subr.bf16.mxu0 0
  %800 = vmatpush1.bf16.msra.mxu0 %v556
  %801 = vmatprep.subr.bf16.mxu0 0
  %802 = vmatpush1.bf16.msra.mxu0 %v557
  %803 = vmatprep.subr.bf16.mxu0 0
  %804 = vmatpush1.bf16.msra.mxu0 %v558
  %805 = vmatprep.subr.bf16.mxu0 0
  %806 = vmatpush1.bf16.msra.mxu0 %v559
  %807 = vmatprep.subr.bf16.mxu0 0
  %808 = vmatpush1.bf16.msra.mxu0 %v560
  %809 = vmatprep.subr.bf16.mxu0 0
  %810 = vmatpush1.bf16.msra.mxu0 %v561
  %811 = vmatprep.subr.bf16.mxu0 0
  %812 = vmatpush1.bf16.msra.mxu0 %v562
  %813 = vmatprep.subr.bf16.mxu0 0
  %814 = vmatpush1.bf16.msra.mxu0 %v563
  %815 = vmatprep.subr.bf16.mxu0 0
  %816 = vmatpush1.bf16.msra.mxu0 %v564
  %817 = vmatprep.subr.bf16.mxu0 0
  %818 = vmatpush1.bf16.msra.mxu0 %v565
  %819 = vmatprep.subr.bf16.mxu0 0
  %820 = vmatpush1.bf16.msra.mxu0 %v566
  %821 = vmatprep.subr.bf16.mxu0 0
  %822 = vmatpush1.bf16.msra.mxu0 %v567
  %823 = vmatprep.subr.bf16.mxu0 0
  %824 = vmatpush1.bf16.msra.mxu0 %v568
  %825 = vmatprep.subr.bf16.mxu0 0
  %826 = vmatpush1.bf16.msra.mxu0 %v569
  %827 = vmatprep.subr.bf16.mxu0 0
  %828 = vmatpush1.bf16.msra.mxu0 %v570
  %829 = vmatprep.subr.bf16.mxu0 0
  %830 = vmatpush1.bf16.msra.mxu0 %v571
  %831 = vmatprep.mubr.bf16.mxu0 %v58
  %832 = vmatmul.mubr.bf16.gmra.mrb[0].mxu0 %v57
  %v833 = vpop.f32.mrb[0].mxu0
  %v834 = vadd.f32 %v785, %v833
  %v835 = vpop.f32.mrb[0].mxu0
  %v836 = vpop.f32.mrb[0].mxu0
  %v837 = vadd.f32 %v788, %v836
  %v838 = vpop.f32.mrb[0].mxu0
  %839 = vmatprep.mubr.bf16.mxu0 %v67
  %840 = vmatmul.mubr.bf16.gmra.mrb[0].mxu0 %v66
  %v841 = vpop.f32.mrb[0].mxu0
  %v842 = vadd.f32 %v793, %v841
  %v843 = vpop.f32.mrb[0].mxu0
  %v844 = vpop.f32.mrb[0].mxu0
  %v845 = vadd.f32 %v796, %v844
  %v846 = vpop.f32.mrb[0].mxu0
  %847 = vdwg.mxu0
  %848 = vmatprep.subr.bf16.mxu0 0
  %849 = vmatpush1.bf16.msra.mxu0 %v572
  %850 = vmatprep.subr.bf16.mxu0 0
  %851 = vmatpush1.bf16.msra.mxu0 %v573
  %852 = vmatprep.subr.bf16.mxu0 0
  %853 = vmatpush1.bf16.msra.mxu0 %v574
  %854 = vmatprep.subr.bf16.mxu0 0
  %855 = vmatpush1.bf16.msra.mxu0 %v575
  %856 = vmatprep.subr.bf16.mxu0 0
  %857 = vmatpush1.bf16.msra.mxu0 %v576
  %858 = vmatprep.subr.bf16.mxu0 0
  %859 = vmatpush1.bf16.msra.mxu0 %v577
  %860 = vmatprep.subr.bf16.mxu0 0
  %861 = vmatpush1.bf16.msra.mxu0 %v578
  %862 = vmatprep.subr.bf16.mxu0 0
  %863 = vmatpush1.bf16.msra.mxu0 %v579
  %864 = vmatprep.subr.bf16.mxu0 0
  %865 = vmatpush1.bf16.msra.mxu0 0
  %866 = vmatprep.subr.bf16.mxu0 0
  %867 = vmatpush1.bf16.msra.mxu0 0
  %868 = vmatprep.subr.bf16.mxu0 0
  %869 = vmatpush1.bf16.msra.mxu0 0
  %870 = vmatprep.subr.bf16.mxu0 0
  %871 = vmatpush1.bf16.msra.mxu0 0
  %872 = vmatprep.subr.bf16.mxu0 0
  %873 = vmatpush1.bf16.msra.mxu0 0
  %874 = vmatprep.subr.bf16.mxu0 0
  %875 = vmatpush1.bf16.msra.mxu0 0
  %876 = vmatprep.subr.bf16.mxu0 0
  %877 = vmatpush1.bf16.msra.mxu0 0
  %878 = vmatprep.subr.bf16.mxu0 0
  %879 = vmatpush1.bf16.msra.mxu0 0
  %880 = vmatprep.mubr.bf16.mxu0 0
  %881 = vmatmul.mubr.bf16.gmra.mrb[0].mxu0 %v59
  %v882 = vpop.f32.mrb[0].mxu0
  %v883 = vadd.f32 %v834, %v882
  %v884 = vpop.f32.mrb[0].mxu0
  %v885 = vpop.f32.mrb[0].mxu0
  %v886 = vadd.f32 %v837, %v885
  %v887 = vpop.f32.mrb[0].mxu0
  %888 = vmatprep.mubr.bf16.mxu0 0
  %889 = vmatmul.mubr.bf16.gmra.mrb[0].mxu0 %v68
  %v890 = vpop.f32.mrb[0].mxu0
  %v891 = vadd.f32 %v842, %v890
  %v892 = vpop.f32.mrb[0].mxu0
  %v893 = vpop.f32.mrb[0].mxu0
  %v894 = vadd.f32 %v845, %v893
  %v895 = vpop.f32.mrb[0].mxu0
  %896 = vdwg.mxu0
  %v897 = vmax.f32 %v883, 0.0
  %v898 = vmax.f32 %v886, 0.0
  %v899 = vmax.f32 %v891, 0.0
  %v900 = vmax.f32 %v894, 0.0
  %901 = vst [vmem:[%s3] sm:$0xff] %v897
  %902 = vst [vmem:[%s3 + $0x8] sm:$0xff] %v898
  %903 = vst [vmem:[%s3 + $0x10] sm:$0xff] %v899
  %904 = vst [vmem:[%s3 + $0x18] sm:$0xff] %v900
  // Predicated region
  $region14: #{seg_discriminator_forward.10} parent=0 // pred_check
    _
  $region15: #{seg_discriminator_forward.10} parent=0 // pred_check_branch
    %906 = sbr.rel (0) target = $region17
  $region16: #{seg_discriminator_forward.10} parent=0 // pred_region
    _
  $region17: #{seg_discriminator_forward.10} parent=0 // pred_fallthru
    _
  // Predicated region
  $region18: #{seg_discriminator_forward.10} parent=0 // pred_check
    _
  $region19: #{seg_discriminator_forward.10} parent=0 // pred_check_branch
    %908 = sbr.rel (0) target = $region21
  $region20: #{seg_discriminator_forward.10} parent=0 // pred_region
    _
  $region21: #{seg_discriminator_forward.10} parent=0 // pred_fallthru
    _

// kernel: seg_discriminator_forward.11
$region0: #{seg_discriminator_forward.11}
  #allocation0 [shape = 'u32[]', space=smem, size = 0x4, offset = 0x4, fixed_abs, tag = 'smem constant byte address 0x4 - core index']
  #allocation1 [shape = 'u32[144,128]{1,0:T(1,128)}', space=vmem, size = 0x12000, scoped, tag = 'internal scratch']
  %s0 = inlined_call_operand.vmem [shape: f32[8,1152], index: 0, kind: input, shape index: {}]
  %s1 = inlined_call_operand.vmem [shape: bf16[1152,128], index: 1, kind: input, shape index: {}]
  %s2 = inlined_call_operand.vmem [shape: f32[1,128], index: 2, kind: input, shape index: {}]
  %s3 = inlined_call_operand.vmem [shape: f32[8,128], index: 3, kind: output, shape index: {}]
  %s4 = sld [smem:[#allocation0]]
  $region22: #{seg_discriminator_forward.11} parent=0
    _
  %s6 = ssub.s32 1, %s4
  %s7 = scalar_select 0, %s6, %s4
  // Predicated region
  $region2: #{seg_discriminator_forward.11} parent=0 // pred_check
    _
  $region3: #{seg_discriminator_forward.11} parent=0 // pred_check_branch
    %9 = sbr.rel (0) target = $region5
  $region4: #{seg_discriminator_forward.11} parent=0 // pred_region
    _
  $region5: #{seg_discriminator_forward.11} parent=0 // pred_fallthru
    _
  // Predicated region
  $region6: #{seg_discriminator_forward.11} parent=0 // pred_check
    _
  $region7: #{seg_discriminator_forward.11} parent=0 // pred_check_branch
    %11 = sbr.rel (0) target = $region9
  $region8: #{seg_discriminator_forward.11} parent=0 // pred_region
    _
  $region9: #{seg_discriminator_forward.11} parent=0 // pred_fallthru
    _
  // Predicated region
  $region10: #{seg_discriminator_forward.11} parent=0 // pred_check
    _
  $region11: #{seg_discriminator_forward.11} parent=0 // pred_check_branch
    %13 = sbr.rel (0) target = $region13
  $region12: #{seg_discriminator_forward.11} parent=0 // pred_region
    _
  $region13: #{seg_discriminator_forward.11} parent=0 // pred_fallthru
    _
  %v15 = vld [vmem:[%s0] sm:$0xff]
  %v16 = vld [vmem:[%s0 + $0x8] sm:$0xff]
  %v17 = vld [vmem:[%s0 + $0x10] sm:$0xff]
  %v18 = vld [vmem:[%s0 + $0x18] sm:$0xff]
  %v19 = vld [vmem:[%s0 + $0x20] sm:$0xff]
  %v20 = vld [vmem:[%s0 + $0x28] sm:$0xff]
  %v21 = vld [vmem:[%s0 + $0x30] sm:$0xff]
  %v22 = vld [vmem:[%s0 + $0x38] sm:$0xff]
  %v23 = vld [vmem:[%s0 + $0x40] sm:$0xff]
  %v24 = vpack.c.bf16 %v15, %v15
  %v25 = vpack.c.bf16 %v16, %v16
  %v26 = vpack.c.bf16 %v17, %v17
  %v27 = vpack.c.bf16 %v18, %v18
  %v28 = vpack.c.bf16 %v19, %v19
  %v29 = vpack.c.bf16 %v20, %v20
  %v30 = vpack.c.bf16 %v21, %v21
  %v31 = vpack.c.bf16 %v22, %v22
  %v32 = vpack.c.bf16 %v23, %v23
  %v33 = vld [vmem:[%s1] sm:$0xf]
  %v34 = vld [vmem:[%s1 + $0x4] sm:$0xf]
  %v35 = vld [vmem:[%s1 + $0x8] sm:$0xf]
  %v36 = vld [vmem:[%s1 + $0xc] sm:$0xf]
  %v37 = vld [vmem:[%s1 + $0x10] sm:$0xf]
  %v38 = vld [vmem:[%s1 + $0x14] sm:$0xf]
  %v39 = vld [vmem:[%s1 + $0x18] sm:$0xf]
  %v40 = vld [vmem:[%s1 + $0x1c] sm:$0xf]
  %v41 = vld [vmem:[%s1 + $0x20] sm:$0xf]
  %v42 = vld [vmem:[%s1 + $0x24] sm:$0xf]
  %v43 = vld [vmem:[%s1 + $0x28] sm:$0xf]
  %v44 = vld [vmem:[%s1 + $0x2c] sm:$0xf]
  %v45 = vld [vmem:[%s1 + $0x30] sm:$0xf]
  %v46 = vld [vmem:[%s1 + $0x34] sm:$0xf]
  %v47 = vld [vmem:[%s1 + $0x38] sm:$0xf]
  %v48 = vld [vmem:[%s1 + $0x3c] sm:$0xf]
  %v49 = vld [vmem:[%s1 + $0x40] sm:$0xf]
  %v50 = vld [vmem:[%s1 + $0x44] sm:$0xf]
  %v51 = vld [vmem:[%s1 + $0x48] sm:$0xf]
  %v52 = vld [vmem:[%s1 + $0x4c] sm:$0xf]
  %v53 = vld [vmem:[%s1 + $0x50] sm:$0xf]
  %v54 = vld [vmem:[%s1 + $0x54] sm:$0xf]
  %v55 = vld [vmem:[%s1 + $0x58] sm:$0xf]
  %v56 = vld [vmem:[%s1 + $0x5c] sm:$0xf]
  %v57 = vld [vmem:[%s1 + $0x60] sm:$0xf]
  %v58 = vld [vmem:[%s1 + $0x64] sm:$0xf]
  %v59 = vld [vmem:[%s1 + $0x68] sm:$0xf]
  %v60 = vld [vmem:[%s1 + $0x6c] sm:$0xf]
  %v61 = vld [vmem:[%s1 + $0x70] sm:$0xf]
  %v62 = vld [vmem:[%s1 + $0x74] sm:$0xf]
  %v63 = vld [vmem:[%s1 + $0x78] sm:$0xf]
  %v64 = vld [vmem:[%s1 + $0x7c] sm:$0xf]
  %v65 = vld [vmem:[%s1 + $0x80] sm:$0xf]
  %v66 = vld [vmem:[%s1 + $0x84] sm:$0xf]
  %v67 = vld [vmem:[%s1 + $0x88] sm:$0xf]
  %v68 = vld [vmem:[%s1 + $0x8c] sm:$0xf]
  %v69 = vld [vmem:[%s1 + $0x90] sm:$0xf]
  %v70 = vld [vmem:[%s1 + $0x94] sm:$0xf]
  %v71 = vld [vmem:[%s1 + $0x98] sm:$0xf]
  %v72 = vld [vmem:[%s1 + $0x9c] sm:$0xf]
  %v73 = vld [vmem:[%s1 + $0xa0] sm:$0xf]
  %v74 = vld [vmem:[%s1 + $0xa4] sm:$0xf]
  %v75 = vld [vmem:[%s1 + $0xa8] sm:$0xf]
  %v76 = vld [vmem:[%s1 + $0xac] sm:$0xf]
  %v77 = vld [vmem:[%s1 + $0xb0] sm:$0xf]
  %v78 = vld [vmem:[%s1 + $0xb4] sm:$0xf]
  %v79 = vld [vmem:[%s1 + $0xb8] sm:$0xf]
  %v80 = vld [vmem:[%s1 + $0xbc] sm:$0xf]
  %v81 = vld [vmem:[%s1 + $0xc0] sm:$0xf]
  %v82 = vld [vmem:[%s1 + $0xc4] sm:$0xf]
  %v83 = vld [vmem:[%s1 + $0xc8] sm:$0xf]
  %v84 = vld [vmem:[%s1 + $0xcc] sm:$0xf]
  %v85 = vld [vmem:[%s1 + $0xd0] sm:$0xf]
  %v86 = vld [vmem:[%s1 + $0xd4] sm:$0xf]
  %v87 = vld [vmem:[%s1 + $0xd8] sm:$0xf]
  %v88 = vld [vmem:[%s1 + $0xdc] sm:$0xf]
  %v89 = vld [vmem:[%s1 + $0xe0] sm:$0xf]
  %v90 = vld [vmem:[%s1 + $0xe4] sm:$0xf]
  %v91 = vld [vmem:[%s1 + $0xe8] sm:$0xf]
  %v92 = vld [vmem:[%s1 + $0xec] sm:$0xf]
  %v93 = vld [vmem:[%s1 + $0xf0] sm:$0xf]
  %v94 = vld [vmem:[%s1 + $0xf4] sm:$0xf]
  %v95 = vld [vmem:[%s1 + $0xf8] sm:$0xf]
  %v96 = vld [vmem:[%s1 + $0xfc] sm:$0xf]
  %v97 = vld [vmem:[%s1 + $0x100] sm:$0xf]
  %v98 = vld [vmem:[%s1 + $0x104] sm:$0xf]
  %v99 = vld [vmem:[%s1 + $0x108] sm:$0xf]
  %v100 = vld [vmem:[%s1 + $0x10c] sm:$0xf]
  %v101 = vld [vmem:[%s1 + $0x110] sm:$0xf]
  %v102 = vld [vmem:[%s1 + $0x114] sm:$0xf]
  %v103 = vld [vmem:[%s1 + $0x118] sm:$0xf]
  %v104 = vld [vmem:[%s1 + $0x11c] sm:$0xf]
  %v105 = vld [vmem:[%s1 + $0x120] sm:$0xf]
  %v106 = vld [vmem:[%s1 + $0x124] sm:$0xf]
  %v107 = vld [vmem:[%s1 + $0x128] sm:$0xf]
  %v108 = vld [vmem:[%s1 + $0x12c] sm:$0xf]
  %v109 = vld [vmem:[%s1 + $0x130] sm:$0xf]
  %v110 = vld [vmem:[%s1 + $0x134] sm:$0xf]
  %v111 = vld [vmem:[%s1 + $0x138] sm:$0xf]
  %v112 = vld [vmem:[%s1 + $0x13c] sm:$0xf]
  %v113 = vld [vmem:[%s1 + $0x140] sm:$0xf]
  %v114 = vld [vmem:[%s1 + $0x144] sm:$0xf]
  %v115 = vld [vmem:[%s1 + $0x148] sm:$0xf]
  %v116 = vld [vmem:[%s1 + $0x14c] sm:$0xf]
  %v117 = vld [vmem:[%s1 + $0x150] sm:$0xf]
  %v118 = vld [vmem:[%s1 + $0x154] sm:$0xf]
  %v119 = vld [vmem:[%s1 + $0x158] sm:$0xf]
  %v120 = vld [vmem:[%s1 + $0x15c] sm:$0xf]
  %v121 = vld [vmem:[%s1 + $0x160] sm:$0xf]
  %v122 = vld [vmem:[%s1 + $0x164] sm:$0xf]
  %v123 = vld [vmem:[%s1 + $0x168] sm:$0xf]
  %v124 = vld [vmem:[%s1 + $0x16c] sm:$0xf]
  %v125 = vld [vmem:[%s1 + $0x170] sm:$0xf]
  %v126 = vld [vmem:[%s1 + $0x174] sm:$0xf]
  %v127 = vld [vmem:[%s1 + $0x178] sm:$0xf]
  %v128 = vld [vmem:[%s1 + $0x17c] sm:$0xf]
  %v129 = vld [vmem:[%s1 + $0x180] sm:$0xf]
  %v130 = vld [vmem:[%s1 + $0x184] sm:$0xf]
  %v131 = vld [vmem:[%s1 + $0x188] sm:$0xf]
  %v132 = vld [vmem:[%s1 + $0x18c] sm:$0xf]
  %v133 = vld [vmem:[%s1 + $0x190] sm:$0xf]
  %v134 = vld [vmem:[%s1 + $0x194] sm:$0xf]
  %v135 = vld [vmem:[%s1 + $0x198] sm:$0xf]
  %v136 = vld [vmem:[%s1 + $0x19c] sm:$0xf]
  %v137 = vld [vmem:[%s1 + $0x1a0] sm:$0xf]
  %v138 = vld [vmem:[%s1 + $0x1a4] sm:$0xf]
  %v139 = vld [vmem:[%s1 + $0x1a8] sm:$0xf]
  %v140 = vld [vmem:[%s1 + $0x1ac] sm:$0xf]
  %v141 = vld [vmem:[%s1 + $0x1b0] sm:$0xf]
  %v142 = vld [vmem:[%s1 + $0x1b4] sm:$0xf]
  %v143 = vld [vmem:[%s1 + $0x1b8] sm:$0xf]
  %v144 = vld [vmem:[%s1 + $0x1bc] sm:$0xf]
  %v145 = vld [vmem:[%s1 + $0x1c0] sm:$0xf]
  %v146 = vld [vmem:[%s1 + $0x1c4] sm:$0xf]
  %v147 = vld [vmem:[%s1 + $0x1c8] sm:$0xf]
  %v148 = vld [vmem:[%s1 + $0x1cc] sm:$0xf]
  %v149 = vld [vmem:[%s1 + $0x1d0] sm:$0xf]
  %v150 = vld [vmem:[%s1 + $0x1d4] sm:$0xf]
  %v151 = vld [vmem:[%s1 + $0x1d8] sm:$0xf]
  %v152 = vld [vmem:[%s1 + $0x1dc] sm:$0xf]
  %v153 = vld [vmem:[%s1 + $0x1e0] sm:$0xf]
  %v154 = vld [vmem:[%s1 + $0x1e4] sm:$0xf]
  %v155 = vld [vmem:[%s1 + $0x1e8] sm:$0xf]
  %v156 = vld [vmem:[%s1 + $0x1ec] sm:$0xf]
  %v157 = vld [vmem:[%s1 + $0x1f0] sm:$0xf]
  %v158 = vld [vmem:[%s1 + $0x1f4] sm:$0xf]
  %v159 = vld [vmem:[%s1 + $0x1f8] sm:$0xf]
  %v160 = vld [vmem:[%s1 + $0x1fc] sm:$0xf]
  %v161 = vld [vmem:[%s1 + $0x200] sm:$0xf]
  %v162 = vld [vmem:[%s1 + $0x204] sm:$0xf]
  %v163 = vld [vmem:[%s1 + $0x208] sm:$0xf]
  %v164 = vld [vmem:[%s1 + $0x20c] sm:$0xf]
  %v165 = vld [vmem:[%s1 + $0x210] sm:$0xf]
  %v166 = vld [vmem:[%s1 + $0x214] sm:$0xf]
  %v167 = vld [vmem:[%s1 + $0x218] sm:$0xf]
  %v168 = vld [vmem:[%s1 + $0x21c] sm:$0xf]
  %v169 = vld [vmem:[%s1 + $0x220] sm:$0xf]
  %v170 = vld [vmem:[%s1 + $0x224] sm:$0xf]
  %v171 = vld [vmem:[%s1 + $0x228] sm:$0xf]
  %v172 = vld [vmem:[%s1 + $0x22c] sm:$0xf]
  %v173 = vld [vmem:[%s1 + $0x230] sm:$0xf]
  %v174 = vld [vmem:[%s1 + $0x234] sm:$0xf]
  %v175 = vld [vmem:[%s1 + $0x238] sm:$0xf]
  %v176 = vld [vmem:[%s1 + $0x23c] sm:$0xf]
  %v177 = vld [vmem:[%s2] sm:$0x1]
  %v179 = vlaneseq
  %v180 = vshrl.u32 %v179, 7
  %v181 = vsub.s32 0, %v180
  %v182 = vrot.slane %v177, %v181
  %v328 = vunpack.c.l.b16 %v33
  %v329 = vunpack.c.l.b16 %v34
  %v330 = vunpack.c.l.b16 %v35
  %v331 = vunpack.c.l.b16 %v36
  %v332 = vunpack.c.l.b16 %v37
  %v333 = vunpack.c.l.b16 %v38
  %v334 = vunpack.c.l.b16 %v39
  %v335 = vunpack.c.l.b16 %v40
  %v336 = vunpack.c.l.b16 %v41
  %v337 = vunpack.c.l.b16 %v42
  %v338 = vunpack.c.l.b16 %v43
  %v339 = vunpack.c.l.b16 %v44
  %v340 = vunpack.c.l.b16 %v45
  %v341 = vunpack.c.l.b16 %v46
  %v342 = vunpack.c.l.b16 %v47
  %v343 = vunpack.c.l.b16 %v48
  %v344 = vunpack.c.l.b16 %v49
  %v345 = vunpack.c.l.b16 %v50
  %v346 = vunpack.c.l.b16 %v51
  %v347 = vunpack.c.l.b16 %v52
  %v348 = vunpack.c.l.b16 %v53
  %v349 = vunpack.c.l.b16 %v54
  %v350 = vunpack.c.l.b16 %v55
  %v351 = vunpack.c.l.b16 %v56
  %v352 = vunpack.c.l.b16 %v57
  %v353 = vunpack.c.l.b16 %v58
  %v354 = vunpack.c.l.b16 %v59
  %v355 = vunpack.c.l.b16 %v60
  %v356 = vunpack.c.l.b16 %v61
  %v357 = vunpack.c.l.b16 %v62
  %v358 = vunpack.c.l.b16 %v63
  %v359 = vunpack.c.l.b16 %v64
  %v360 = vunpack.c.l.b16 %v65
  %v361 = vunpack.c.l.b16 %v66
  %v362 = vunpack.c.l.b16 %v67
  %v363 = vunpack.c.l.b16 %v68
  %v364 = vunpack.c.l.b16 %v69
  %v365 = vunpack.c.l.b16 %v70
  %v366 = vunpack.c.l.b16 %v71
  %v367 = vunpack.c.l.b16 %v72
  %v368 = vunpack.c.l.b16 %v73
  %v369 = vunpack.c.l.b16 %v74
  %v370 = vunpack.c.l.b16 %v75
  %v371 = vunpack.c.l.b16 %v76
  %v372 = vunpack.c.l.b16 %v77
  %v373 = vunpack.c.l.b16 %v78
  %v374 = vunpack.c.l.b16 %v79
  %v375 = vunpack.c.l.b16 %v80
  %v376 = vunpack.c.l.b16 %v81
  %v377 = vunpack.c.l.b16 %v82
  %v378 = vunpack.c.l.b16 %v83
  %v379 = vunpack.c.l.b16 %v84
  %v380 = vunpack.c.l.b16 %v85
  %v381 = vunpack.c.l.b16 %v86
  %v382 = vunpack.c.l.b16 %v87
  %v383 = vunpack.c.l.b16 %v88
  %v384 = vunpack.c.l.b16 %v89
  %v385 = vunpack.c.l.b16 %v90
  %v386 = vunpack.c.l.b16 %v91
  %v387 = vunpack.c.l.b16 %v92
  %v388 = vunpack.c.l.b16 %v93
  %v389 = vunpack.c.l.b16 %v94
  %v390 = vunpack.c.l.b16 %v95
  %v391 = vunpack.c.l.b16 %v96
  %v392 = vunpack.c.l.b16 %v97
  %v393 = vunpack.c.l.b16 %v98
  %v394 = vunpack.c.l.b16 %v99
  %v395 = vunpack.c.l.b16 %v100
  %v396 = vunpack.c.l.b16 %v101
  %v397 = vunpack.c.l.b16 %v102
  %v398 = vunpack.c.l.b16 %v103
  %v399 = vunpack.c.l.b16 %v104
  %v400 = vunpack.c.l.b16 %v105
  %v401 = vunpack.c.l.b16 %v106
  %v402 = vunpack.c.l.b16 %v107
  %v403 = vunpack.c.l.b16 %v108
  %v404 = vunpack.c.l.b16 %v109
  %v405 = vunpack.c.l.b16 %v110
  %v406 = vunpack.c.l.b16 %v111
  %v407 = vunpack.c.l.b16 %v112
  %v408 = vunpack.c.l.b16 %v113
  %v409 = vunpack.c.l.b16 %v114
  %v410 = vunpack.c.l.b16 %v115
  %v411 = vunpack.c.l.b16 %v116
  %v412 = vunpack.c.l.b16 %v117
  %v413 = vunpack.c.l.b16 %v118
  %v414 = vunpack.c.l.b16 %v119
  %v415 = vunpack.c.l.b16 %v120
  %v416 = vunpack.c.l.b16 %v121
  %v417 = vunpack.c.l.b16 %v122
  %v418 = vunpack.c.l.b16 %v123
  %v419 = vunpack.c.l.b16 %v124
  %v420 = vunpack.c.l.b16 %v125
  %v421 = vunpack.c.l.b16 %v126
  %v422 = vunpack.c.l.b16 %v127
  %v423 = vunpack.c.l.b16 %v128
  %v424 = vunpack.c.l.b16 %v129
  %v425 = vunpack.c.l.b16 %v130
  %v426 = vunpack.c.l.b16 %v131
  %v427 = vunpack.c.l.b16 %v132
  %v428 = vunpack.c.l.b16 %v133
  %v429 = vunpack.c.l.b16 %v134
  %v430 = vunpack.c.l.b16 %v135
  %v431 = vunpack.c.l.b16 %v136
  %v432 = vunpack.c.l.b16 %v137
  %v433 = vunpack.c.l.b16 %v138
  %v434 = vunpack.c.l.b16 %v139
  %v435 = vunpack.c.l.b16 %v140
  %v436 = vunpack.c.l.b16 %v141
  %v437 = vunpack.c.l.b16 %v142
  %v438 = vunpack.c.l.b16 %v143
  %v439 = vunpack.c.l.b16 %v144
  %v440 = vunpack.c.l.b16 %v145
  %v441 = vunpack.c.l.b16 %v146
  %v442 = vunpack.c.l.b16 %v147
  %v443 = vunpack.c.l.b16 %v148
  %v444 = vunpack.c.l.b16 %v149
  %v445 = vunpack.c.l.b16 %v150
  %v446 = vunpack.c.l.b16 %v151
  %v447 = vunpack.c.l.b16 %v152
  %v448 = vunpack.c.l.b16 %v153
  %v449 = vunpack.c.l.b16 %v154
  %v450 = vunpack.c.l.b16 %v155
  %v451 = vunpack.c.l.b16 %v156
  %v452 = vunpack.c.l.b16 %v157
  %v453 = vunpack.c.l.b16 %v158
  %v454 = vunpack.c.l.b16 %v159
  %v455 = vunpack.c.l.b16 %v160
  %v456 = vunpack.c.l.b16 %v161
  %v457 = vunpack.c.l.b16 %v162
  %v458 = vunpack.c.l.b16 %v163
  %v459 = vunpack.c.l.b16 %v164
  %v460 = vunpack.c.l.b16 %v165
  %v461 = vunpack.c.l.b16 %v166
  %v462 = vunpack.c.l.b16 %v167
  %v463 = vunpack.c.l.b16 %v168
  %v464 = vunpack.c.l.b16 %v169
  %v465 = vunpack.c.l.b16 %v170
  %v466 = vunpack.c.l.b16 %v171
  %v467 = vunpack.c.l.b16 %v172
  %v468 = vunpack.c.l.b16 %v173
  %v469 = vunpack.c.l.b16 %v174
  %v470 = vunpack.c.l.b16 %v175
  %v471 = vunpack.c.l.b16 %v176
  %v472 = vpack.c.b16 %v329, %v328
  %v473 = vpack.c.b16 %v331, %v330
  %v474 = vpack.c.b16 %v333, %v332
  %v475 = vpack.c.b16 %v335, %v334
  %v476 = vpack.c.b16 %v337, %v336
  %v477 = vpack.c.b16 %v339, %v338
  %v478 = vpack.c.b16 %v341, %v340
  %v479 = vpack.c.b16 %v343, %v342
  %v480 = vpack.c.b16 %v345, %v344
  %v481 = vpack.c.b16 %v347, %v346
  %v482 = vpack.c.b16 %v349, %v348
  %v483 = vpack.c.b16 %v351, %v350
  %v484 = vpack.c.b16 %v353, %v352
  %v485 = vpack.c.b16 %v355, %v354
  %v486 = vpack.c.b16 %v357, %v356
  %v487 = vpack.c.b16 %v359, %v358
  %v488 = vpack.c.b16 %v361, %v360
  %v489 = vpack.c.b16 %v363, %v362
  %v490 = vpack.c.b16 %v365, %v364
  %v491 = vpack.c.b16 %v367, %v366
  %v492 = vpack.c.b16 %v369, %v368
  %v493 = vpack.c.b16 %v371, %v370
  %v494 = vpack.c.b16 %v373, %v372
  %v495 = vpack.c.b16 %v375, %v374
  %v496 = vpack.c.b16 %v377, %v376
  %v497 = vpack.c.b16 %v379, %v378
  %v498 = vpack.c.b16 %v381, %v380
  %v499 = vpack.c.b16 %v383, %v382
  %v500 = vpack.c.b16 %v385, %v384
  %v501 = vpack.c.b16 %v387, %v386
  %v502 = vpack.c.b16 %v389, %v388
  %v503 = vpack.c.b16 %v391, %v390
  %v504 = vpack.c.b16 %v393, %v392
  %v505 = vpack.c.b16 %v395, %v394
  %v506 = vpack.c.b16 %v397, %v396
  %v507 = vpack.c.b16 %v399, %v398
  %v508 = vpack.c.b16 %v401, %v400
  %v509 = vpack.c.b16 %v403, %v402
  %v510 = vpack.c.b16 %v405, %v404
  %v511 = vpack.c.b16 %v407, %v406
  %v512 = vpack.c.b16 %v409, %v408
  %v513 = vpack.c.b16 %v411, %v410
  %v514 = vpack.c.b16 %v413, %v412
  %v515 = vpack.c.b16 %v415, %v414
  %v516 = vpack.c.b16 %v417, %v416
  %v517 = vpack.c.b16 %v419, %v418
  %v518 = vpack.c.b16 %v421, %v420
  %v519 = vpack.c.b16 %v423, %v422
  %v520 = vpack.c.b16 %v425, %v424
  %v521 = vpack.c.b16 %v427, %v426
  %v522 = vpack.c.b16 %v429, %v428
  %v523 = vpack.c.b16 %v431, %v430
  %v524 = vpack.c.b16 %v433, %v432
  %v525 = vpack.c.b16 %v435, %v434
  %v526 = vpack.c.b16 %v437, %v436
  %v527 = vpack.c.b16 %v439, %v438
  %v528 = vpack.c.b16 %v441, %v440
  %v529 = vpack.c.b16 %v443, %v442
  %v530 = vpack.c.b16 %v445, %v444
  %v531 = vpack.c.b16 %v447, %v446
  %v532 = vpack.c.b16 %v449, %v448
  %v533 = vpack.c.b16 %v451, %v450
  %v534 = vpack.c.b16 %v453, %v452
  %v535 = vpack.c.b16 %v455, %v454
  %v536 = vpack.c.b16 %v457, %v456
  %v537 = vpack.c.b16 %v459, %v458
  %v538 = vpack.c.b16 %v461, %v460
  %v539 = vpack.c.b16 %v463, %v462
  %v540 = vpack.c.b16 %v465, %v464
  %v541 = vpack.c.b16 %v467, %v466
  %v542 = vpack.c.b16 %v469, %v468
  %v543 = vpack.c.b16 %v471, %v470
  %616 = vmatprep.subr.bf16.mxu0 0
  %617 = vmatpush1.bf16.msra.mxu0 %v472
  %618 = vmatprep.subr.bf16.mxu0 0
  %619 = vmatpush1.bf16.msra.mxu0 %v473
  %620 = vmatprep.subr.bf16.mxu0 0
  %621 = vmatpush1.bf16.msra.mxu0 %v474
  %622 = vmatprep.subr.bf16.mxu0 0
  %623 = vmatpush1.bf16.msra.mxu0 %v475
  %624 = vmatprep.subr.bf16.mxu0 0
  %625 = vmatpush1.bf16.msra.mxu0 %v476
  %626 = vmatprep.subr.bf16.mxu0 0
  %627 = vmatpush1.bf16.msra.mxu0 %v477
  %628 = vmatprep.subr.bf16.mxu0 0
  %629 = vmatpush1.bf16.msra.mxu0 %v478
  %630 = vmatprep.subr.bf16.mxu0 0
  %631 = vmatpush1.bf16.msra.mxu0 %v479
  %632 = vmatprep.subr.bf16.mxu0 0
  %633 = vmatpush1.bf16.msra.mxu0 %v480
  %634 = vmatprep.subr.bf16.mxu0 0
  %635 = vmatpush1.bf16.msra.mxu0 %v481
  %636 = vmatprep.subr.bf16.mxu0 0
  %637 = vmatpush1.bf16.msra.mxu0 %v482
  %638 = vmatprep.subr.bf16.mxu0 0
  %639 = vmatpush1.bf16.msra.mxu0 %v483
  %640 = vmatprep.subr.bf16.mxu0 0
  %641 = vmatpush1.bf16.msra.mxu0 %v484
  %642 = vmatprep.subr.bf16.mxu0 0
  %643 = vmatpush1.bf16.msra.mxu0 %v485
  %644 = vmatprep.subr.bf16.mxu0 0
  %645 = vmatpush1.bf16.msra.mxu0 %v486
  %646 = vmatprep.subr.bf16.mxu0 0
  %647 = vmatpush1.bf16.msra.mxu0 %v487
  %648 = vmatprep.mubr.bf16.mxu0 %v25
  %649 = vmatmul.mubr.bf16.gmra.mrb[0].mxu0 %v24
  %v650 = vpop.f32.mrb[0].mxu0
  %v651 = vadd.f32 %v182, %v650
  %v652 = vpop.f32.mrb[0].mxu0
  %v653 = vpop.f32.mrb[0].mxu0
  %v654 = vpop.f32.mrb[0].mxu0
  %655 = vdwg.mxu0
  %656 = vmatprep.subr.bf16.mxu0 0
  %657 = vmatpush1.bf16.msra.mxu0 %v488
  %658 = vmatprep.subr.bf16.mxu0 0
  %659 = vmatpush1.bf16.msra.mxu0 %v489
  %660 = vmatprep.subr.bf16.mxu0 0
  %661 = vmatpush1.bf16.msra.mxu0 %v490
  %662 = vmatprep.subr.bf16.mxu0 0
  %663 = vmatpush1.bf16.msra.mxu0 %v491
  %664 = vmatprep.subr.bf16.mxu0 0
  %665 = vmatpush1.bf16.msra.mxu0 %v492
  %666 = vmatprep.subr.bf16.mxu0 0
  %667 = vmatpush1.bf16.msra.mxu0 %v493
  %668 = vmatprep.subr.bf16.mxu0 0
  %669 = vmatpush1.bf16.msra.mxu0 %v494
  %670 = vmatprep.subr.bf16.mxu0 0
  %671 = vmatpush1.bf16.msra.mxu0 %v495
  %672 = vmatprep.subr.bf16.mxu0 0
  %673 = vmatpush1.bf16.msra.mxu0 %v496
  %674 = vmatprep.subr.bf16.mxu0 0
  %675 = vmatpush1.bf16.msra.mxu0 %v497
  %676 = vmatprep.subr.bf16.mxu0 0
  %677 = vmatpush1.bf16.msra.mxu0 %v498
  %678 = vmatprep.subr.bf16.mxu0 0
  %679 = vmatpush1.bf16.msra.mxu0 %v499
  %680 = vmatprep.subr.bf16.mxu0 0
  %681 = vmatpush1.bf16.msra.mxu0 %v500
  %682 = vmatprep.subr.bf16.mxu0 0
  %683 = vmatpush1.bf16.msra.mxu0 %v501
  %684 = vmatprep.subr.bf16.mxu0 0
  %685 = vmatpush1.bf16.msra.mxu0 %v502
  %686 = vmatprep.subr.bf16.mxu0 0
  %687 = vmatpush1.bf16.msra.mxu0 %v503
  %688 = vmatprep.mubr.bf16.mxu0 %v27
  %689 = vmatmul.mubr.bf16.gmra.mrb[0].mxu0 %v26
  %v690 = vpop.f32.mrb[0].mxu0
  %v691 = vadd.f32 %v651, %v690
  %v692 = vpop.f32.mrb[0].mxu0
  %v693 = vpop.f32.mrb[0].mxu0
  %v694 = vpop.f32.mrb[0].mxu0
  %695 = vdwg.mxu0
  %696 = vmatprep.subr.bf16.mxu0 0
  %697 = vmatpush1.bf16.msra.mxu0 %v504
  %698 = vmatprep.subr.bf16.mxu0 0
  %699 = vmatpush1.bf16.msra.mxu0 %v505
  %700 = vmatprep.subr.bf16.mxu0 0
  %701 = vmatpush1.bf16.msra.mxu0 %v506
  %702 = vmatprep.subr.bf16.mxu0 0
  %703 = vmatpush1.bf16.msra.mxu0 %v507
  %704 = vmatprep.subr.bf16.mxu0 0
  %705 = vmatpush1.bf16.msra.mxu0 %v508
  %706 = vmatprep.subr.bf16.mxu0 0
  %707 = vmatpush1.bf16.msra.mxu0 %v509
  %708 = vmatprep.subr.bf16.mxu0 0
  %709 = vmatpush1.bf16.msra.mxu0 %v510
  %710 = vmatprep.subr.bf16.mxu0 0
  %711 = vmatpush1.bf16.msra.mxu0 %v511
  %712 = vmatprep.subr.bf16.mxu0 0
  %713 = vmatpush1.bf16.msra.mxu0 %v512
  %714 = vmatprep.subr.bf16.mxu0 0
  %715 = vmatpush1.bf16.msra.mxu0 %v513
  %716 = vmatprep.subr.bf16.mxu0 0
  %717 = vmatpush1.bf16.msra.mxu0 %v514
  %718 = vmatprep.subr.bf16.mxu0 0
  %719 = vmatpush1.bf16.msra.mxu0 %v515
  %720 = vmatprep.subr.bf16.mxu0 0
  %721 = vmatpush1.bf16.msra.mxu0 %v516
  %722 = vmatprep.subr.bf16.mxu0 0
  %723 = vmatpush1.bf16.msra.mxu0 %v517
  %724 = vmatprep.subr.bf16.mxu0 0
  %725 = vmatpush1.bf16.msra.mxu0 %v518
  %726 = vmatprep.subr.bf16.mxu0 0
  %727 = vmatpush1.bf16.msra.mxu0 %v519
  %728 = vmatprep.mubr.bf16.mxu0 %v29
  %729 = vmatmul.mubr.bf16.gmra.mrb[0].mxu0 %v28
  %v730 = vpop.f32.mrb[0].mxu0
  %v731 = vadd.f32 %v691, %v730
  %v732 = vpop.f32.mrb[0].mxu0
  %v733 = vpop.f32.mrb[0].mxu0
  %v734 = vpop.f32.mrb[0].mxu0
  %735 = vdwg.mxu0
  %736 = vmatprep.subr.bf16.mxu0 0
  %737 = vmatpush1.bf16.msra.mxu0 %v520
  %738 = vmatprep.subr.bf16.mxu0 0
  %739 = vmatpush1.bf16.msra.mxu0 %v521
  %740 = vmatprep.subr.bf16.mxu0 0
  %741 = vmatpush1.bf16.msra.mxu0 %v522
  %742 = vmatprep.subr.bf16.mxu0 0
  %743 = vmatpush1.bf16.msra.mxu0 %v523
  %744 = vmatprep.subr.bf16.mxu0 0
  %745 = vmatpush1.bf16.msra.mxu0 %v524
  %746 = vmatprep.subr.bf16.mxu0 0
  %747 = vmatpush1.bf16.msra.mxu0 %v525
  %748 = vmatprep.subr.bf16.mxu0 0
  %749 = vmatpush1.bf16.msra.mxu0 %v526
  %750 = vmatprep.subr.bf16.mxu0 0
  %751 = vmatpush1.bf16.msra.mxu0 %v527
  %752 = vmatprep.subr.bf16.mxu0 0
  %753 = vmatpush1.bf16.msra.mxu0 %v528
  %754 = vmatprep.subr.bf16.mxu0 0
  %755 = vmatpush1.bf16.msra.mxu0 %v529
  %756 = vmatprep.subr.bf16.mxu0 0
  %757 = vmatpush1.bf16.msra.mxu0 %v530
  %758 = vmatprep.subr.bf16.mxu0 0
  %759 = vmatpush1.bf16.msra.mxu0 %v531
  %760 = vmatprep.subr.bf16.mxu0 0
  %761 = vmatpush1.bf16.msra.mxu0 %v532
  %762 = vmatprep.subr.bf16.mxu0 0
  %763 = vmatpush1.bf16.msra.mxu0 %v533
  %764 = vmatprep.subr.bf16.mxu0 0
  %765 = vmatpush1.bf16.msra.mxu0 %v534
  %766 = vmatprep.subr.bf16.mxu0 0
  %767 = vmatpush1.bf16.msra.mxu0 %v535
  %768 = vmatprep.mubr.bf16.mxu0 %v31
  %769 = vmatmul.mubr.bf16.gmra.mrb[0].mxu0 %v30
  %v770 = vpop.f32.mrb[0].mxu0
  %v771 = vadd.f32 %v731, %v770
  %v772 = vpop.f32.mrb[0].mxu0
  %v773 = vpop.f32.mrb[0].mxu0
  %v774 = vpop.f32.mrb[0].mxu0
  %775 = vdwg.mxu0
  %776 = vmatprep.subr.bf16.mxu0 0
  %777 = vmatpush1.bf16.msra.mxu0 %v536
  %778 = vmatprep.subr.bf16.mxu0 0
  %779 = vmatpush1.bf16.msra.mxu0 %v537
  %780 = vmatprep.subr.bf16.mxu0 0
  %781 = vmatpush1.bf16.msra.mxu0 %v538
  %782 = vmatprep.subr.bf16.mxu0 0
  %783 = vmatpush1.bf16.msra.mxu0 %v539
  %784 = vmatprep.subr.bf16.mxu0 0
  %785 = vmatpush1.bf16.msra.mxu0 %v540
  %786 = vmatprep.subr.bf16.mxu0 0
  %787 = vmatpush1.bf16.msra.mxu0 %v541
  %788 = vmatprep.subr.bf16.mxu0 0
  %789 = vmatpush1.bf16.msra.mxu0 %v542
  %790 = vmatprep.subr.bf16.mxu0 0
  %791 = vmatpush1.bf16.msra.mxu0 %v543
  %792 = vmatprep.subr.bf16.mxu0 0
  %793 = vmatpush1.bf16.msra.mxu0 0
  %794 = vmatprep.subr.bf16.mxu0 0
  %795 = vmatpush1.bf16.msra.mxu0 0
  %796 = vmatprep.subr.bf16.mxu0 0
  %797 = vmatpush1.bf16.msra.mxu0 0
  %798 = vmatprep.subr.bf16.mxu0 0
  %799 = vmatpush1.bf16.msra.mxu0 0
  %800 = vmatprep.subr.bf16.mxu0 0
  %801 = vmatpush1.bf16.msra.mxu0 0
  %802 = vmatprep.subr.bf16.mxu0 0
  %803 = vmatpush1.bf16.msra.mxu0 0
  %804 = vmatprep.subr.bf16.mxu0 0
  %805 = vmatpush1.bf16.msra.mxu0 0
  %806 = vmatprep.subr.bf16.mxu0 0
  %807 = vmatpush1.bf16.msra.mxu0 0
  %808 = vmatprep.mubr.bf16.mxu0 0
  %809 = vmatmul.mubr.bf16.gmra.mrb[0].mxu0 %v32
  %v810 = vpop.f32.mrb[0].mxu0
  %v811 = vadd.f32 %v771, %v810
  %v812 = vpop.f32.mrb[0].mxu0
  %v813 = vpop.f32.mrb[0].mxu0
  %v814 = vpop.f32.mrb[0].mxu0
  %815 = vdwg.mxu0
  %v816 = vmax.f32 %v811, 0.0
  %817 = vst [vmem:[%s3] sm:$0xff] %v816
  // Predicated region
  $region14: #{seg_discriminator_forward.11} parent=0 // pred_check
    _
  $region15: #{seg_discriminator_forward.11} parent=0 // pred_check_branch
    %819 = sbr.rel (0) target = $region17
  $region16: #{seg_discriminator_forward.11} parent=0 // pred_region
    _
  $region17: #{seg_discriminator_forward.11} parent=0 // pred_fallthru
    _
  // Predicated region
  $region18: #{seg_discriminator_forward.11} parent=0 // pred_check
    _
  $region19: #{seg_discriminator_forward.11} parent=0 // pred_check_branch
    %821 = sbr.rel (0) target = $region21
  $region20: #{seg_discriminator_forward.11} parent=0 // pred_region
    _
  $region21: #{seg_discriminator_forward.11} parent=0 // pred_fallthru
    _

// kernel: seg_discriminator_forward.12
$region0: #{seg_discriminator_forward.12}
  #allocation0 [shape = 'u32[]', space=smem, size = 0x4, offset = 0x4, fixed_abs, tag = 'smem constant byte address 0x4 - core index']
  #allocation1 [shape = 'u32[144,128]{1,0:T(1,128)}', space=vmem, size = 0x12000, scoped, tag = 'internal scratch']
  %s0 = inlined_call_operand.vmem [shape: f32[2,512], index: 0, kind: input, shape index: {}]
  %s1 = inlined_call_operand.vmem [shape: bf16[512,512], index: 1, kind: input, shape index: {}]
  %s2 = inlined_call_operand.vmem [shape: f32[1,512], index: 2, kind: input, shape index: {}]
  %s3 = inlined_call_operand.vmem [shape: bf16[512,128], index: 3, kind: input, shape index: {}]
  %s4 = inlined_call_operand.vmem [shape: f32[1,128], index: 4, kind: input, shape index: {}]
  %s5 = inlined_call_operand.vmem [shape: bf16[512,128], index: 5, kind: input, shape index: {}]
  %s6 = inlined_call_operand.vmem [shape: bf16[128,128], index: 6, kind: input, shape index: {}]
  %s7 = inlined_call_operand.vmem [shape: f32[1,128], index: 7, kind: input, shape index: {}]
  %s8 = inlined_call_operand.vmem [shape: bf16[128,512], index: 8, kind: input, shape index: {}]
  %s9 = inlined_call_operand.vmem [shape: f32[1,512], index: 9, kind: input, shape index: {}]
  %s10 = inlined_call_operand.vmem [shape: f32[2,512], index: 10, kind: output, shape index: {}]
  %s11 = sld [smem:[#allocation0]]
  $region50: #{seg_discriminator_forward.12} parent=0
    _
  %s13 = ssub.s32 1, %s11
  %s14 = scalar_select 0, %s13, %s11
  // Predicated region
  $region2: #{seg_discriminator_forward.12} parent=0 // pred_check
    _
  $region3: #{seg_discriminator_forward.12} parent=0 // pred_check_branch
    %16 = sbr.rel (0) target = $region5
  $region4: #{seg_discriminator_forward.12} parent=0 // pred_region
    _
  $region5: #{seg_discriminator_forward.12} parent=0 // pred_fallthru
    _
  // Predicated region
  $region6: #{seg_discriminator_forward.12} parent=0 // pred_check
    _
  $region7: #{seg_discriminator_forward.12} parent=0 // pred_check_branch
    %18 = sbr.rel (0) target = $region9
  $region8: #{seg_discriminator_forward.12} parent=0 // pred_region
    _
  $region9: #{seg_discriminator_forward.12} parent=0 // pred_fallthru
    _
  // Predicated region
  $region10: #{seg_discriminator_forward.12} parent=0 // pred_check
    _
  $region11: #{seg_discriminator_forward.12} parent=0 // pred_check_branch
    %20 = sbr.rel (0) target = $region13
  $region12: #{seg_discriminator_forward.12} parent=0 // pred_region
    _
  $region13: #{seg_discriminator_forward.12} parent=0 // pred_fallthru
    _
  // Predicated region
  $region14: #{seg_discriminator_forward.12} parent=0 // pred_check
    _
  $region15: #{seg_discriminator_forward.12} parent=0 // pred_check_branch
    %22 = sbr.rel (0) target = $region17
  $region16: #{seg_discriminator_forward.12} parent=0 // pred_region
    _
  $region17: #{seg_discriminator_forward.12} parent=0 // pred_fallthru
    _
  // Predicated region
  $region18: #{seg_discriminator_forward.12} parent=0 // pred_check
    _
  $region19: #{seg_discriminator_forward.12} parent=0 // pred_check_branch
    %24 = sbr.rel (0) target = $region21
  $region20: #{seg_discriminator_forward.12} parent=0 // pred_region
    _
  $region21: #{seg_discriminator_forward.12} parent=0 // pred_fallthru
    _
  // Predicated region
  $region22: #{seg_discriminator_forward.12} parent=0 // pred_check
    _
  $region23: #{seg_discriminator_forward.12} parent=0 // pred_check_branch
    %26 = sbr.rel (0) target = $region25
  $region24: #{seg_discriminator_forward.12} parent=0 // pred_region
    _
  $region25: #{seg_discriminator_forward.12} parent=0 // pred_fallthru
    _
  // Predicated region
  $region26: #{seg_discriminator_forward.12} parent=0 // pred_check
    _
  $region27: #{seg_discriminator_forward.12} parent=0 // pred_check_branch
    %28 = sbr.rel (0) target = $region29
  $region28: #{seg_discriminator_forward.12} parent=0 // pred_region
    _
  $region29: #{seg_discriminator_forward.12} parent=0 // pred_fallthru
    _
  // Predicated region
  $region30: #{seg_discriminator_forward.12} parent=0 // pred_check
    _
  $region31: #{seg_discriminator_forward.12} parent=0 // pred_check_branch
    %30 = sbr.rel (0) target = $region33
  $region32: #{seg_discriminator_forward.12} parent=0 // pred_region
    _
  $region33: #{seg_discriminator_forward.12} parent=0 // pred_fallthru
    _
  // Predicated region
  $region34: #{seg_discriminator_forward.12} parent=0 // pred_check
    _
  $region35: #{seg_discriminator_forward.12} parent=0 // pred_check_branch
    %32 = sbr.rel (0) target = $region37
  $region36: #{seg_discriminator_forward.12} parent=0 // pred_region
    _
  $region37: #{seg_discriminator_forward.12} parent=0 // pred_fallthru
    _
  // Predicated region
  $region38: #{seg_discriminator_forward.12} parent=0 // pred_check
    _
  $region39: #{seg_discriminator_forward.12} parent=0 // pred_check_branch
    %34 = sbr.rel (0) target = $region41
  $region40: #{seg_discriminator_forward.12} parent=0 // pred_region
    _
  $region41: #{seg_discriminator_forward.12} parent=0 // pred_fallthru
    _
  %v36 = vld [vmem:[%s0] sm:$0xff]
  %v38 = vcombine.high %v36, %v36
  %v40 = vunpack.c.l.s4 1983009808
  %v41 = vunpack.c.0.s8 %v40
  %v42 = vlaneseq
  %v43 = vshrl.u32 %v42, 7
  %v44 = vsub.s32 %v41, %v43
  %v45 = vrot.slane %v36, %v44
  %v47 = vunpack.c.l.s4 1983009808
  %v48 = vunpack.c.0.s8 %v47
  %v49 = vlaneseq
  %v50 = vshrl.u32 %v49, 7
  %v51 = vsub.s32 %v48, %v50
  %v52 = vrot.slane %v38, %v51
  %v53 = vcombine.high %v45, %v45
  %v54 = vcombine.high %v52, %v52
  %v59 = vpack.c.bf16 %v45, %v45
  %v60 = vpack.c.bf16 %v53, %v53
  %v61 = vpack.c.bf16 %v52, %v52
  %v62 = vpack.c.bf16 %v54, %v54
  %v63 = vld [vmem:[%s1] sm:$0xff]
  %v64 = vld [vmem:[%s1 + $0x8] sm:$0xff]
  %v65 = vld [vmem:[%s1 + $0x10] sm:$0xff]
  %v66 = vld [vmem:[%s1 + $0x18] sm:$0xff]
  %v67 = vld [vmem:[%s1 + $0x20] sm:$0xff]
  %v68 = vld [vmem:[%s1 + $0x28] sm:$0xff]
  %v69 = vld [vmem:[%s1 + $0x30] sm:$0xff]
  %v70 = vld [vmem:[%s1 + $0x38] sm:$0xff]
  %v71 = vld [vmem:[%s1 + $0x40] sm:$0xff]
  %v72 = vld [vmem:[%s1 + $0x48] sm:$0xff]
  %v73 = vld [vmem:[%s1 + $0x50] sm:$0xff]
  %v74 = vld [vmem:[%s1 + $0x58] sm:$0xff]
  %v75 = vld [vmem:[%s1 + $0x60] sm:$0xff]
  %v76 = vld [vmem:[%s1 + $0x68] sm:$0xff]
  %v77 = vld [vmem:[%s1 + $0x70] sm:$0xff]
  %v78 = vld [vmem:[%s1 + $0x78] sm:$0xff]
  %v79 = vld [vmem:[%s1 + $0x80] sm:$0xff]
  %v80 = vld [vmem:[%s1 + $0x88] sm:$0xff]
  %v81 = vld [vmem:[%s1 + $0x90] sm:$0xff]
  %v82 = vld [vmem:[%s1 + $0x98] sm:$0xff]
  %v83 = vld [vmem:[%s1 + $0xa0] sm:$0xff]
  %v84 = vld [vmem:[%s1 + $0xa8] sm:$0xff]
  %v85 = vld [vmem:[%s1 + $0xb0] sm:$0xff]
  %v86 = vld [vmem:[%s1 + $0xb8] sm:$0xff]
  %v87 = vld [vmem:[%s1 + $0xc0] sm:$0xff]
  %v88 = vld [vmem:[%s1 + $0xc8] sm:$0xff]
  %v89 = vld [vmem:[%s1 + $0xd0] sm:$0xff]
  %v90 = vld [vmem:[%s1 + $0xd8] sm:$0xff]
  %v91 = vld [vmem:[%s1 + $0xe0] sm:$0xff]
  %v92 = vld [vmem:[%s1 + $0xe8] sm:$0xff]
  %v93 = vld [vmem:[%s1 + $0xf0] sm:$0xff]
  %v94 = vld [vmem:[%s1 + $0xf8] sm:$0xff]
  %v95 = vld [vmem:[%s1 + $0x100] sm:$0xff]
  %v96 = vld [vmem:[%s1 + $0x108] sm:$0xff]
  %v97 = vld [vmem:[%s1 + $0x110] sm:$0xff]
  %v98 = vld [vmem:[%s1 + $0x118] sm:$0xff]
  %v99 = vld [vmem:[%s1 + $0x120] sm:$0xff]
  %v100 = vld [vmem:[%s1 + $0x128] sm:$0xff]
  %v101 = vld [vmem:[%s1 + $0x130] sm:$0xff]
  %v102 = vld [vmem:[%s1 + $0x138] sm:$0xff]
  %v103 = vld [vmem:[%s1 + $0x140] sm:$0xff]
  %v104 = vld [vmem:[%s1 + $0x148] sm:$0xff]
  %v105 = vld [vmem:[%s1 + $0x150] sm:$0xff]
  %v106 = vld [vmem:[%s1 + $0x158] sm:$0xff]
  %v107 = vld [vmem:[%s1 + $0x160] sm:$0xff]
  %v108 = vld [vmem:[%s1 + $0x168] sm:$0xff]
  %v109 = vld [vmem:[%s1 + $0x170] sm:$0xff]
  %v110 = vld [vmem:[%s1 + $0x178] sm:$0xff]
  %v111 = vld [vmem:[%s1 + $0x180] sm:$0xff]
  %v112 = vld [vmem:[%s1 + $0x188] sm:$0xff]
  %v113 = vld [vmem:[%s1 + $0x190] sm:$0xff]
  %v114 = vld [vmem:[%s1 + $0x198] sm:$0xff]
  %v115 = vld [vmem:[%s1 + $0x1a0] sm:$0xff]
  %v116 = vld [vmem:[%s1 + $0x1a8] sm:$0xff]
  %v117 = vld [vmem:[%s1 + $0x1b0] sm:$0xff]
  %v118 = vld [vmem:[%s1 + $0x1b8] sm:$0xff]
  %v119 = vld [vmem:[%s1 + $0x1c0] sm:$0xff]
  %v120 = vld [vmem:[%s1 + $0x1c8] sm:$0xff]
  %v121 = vld [vmem:[%s1 + $0x1d0] sm:$0xff]
  %v122 = vld [vmem:[%s1 + $0x1d8] sm:$0xff]
  %v123 = vld [vmem:[%s1 + $0x1e0] sm:$0xff]
  %v124 = vld [vmem:[%s1 + $0x1e8] sm:$0xff]
  %v125 = vld [vmem:[%s1 + $0x1f0] sm:$0xff]
  %v126 = vld [vmem:[%s1 + $0x1f8] sm:$0xff]
  %v127 = vld [vmem:[%s1 + $0x200] sm:$0xff]
  %v128 = vld [vmem:[%s1 + $0x208] sm:$0xff]
  %v129 = vld [vmem:[%s1 + $0x210] sm:$0xff]
  %v130 = vld [vmem:[%s1 + $0x218] sm:$0xff]
  %v131 = vld [vmem:[%s1 + $0x220] sm:$0xff]
  %v132 = vld [vmem:[%s1 + $0x228] sm:$0xff]
  %v133 = vld [vmem:[%s1 + $0x230] sm:$0xff]
  %v134 = vld [vmem:[%s1 + $0x238] sm:$0xff]
  %v135 = vld [vmem:[%s1 + $0x240] sm:$0xff]
  %v136 = vld [vmem:[%s1 + $0x248] sm:$0xff]
  %v137 = vld [vmem:[%s1 + $0x250] sm:$0xff]
  %v138 = vld [vmem:[%s1 + $0x258] sm:$0xff]
  %v139 = vld [vmem:[%s1 + $0x260] sm:$0xff]
  %v140 = vld [vmem:[%s1 + $0x268] sm:$0xff]
  %v141 = vld [vmem:[%s1 + $0x270] sm:$0xff]
  %v142 = vld [vmem:[%s1 + $0x278] sm:$0xff]
  %v143 = vld [vmem:[%s1 + $0x280] sm:$0xff]
  %v144 = vld [vmem:[%s1 + $0x288] sm:$0xff]
  %v145 = vld [vmem:[%s1 + $0x290] sm:$0xff]
  %v146 = vld [vmem:[%s1 + $0x298] sm:$0xff]
  %v147 = vld [vmem:[%s1 + $0x2a0] sm:$0xff]
  %v148 = vld [vmem:[%s1 + $0x2a8] sm:$0xff]
  %v149 = vld [vmem:[%s1 + $0x2b0] sm:$0xff]
  %v150 = vld [vmem:[%s1 + $0x2b8] sm:$0xff]
  %v151 = vld [vmem:[%s1 + $0x2c0] sm:$0xff]
  %v152 = vld [vmem:[%s1 + $0x2c8] sm:$0xff]
  %v153 = vld [vmem:[%s1 + $0x2d0] sm:$0xff]
  %v154 = vld [vmem:[%s1 + $0x2d8] sm:$0xff]
  %v155 = vld [vmem:[%s1 + $0x2e0] sm:$0xff]
  %v156 = vld [vmem:[%s1 + $0x2e8] sm:$0xff]
  %v157 = vld [vmem:[%s1 + $0x2f0] sm:$0xff]
  %v158 = vld [vmem:[%s1 + $0x2f8] sm:$0xff]
  %v159 = vld [vmem:[%s1 + $0x300] sm:$0xff]
  %v160 = vld [vmem:[%s1 + $0x308] sm:$0xff]
  %v161 = vld [vmem:[%s1 + $0x310] sm:$0xff]
  %v162 = vld [vmem:[%s1 + $0x318] sm:$0xff]
  %v163 = vld [vmem:[%s1 + $0x320] sm:$0xff]
  %v164 = vld [vmem:[%s1 + $0x328] sm:$0xff]
  %v165 = vld [vmem:[%s1 + $0x330] sm:$0xff]
  %v166 = vld [vmem:[%s1 + $0x338] sm:$0xff]
  %v167 = vld [vmem:[%s1 + $0x340] sm:$0xff]
  %v168 = vld [vmem:[%s1 + $0x348] sm:$0xff]
  %v169 = vld [vmem:[%s1 + $0x350] sm:$0xff]
  %v170 = vld [vmem:[%s1 + $0x358] sm:$0xff]
  %v171 = vld [vmem:[%s1 + $0x360] sm:$0xff]
  %v172 = vld [vmem:[%s1 + $0x368] sm:$0xff]
  %v173 = vld [vmem:[%s1 + $0x370] sm:$0xff]
  %v174 = vld [vmem:[%s1 + $0x378] sm:$0xff]
  %v175 = vld [vmem:[%s1 + $0x380] sm:$0xff]
  %v176 = vld [vmem:[%s1 + $0x388] sm:$0xff]
  %v177 = vld [vmem:[%s1 + $0x390] sm:$0xff]
  %v178 = vld [vmem:[%s1 + $0x398] sm:$0xff]
  %v179 = vld [vmem:[%s1 + $0x3a0] sm:$0xff]
  %v180 = vld [vmem:[%s1 + $0x3a8] sm:$0xff]
  %v181 = vld [vmem:[%s1 + $0x3b0] sm:$0xff]
  %v182 = vld [vmem:[%s1 + $0x3b8] sm:$0xff]
  %v183 = vld [vmem:[%s1 + $0x3c0] sm:$0xff]
  %v184 = vld [vmem:[%s1 + $0x3c8] sm:$0xff]
  %v185 = vld [vmem:[%s1 + $0x3d0] sm:$0xff]
  %v186 = vld [vmem:[%s1 + $0x3d8] sm:$0xff]
  %v187 = vld [vmem:[%s1 + $0x3e0] sm:$0xff]
  %v188 = vld [vmem:[%s1 + $0x3e8] sm:$0xff]
  %v189 = vld [vmem:[%s1 + $0x3f0] sm:$0xff]
  %v190 = vld [vmem:[%s1 + $0x3f8] sm:$0xff]
  %v191 = vld [vmem:[%s2] sm:$0xf]
  %v193 = vlaneseq
  %v194 = vshrl.u32 %v193, 7
  %v195 = vsub.s32 0, %v194
  %v196 = vrot.slane %v191, %v195
  %v197 = vlaneseq
  %v198 = vshrl.u32 %v197, 7
  %v199 = vsub.s32 1, %v198
  %v200 = vrot.slane %v191, %v199
  %v201 = vlaneseq
  %v202 = vshrl.u32 %v201, 7
  %v203 = vsub.s32 2, %v202
  %v204 = vrot.slane %v191, %v203
  %v205 = vlaneseq
  %v206 = vshrl.u32 %v205, 7
  %v207 = vsub.s32 3, %v206
  %v208 = vrot.slane %v191, %v207
  %v341 = vunpack.c.l.b16 %v63
  %v342 = vunpack.c.h.b16 %v63
  %v343 = vunpack.c.l.b16 %v64
  %v344 = vunpack.c.h.b16 %v64
  %v345 = vunpack.c.l.b16 %v65
  %v346 = vunpack.c.h.b16 %v65
  %v347 = vunpack.c.l.b16 %v66
  %v348 = vunpack.c.h.b16 %v66
  %v349 = vunpack.c.l.b16 %v67
  %v350 = vunpack.c.h.b16 %v67
  %v351 = vunpack.c.l.b16 %v68
  %v352 = vunpack.c.h.b16 %v68
  %v353 = vunpack.c.l.b16 %v69
  %v354 = vunpack.c.h.b16 %v69
  %v355 = vunpack.c.l.b16 %v70
  %v356 = vunpack.c.h.b16 %v70
  %v357 = vunpack.c.l.b16 %v71
  %v358 = vunpack.c.h.b16 %v71
  %v359 = vunpack.c.l.b16 %v72
  %v360 = vunpack.c.h.b16 %v72
  %v361 = vunpack.c.l.b16 %v73
  %v362 = vunpack.c.h.b16 %v73
  %v363 = vunpack.c.l.b16 %v74
  %v364 = vunpack.c.h.b16 %v74
  %v365 = vunpack.c.l.b16 %v75
  %v366 = vunpack.c.h.b16 %v75
  %v367 = vunpack.c.l.b16 %v76
  %v368 = vunpack.c.h.b16 %v76
  %v369 = vunpack.c.l.b16 %v77
  %v370 = vunpack.c.h.b16 %v77
  %v371 = vunpack.c.l.b16 %v78
  %v372 = vunpack.c.h.b16 %v78
  %v373 = vunpack.c.l.b16 %v79
  %v374 = vunpack.c.h.b16 %v79
  %v375 = vunpack.c.l.b16 %v80
  %v376 = vunpack.c.h.b16 %v80
  %v377 = vunpack.c.l.b16 %v81
  %v378 = vunpack.c.h.b16 %v81
  %v379 = vunpack.c.l.b16 %v82
  %v380 = vunpack.c.h.b16 %v82
  %v381 = vunpack.c.l.b16 %v83
  %v382 = vunpack.c.h.b16 %v83
  %v383 = vunpack.c.l.b16 %v84
  %v384 = vunpack.c.h.b16 %v84
  %v385 = vunpack.c.l.b16 %v85
  %v386 = vunpack.c.h.b16 %v85
  %v387 = vunpack.c.l.b16 %v86
  %v388 = vunpack.c.h.b16 %v86
  %v389 = vunpack.c.l.b16 %v87
  %v390 = vunpack.c.h.b16 %v87
  %v391 = vunpack.c.l.b16 %v88
  %v392 = vunpack.c.h.b16 %v88
  %v393 = vunpack.c.l.b16 %v89
  %v394 = vunpack.c.h.b16 %v89
  %v395 = vunpack.c.l.b16 %v90
  %v396 = vunpack.c.h.b16 %v90
  %v397 = vunpack.c.l.b16 %v91
  %v398 = vunpack.c.h.b16 %v91
  %v399 = vunpack.c.l.b16 %v92
  %v400 = vunpack.c.h.b16 %v92
  %v401 = vunpack.c.l.b16 %v93
  %v402 = vunpack.c.h.b16 %v93
  %v403 = vunpack.c.l.b16 %v94
  %v404 = vunpack.c.h.b16 %v94
  %v405 = vunpack.c.l.b16 %v95
  %v406 = vunpack.c.h.b16 %v95
  %v407 = vunpack.c.l.b16 %v96
  %v408 = vunpack.c.h.b16 %v96
  %v409 = vunpack.c.l.b16 %v97
  %v410 = vunpack.c.h.b16 %v97
  %v411 = vunpack.c.l.b16 %v98
  %v412 = vunpack.c.h.b16 %v98
  %v413 = vunpack.c.l.b16 %v99
  %v414 = vunpack.c.h.b16 %v99
  %v415 = vunpack.c.l.b16 %v100
  %v416 = vunpack.c.h.b16 %v100
  %v417 = vunpack.c.l.b16 %v101
  %v418 = vunpack.c.h.b16 %v101
  %v419 = vunpack.c.l.b16 %v102
  %v420 = vunpack.c.h.b16 %v102
  %v421 = vunpack.c.l.b16 %v103
  %v422 = vunpack.c.h.b16 %v103
  %v423 = vunpack.c.l.b16 %v104
  %v424 = vunpack.c.h.b16 %v104
  %v425 = vunpack.c.l.b16 %v105
  %v426 = vunpack.c.h.b16 %v105
  %v427 = vunpack.c.l.b16 %v106
  %v428 = vunpack.c.h.b16 %v106
  %v429 = vunpack.c.l.b16 %v107
  %v430 = vunpack.c.h.b16 %v107
  %v431 = vunpack.c.l.b16 %v108
  %v432 = vunpack.c.h.b16 %v108
  %v433 = vunpack.c.l.b16 %v109
  %v434 = vunpack.c.h.b16 %v109
  %v435 = vunpack.c.l.b16 %v110
  %v436 = vunpack.c.h.b16 %v110
  %v437 = vunpack.c.l.b16 %v111
  %v438 = vunpack.c.h.b16 %v111
  %v439 = vunpack.c.l.b16 %v112
  %v440 = vunpack.c.h.b16 %v112
  %v441 = vunpack.c.l.b16 %v113
  %v442 = vunpack.c.h.b16 %v113
  %v443 = vunpack.c.l.b16 %v114
  %v444 = vunpack.c.h.b16 %v114
  %v445 = vunpack.c.l.b16 %v115
  %v446 = vunpack.c.h.b16 %v115
  %v447 = vunpack.c.l.b16 %v116
  %v448 = vunpack.c.h.b16 %v116
  %v449 = vunpack.c.l.b16 %v117
  %v450 = vunpack.c.h.b16 %v117
  %v451 = vunpack.c.l.b16 %v118
  %v452 = vunpack.c.h.b16 %v118
  %v453 = vunpack.c.l.b16 %v119
  %v454 = vunpack.c.h.b16 %v119
  %v455 = vunpack.c.l.b16 %v120
  %v456 = vunpack.c.h.b16 %v120
  %v457 = vunpack.c.l.b16 %v121
  %v458 = vunpack.c.h.b16 %v121
  %v459 = vunpack.c.l.b16 %v122
  %v460 = vunpack.c.h.b16 %v122
  %v461 = vunpack.c.l.b16 %v123
  %v462 = vunpack.c.h.b16 %v123
  %v463 = vunpack.c.l.b16 %v124
  %v464 = vunpack.c.h.b16 %v124
  %v465 = vunpack.c.l.b16 %v125
  %v466 = vunpack.c.h.b16 %v125
  %v467 = vunpack.c.l.b16 %v126
  %v468 = vunpack.c.h.b16 %v126
  %v469 = vunpack.c.l.b16 %v127
  %v470 = vunpack.c.h.b16 %v127
  %v471 = vunpack.c.l.b16 %v128
  %v472 = vunpack.c.h.b16 %v128
  %v473 = vunpack.c.l.b16 %v129
  %v474 = vunpack.c.h.b16 %v129
  %v475 = vunpack.c.l.b16 %v130
  %v476 = vunpack.c.h.b16 %v130
  %v477 = vunpack.c.l.b16 %v131
  %v478 = vunpack.c.h.b16 %v131
  %v479 = vunpack.c.l.b16 %v132
  %v480 = vunpack.c.h.b16 %v132
  %v481 = vunpack.c.l.b16 %v133
  %v482 = vunpack.c.h.b16 %v133
  %v483 = vunpack.c.l.b16 %v134
  %v484 = vunpack.c.h.b16 %v134
  %v485 = vunpack.c.l.b16 %v135
  %v486 = vunpack.c.h.b16 %v135
  %v487 = vunpack.c.l.b16 %v136
  %v488 = vunpack.c.h.b16 %v136
  %v489 = vunpack.c.l.b16 %v137
  %v490 = vunpack.c.h.b16 %v137
  %v491 = vunpack.c.l.b16 %v138
  %v492 = vunpack.c.h.b16 %v138
  %v493 = vunpack.c.l.b16 %v139
  %v494 = vunpack.c.h.b16 %v139
  %v495 = vunpack.c.l.b16 %v140
  %v496 = vunpack.c.h.b16 %v140
  %v497 = vunpack.c.l.b16 %v141
  %v498 = vunpack.c.h.b16 %v141
  %v499 = vunpack.c.l.b16 %v142
  %v500 = vunpack.c.h.b16 %v142
  %v501 = vunpack.c.l.b16 %v143
  %v502 = vunpack.c.h.b16 %v143
  %v503 = vunpack.c.l.b16 %v144
  %v504 = vunpack.c.h.b16 %v144
  %v505 = vunpack.c.l.b16 %v145
  %v506 = vunpack.c.h.b16 %v145
  %v507 = vunpack.c.l.b16 %v146
  %v508 = vunpack.c.h.b16 %v146
  %v509 = vunpack.c.l.b16 %v147
  %v510 = vunpack.c.h.b16 %v147
  %v511 = vunpack.c.l.b16 %v148
  %v512 = vunpack.c.h.b16 %v148
  %v513 = vunpack.c.l.b16 %v149
  %v514 = vunpack.c.h.b16 %v149
  %v515 = vunpack.c.l.b16 %v150
  %v516 = vunpack.c.h.b16 %v150
  %v517 = vunpack.c.l.b16 %v151
  %v518 = vunpack.c.h.b16 %v151
  %v519 = vunpack.c.l.b16 %v152
  %v520 = vunpack.c.h.b16 %v152
  %v521 = vunpack.c.l.b16 %v153
  %v522 = vunpack.c.h.b16 %v153
  %v523 = vunpack.c.l.b16 %v154
  %v524 = vunpack.c.h.b16 %v154
  %v525 = vunpack.c.l.b16 %v155
  %v526 = vunpack.c.h.b16 %v155
  %v527 = vunpack.c.l.b16 %v156
  %v528 = vunpack.c.h.b16 %v156
  %v529 = vunpack.c.l.b16 %v157
  %v530 = vunpack.c.h.b16 %v157
  %v531 = vunpack.c.l.b16 %v158
  %v532 = vunpack.c.h.b16 %v158
  %v533 = vunpack.c.l.b16 %v159
  %v534 = vunpack.c.h.b16 %v159
  %v535 = vunpack.c.l.b16 %v160
  %v536 = vunpack.c.h.b16 %v160
  %v537 = vunpack.c.l.b16 %v161
  %v538 = vunpack.c.h.b16 %v161
  %v539 = vunpack.c.l.b16 %v162
  %v540 = vunpack.c.h.b16 %v162
  %v541 = vunpack.c.l.b16 %v163
  %v542 = vunpack.c.h.b16 %v163
  %v543 = vunpack.c.l.b16 %v164
  %v544 = vunpack.c.h.b16 %v164
  %v545 = vunpack.c.l.b16 %v165
  %v546 = vunpack.c.h.b16 %v165
  %v547 = vunpack.c.l.b16 %v166
  %v548 = vunpack.c.h.b16 %v166
  %v549 = vunpack.c.l.b16 %v167
  %v550 = vunpack.c.h.b16 %v167
  %v551 = vunpack.c.l.b16 %v168
  %v552 = vunpack.c.h.b16 %v168
  %v553 = vunpack.c.l.b16 %v169
  %v554 = vunpack.c.h.b16 %v169
  %v555 = vunpack.c.l.b16 %v170
  %v556 = vunpack.c.h.b16 %v170
  %v557 = vunpack.c.l.b16 %v171
  %v558 = vunpack.c.h.b16 %v171
  %v559 = vunpack.c.l.b16 %v172
  %v560 = vunpack.c.h.b16 %v172
  %v561 = vunpack.c.l.b16 %v173
  %v562 = vunpack.c.h.b16 %v173
  %v563 = vunpack.c.l.b16 %v174
  %v564 = vunpack.c.h.b16 %v174
  %v565 = vunpack.c.l.b16 %v175
  %v566 = vunpack.c.h.b16 %v175
  %v567 = vunpack.c.l.b16 %v176
  %v568 = vunpack.c.h.b16 %v176
  %v569 = vunpack.c.l.b16 %v177
  %v570 = vunpack.c.h.b16 %v177
  %v571 = vunpack.c.l.b16 %v178
  %v572 = vunpack.c.h.b16 %v178
  %v573 = vunpack.c.l.b16 %v179
  %v574 = vunpack.c.h.b16 %v179
  %v575 = vunpack.c.l.b16 %v180
  %v576 = vunpack.c.h.b16 %v180
  %v577 = vunpack.c.l.b16 %v181
  %v578 = vunpack.c.h.b16 %v181
  %v579 = vunpack.c.l.b16 %v182
  %v580 = vunpack.c.h.b16 %v182
  %v581 = vunpack.c.l.b16 %v183
  %v582 = vunpack.c.h.b16 %v183
  %v583 = vunpack.c.l.b16 %v184
  %v584 = vunpack.c.h.b16 %v184
  %v585 = vunpack.c.l.b16 %v185
  %v586 = vunpack.c.h.b16 %v185
  %v587 = vunpack.c.l.b16 %v186
  %v588 = vunpack.c.h.b16 %v186
  %v589 = vunpack.c.l.b16 %v187
  %v590 = vunpack.c.h.b16 %v187
  %v591 = vunpack.c.l.b16 %v188
  %v592 = vunpack.c.h.b16 %v188
  %v593 = vunpack.c.l.b16 %v189
  %v594 = vunpack.c.h.b16 %v189
  %v595 = vunpack.c.l.b16 %v190
  %v596 = vunpack.c.h.b16 %v190
  %v597 = vpack.c.b16 %v345, %v341
  %v598 = vpack.c.b16 %v346, %v342
  %v599 = vpack.c.b16 %v347, %v343
  %v600 = vpack.c.b16 %v348, %v344
  %v601 = vpack.c.b16 %v353, %v349
  %v602 = vpack.c.b16 %v354, %v350
  %v603 = vpack.c.b16 %v355, %v351
  %v604 = vpack.c.b16 %v356, %v352
  %v605 = vpack.c.b16 %v361, %v357
  %v606 = vpack.c.b16 %v362, %v358
  %v607 = vpack.c.b16 %v363, %v359
  %v608 = vpack.c.b16 %v364, %v360
  %v609 = vpack.c.b16 %v369, %v365
  %v610 = vpack.c.b16 %v370, %v366
  %v611 = vpack.c.b16 %v371, %v367
  %v612 = vpack.c.b16 %v372, %v368
  %v613 = vpack.c.b16 %v377, %v373
  %v614 = vpack.c.b16 %v378, %v374
  %v615 = vpack.c.b16 %v379, %v375
  %v616 = vpack.c.b16 %v380, %v376
  %v617 = vpack.c.b16 %v385, %v381
  %v618 = vpack.c.b16 %v386, %v382
  %v619 = vpack.c.b16 %v387, %v383
  %v620 = vpack.c.b16 %v388, %v384
  %v621 = vpack.c.b16 %v393, %v389
  %v622 = vpack.c.b16 %v394, %v390
  %v623 = vpack.c.b16 %v395, %v391
  %v624 = vpack.c.b16 %v396, %v392
  %v625 = vpack.c.b16 %v401, %v397
  %v626 = vpack.c.b16 %v402, %v398
  %v627 = vpack.c.b16 %v403, %v399
  %v628 = vpack.c.b16 %v404, %v400
  %v629 = vpack.c.b16 %v409, %v405
  %v630 = vpack.c.b16 %v410, %v406
  %v631 = vpack.c.b16 %v411, %v407
  %v632 = vpack.c.b16 %v412, %v408
  %v633 = vpack.c.b16 %v417, %v413
  %v634 = vpack.c.b16 %v418, %v414
  %v635 = vpack.c.b16 %v419, %v415
  %v636 = vpack.c.b16 %v420, %v416
  %v637 = vpack.c.b16 %v425, %v421
  %v638 = vpack.c.b16 %v426, %v422
  %v639 = vpack.c.b16 %v427, %v423
  %v640 = vpack.c.b16 %v428, %v424
  %v641 = vpack.c.b16 %v433, %v429
  %v642 = vpack.c.b16 %v434, %v430
  %v643 = vpack.c.b16 %v435, %v431
  %v644 = vpack.c.b16 %v436, %v432
  %v645 = vpack.c.b16 %v441, %v437
  %v646 = vpack.c.b16 %v442, %v438
  %v647 = vpack.c.b16 %v443, %v439
  %v648 = vpack.c.b16 %v444, %v440
  %v649 = vpack.c.b16 %v449, %v445
  %v650 = vpack.c.b16 %v450, %v446
  %v651 = vpack.c.b16 %v451, %v447
  %v652 = vpack.c.b16 %v452, %v448
  %v653 = vpack.c.b16 %v457, %v453
  %v654 = vpack.c.b16 %v458, %v454
  %v655 = vpack.c.b16 %v459, %v455
  %v656 = vpack.c.b16 %v460, %v456
  %v657 = vpack.c.b16 %v465, %v461
  %v658 = vpack.c.b16 %v466, %v462
  %v659 = vpack.c.b16 %v467, %v463
  %v660 = vpack.c.b16 %v468, %v464
  %v661 = vpack.c.b16 %v473, %v469
  %v662 = vpack.c.b16 %v474, %v470
  %v663 = vpack.c.b16 %v475, %v471
  %v664 = vpack.c.b16 %v476, %v472
  %v665 = vpack.c.b16 %v481, %v477
  %v666 = vpack.c.b16 %v482, %v478
  %v667 = vpack.c.b16 %v483, %v479
  %v668 = vpack.c.b16 %v484, %v480
  %v669 = vpack.c.b16 %v489, %v485
  %v670 = vpack.c.b16 %v490, %v486
  %v671 = vpack.c.b16 %v491, %v487
  %v672 = vpack.c.b16 %v492, %v488
  %v673 = vpack.c.b16 %v497, %v493
  %v674 = vpack.c.b16 %v498, %v494
  %v675 = vpack.c.b16 %v499, %v495
  %v676 = vpack.c.b16 %v500, %v496
  %v677 = vpack.c.b16 %v505, %v501
  %v678 = vpack.c.b16 %v506, %v502
  %v679 = vpack.c.b16 %v507, %v503
  %v680 = vpack.c.b16 %v508, %v504
  %v681 = vpack.c.b16 %v513, %v509
  %v682 = vpack.c.b16 %v514, %v510
  %v683 = vpack.c.b16 %v515, %v511
  %v684 = vpack.c.b16 %v516, %v512
  %v685 = vpack.c.b16 %v521, %v517
  %v686 = vpack.c.b16 %v522, %v518
  %v687 = vpack.c.b16 %v523, %v519
  %v688 = vpack.c.b16 %v524, %v520
  %v689 = vpack.c.b16 %v529, %v525
  %v690 = vpack.c.b16 %v530, %v526
  %v691 = vpack.c.b16 %v531, %v527
  %v692 = vpack.c.b16 %v532, %v528
  %v693 = vpack.c.b16 %v537, %v533
  %v694 = vpack.c.b16 %v538, %v534
  %v695 = vpack.c.b16 %v539, %v535
  %v696 = vpack.c.b16 %v540, %v536
  %v697 = vpack.c.b16 %v545, %v541
  %v698 = vpack.c.b16 %v546, %v542
  %v699 = vpack.c.b16 %v547, %v543
  %v700 = vpack.c.b16 %v548, %v544
  %v701 = vpack.c.b16 %v553, %v549
  %v702 = vpack.c.b16 %v554, %v550
  %v703 = vpack.c.b16 %v555, %v551
  %v704 = vpack.c.b16 %v556, %v552
  %v705 = vpack.c.b16 %v561, %v557
  %v706 = vpack.c.b16 %v562, %v558
  %v707 = vpack.c.b16 %v563, %v559
  %v708 = vpack.c.b16 %v564, %v560
  %v709 = vpack.c.b16 %v569, %v565
  %v710 = vpack.c.b16 %v570, %v566
  %v711 = vpack.c.b16 %v571, %v567
  %v712 = vpack.c.b16 %v572, %v568
  %v713 = vpack.c.b16 %v577, %v573
  %v714 = vpack.c.b16 %v578, %v574
  %v715 = vpack.c.b16 %v579, %v575
  %v716 = vpack.c.b16 %v580, %v576
  %v717 = vpack.c.b16 %v585, %v581
  %v718 = vpack.c.b16 %v586, %v582
  %v719 = vpack.c.b16 %v587, %v583
  %v720 = vpack.c.b16 %v588, %v584
  %v721 = vpack.c.b16 %v593, %v589
  %v722 = vpack.c.b16 %v594, %v590
  %v723 = vpack.c.b16 %v595, %v591
  %v724 = vpack.c.b16 %v596, %v592
  %853 = vmatprep.subr.bf16.mxu0 %v598
  %854 = vmatpush1.bf16.msra.mxu0 %v597
  %855 = vmatprep.subr.bf16.mxu0 %v602
  %856 = vmatpush1.bf16.msra.mxu0 %v601
  %857 = vmatprep.subr.bf16.mxu0 %v606
  %858 = vmatpush1.bf16.msra.mxu0 %v605
  %859 = vmatprep.subr.bf16.mxu0 %v610
  %860 = vmatpush1.bf16.msra.mxu0 %v609
  %861 = vmatprep.subr.bf16.mxu0 %v614
  %862 = vmatpush1.bf16.msra.mxu0 %v613
  %863 = vmatprep.subr.bf16.mxu0 %v618
  %864 = vmatpush1.bf16.msra.mxu0 %v617
  %865 = vmatprep.subr.bf16.mxu0 %v622
  %866 = vmatpush1.bf16.msra.mxu0 %v621
  %867 = vmatprep.subr.bf16.mxu0 %v626
  %868 = vmatpush1.bf16.msra.mxu0 %v625
  %869 = vmatprep.subr.bf16.mxu0 %v630
  %870 = vmatpush1.bf16.msra.mxu0 %v629
  %871 = vmatprep.subr.bf16.mxu0 %v634
  %872 = vmatpush1.bf16.msra.mxu0 %v633
  %873 = vmatprep.subr.bf16.mxu0 %v638
  %874 = vmatpush1.bf16.msra.mxu0 %v637
  %875 = vmatprep.subr.bf16.mxu0 %v642
  %876 = vmatpush1.bf16.msra.mxu0 %v641
  %877 = vmatprep.subr.bf16.mxu0 %v646
  %878 = vmatpush1.bf16.msra.mxu0 %v645
  %879 = vmatprep.subr.bf16.mxu0 %v650
  %880 = vmatpush1.bf16.msra.mxu0 %v649
  %881 = vmatprep.subr.bf16.mxu0 %v654
  %882 = vmatpush1.bf16.msra.mxu0 %v653
  %883 = vmatprep.subr.bf16.mxu0 %v658
  %884 = vmatpush1.bf16.msra.mxu0 %v657
  %885 = vmatprep.mubr.bf16.mxu0 %v60
  %886 = vmatmul.mubr.bf16.gmra.mrb[0].mxu0 %v59
  %v887 = vpop.f32.mrb[0].mxu0
  %v888 = vadd.f32 %v196, %v887
  %v889 = vpop.f32.mrb[0].mxu0
  %v890 = vadd.f32 %v200, %v889
  %v891 = vpop.f32.mrb[0].mxu0
  %v892 = vpop.f32.mrb[0].mxu0
  %893 = vdwg.mxu0
  %894 = vmatprep.subr.bf16.mxu0 %v662
  %895 = vmatpush1.bf16.msra.mxu0 %v661
  %896 = vmatprep.subr.bf16.mxu0 %v666
  %897 = vmatpush1.bf16.msra.mxu0 %v665
  %898 = vmatprep.subr.bf16.mxu0 %v670
  %899 = vmatpush1.bf16.msra.mxu0 %v669
  %900 = vmatprep.subr.bf16.mxu0 %v674
  %901 = vmatpush1.bf16.msra.mxu0 %v673
  %902 = vmatprep.subr.bf16.mxu0 %v678
  %903 = vmatpush1.bf16.msra.mxu0 %v677
  %904 = vmatprep.subr.bf16.mxu0 %v682
  %905 = vmatpush1.bf16.msra.mxu0 %v681
  %906 = vmatprep.subr.bf16.mxu0 %v686
  %907 = vmatpush1.bf16.msra.mxu0 %v685
  %908 = vmatprep.subr.bf16.mxu0 %v690
  %909 = vmatpush1.bf16.msra.mxu0 %v689
  %910 = vmatprep.subr.bf16.mxu0 %v694
  %911 = vmatpush1.bf16.msra.mxu0 %v693
  %912 = vmatprep.subr.bf16.mxu0 %v698
  %913 = vmatpush1.bf16.msra.mxu0 %v697
  %914 = vmatprep.subr.bf16.mxu0 %v702
  %915 = vmatpush1.bf16.msra.mxu0 %v701
  %916 = vmatprep.subr.bf16.mxu0 %v706
  %917 = vmatpush1.bf16.msra.mxu0 %v705
  %918 = vmatprep.subr.bf16.mxu0 %v710
  %919 = vmatpush1.bf16.msra.mxu0 %v709
  %920 = vmatprep.subr.bf16.mxu0 %v714
  %921 = vmatpush1.bf16.msra.mxu0 %v713
  %922 = vmatprep.subr.bf16.mxu0 %v718
  %923 = vmatpush1.bf16.msra.mxu0 %v717
  %924 = vmatprep.subr.bf16.mxu0 %v722
  %925 = vmatpush1.bf16.msra.mxu0 %v721
  %926 = vmatprep.mubr.bf16.mxu0 %v62
  %927 = vmatmul.mubr.bf16.gmra.mrb[0].mxu0 %v61
  %v928 = vpop.f32.mrb[0].mxu0
  %v929 = vadd.f32 %v888, %v928
  %v930 = vpop.f32.mrb[0].mxu0
  %v931 = vadd.f32 %v890, %v930
  %v932 = vpop.f32.mrb[0].mxu0
  %v933 = vpop.f32.mrb[0].mxu0
  %934 = vdwg.mxu0
  %935 = vmatprep.subr.bf16.mxu0 %v600
  %936 = vmatpush1.bf16.msra.mxu0 %v599
  %937 = vmatprep.subr.bf16.mxu0 %v604
  %938 = vmatpush1.bf16.msra.mxu0 %v603
  %939 = vmatprep.subr.bf16.mxu0 %v608
  %940 = vmatpush1.bf16.msra.mxu0 %v607
  %941 = vmatprep.subr.bf16.mxu0 %v612
  %942 = vmatpush1.bf16.msra.mxu0 %v611
  %943 = vmatprep.subr.bf16.mxu0 %v616
  %944 = vmatpush1.bf16.msra.mxu0 %v615
  %945 = vmatprep.subr.bf16.mxu0 %v620
  %946 = vmatpush1.bf16.msra.mxu0 %v619
  %947 = vmatprep.subr.bf16.mxu0 %v624
  %948 = vmatpush1.bf16.msra.mxu0 %v623
  %949 = vmatprep.subr.bf16.mxu0 %v628
  %950 = vmatpush1.bf16.msra.mxu0 %v627
  %951 = vmatprep.subr.bf16.mxu0 %v632
  %952 = vmatpush1.bf16.msra.mxu0 %v631
  %953 = vmatprep.subr.bf16.mxu0 %v636
  %954 = vmatpush1.bf16.msra.mxu0 %v635
  %955 = vmatprep.subr.bf16.mxu0 %v640
  %956 = vmatpush1.bf16.msra.mxu0 %v639
  %957 = vmatprep.subr.bf16.mxu0 %v644
  %958 = vmatpush1.bf16.msra.mxu0 %v643
  %959 = vmatprep.subr.bf16.mxu0 %v648
  %960 = vmatpush1.bf16.msra.mxu0 %v647
  %961 = vmatprep.subr.bf16.mxu0 %v652
  %962 = vmatpush1.bf16.msra.mxu0 %v651
  %963 = vmatprep.subr.bf16.mxu0 %v656
  %964 = vmatpush1.bf16.msra.mxu0 %v655
  %965 = vmatprep.subr.bf16.mxu0 %v660
  %966 = vmatpush1.bf16.msra.mxu0 %v659
  %967 = vmatprep.mubr.bf16.mxu0 %v60
  %968 = vmatmul.mubr.bf16.gmra.mrb[0].mxu0 %v59
  %v969 = vpop.f32.mrb[0].mxu0
  %v970 = vadd.f32 %v204, %v969
  %v971 = vpop.f32.mrb[0].mxu0
  %v972 = vadd.f32 %v208, %v971
  %v973 = vpop.f32.mrb[0].mxu0
  %v974 = vpop.f32.mrb[0].mxu0
  %975 = vdwg.mxu0
  %976 = vmatprep.subr.bf16.mxu0 %v664
  %977 = vmatpush1.bf16.msra.mxu0 %v663
  %978 = vmatprep.subr.bf16.mxu0 %v668
  %979 = vmatpush1.bf16.msra.mxu0 %v667
  %980 = vmatprep.subr.bf16.mxu0 %v672
  %981 = vmatpush1.bf16.msra.mxu0 %v671
  %982 = vmatprep.subr.bf16.mxu0 %v676
  %983 = vmatpush1.bf16.msra.mxu0 %v675
  %984 = vmatprep.subr.bf16.mxu0 %v680
  %985 = vmatpush1.bf16.msra.mxu0 %v679
  %986 = vmatprep.subr.bf16.mxu0 %v684
  %987 = vmatpush1.bf16.msra.mxu0 %v683
  %988 = vmatprep.subr.bf16.mxu0 %v688
  %989 = vmatpush1.bf16.msra.mxu0 %v687
  %990 = vmatprep.subr.bf16.mxu0 %v692
  %991 = vmatpush1.bf16.msra.mxu0 %v691
  %992 = vmatprep.subr.bf16.mxu0 %v696
  %993 = vmatpush1.bf16.msra.mxu0 %v695
  %994 = vmatprep.subr.bf16.mxu0 %v700
  %995 = vmatpush1.bf16.msra.mxu0 %v699
  %996 = vmatprep.subr.bf16.mxu0 %v704
  %997 = vmatpush1.bf16.msra.mxu0 %v703
  %998 = vmatprep.subr.bf16.mxu0 %v708
  %999 = vmatpush1.bf16.msra.mxu0 %v707
  %1000 = vmatprep.subr.bf16.mxu0 %v712
  %1001 = vmatpush1.bf16.msra.mxu0 %v711
  %1002 = vmatprep.subr.bf16.mxu0 %v716
  %1003 = vmatpush1.bf16.msra.mxu0 %v715
  %1004 = vmatprep.subr.bf16.mxu0 %v720
  %1005 = vmatpush1.bf16.msra.mxu0 %v719
  %1006 = vmatprep.subr.bf16.mxu0 %v724
  %1007 = vmatpush1.bf16.msra.mxu0 %v723
  %1008 = vmatprep.mubr.bf16.mxu0 %v62
  %1009 = vmatmul.mubr.bf16.gmra.mrb[0].mxu0 %v61
  %v1010 = vpop.f32.mrb[0].mxu0
  %v1011 = vadd.f32 %v970, %v1010
  %v1012 = vpop.f32.mrb[0].mxu0
  %v1013 = vadd.f32 %v972, %v1012
  %v1014 = vpop.f32.mrb[0].mxu0
  %v1015 = vpop.f32.mrb[0].mxu0
  %1016 = vdwg.mxu0
  %v1017 = vmax.f32 %v929, 0.0
  %v1018 = vmax.f32 %v931, 0.0
  %v1019 = vmax.f32 %v1011, 0.0
  %v1020 = vmax.f32 %v1013, 0.0
  %v1021 = vld [vmem:[%s3] sm:$0xf]
  %v1022 = vld [vmem:[%s3 + $0x4] sm:$0xf]
  %v1023 = vld [vmem:[%s3 + $0x8] sm:$0xf]
  %v1024 = vld [vmem:[%s3 + $0xc] sm:$0xf]
  %v1025 = vld [vmem:[%s3 + $0x10] sm:$0xf]
  %v1026 = vld [vmem:[%s3 + $0x14] sm:$0xf]
  %v1027 = vld [vmem:[%s3 + $0x18] sm:$0xf]
  %v1028 = vld [vmem:[%s3 + $0x1c] sm:$0xf]
  %v1029 = vld [vmem:[%s3 + $0x20] sm:$0xf]
  %v1030 = vld [vmem:[%s3 + $0x24] sm:$0xf]
  %v1031 = vld [vmem:[%s3 + $0x28] sm:$0xf]
  %v1032 = vld [vmem:[%s3 + $0x2c] sm:$0xf]
  %v1033 = vld [vmem:[%s3 + $0x30] sm:$0xf]
  %v1034 = vld [vmem:[%s3 + $0x34] sm:$0xf]
  %v1035 = vld [vmem:[%s3 + $0x38] sm:$0xf]
  %v1036 = vld [vmem:[%s3 + $0x3c] sm:$0xf]
  %v1037 = vld [vmem:[%s3 + $0x40] sm:$0xf]
  %v1038 = vld [vmem:[%s3 + $0x44] sm:$0xf]
  %v1039 = vld [vmem:[%s3 + $0x48] sm:$0xf]
  %v1040 = vld [vmem:[%s3 + $0x4c] sm:$0xf]
  %v1041 = vld [vmem:[%s3 + $0x50] sm:$0xf]
  %v1042 = vld [vmem:[%s3 + $0x54] sm:$0xf]
  %v1043 = vld [vmem:[%s3 + $0x58] sm:$0xf]
  %v1044 = vld [vmem:[%s3 + $0x5c] sm:$0xf]
  %v1045 = vld [vmem:[%s3 + $0x60] sm:$0xf]
  %v1046 = vld [vmem:[%s3 + $0x64] sm:$0xf]
  %v1047 = vld [vmem:[%s3 + $0x68] sm:$0xf]
  %v1048 = vld [vmem:[%s3 + $0x6c] sm:$0xf]
  %v1049 = vld [vmem:[%s3 + $0x70] sm:$0xf]
  %v1050 = vld [vmem:[%s3 + $0x74] sm:$0xf]
  %v1051 = vld [vmem:[%s3 + $0x78] sm:$0xf]
  %v1052 = vld [vmem:[%s3 + $0x7c] sm:$0xf]
  %v1053 = vld [vmem:[%s3 + $0x80] sm:$0xf]
  %v1054 = vld [vmem:[%s3 + $0x84] sm:$0xf]
  %v1055 = vld [vmem:[%s3 + $0x88] sm:$0xf]
  %v1056 = vld [vmem:[%s3 + $0x8c] sm:$0xf]
  %v1057 = vld [vmem:[%s3 + $0x90] sm:$0xf]
  %v1058 = vld [vmem:[%s3 + $0x94] sm:$0xf]
  %v1059 = vld [vmem:[%s3 + $0x98] sm:$0xf]
  %v1060 = vld [vmem:[%s3 + $0x9c] sm:$0xf]
  %v1061 = vld [vmem:[%s3 + $0xa0] sm:$0xf]
  %v1062 = vld [vmem:[%s3 + $0xa4] sm:$0xf]
  %v1063 = vld [vmem:[%s3 + $0xa8] sm:$0xf]
  %v1064 = vld [vmem:[%s3 + $0xac] sm:$0xf]
  %v1065 = vld [vmem:[%s3 + $0xb0] sm:$0xf]
  %v1066 = vld [vmem:[%s3 + $0xb4] sm:$0xf]
  %v1067 = vld [vmem:[%s3 + $0xb8] sm:$0xf]
  %v1068 = vld [vmem:[%s3 + $0xbc] sm:$0xf]
  %v1069 = vld [vmem:[%s3 + $0xc0] sm:$0xf]
  %v1070 = vld [vmem:[%s3 + $0xc4] sm:$0xf]
  %v1071 = vld [vmem:[%s3 + $0xc8] sm:$0xf]
  %v1072 = vld [vmem:[%s3 + $0xcc] sm:$0xf]
  %v1073 = vld [vmem:[%s3 + $0xd0] sm:$0xf]
  %v1074 = vld [vmem:[%s3 + $0xd4] sm:$0xf]
  %v1075 = vld [vmem:[%s3 + $0xd8] sm:$0xf]
  %v1076 = vld [vmem:[%s3 + $0xdc] sm:$0xf]
  %v1077 = vld [vmem:[%s3 + $0xe0] sm:$0xf]
  %v1078 = vld [vmem:[%s3 + $0xe4] sm:$0xf]
  %v1079 = vld [vmem:[%s3 + $0xe8] sm:$0xf]
  %v1080 = vld [vmem:[%s3 + $0xec] sm:$0xf]
  %v1081 = vld [vmem:[%s3 + $0xf0] sm:$0xf]
  %v1082 = vld [vmem:[%s3 + $0xf4] sm:$0xf]
  %v1083 = vld [vmem:[%s3 + $0xf8] sm:$0xf]
  %v1084 = vld [vmem:[%s3 + $0xfc] sm:$0xf]
  %v1085 = vld [vmem:[%s4] sm:$0x1]
  %v1087 = vlaneseq
  %v1088 = vshrl.u32 %v1087, 7
  %v1089 = vsub.s32 0, %v1088
  %v1090 = vrot.slane %v1085, %v1089
  %v1156 = vunpack.c.l.b16 %v1021
  %v1157 = vunpack.c.l.b16 %v1022
  %v1158 = vunpack.c.l.b16 %v1023
  %v1159 = vunpack.c.l.b16 %v1024
  %v1160 = vunpack.c.l.b16 %v1025
  %v1161 = vunpack.c.l.b16 %v1026
  %v1162 = vunpack.c.l.b16 %v1027
  %v1163 = vunpack.c.l.b16 %v1028
  %v1164 = vunpack.c.l.b16 %v1029
  %v1165 = vunpack.c.l.b16 %v1030
  %v1166 = vunpack.c.l.b16 %v1031
  %v1167 = vunpack.c.l.b16 %v1032
  %v1168 = vunpack.c.l.b16 %v1033
  %v1169 = vunpack.c.l.b16 %v1034
  %v1170 = vunpack.c.l.b16 %v1035
  %v1171 = vunpack.c.l.b16 %v1036
  %v1172 = vunpack.c.l.b16 %v1037
  %v1173 = vunpack.c.l.b16 %v1038
  %v1174 = vunpack.c.l.b16 %v1039
  %v1175 = vunpack.c.l.b16 %v1040
  %v1176 = vunpack.c.l.b16 %v1041
  %v1177 = vunpack.c.l.b16 %v1042
  %v1178 = vunpack.c.l.b16 %v1043
  %v1179 = vunpack.c.l.b16 %v1044
  %v1180 = vunpack.c.l.b16 %v1045
  %v1181 = vunpack.c.l.b16 %v1046
  %v1182 = vunpack.c.l.b16 %v1047
  %v1183 = vunpack.c.l.b16 %v1048
  %v1184 = vunpack.c.l.b16 %v1049
  %v1185 = vunpack.c.l.b16 %v1050
  %v1186 = vunpack.c.l.b16 %v1051
  %v1187 = vunpack.c.l.b16 %v1052
  %v1188 = vunpack.c.l.b16 %v1053
  %v1189 = vunpack.c.l.b16 %v1054
  %v1190 = vunpack.c.l.b16 %v1055
  %v1191 = vunpack.c.l.b16 %v1056
  %v1192 = vunpack.c.l.b16 %v1057
  %v1193 = vunpack.c.l.b16 %v1058
  %v1194 = vunpack.c.l.b16 %v1059
  %v1195 = vunpack.c.l.b16 %v1060
  %v1196 = vunpack.c.l.b16 %v1061
  %v1197 = vunpack.c.l.b16 %v1062
  %v1198 = vunpack.c.l.b16 %v1063
  %v1199 = vunpack.c.l.b16 %v1064
  %v1200 = vunpack.c.l.b16 %v1065
  %v1201 = vunpack.c.l.b16 %v1066
  %v1202 = vunpack.c.l.b16 %v1067
  %v1203 = vunpack.c.l.b16 %v1068
  %v1204 = vunpack.c.l.b16 %v1069
  %v1205 = vunpack.c.l.b16 %v1070
  %v1206 = vunpack.c.l.b16 %v1071
  %v1207 = vunpack.c.l.b16 %v1072
  %v1208 = vunpack.c.l.b16 %v1073
  %v1209 = vunpack.c.l.b16 %v1074
  %v1210 = vunpack.c.l.b16 %v1075
  %v1211 = vunpack.c.l.b16 %v1076
  %v1212 = vunpack.c.l.b16 %v1077
  %v1213 = vunpack.c.l.b16 %v1078
  %v1214 = vunpack.c.l.b16 %v1079
  %v1215 = vunpack.c.l.b16 %v1080
  %v1216 = vunpack.c.l.b16 %v1081
  %v1217 = vunpack.c.l.b16 %v1082
  %v1218 = vunpack.c.l.b16 %v1083
  %v1219 = vunpack.c.l.b16 %v1084
  %v1220 = vpack.c.b16 %v1157, %v1156
  %v1221 = vpack.c.b16 %v1159, %v1158
  %v1222 = vpack.c.b16 %v1161, %v1160
  %v1223 = vpack.c.b16 %v1163, %v1162
  %v1224 = vpack.c.b16 %v1165, %v1164
  %v1225 = vpack.c.b16 %v1167, %v1166
  %v1226 = vpack.c.b16 %v1169, %v1168
  %v1227 = vpack.c.b16 %v1171, %v1170
  %v1228 = vpack.c.b16 %v1173, %v1172
  %v1229 = vpack.c.b16 %v1175, %v1174
  %v1230 = vpack.c.b16 %v1177, %v1176
  %v1231 = vpack.c.b16 %v1179, %v1178
  %v1232 = vpack.c.b16 %v1181, %v1180
  %v1233 = vpack.c.b16 %v1183, %v1182
  %v1234 = vpack.c.b16 %v1185, %v1184
  %v1235 = vpack.c.b16 %v1187, %v1186
  %v1236 = vpack.c.b16 %v1189, %v1188
  %v1237 = vpack.c.b16 %v1191, %v1190
  %v1238 = vpack.c.b16 %v1193, %v1192
  %v1239 = vpack.c.b16 %v1195, %v1194
  %v1240 = vpack.c.b16 %v1197, %v1196
  %v1241 = vpack.c.b16 %v1199, %v1198
  %v1242 = vpack.c.b16 %v1201, %v1200
  %v1243 = vpack.c.b16 %v1203, %v1202
  %v1244 = vpack.c.b16 %v1205, %v1204
  %v1245 = vpack.c.b16 %v1207, %v1206
  %v1246 = vpack.c.b16 %v1209, %v1208
  %v1247 = vpack.c.b16 %v1211, %v1210
  %v1248 = vpack.c.b16 %v1213, %v1212
  %v1249 = vpack.c.b16 %v1215, %v1214
  %v1250 = vpack.c.b16 %v1217, %v1216
  %v1251 = vpack.c.b16 %v1219, %v1218
  %1284 = vmatprep.subr.bf16.mxu0 0
  %1285 = vmatpush1.bf16.msra.mxu0 %v1220
  %1286 = vmatprep.subr.bf16.mxu0 0
  %1287 = vmatpush1.bf16.msra.mxu0 %v1221
  %1288 = vmatprep.subr.bf16.mxu0 0
  %1289 = vmatpush1.bf16.msra.mxu0 %v1222
  %1290 = vmatprep.subr.bf16.mxu0 0
  %1291 = vmatpush1.bf16.msra.mxu0 %v1223
  %1292 = vmatprep.subr.bf16.mxu0 0
  %1293 = vmatpush1.bf16.msra.mxu0 %v1224
  %1294 = vmatprep.subr.bf16.mxu0 0
  %1295 = vmatpush1.bf16.msra.mxu0 %v1225
  %1296 = vmatprep.subr.bf16.mxu0 0
  %1297 = vmatpush1.bf16.msra.mxu0 %v1226
  %1298 = vmatprep.subr.bf16.mxu0 0
  %1299 = vmatpush1.bf16.msra.mxu0 %v1227
  %1300 = vmatprep.subr.bf16.mxu0 0
  %1301 = vmatpush1.bf16.msra.mxu0 %v1228
  %1302 = vmatprep.subr.bf16.mxu0 0
  %1303 = vmatpush1.bf16.msra.mxu0 %v1229
  %1304 = vmatprep.subr.bf16.mxu0 0
  %1305 = vmatpush1.bf16.msra.mxu0 %v1230
  %1306 = vmatprep.subr.bf16.mxu0 0
  %1307 = vmatpush1.bf16.msra.mxu0 %v1231
  %1308 = vmatprep.subr.bf16.mxu0 0
  %1309 = vmatpush1.bf16.msra.mxu0 %v1232
  %1310 = vmatprep.subr.bf16.mxu0 0
  %1311 = vmatpush1.bf16.msra.mxu0 %v1233
  %1312 = vmatprep.subr.bf16.mxu0 0
  %1313 = vmatpush1.bf16.msra.mxu0 %v1234
  %1314 = vmatprep.subr.bf16.mxu0 0
  %1315 = vmatpush1.bf16.msra.mxu0 %v1235
  %1316 = vmatprep.mubr.bf16.mxu0 %v60
  %1317 = vmatmul.mubr.bf16.gmra.mrb[0].mxu0 %v59
  %v1318 = vpop.f32.mrb[0].mxu0
  %v1319 = vadd.f32 %v1090, %v1318
  %v1320 = vpop.f32.mrb[0].mxu0
  %v1321 = vpop.f32.mrb[0].mxu0
  %v1322 = vpop.f32.mrb[0].mxu0
  %1323 = vdwg.mxu0
  %1324 = vmatprep.subr.bf16.mxu0 0
  %1325 = vmatpush1.bf16.msra.mxu0 %v1236
  %1326 = vmatprep.subr.bf16.mxu0 0
  %1327 = vmatpush1.bf16.msra.mxu0 %v1237
  %1328 = vmatprep.subr.bf16.mxu0 0
  %1329 = vmatpush1.bf16.msra.mxu0 %v1238
  %1330 = vmatprep.subr.bf16.mxu0 0
  %1331 = vmatpush1.bf16.msra.mxu0 %v1239
  %1332 = vmatprep.subr.bf16.mxu0 0
  %1333 = vmatpush1.bf16.msra.mxu0 %v1240
  %1334 = vmatprep.subr.bf16.mxu0 0
  %1335 = vmatpush1.bf16.msra.mxu0 %v1241
  %1336 = vmatprep.subr.bf16.mxu0 0
  %1337 = vmatpush1.bf16.msra.mxu0 %v1242
  %1338 = vmatprep.subr.bf16.mxu0 0
  %1339 = vmatpush1.bf16.msra.mxu0 %v1243
  %1340 = vmatprep.subr.bf16.mxu0 0
  %1341 = vmatpush1.bf16.msra.mxu0 %v1244
  %1342 = vmatprep.subr.bf16.mxu0 0
  %1343 = vmatpush1.bf16.msra.mxu0 %v1245
  %1344 = vmatprep.subr.bf16.mxu0 0
  %1345 = vmatpush1.bf16.msra.mxu0 %v1246
  %1346 = vmatprep.subr.bf16.mxu0 0
  %1347 = vmatpush1.bf16.msra.mxu0 %v1247
  %1348 = vmatprep.subr.bf16.mxu0 0
  %1349 = vmatpush1.bf16.msra.mxu0 %v1248
  %1350 = vmatprep.subr.bf16.mxu0 0
  %1351 = vmatpush1.bf16.msra.mxu0 %v1249
  %1352 = vmatprep.subr.bf16.mxu0 0
  %1353 = vmatpush1.bf16.msra.mxu0 %v1250
  %1354 = vmatprep.subr.bf16.mxu0 0
  %1355 = vmatpush1.bf16.msra.mxu0 %v1251
  %1356 = vmatprep.mubr.bf16.mxu0 %v62
  %1357 = vmatmul.mubr.bf16.gmra.mrb[0].mxu0 %v61
  %v1358 = vpop.f32.mrb[0].mxu0
  %v1359 = vadd.f32 %v1319, %v1358
  %v1360 = vpop.f32.mrb[0].mxu0
  %v1361 = vpop.f32.mrb[0].mxu0
  %v1362 = vpop.f32.mrb[0].mxu0
  %1363 = vdwg.mxu0
  %v1364 = vmax.f32 %v1359, 0.0
  %v1365 = vpack.c.bf16 %v1017, %v1017
  %v1366 = vpack.c.bf16 %v1018, %v1018
  %v1367 = vpack.c.bf16 %v1019, %v1019
  %v1368 = vpack.c.bf16 %v1020, %v1020
  %v1369 = vld [vmem:[%s5] sm:$0xf]
  %v1370 = vld [vmem:[%s5 + $0x4] sm:$0xf]
  %v1371 = vld [vmem:[%s5 + $0x8] sm:$0xf]
  %v1372 = vld [vmem:[%s5 + $0xc] sm:$0xf]
  %v1373 = vld [vmem:[%s5 + $0x10] sm:$0xf]
  %v1374 = vld [vmem:[%s5 + $0x14] sm:$0xf]
  %v1375 = vld [vmem:[%s5 + $0x18] sm:$0xf]
  %v1376 = vld [vmem:[%s5 + $0x1c] sm:$0xf]
  %v1377 = vld [vmem:[%s5 + $0x20] sm:$0xf]
  %v1378 = vld [vmem:[%s5 + $0x24] sm:$0xf]
  %v1379 = vld [vmem:[%s5 + $0x28] sm:$0xf]
  %v1380 = vld [vmem:[%s5 + $0x2c] sm:$0xf]
  %v1381 = vld [vmem:[%s5 + $0x30] sm:$0xf]
  %v1382 = vld [vmem:[%s5 + $0x34] sm:$0xf]
  %v1383 = vld [vmem:[%s5 + $0x38] sm:$0xf]
  %v1384 = vld [vmem:[%s5 + $0x3c] sm:$0xf]
  %v1385 = vld [vmem:[%s5 + $0x40] sm:$0xf]
  %v1386 = vld [vmem:[%s5 + $0x44] sm:$0xf]
  %v1387 = vld [vmem:[%s5 + $0x48] sm:$0xf]
  %v1388 = vld [vmem:[%s5 + $0x4c] sm:$0xf]
  %v1389 = vld [vmem:[%s5 + $0x50] sm:$0xf]
  %v1390 = vld [vmem:[%s5 + $0x54] sm:$0xf]
  %v1391 = vld [vmem:[%s5 + $0x58] sm:$0xf]
  %v1392 = vld [vmem:[%s5 + $0x5c] sm:$0xf]
  %v1393 = vld [vmem:[%s5 + $0x60] sm:$0xf]
  %v1394 = vld [vmem:[%s5 + $0x64] sm:$0xf]
  %v1395 = vld [vmem:[%s5 + $0x68] sm:$0xf]
  %v1396 = vld [vmem:[%s5 + $0x6c] sm:$0xf]
  %v1397 = vld [vmem:[%s5 + $0x70] sm:$0xf]
  %v1398 = vld [vmem:[%s5 + $0x74] sm:$0xf]
  %v1399 = vld [vmem:[%s5 + $0x78] sm:$0xf]
  %v1400 = vld [vmem:[%s5 + $0x7c] sm:$0xf]
  %v1401 = vld [vmem:[%s5 + $0x80] sm:$0xf]
  %v1402 = vld [vmem:[%s5 + $0x84] sm:$0xf]
  %v1403 = vld [vmem:[%s5 + $0x88] sm:$0xf]
  %v1404 = vld [vmem:[%s5 + $0x8c] sm:$0xf]
  %v1405 = vld [vmem:[%s5 + $0x90] sm:$0xf]
  %v1406 = vld [vmem:[%s5 + $0x94] sm:$0xf]
  %v1407 = vld [vmem:[%s5 + $0x98] sm:$0xf]
  %v1408 = vld [vmem:[%s5 + $0x9c] sm:$0xf]
  %v1409 = vld [vmem:[%s5 + $0xa0] sm:$0xf]
  %v1410 = vld [vmem:[%s5 + $0xa4] sm:$0xf]
  %v1411 = vld [vmem:[%s5 + $0xa8] sm:$0xf]
  %v1412 = vld [vmem:[%s5 + $0xac] sm:$0xf]
  %v1413 = vld [vmem:[%s5 + $0xb0] sm:$0xf]
  %v1414 = vld [vmem:[%s5 + $0xb4] sm:$0xf]
  %v1415 = vld [vmem:[%s5 + $0xb8] sm:$0xf]
  %v1416 = vld [vmem:[%s5 + $0xbc] sm:$0xf]
  %v1417 = vld [vmem:[%s5 + $0xc0] sm:$0xf]
  %v1418 = vld [vmem:[%s5 + $0xc4] sm:$0xf]
  %v1419 = vld [vmem:[%s5 + $0xc8] sm:$0xf]
  %v1420 = vld [vmem:[%s5 + $0xcc] sm:$0xf]
  %v1421 = vld [vmem:[%s5 + $0xd0] sm:$0xf]
  %v1422 = vld [vmem:[%s5 + $0xd4] sm:$0xf]
  %v1423 = vld [vmem:[%s5 + $0xd8] sm:$0xf]
  %v1424 = vld [vmem:[%s5 + $0xdc] sm:$0xf]
  %v1425 = vld [vmem:[%s5 + $0xe0] sm:$0xf]
  %v1426 = vld [vmem:[%s5 + $0xe4] sm:$0xf]
  %v1427 = vld [vmem:[%s5 + $0xe8] sm:$0xf]
  %v1428 = vld [vmem:[%s5 + $0xec] sm:$0xf]
  %v1429 = vld [vmem:[%s5 + $0xf0] sm:$0xf]
  %v1430 = vld [vmem:[%s5 + $0xf4] sm:$0xf]
  %v1431 = vld [vmem:[%s5 + $0xf8] sm:$0xf]
  %v1432 = vld [vmem:[%s5 + $0xfc] sm:$0xf]
  %v1433 = vpack.c.bf16 %v1364, %v1364
  %v1434 = vld [vmem:[%s6] sm:$0xf]
  %v1435 = vld [vmem:[%s6 + $0x4] sm:$0xf]
  %v1436 = vld [vmem:[%s6 + $0x8] sm:$0xf]
  %v1437 = vld [vmem:[%s6 + $0xc] sm:$0xf]
  %v1438 = vld [vmem:[%s6 + $0x10] sm:$0xf]
  %v1439 = vld [vmem:[%s6 + $0x14] sm:$0xf]
  %v1440 = vld [vmem:[%s6 + $0x18] sm:$0xf]
  %v1441 = vld [vmem:[%s6 + $0x1c] sm:$0xf]
  %v1442 = vld [vmem:[%s6 + $0x20] sm:$0xf]
  %v1443 = vld [vmem:[%s6 + $0x24] sm:$0xf]
  %v1444 = vld [vmem:[%s6 + $0x28] sm:$0xf]
  %v1445 = vld [vmem:[%s6 + $0x2c] sm:$0xf]
  %v1446 = vld [vmem:[%s6 + $0x30] sm:$0xf]
  %v1447 = vld [vmem:[%s6 + $0x34] sm:$0xf]
  %v1448 = vld [vmem:[%s6 + $0x38] sm:$0xf]
  %v1449 = vld [vmem:[%s6 + $0x3c] sm:$0xf]
  %v1466 = vunpack.c.l.b16 %v1434
  %v1467 = vunpack.c.l.b16 %v1435
  %v1468 = vunpack.c.l.b16 %v1436
  %v1469 = vunpack.c.l.b16 %v1437
  %v1470 = vunpack.c.l.b16 %v1438
  %v1471 = vunpack.c.l.b16 %v1439
  %v1472 = vunpack.c.l.b16 %v1440
  %v1473 = vunpack.c.l.b16 %v1441
  %v1474 = vunpack.c.l.b16 %v1442
  %v1475 = vunpack.c.l.b16 %v1443
  %v1476 = vunpack.c.l.b16 %v1444
  %v1477 = vunpack.c.l.b16 %v1445
  %v1478 = vunpack.c.l.b16 %v1446
  %v1479 = vunpack.c.l.b16 %v1447
  %v1480 = vunpack.c.l.b16 %v1448
  %v1481 = vunpack.c.l.b16 %v1449
  %v1482 = vpack.c.b16 %v1467, %v1466
  %v1483 = vpack.c.b16 %v1469, %v1468
  %v1484 = vpack.c.b16 %v1471, %v1470
  %v1485 = vpack.c.b16 %v1473, %v1472
  %v1486 = vpack.c.b16 %v1475, %v1474
  %v1487 = vpack.c.b16 %v1477, %v1476
  %v1488 = vpack.c.b16 %v1479, %v1478
  %v1489 = vpack.c.b16 %v1481, %v1480
  %1498 = vmatprep.subr.bf16.mxu0 0
  %1499 = vmatpush1.bf16.msra.mxu0 %v1482
  %1500 = vmatprep.subr.bf16.mxu0 0
  %1501 = vmatpush1.bf16.msra.mxu0 %v1483
  %1502 = vmatprep.subr.bf16.mxu0 0
  %1503 = vmatpush1.bf16.msra.mxu0 %v1484
  %1504 = vmatprep.subr.bf16.mxu0 0
  %1505 = vmatpush1.bf16.msra.mxu0 %v1485
  %1506 = vmatprep.subr.bf16.mxu0 0
  %1507 = vmatpush1.bf16.msra.mxu0 %v1486
  %1508 = vmatprep.subr.bf16.mxu0 0
  %1509 = vmatpush1.bf16.msra.mxu0 %v1487
  %1510 = vmatprep.subr.bf16.mxu0 0
  %1511 = vmatpush1.bf16.msra.mxu0 %v1488
  %1512 = vmatprep.subr.bf16.mxu0 0
  %1513 = vmatpush1.bf16.msra.mxu0 %v1489
  %1514 = vmatprep.subr.bf16.mxu0 0
  %1515 = vmatpush1.bf16.msra.mxu0 0
  %1516 = vmatprep.subr.bf16.mxu0 0
  %1517 = vmatpush1.bf16.msra.mxu0 0
  %1518 = vmatprep.subr.bf16.mxu0 0
  %1519 = vmatpush1.bf16.msra.mxu0 0
  %1520 = vmatprep.subr.bf16.mxu0 0
  %1521 = vmatpush1.bf16.msra.mxu0 0
  %1522 = vmatprep.subr.bf16.mxu0 0
  %1523 = vmatpush1.bf16.msra.mxu0 0
  %1524 = vmatprep.subr.bf16.mxu0 0
  %1525 = vmatpush1.bf16.msra.mxu0 0
  %1526 = vmatprep.subr.bf16.mxu0 0
  %1527 = vmatpush1.bf16.msra.mxu0 0
  %1528 = vmatprep.subr.bf16.mxu0 0
  %1529 = vmatpush1.bf16.msra.mxu0 0
  %1530 = vmatprep.mubr.bf16.mxu0 0
  %1531 = vmatmul.mubr.bf16.gmra.mrb[0].mxu0 %v1433
  %v1532 = vpop.f32.mrb[0].mxu0
  %v1533 = vadd.f32 0.0, %v1532
  %v1534 = vpop.f32.mrb[0].mxu0
  %v1535 = vpop.f32.mrb[0].mxu0
  %v1536 = vpop.f32.mrb[0].mxu0
  %1537 = vdwg.mxu0
  %v1602 = vunpack.c.l.b16 %v1369
  %v1603 = vunpack.c.l.b16 %v1370
  %v1604 = vunpack.c.l.b16 %v1371
  %v1605 = vunpack.c.l.b16 %v1372
  %v1606 = vunpack.c.l.b16 %v1373
  %v1607 = vunpack.c.l.b16 %v1374
  %v1608 = vunpack.c.l.b16 %v1375
  %v1609 = vunpack.c.l.b16 %v1376
  %v1610 = vunpack.c.l.b16 %v1377
  %v1611 = vunpack.c.l.b16 %v1378
  %v1612 = vunpack.c.l.b16 %v1379
  %v1613 = vunpack.c.l.b16 %v1380
  %v1614 = vunpack.c.l.b16 %v1381
  %v1615 = vunpack.c.l.b16 %v1382
  %v1616 = vunpack.c.l.b16 %v1383
  %v1617 = vunpack.c.l.b16 %v1384
  %v1618 = vunpack.c.l.b16 %v1385
  %v1619 = vunpack.c.l.b16 %v1386
  %v1620 = vunpack.c.l.b16 %v1387
  %v1621 = vunpack.c.l.b16 %v1388
  %v1622 = vunpack.c.l.b16 %v1389
  %v1623 = vunpack.c.l.b16 %v1390
  %v1624 = vunpack.c.l.b16 %v1391
  %v1625 = vunpack.c.l.b16 %v1392
  %v1626 = vunpack.c.l.b16 %v1393
  %v1627 = vunpack.c.l.b16 %v1394
  %v1628 = vunpack.c.l.b16 %v1395
  %v1629 = vunpack.c.l.b16 %v1396
  %v1630 = vunpack.c.l.b16 %v1397
  %v1631 = vunpack.c.l.b16 %v1398
  %v1632 = vunpack.c.l.b16 %v1399
  %v1633 = vunpack.c.l.b16 %v1400
  %v1634 = vunpack.c.l.b16 %v1401
  %v1635 = vunpack.c.l.b16 %v1402
  %v1636 = vunpack.c.l.b16 %v1403
  %v1637 = vunpack.c.l.b16 %v1404
  %v1638 = vunpack.c.l.b16 %v1405
  %v1639 = vunpack.c.l.b16 %v1406
  %v1640 = vunpack.c.l.b16 %v1407
  %v1641 = vunpack.c.l.b16 %v1408
  %v1642 = vunpack.c.l.b16 %v1409
  %v1643 = vunpack.c.l.b16 %v1410
  %v1644 = vunpack.c.l.b16 %v1411
  %v1645 = vunpack.c.l.b16 %v1412
  %v1646 = vunpack.c.l.b16 %v1413
  %v1647 = vunpack.c.l.b16 %v1414
  %v1648 = vunpack.c.l.b16 %v1415
  %v1649 = vunpack.c.l.b16 %v1416
  %v1650 = vunpack.c.l.b16 %v1417
  %v1651 = vunpack.c.l.b16 %v1418
  %v1652 = vunpack.c.l.b16 %v1419
  %v1653 = vunpack.c.l.b16 %v1420
  %v1654 = vunpack.c.l.b16 %v1421
  %v1655 = vunpack.c.l.b16 %v1422
  %v1656 = vunpack.c.l.b16 %v1423
  %v1657 = vunpack.c.l.b16 %v1424
  %v1658 = vunpack.c.l.b16 %v1425
  %v1659 = vunpack.c.l.b16 %v1426
  %v1660 = vunpack.c.l.b16 %v1427
  %v1661 = vunpack.c.l.b16 %v1428
  %v1662 = vunpack.c.l.b16 %v1429
  %v1663 = vunpack.c.l.b16 %v1430
  %v1664 = vunpack.c.l.b16 %v1431
  %v1665 = vunpack.c.l.b16 %v1432
  %v1666 = vpack.c.b16 %v1603, %v1602
  %v1667 = vpack.c.b16 %v1605, %v1604
  %v1668 = vpack.c.b16 %v1607, %v1606
  %v1669 = vpack.c.b16 %v1609, %v1608
  %v1670 = vpack.c.b16 %v1611, %v1610
  %v1671 = vpack.c.b16 %v1613, %v1612
  %v1672 = vpack.c.b16 %v1615, %v1614
  %v1673 = vpack.c.b16 %v1617, %v1616
  %v1674 = vpack.c.b16 %v1619, %v1618
  %v1675 = vpack.c.b16 %v1621, %v1620
  %v1676 = vpack.c.b16 %v1623, %v1622
  %v1677 = vpack.c.b16 %v1625, %v1624
  %v1678 = vpack.c.b16 %v1627, %v1626
  %v1679 = vpack.c.b16 %v1629, %v1628
  %v1680 = vpack.c.b16 %v1631, %v1630
  %v1681 = vpack.c.b16 %v1633, %v1632
  %v1682 = vpack.c.b16 %v1635, %v1634
  %v1683 = vpack.c.b16 %v1637, %v1636
  %v1684 = vpack.c.b16 %v1639, %v1638
  %v1685 = vpack.c.b16 %v1641, %v1640
  %v1686 = vpack.c.b16 %v1643, %v1642
  %v1687 = vpack.c.b16 %v1645, %v1644
  %v1688 = vpack.c.b16 %v1647, %v1646
  %v1689 = vpack.c.b16 %v1649, %v1648
  %v1690 = vpack.c.b16 %v1651, %v1650
  %v1691 = vpack.c.b16 %v1653, %v1652
  %v1692 = vpack.c.b16 %v1655, %v1654
  %v1693 = vpack.c.b16 %v1657, %v1656
  %v1694 = vpack.c.b16 %v1659, %v1658
  %v1695 = vpack.c.b16 %v1661, %v1660
  %v1696 = vpack.c.b16 %v1663, %v1662
  %v1697 = vpack.c.b16 %v1665, %v1664
  %1730 = vmatprep.subr.bf16.mxu0 0
  %1731 = vmatpush1.bf16.msra.mxu0 %v1666
  %1732 = vmatprep.subr.bf16.mxu0 0
  %1733 = vmatpush1.bf16.msra.mxu0 %v1667
  %1734 = vmatprep.subr.bf16.mxu0 0
  %1735 = vmatpush1.bf16.msra.mxu0 %v1668
  %1736 = vmatprep.subr.bf16.mxu0 0
  %1737 = vmatpush1.bf16.msra.mxu0 %v1669
  %1738 = vmatprep.subr.bf16.mxu0 0
  %1739 = vmatpush1.bf16.msra.mxu0 %v1670
  %1740 = vmatprep.subr.bf16.mxu0 0
  %1741 = vmatpush1.bf16.msra.mxu0 %v1671
  %1742 = vmatprep.subr.bf16.mxu0 0
  %1743 = vmatpush1.bf16.msra.mxu0 %v1672
  %1744 = vmatprep.subr.bf16.mxu0 0
  %1745 = vmatpush1.bf16.msra.mxu0 %v1673
  %1746 = vmatprep.subr.bf16.mxu0 0
  %1747 = vmatpush1.bf16.msra.mxu0 %v1674
  %1748 = vmatprep.subr.bf16.mxu0 0
  %1749 = vmatpush1.bf16.msra.mxu0 %v1675
  %1750 = vmatprep.subr.bf16.mxu0 0
  %1751 = vmatpush1.bf16.msra.mxu0 %v1676
  %1752 = vmatprep.subr.bf16.mxu0 0
  %1753 = vmatpush1.bf16.msra.mxu0 %v1677
  %1754 = vmatprep.subr.bf16.mxu0 0
  %1755 = vmatpush1.bf16.msra.mxu0 %v1678
  %1756 = vmatprep.subr.bf16.mxu0 0
  %1757 = vmatpush1.bf16.msra.mxu0 %v1679
  %1758 = vmatprep.subr.bf16.mxu0 0
  %1759 = vmatpush1.bf16.msra.mxu0 %v1680
  %1760 = vmatprep.subr.bf16.mxu0 0
  %1761 = vmatpush1.bf16.msra.mxu0 %v1681
  %1762 = vmatprep.mubr.bf16.mxu0 %v1366
  %1763 = vmatmul.mubr.bf16.gmra.mrb[0].mxu0 %v1365
  %v1764 = vpop.f32.mrb[0].mxu0
  %v1765 = vadd.f32 %v1533, %v1764
  %v1766 = vpop.f32.mrb[0].mxu0
  %v1767 = vpop.f32.mrb[0].mxu0
  %v1768 = vpop.f32.mrb[0].mxu0
  %1769 = vdwg.mxu0
  %1770 = vmatprep.subr.bf16.mxu0 0
  %1771 = vmatpush1.bf16.msra.mxu0 %v1682
  %1772 = vmatprep.subr.bf16.mxu0 0
  %1773 = vmatpush1.bf16.msra.mxu0 %v1683
  %1774 = vmatprep.subr.bf16.mxu0 0
  %1775 = vmatpush1.bf16.msra.mxu0 %v1684
  %1776 = vmatprep.subr.bf16.mxu0 0
  %1777 = vmatpush1.bf16.msra.mxu0 %v1685
  %1778 = vmatprep.subr.bf16.mxu0 0
  %1779 = vmatpush1.bf16.msra.mxu0 %v1686
  %1780 = vmatprep.subr.bf16.mxu0 0
  %1781 = vmatpush1.bf16.msra.mxu0 %v1687
  %1782 = vmatprep.subr.bf16.mxu0 0
  %1783 = vmatpush1.bf16.msra.mxu0 %v1688
  %1784 = vmatprep.subr.bf16.mxu0 0
  %1785 = vmatpush1.bf16.msra.mxu0 %v1689
  %1786 = vmatprep.subr.bf16.mxu0 0
  %1787 = vmatpush1.bf16.msra.mxu0 %v1690
  %1788 = vmatprep.subr.bf16.mxu0 0
  %1789 = vmatpush1.bf16.msra.mxu0 %v1691
  %1790 = vmatprep.subr.bf16.mxu0 0
  %1791 = vmatpush1.bf16.msra.mxu0 %v1692
  %1792 = vmatprep.subr.bf16.mxu0 0
  %1793 = vmatpush1.bf16.msra.mxu0 %v1693
  %1794 = vmatprep.subr.bf16.mxu0 0
  %1795 = vmatpush1.bf16.msra.mxu0 %v1694
  %1796 = vmatprep.subr.bf16.mxu0 0
  %1797 = vmatpush1.bf16.msra.mxu0 %v1695
  %1798 = vmatprep.subr.bf16.mxu0 0
  %1799 = vmatpush1.bf16.msra.mxu0 %v1696
  %1800 = vmatprep.subr.bf16.mxu0 0
  %1801 = vmatpush1.bf16.msra.mxu0 %v1697
  %1802 = vmatprep.mubr.bf16.mxu0 %v1368
  %1803 = vmatmul.mubr.bf16.gmra.mrb[0].mxu0 %v1367
  %v1804 = vpop.f32.mrb[0].mxu0
  %v1805 = vadd.f32 %v1765, %v1804
  %v1806 = vpop.f32.mrb[0].mxu0
  %v1807 = vpop.f32.mrb[0].mxu0
  %v1808 = vpop.f32.mrb[0].mxu0
  %1809 = vdwg.mxu0
  %v1810 = vld [vmem:[%s7] sm:$0x1]
  %v1812 = vlaneseq
  %v1813 = vshrl.u32 %v1812, 7
  %v1814 = vsub.s32 0, %v1813
  %v1815 = vrot.slane %v1810, %v1814
  %v1817 = vadd.f32 %v1805, %v1815
  %v1818 = vmax.f32 %v1817, 0.0
  %v1819 = vpack.c.bf16 %v1818, %v1818
  %v1820 = vld [vmem:[%s8] sm:$0xff]
  %v1821 = vld [vmem:[%s8 + $0x8] sm:$0xff]
  %v1822 = vld [vmem:[%s8 + $0x10] sm:$0xff]
  %v1823 = vld [vmem:[%s8 + $0x18] sm:$0xff]
  %v1824 = vld [vmem:[%s8 + $0x20] sm:$0xff]
  %v1825 = vld [vmem:[%s8 + $0x28] sm:$0xff]
  %v1826 = vld [vmem:[%s8 + $0x30] sm:$0xff]
  %v1827 = vld [vmem:[%s8 + $0x38] sm:$0xff]
  %v1828 = vld [vmem:[%s8 + $0x40] sm:$0xff]
  %v1829 = vld [vmem:[%s8 + $0x48] sm:$0xff]
  %v1830 = vld [vmem:[%s8 + $0x50] sm:$0xff]
  %v1831 = vld [vmem:[%s8 + $0x58] sm:$0xff]
  %v1832 = vld [vmem:[%s8 + $0x60] sm:$0xff]
  %v1833 = vld [vmem:[%s8 + $0x68] sm:$0xff]
  %v1834 = vld [vmem:[%s8 + $0x70] sm:$0xff]
  %v1835 = vld [vmem:[%s8 + $0x78] sm:$0xff]
  %v1836 = vld [vmem:[%s8 + $0x80] sm:$0xff]
  %v1837 = vld [vmem:[%s8 + $0x88] sm:$0xff]
  %v1838 = vld [vmem:[%s8 + $0x90] sm:$0xff]
  %v1839 = vld [vmem:[%s8 + $0x98] sm:$0xff]
  %v1840 = vld [vmem:[%s8 + $0xa0] sm:$0xff]
  %v1841 = vld [vmem:[%s8 + $0xa8] sm:$0xff]
  %v1842 = vld [vmem:[%s8 + $0xb0] sm:$0xff]
  %v1843 = vld [vmem:[%s8 + $0xb8] sm:$0xff]
  %v1844 = vld [vmem:[%s8 + $0xc0] sm:$0xff]
  %v1845 = vld [vmem:[%s8 + $0xc8] sm:$0xff]
  %v1846 = vld [vmem:[%s8 + $0xd0] sm:$0xff]
  %v1847 = vld [vmem:[%s8 + $0xd8] sm:$0xff]
  %v1848 = vld [vmem:[%s8 + $0xe0] sm:$0xff]
  %v1849 = vld [vmem:[%s8 + $0xe8] sm:$0xff]
  %v1850 = vld [vmem:[%s8 + $0xf0] sm:$0xff]
  %v1851 = vld [vmem:[%s8 + $0xf8] sm:$0xff]
  %v1852 = vld [vmem:[%s9] sm:$0xf]
  %v1854 = vlaneseq
  %v1855 = vshrl.u32 %v1854, 7
  %v1856 = vsub.s32 0, %v1855
  %v1857 = vrot.slane %v1852, %v1856
  %v1858 = vlaneseq
  %v1859 = vshrl.u32 %v1858, 7
  %v1860 = vsub.s32 1, %v1859
  %v1861 = vrot.slane %v1852, %v1860
  %v1862 = vlaneseq
  %v1863 = vshrl.u32 %v1862, 7
  %v1864 = vsub.s32 2, %v1863
  %v1865 = vrot.slane %v1852, %v1864
  %v1866 = vlaneseq
  %v1867 = vshrl.u32 %v1866, 7
  %v1868 = vsub.s32 3, %v1867
  %v1869 = vrot.slane %v1852, %v1868
  %v1906 = vunpack.c.l.b16 %v1820
  %v1907 = vunpack.c.h.b16 %v1820
  %v1908 = vunpack.c.l.b16 %v1821
  %v1909 = vunpack.c.h.b16 %v1821
  %v1910 = vunpack.c.l.b16 %v1822
  %v1911 = vunpack.c.h.b16 %v1822
  %v1912 = vunpack.c.l.b16 %v1823
  %v1913 = vunpack.c.h.b16 %v1823
  %v1914 = vunpack.c.l.b16 %v1824
  %v1915 = vunpack.c.h.b16 %v1824
  %v1916 = vunpack.c.l.b16 %v1825
  %v1917 = vunpack.c.h.b16 %v1825
  %v1918 = vunpack.c.l.b16 %v1826
  %v1919 = vunpack.c.h.b16 %v1826
  %v1920 = vunpack.c.l.b16 %v1827
  %v1921 = vunpack.c.h.b16 %v1827
  %v1922 = vunpack.c.l.b16 %v1828
  %v1923 = vunpack.c.h.b16 %v1828
  %v1924 = vunpack.c.l.b16 %v1829
  %v1925 = vunpack.c.h.b16 %v1829
  %v1926 = vunpack.c.l.b16 %v1830
  %v1927 = vunpack.c.h.b16 %v1830
  %v1928 = vunpack.c.l.b16 %v1831
  %v1929 = vunpack.c.h.b16 %v1831
  %v1930 = vunpack.c.l.b16 %v1832
  %v1931 = vunpack.c.h.b16 %v1832
  %v1932 = vunpack.c.l.b16 %v1833
  %v1933 = vunpack.c.h.b16 %v1833
  %v1934 = vunpack.c.l.b16 %v1834
  %v1935 = vunpack.c.h.b16 %v1834
  %v1936 = vunpack.c.l.b16 %v1835
  %v1937 = vunpack.c.h.b16 %v1835
  %v1938 = vunpack.c.l.b16 %v1836
  %v1939 = vunpack.c.h.b16 %v1836
  %v1940 = vunpack.c.l.b16 %v1837
  %v1941 = vunpack.c.h.b16 %v1837
  %v1942 = vunpack.c.l.b16 %v1838
  %v1943 = vunpack.c.h.b16 %v1838
  %v1944 = vunpack.c.l.b16 %v1839
  %v1945 = vunpack.c.h.b16 %v1839
  %v1946 = vunpack.c.l.b16 %v1840
  %v1947 = vunpack.c.h.b16 %v1840
  %v1948 = vunpack.c.l.b16 %v1841
  %v1949 = vunpack.c.h.b16 %v1841
  %v1950 = vunpack.c.l.b16 %v1842
  %v1951 = vunpack.c.h.b16 %v1842
  %v1952 = vunpack.c.l.b16 %v1843
  %v1953 = vunpack.c.h.b16 %v1843
  %v1954 = vunpack.c.l.b16 %v1844
  %v1955 = vunpack.c.h.b16 %v1844
  %v1956 = vunpack.c.l.b16 %v1845
  %v1957 = vunpack.c.h.b16 %v1845
  %v1958 = vunpack.c.l.b16 %v1846
  %v1959 = vunpack.c.h.b16 %v1846
  %v1960 = vunpack.c.l.b16 %v1847
  %v1961 = vunpack.c.h.b16 %v1847
  %v1962 = vunpack.c.l.b16 %v1848
  %v1963 = vunpack.c.h.b16 %v1848
  %v1964 = vunpack.c.l.b16 %v1849
  %v1965 = vunpack.c.h.b16 %v1849
  %v1966 = vunpack.c.l.b16 %v1850
  %v1967 = vunpack.c.h.b16 %v1850
  %v1968 = vunpack.c.l.b16 %v1851
  %v1969 = vunpack.c.h.b16 %v1851
  %v1970 = vpack.c.b16 %v1910, %v1906
  %v1971 = vpack.c.b16 %v1911, %v1907
  %v1972 = vpack.c.b16 %v1912, %v1908
  %v1973 = vpack.c.b16 %v1913, %v1909
  %v1974 = vpack.c.b16 %v1918, %v1914
  %v1975 = vpack.c.b16 %v1919, %v1915
  %v1976 = vpack.c.b16 %v1920, %v1916
  %v1977 = vpack.c.b16 %v1921, %v1917
  %v1978 = vpack.c.b16 %v1926, %v1922
  %v1979 = vpack.c.b16 %v1927, %v1923
  %v1980 = vpack.c.b16 %v1928, %v1924
  %v1981 = vpack.c.b16 %v1929, %v1925
  %v1982 = vpack.c.b16 %v1934, %v1930
  %v1983 = vpack.c.b16 %v1935, %v1931
  %v1984 = vpack.c.b16 %v1936, %v1932
  %v1985 = vpack.c.b16 %v1937, %v1933
  %v1986 = vpack.c.b16 %v1942, %v1938
  %v1987 = vpack.c.b16 %v1943, %v1939
  %v1988 = vpack.c.b16 %v1944, %v1940
  %v1989 = vpack.c.b16 %v1945, %v1941
  %v1990 = vpack.c.b16 %v1950, %v1946
  %v1991 = vpack.c.b16 %v1951, %v1947
  %v1992 = vpack.c.b16 %v1952, %v1948
  %v1993 = vpack.c.b16 %v1953, %v1949
  %v1994 = vpack.c.b16 %v1958, %v1954
  %v1995 = vpack.c.b16 %v1959, %v1955
  %v1996 = vpack.c.b16 %v1960, %v1956
  %v1997 = vpack.c.b16 %v1961, %v1957
  %v1998 = vpack.c.b16 %v1966, %v1962
  %v1999 = vpack.c.b16 %v1967, %v1963
  %v2000 = vpack.c.b16 %v1968, %v1964
  %v2001 = vpack.c.b16 %v1969, %v1965
  %2034 = vmatprep.subr.bf16.mxu0 %v1971
  %2035 = vmatpush1.bf16.msra.mxu0 %v1970
  %2036 = vmatprep.subr.bf16.mxu0 %v1975
  %2037 = vmatpush1.bf16.msra.mxu0 %v1974
  %2038 = vmatprep.subr.bf16.mxu0 %v1979
  %2039 = vmatpush1.bf16.msra.mxu0 %v1978
  %2040 = vmatprep.subr.bf16.mxu0 %v1983
  %2041 = vmatpush1.bf16.msra.mxu0 %v1982
  %2042 = vmatprep.subr.bf16.mxu0 %v1987
  %2043 = vmatpush1.bf16.msra.mxu0 %v1986
  %2044 = vmatprep.subr.bf16.mxu0 %v1991
  %2045 = vmatpush1.bf16.msra.mxu0 %v1990
  %2046 = vmatprep.subr.bf16.mxu0 %v1995
  %2047 = vmatpush1.bf16.msra.mxu0 %v1994
  %2048 = vmatprep.subr.bf16.mxu0 %v1999
  %2049 = vmatpush1.bf16.msra.mxu0 %v1998
  %2050 = vmatprep.subr.bf16.mxu0 0
  %2051 = vmatpush1.bf16.msra.mxu0 0
  %2052 = vmatprep.subr.bf16.mxu0 0
  %2053 = vmatpush1.bf16.msra.mxu0 0
  %2054 = vmatprep.subr.bf16.mxu0 0
  %2055 = vmatpush1.bf16.msra.mxu0 0
  %2056 = vmatprep.subr.bf16.mxu0 0
  %2057 = vmatpush1.bf16.msra.mxu0 0
  %2058 = vmatprep.subr.bf16.mxu0 0
  %2059 = vmatpush1.bf16.msra.mxu0 0
  %2060 = vmatprep.subr.bf16.mxu0 0
  %2061 = vmatpush1.bf16.msra.mxu0 0
  %2062 = vmatprep.subr.bf16.mxu0 0
  %2063 = vmatpush1.bf16.msra.mxu0 0
  %2064 = vmatprep.subr.bf16.mxu0 0
  %2065 = vmatpush1.bf16.msra.mxu0 0
  %2066 = vmatprep.mubr.bf16.mxu0 0
  %2067 = vmatmul.mubr.bf16.gmra.mrb[0].mxu0 %v1819
  %v2068 = vpop.f32.mrb[0].mxu0
  %v2069 = vadd.f32 %v1857, %v2068
  %v2070 = vpop.f32.mrb[0].mxu0
  %v2071 = vadd.f32 %v1861, %v2070
  %v2072 = vpop.f32.mrb[0].mxu0
  %v2073 = vpop.f32.mrb[0].mxu0
  %2074 = vdwg.mxu0
  %2075 = vmatprep.subr.bf16.mxu0 %v1973
  %2076 = vmatpush1.bf16.msra.mxu0 %v1972
  %2077 = vmatprep.subr.bf16.mxu0 %v1977
  %2078 = vmatpush1.bf16.msra.mxu0 %v1976
  %2079 = vmatprep.subr.bf16.mxu0 %v1981
  %2080 = vmatpush1.bf16.msra.mxu0 %v1980
  %2081 = vmatprep.subr.bf16.mxu0 %v1985
  %2082 = vmatpush1.bf16.msra.mxu0 %v1984
  %2083 = vmatprep.subr.bf16.mxu0 %v1989
  %2084 = vmatpush1.bf16.msra.mxu0 %v1988
  %2085 = vmatprep.subr.bf16.mxu0 %v1993
  %2086 = vmatpush1.bf16.msra.mxu0 %v1992
  %2087 = vmatprep.subr.bf16.mxu0 %v1997
  %2088 = vmatpush1.bf16.msra.mxu0 %v1996
  %2089 = vmatprep.subr.bf16.mxu0 %v2001
  %2090 = vmatpush1.bf16.msra.mxu0 %v2000
  %2091 = vmatprep.subr.bf16.mxu0 0
  %2092 = vmatpush1.bf16.msra.mxu0 0
  %2093 = vmatprep.subr.bf16.mxu0 0
  %2094 = vmatpush1.bf16.msra.mxu0 0
  %2095 = vmatprep.subr.bf16.mxu0 0
  %2096 = vmatpush1.bf16.msra.mxu0 0
  %2097 = vmatprep.subr.bf16.mxu0 0
  %2098 = vmatpush1.bf16.msra.mxu0 0
  %2099 = vmatprep.subr.bf16.mxu0 0
  %2100 = vmatpush1.bf16.msra.mxu0 0
  %2101 = vmatprep.subr.bf16.mxu0 0
  %2102 = vmatpush1.bf16.msra.mxu0 0
  %2103 = vmatprep.subr.bf16.mxu0 0
  %2104 = vmatpush1.bf16.msra.mxu0 0
  %2105 = vmatprep.subr.bf16.mxu0 0
  %2106 = vmatpush1.bf16.msra.mxu0 0
  %2107 = vmatprep.mubr.bf16.mxu0 0
  %2108 = vmatmul.mubr.bf16.gmra.mrb[0].mxu0 %v1819
  %v2109 = vpop.f32.mrb[0].mxu0
  %v2110 = vadd.f32 %v1865, %v2109
  %v2111 = vpop.f32.mrb[0].mxu0
  %v2112 = vadd.f32 %v1869, %v2111
  %v2113 = vpop.f32.mrb[0].mxu0
  %v2114 = vpop.f32.mrb[0].mxu0
  %2115 = vdwg.mxu0
  %v2116 = vmax.f32 %v2069, 0.0
  %v2117 = vmax.f32 %v2071, 0.0
  %v2118 = vmax.f32 %v2110, 0.0
  %v2119 = vmax.f32 %v2112, 0.0
  %v2124 = vcombine.low %v2116, %v2117
  %v2125 = vcombine.low %v2118, %v2119
  %v2127 = vunpack.c.l.s4 1983009808
  %v2128 = vunpack.c.0.s8 %v2127
  %v2129 = vlaneseq
  %v2130 = vshrl.u32 %v2129, 7
  %v2131 = vsub.s32 %v2128, %v2130
  %v2132 = vrot.slane %v2124, %v2131
  %v2134 = vunpack.c.l.s4 1983009808
  %v2135 = vunpack.c.0.s8 %v2134
  %v2136 = vlaneseq
  %v2137 = vshrl.u32 %v2136, 7
  %v2138 = vsub.s32 %v2135, %v2137
  %v2139 = vrot.slane %v2125, %v2138
  %v2140 = vcombine.low %v2132, %v2139
  %2142 = vst [vmem:[%s10] sm:$0xff] %v2140
  // Predicated region
  $region42: #{seg_discriminator_forward.12} parent=0 // pred_check
    _
  $region43: #{seg_discriminator_forward.12} parent=0 // pred_check_branch
    %2144 = sbr.rel (0) target = $region45
  $region44: #{seg_discriminator_forward.12} parent=0 // pred_region
    _
  $region45: #{seg_discriminator_forward.12} parent=0 // pred_fallthru
    _
  // Predicated region
  $region46: #{seg_discriminator_forward.12} parent=0 // pred_check
    _
  $region47: #{seg_discriminator_forward.12} parent=0 // pred_check_branch
    %2146 = sbr.rel (0) target = $region49
  $region48: #{seg_discriminator_forward.12} parent=0 // pred_region
    _
  $region49: #{seg_discriminator_forward.12} parent=0 // pred_fallthru
    _

// kernel: seg_discriminator_forward.14
$region0: #{seg_discriminator_forward.14}
  #allocation0 [shape = 'u32[]', space=smem, size = 0x4, offset = 0x4, fixed_abs, tag = 'smem constant byte address 0x4 - core index']
  #allocation1 [shape = 'u32[144,128]{1,0:T(1,128)}', space=vmem, size = 0x12000, scoped, tag = 'internal scratch']
  %s0 = inlined_call_operand.vmem [shape: f32[128,2304], index: 0, kind: input, shape index: {}]
  %s1 = inlined_call_operand.vmem [shape: bf16[2304,128], index: 1, kind: input, shape index: {}]
  %s2 = inlined_call_operand.vmem [shape: f32[1,128], index: 2, kind: input, shape index: {}]
  %s3 = inlined_call_operand.vmem [shape: f32[128,128], index: 3, kind: output, shape index: {}]
  %s4 = sld [smem:[#allocation0]]
  $region22: #{seg_discriminator_forward.14} parent=0
    _
  %s6 = ssub.s32 1, %s4
  %s7 = scalar_select 0, %s6, %s4
  // Predicated region
  $region2: #{seg_discriminator_forward.14} parent=0 // pred_check
    _
  $region3: #{seg_discriminator_forward.14} parent=0 // pred_check_branch
    %9 = sbr.rel (0) target = $region5
  $region4: #{seg_discriminator_forward.14} parent=0 // pred_region
    _
  $region5: #{seg_discriminator_forward.14} parent=0 // pred_fallthru
    _
  // Predicated region
  $region6: #{seg_discriminator_forward.14} parent=0 // pred_check
    _
  $region7: #{seg_discriminator_forward.14} parent=0 // pred_check_branch
    %11 = sbr.rel (0) target = $region9
  $region8: #{seg_discriminator_forward.14} parent=0 // pred_region
    _
  $region9: #{seg_discriminator_forward.14} parent=0 // pred_fallthru
    _
  // Predicated region
  $region10: #{seg_discriminator_forward.14} parent=0 // pred_check
    _
  $region11: #{seg_discriminator_forward.14} parent=0 // pred_check_branch
    %13 = sbr.rel (0) target = $region13
  $region12: #{seg_discriminator_forward.14} parent=0 // pred_region
    _
  $region13: #{seg_discriminator_forward.14} parent=0 // pred_fallthru
    _
  %v15 = vld [vmem:[%s0] sm:$0xff]
  %v16 = vld [vmem:[%s0 + $0x8] sm:$0xff]
  %v17 = vld [vmem:[%s0 + $0x10] sm:$0xff]
  %v18 = vld [vmem:[%s0 + $0x18] sm:$0xff]
  %v19 = vld [vmem:[%s0 + $0x20] sm:$0xff]
  %v20 = vld [vmem:[%s0 + $0x28] sm:$0xff]
  %v21 = vld [vmem:[%s0 + $0x30] sm:$0xff]
  %v22 = vld [vmem:[%s0 + $0x38] sm:$0xff]
  %v23 = vld [vmem:[%s0 + $0x40] sm:$0xff]
  %v24 = vld [vmem:[%s0 + $0x48] sm:$0xff]
  %v25 = vld [vmem:[%s0 + $0x50] sm:$0xff]
  %v26 = vld [vmem:[%s0 + $0x58] sm:$0xff]
  %v27 = vld [vmem:[%s0 + $0x60] sm:$0xff]
  %v28 = vld [vmem:[%s0 + $0x68] sm:$0xff]
  %v29 = vld [vmem:[%s0 + $0x70] sm:$0xff]
  %v30 = vld [vmem:[%s0 + $0x78] sm:$0xff]
  %v31 = vld [vmem:[%s0 + $0x80] sm:$0xff]
  %v32 = vld [vmem:[%s0 + $0x88] sm:$0xff]
  %v33 = vld [vmem:[%s0 + $0x90] sm:$0xff]
  %v34 = vld [vmem:[%s0 + $0x98] sm:$0xff]
  %v35 = vld [vmem:[%s0 + $0xa0] sm:$0xff]
  %v36 = vld [vmem:[%s0 + $0xa8] sm:$0xff]
  %v37 = vld [vmem:[%s0 + $0xb0] sm:$0xff]
  %v38 = vld [vmem:[%s0 + $0xb8] sm:$0xff]
  %v39 = vld [vmem:[%s0 + $0xc0] sm:$0xff]
  %v40 = vld [vmem:[%s0 + $0xc8] sm:$0xff]
  %v41 = vld [vmem:[%s0 + $0xd0] sm:$0xff]
  %v42 = vld [vmem:[%s0 + $0xd8] sm:$0xff]
  %v43 = vld [vmem:[%s0 + $0xe0] sm:$0xff]
  %v44 = vld [vmem:[%s0 + $0xe8] sm:$0xff]
  %v45 = vld [vmem:[%s0 + $0xf0] sm:$0xff]
  %v46 = vld [vmem:[%s0 + $0xf8] sm:$0xff]
  %v47 = vld [vmem:[%s0 + $0x100] sm:$0xff]
  %v48 = vld [vmem:[%s0 + $0x108] sm:$0xff]
  %v49 = vld [vmem:[%s0 + $0x110] sm:$0xff]
  %v50 = vld [vmem:[%s0 + $0x118] sm:$0xff]
  %v51 = vld [vmem:[%s0 + $0x120] sm:$0xff]
  %v52 = vld [vmem:[%s0 + $0x128] sm:$0xff]
  %v53 = vld [vmem:[%s0 + $0x130] sm:$0xff]
  %v54 = vld [vmem:[%s0 + $0x138] sm:$0xff]
  %v55 = vld [vmem:[%s0 + $0x140] sm:$0xff]
  %v56 = vld [vmem:[%s0 + $0x148] sm:$0xff]
  %v57 = vld [vmem:[%s0 + $0x150] sm:$0xff]
  %v58 = vld [vmem:[%s0 + $0x158] sm:$0xff]
  %v59 = vld [vmem:[%s0 + $0x160] sm:$0xff]
  %v60 = vld [vmem:[%s0 + $0x168] sm:$0xff]
  %v61 = vld [vmem:[%s0 + $0x170] sm:$0xff]
  %v62 = vld [vmem:[%s0 + $0x178] sm:$0xff]
  %v63 = vld [vmem:[%s0 + $0x180] sm:$0xff]
  %v64 = vld [vmem:[%s0 + $0x188] sm:$0xff]
  %v65 = vld [vmem:[%s0 + $0x190] sm:$0xff]
  %v66 = vld [vmem:[%s0 + $0x198] sm:$0xff]
  %v67 = vld [vmem:[%s0 + $0x1a0] sm:$0xff]
  %v68 = vld [vmem:[%s0 + $0x1a8] sm:$0xff]
  %v69 = vld [vmem:[%s0 + $0x1b0] sm:$0xff]
  %v70 = vld [vmem:[%s0 + $0x1b8] sm:$0xff]
  %v71 = vld [vmem:[%s0 + $0x1c0] sm:$0xff]
  %v72 = vld [vmem:[%s0 + $0x1c8] sm:$0xff]
  %v73 = vld [vmem:[%s0 + $0x1d0] sm:$0xff]
  %v74 = vld [vmem:[%s0 + $0x1d8] sm:$0xff]
  %v75 = vld [vmem:[%s0 + $0x1e0] sm:$0xff]
  %v76 = vld [vmem:[%s0 + $0x1e8] sm:$0xff]
  %v77 = vld [vmem:[%s0 + $0x1f0] sm:$0xff]
  %v78 = vld [vmem:[%s0 + $0x1f8] sm:$0xff]
  %v79 = vld [vmem:[%s0 + $0x200] sm:$0xff]
  %v80 = vld [vmem:[%s0 + $0x208] sm:$0xff]
  %v81 = vld [vmem:[%s0 + $0x210] sm:$0xff]
  %v82 = vld [vmem:[%s0 + $0x218] sm:$0xff]
  %v83 = vld [vmem:[%s0 + $0x220] sm:$0xff]
  %v84 = vld [vmem:[%s0 + $0x228] sm:$0xff]
  %v85 = vld [vmem:[%s0 + $0x230] sm:$0xff]
  %v86 = vld [vmem:[%s0 + $0x238] sm:$0xff]
  %v87 = vld [vmem:[%s0 + $0x240] sm:$0xff]
  %v88 = vld [vmem:[%s0 + $0x248] sm:$0xff]
  %v89 = vld [vmem:[%s0 + $0x250] sm:$0xff]
  %v90 = vld [vmem:[%s0 + $0x258] sm:$0xff]
  %v91 = vld [vmem:[%s0 + $0x260] sm:$0xff]
  %v92 = vld [vmem:[%s0 + $0x268] sm:$0xff]
  %v93 = vld [vmem:[%s0 + $0x270] sm:$0xff]
  %v94 = vld [vmem:[%s0 + $0x278] sm:$0xff]
  %v95 = vld [vmem:[%s0 + $0x280] sm:$0xff]
  %v96 = vld [vmem:[%s0 + $0x288] sm:$0xff]
  %v97 = vld [vmem:[%s0 + $0x290] sm:$0xff]
  %v98 = vld [vmem:[%s0 + $0x298] sm:$0xff]
  %v99 = vld [vmem:[%s0 + $0x2a0] sm:$0xff]
  %v100 = vld [vmem:[%s0 + $0x2a8] sm:$0xff]
  %v101 = vld [vmem:[%s0 + $0x2b0] sm:$0xff]
  %v102 = vld [vmem:[%s0 + $0x2b8] sm:$0xff]
  %v103 = vld [vmem:[%s0 + $0x2c0] sm:$0xff]
  %v104 = vld [vmem:[%s0 + $0x2c8] sm:$0xff]
  %v105 = vld [vmem:[%s0 + $0x2d0] sm:$0xff]
  %v106 = vld [vmem:[%s0 + $0x2d8] sm:$0xff]
  %v107 = vld [vmem:[%s0 + $0x2e0] sm:$0xff]
  %v108 = vld [vmem:[%s0 + $0x2e8] sm:$0xff]
  %v109 = vld [vmem:[%s0 + $0x2f0] sm:$0xff]
  %v110 = vld [vmem:[%s0 + $0x2f8] sm:$0xff]
  %v111 = vld [vmem:[%s0 + $0x300] sm:$0xff]
  %v112 = vld [vmem:[%s0 + $0x308] sm:$0xff]
  %v113 = vld [vmem:[%s0 + $0x310] sm:$0xff]
  %v114 = vld [vmem:[%s0 + $0x318] sm:$0xff]
  %v115 = vld [vmem:[%s0 + $0x320] sm:$0xff]
  %v116 = vld [vmem:[%s0 + $0x328] sm:$0xff]
  %v117 = vld [vmem:[%s0 + $0x330] sm:$0xff]
  %v118 = vld [vmem:[%s0 + $0x338] sm:$0xff]
  %v119 = vld [vmem:[%s0 + $0x340] sm:$0xff]
  %v120 = vld [vmem:[%s0 + $0x348] sm:$0xff]
  %v121 = vld [vmem:[%s0 + $0x350] sm:$0xff]
  %v122 = vld [vmem:[%s0 + $0x358] sm:$0xff]
  %v123 = vld [vmem:[%s0 + $0x360] sm:$0xff]
  %v124 = vld [vmem:[%s0 + $0x368] sm:$0xff]
  %v125 = vld [vmem:[%s0 + $0x370] sm:$0xff]
  %v126 = vld [vmem:[%s0 + $0x378] sm:$0xff]
  %v127 = vld [vmem:[%s0 + $0x380] sm:$0xff]
  %v128 = vld [vmem:[%s0 + $0x388] sm:$0xff]
  %v129 = vld [vmem:[%s0 + $0x390] sm:$0xff]
  %v130 = vld [vmem:[%s0 + $0x398] sm:$0xff]
  %v131 = vld [vmem:[%s0 + $0x3a0] sm:$0xff]
  %v132 = vld [vmem:[%s0 + $0x3a8] sm:$0xff]
  %v133 = vld [vmem:[%s0 + $0x3b0] sm:$0xff]
  %v134 = vld [vmem:[%s0 + $0x3b8] sm:$0xff]
  %v135 = vld [vmem:[%s0 + $0x3c0] sm:$0xff]
  %v136 = vld [vmem:[%s0 + $0x3c8] sm:$0xff]
  %v137 = vld [vmem:[%s0 + $0x3d0] sm:$0xff]
  %v138 = vld [vmem:[%s0 + $0x3d8] sm:$0xff]
  %v139 = vld [vmem:[%s0 + $0x3e0] sm:$0xff]
  %v140 = vld [vmem:[%s0 + $0x3e8] sm:$0xff]
  %v141 = vld [vmem:[%s0 + $0x3f0] sm:$0xff]
  %v142 = vld [vmem:[%s0 + $0x3f8] sm:$0xff]
  %v143 = vld [vmem:[%s0 + $0x400] sm:$0xff]
  %v144 = vld [vmem:[%s0 + $0x408] sm:$0xff]
  %v145 = vld [vmem:[%s0 + $0x410] sm:$0xff]
  %v146 = vld [vmem:[%s0 + $0x418] sm:$0xff]
  %v147 = vld [vmem:[%s0 + $0x420] sm:$0xff]
  %v148 = vld [vmem:[%s0 + $0x428] sm:$0xff]
  %v149 = vld [vmem:[%s0 + $0x430] sm:$0xff]
  %v150 = vld [vmem:[%s0 + $0x438] sm:$0xff]
  %v151 = vld [vmem:[%s0 + $0x440] sm:$0xff]
  %v152 = vld [vmem:[%s0 + $0x448] sm:$0xff]
  %v153 = vld [vmem:[%s0 + $0x450] sm:$0xff]
  %v154 = vld [vmem:[%s0 + $0x458] sm:$0xff]
  %v155 = vld [vmem:[%s0 + $0x460] sm:$0xff]
  %v156 = vld [vmem:[%s0 + $0x468] sm:$0xff]
  %v157 = vld [vmem:[%s0 + $0x470] sm:$0xff]
  %v158 = vld [vmem:[%s0 + $0x478] sm:$0xff]
  %v159 = vld [vmem:[%s0 + $0x480] sm:$0xff]
  %v160 = vld [vmem:[%s0 + $0x488] sm:$0xff]
  %v161 = vld [vmem:[%s0 + $0x490] sm:$0xff]
  %v162 = vld [vmem:[%s0 + $0x498] sm:$0xff]
  %v163 = vld [vmem:[%s0 + $0x4a0] sm:$0xff]
  %v164 = vld [vmem:[%s0 + $0x4a8] sm:$0xff]
  %v165 = vld [vmem:[%s0 + $0x4b0] sm:$0xff]
  %v166 = vld [vmem:[%s0 + $0x4b8] sm:$0xff]
  %v167 = vld [vmem:[%s0 + $0x4c0] sm:$0xff]
  %v168 = vld [vmem:[%s0 + $0x4c8] sm:$0xff]
  %v169 = vld [vmem:[%s0 + $0x4d0] sm:$0xff]
  %v170 = vld [vmem:[%s0 + $0x4d8] sm:$0xff]
  %v171 = vld [vmem:[%s0 + $0x4e0] sm:$0xff]
  %v172 = vld [vmem:[%s0 + $0x4e8] sm:$0xff]
  %v173 = vld [vmem:[%s0 + $0x4f0] sm:$0xff]
  %v174 = vld [vmem:[%s0 + $0x4f8] sm:$0xff]
  %v175 = vld [vmem:[%s0 + $0x500] sm:$0xff]
  %v176 = vld [vmem:[%s0 + $0x508] sm:$0xff]
  %v177 = vld [vmem:[%s0 + $0x510] sm:$0xff]
  %v178 = vld [vmem:[%s0 + $0x518] sm:$0xff]
  %v179 = vld [vmem:[%s0 + $0x520] sm:$0xff]
  %v180 = vld [vmem:[%s0 + $0x528] sm:$0xff]
  %v181 = vld [vmem:[%s0 + $0x530] sm:$0xff]
  %v182 = vld [vmem:[%s0 + $0x538] sm:$0xff]
  %v183 = vld [vmem:[%s0 + $0x540] sm:$0xff]
  %v184 = vld [vmem:[%s0 + $0x548] sm:$0xff]
  %v185 = vld [vmem:[%s0 + $0x550] sm:$0xff]
  %v186 = vld [vmem:[%s0 + $0x558] sm:$0xff]
  %v187 = vld [vmem:[%s0 + $0x560] sm:$0xff]
  %v188 = vld [vmem:[%s0 + $0x568] sm:$0xff]
  %v189 = vld [vmem:[%s0 + $0x570] sm:$0xff]
  %v190 = vld [vmem:[%s0 + $0x578] sm:$0xff]
  %v191 = vld [vmem:[%s0 + $0x580] sm:$0xff]
  %v192 = vld [vmem:[%s0 + $0x588] sm:$0xff]
  %v193 = vld [vmem:[%s0 + $0x590] sm:$0xff]
  %v194 = vld [vmem:[%s0 + $0x598] sm:$0xff]
  %v195 = vld [vmem:[%s0 + $0x5a0] sm:$0xff]
  %v196 = vld [vmem:[%s0 + $0x5a8] sm:$0xff]
  %v197 = vld [vmem:[%s0 + $0x5b0] sm:$0xff]
  %v198 = vld [vmem:[%s0 + $0x5b8] sm:$0xff]
  %v199 = vld [vmem:[%s0 + $0x5c0] sm:$0xff]
  %v200 = vld [vmem:[%s0 + $0x5c8] sm:$0xff]
  %v201 = vld [vmem:[%s0 + $0x5d0] sm:$0xff]
  %v202 = vld [vmem:[%s0 + $0x5d8] sm:$0xff]
  %v203 = vld [vmem:[%s0 + $0x5e0] sm:$0xff]
  %v204 = vld [vmem:[%s0 + $0x5e8] sm:$0xff]
  %v205 = vld [vmem:[%s0 + $0x5f0] sm:$0xff]
  %v206 = vld [vmem:[%s0 + $0x5f8] sm:$0xff]
  %v207 = vld [vmem:[%s0 + $0x600] sm:$0xff]
  %v208 = vld [vmem:[%s0 + $0x608] sm:$0xff]
  %v209 = vld [vmem:[%s0 + $0x610] sm:$0xff]
  %v210 = vld [vmem:[%s0 + $0x618] sm:$0xff]
  %v211 = vld [vmem:[%s0 + $0x620] sm:$0xff]
  %v212 = vld [vmem:[%s0 + $0x628] sm:$0xff]
  %v213 = vld [vmem:[%s0 + $0x630] sm:$0xff]
  %v214 = vld [vmem:[%s0 + $0x638] sm:$0xff]
  %v215 = vld [vmem:[%s0 + $0x640] sm:$0xff]
  %v216 = vld [vmem:[%s0 + $0x648] sm:$0xff]
  %v217 = vld [vmem:[%s0 + $0x650] sm:$0xff]
  %v218 = vld [vmem:[%s0 + $0x658] sm:$0xff]
  %v219 = vld [vmem:[%s0 + $0x660] sm:$0xff]
  %v220 = vld [vmem:[%s0 + $0x668] sm:$0xff]
  %v221 = vld [vmem:[%s0 + $0x670] sm:$0xff]
  %v222 = vld [vmem:[%s0 + $0x678] sm:$0xff]
  %v223 = vld [vmem:[%s0 + $0x680] sm:$0xff]
  %v224 = vld [vmem:[%s0 + $0x688] sm:$0xff]
  %v225 = vld [vmem:[%s0 + $0x690] sm:$0xff]
  %v226 = vld [vmem:[%s0 + $0x698] sm:$0xff]
  %v227 = vld [vmem:[%s0 + $0x6a0] sm:$0xff]
  %v228 = vld [vmem:[%s0 + $0x6a8] sm:$0xff]
  %v229 = vld [vmem:[%s0 + $0x6b0] sm:$0xff]
  %v230 = vld [vmem:[%s0 + $0x6b8] sm:$0xff]
  %v231 = vld [vmem:[%s0 + $0x6c0] sm:$0xff]
  %v232 = vld [vmem:[%s0 + $0x6c8] sm:$0xff]
  %v233 = vld [vmem:[%s0 + $0x6d0] sm:$0xff]
  %v234 = vld [vmem:[%s0 + $0x6d8] sm:$0xff]
  %v235 = vld [vmem:[%s0 + $0x6e0] sm:$0xff]
  %v236 = vld [vmem:[%s0 + $0x6e8] sm:$0xff]
  %v237 = vld [vmem:[%s0 + $0x6f0] sm:$0xff]
  %v238 = vld [vmem:[%s0 + $0x6f8] sm:$0xff]
  %v239 = vld [vmem:[%s0 + $0x700] sm:$0xff]
  %v240 = vld [vmem:[%s0 + $0x708] sm:$0xff]
  %v241 = vld [vmem:[%s0 + $0x710] sm:$0xff]
  %v242 = vld [vmem:[%s0 + $0x718] sm:$0xff]
  %v243 = vld [vmem:[%s0 + $0x720] sm:$0xff]
  %v244 = vld [vmem:[%s0 + $0x728] sm:$0xff]
  %v245 = vld [vmem:[%s0 + $0x730] sm:$0xff]
  %v246 = vld [vmem:[%s0 + $0x738] sm:$0xff]
  %v247 = vld [vmem:[%s0 + $0x740] sm:$0xff]
  %v248 = vld [vmem:[%s0 + $0x748] sm:$0xff]
  %v249 = vld [vmem:[%s0 + $0x750] sm:$0xff]
  %v250 = vld [vmem:[%s0 + $0x758] sm:$0xff]
  %v251 = vld [vmem:[%s0 + $0x760] sm:$0xff]
  %v252 = vld [vmem:[%s0 + $0x768] sm:$0xff]
  %v253 = vld [vmem:[%s0 + $0x770] sm:$0xff]
  %v254 = vld [vmem:[%s0 + $0x778] sm:$0xff]
  %v255 = vld [vmem:[%s0 + $0x780] sm:$0xff]
  %v256 = vld [vmem:[%s0 + $0x788] sm:$0xff]
  %v257 = vld [vmem:[%s0 + $0x790] sm:$0xff]
  %v258 = vld [vmem:[%s0 + $0x798] sm:$0xff]
  %v259 = vld [vmem:[%s0 + $0x7a0] sm:$0xff]
  %v260 = vld [vmem:[%s0 + $0x7a8] sm:$0xff]
  %v261 = vld [vmem:[%s0 + $0x7b0] sm:$0xff]
  %v262 = vld [vmem:[%s0 + $0x7b8] sm:$0xff]
  %v263 = vld [vmem:[%s0 + $0x7c0] sm:$0xff]
  %v264 = vld [vmem:[%s0 + $0x7c8] sm:$0xff]
  %v265 = vld [vmem:[%s0 + $0x7d0] sm:$0xff]
  %v266 = vld [vmem:[%s0 + $0x7d8] sm:$0xff]
  %v267 = vld [vmem:[%s0 + $0x7e0] sm:$0xff]
  %v268 = vld [vmem:[%s0 + $0x7e8] sm:$0xff]
  %v269 = vld [vmem:[%s0 + $0x7f0] sm:$0xff]
  %v270 = vld [vmem:[%s0 + $0x7f8] sm:$0xff]
  %v271 = vld [vmem:[%s0 + $0x800] sm:$0xff]
  %v272 = vld [vmem:[%s0 + $0x808] sm:$0xff]
  %v273 = vld [vmem:[%s0 + $0x810] sm:$0xff]
  %v274 = vld [vmem:[%s0 + $0x818] sm:$0xff]
  %v275 = vld [vmem:[%s0 + $0x820] sm:$0xff]
  %v276 = vld [vmem:[%s0 + $0x828] sm:$0xff]
  %v277 = vld [vmem:[%s0 + $0x830] sm:$0xff]
  %v278 = vld [vmem:[%s0 + $0x838] sm:$0xff]
  %v279 = vld [vmem:[%s0 + $0x840] sm:$0xff]
  %v280 = vld [vmem:[%s0 + $0x848] sm:$0xff]
  %v281 = vld [vmem:[%s0 + $0x850] sm:$0xff]
  %v282 = vld [vmem:[%s0 + $0x858] sm:$0xff]
  %v283 = vld [vmem:[%s0 + $0x860] sm:$0xff]
  %v284 = vld [vmem:[%s0 + $0x868] sm:$0xff]
  %v285 = vld [vmem:[%s0 + $0x870] sm:$0xff]
  %v286 = vld [vmem:[%s0 + $0x878] sm:$0xff]
  %v287 = vld [vmem:[%s0 + $0x880] sm:$0xff]
  %v288 = vld [vmem:[%s0 + $0x888] sm:$0xff]
  %v289 = vld [vmem:[%s0 + $0x890] sm:$0xff]
  %v290 = vld [vmem:[%s0 + $0x898] sm:$0xff]
  %v291 = vld [vmem:[%s0 + $0x8a0] sm:$0xff]
  %v292 = vld [vmem:[%s0 + $0x8a8] sm:$0xff]
  %v293 = vld [vmem:[%s0 + $0x8b0] sm:$0xff]
  %v294 = vld [vmem:[%s0 + $0x8b8] sm:$0xff]
  %v295 = vld [vmem:[%s0 + $0x8c0] sm:$0xff]
  %v296 = vld [vmem:[%s0 + $0x8c8] sm:$0xff]
  %v297 = vld [vmem:[%s0 + $0x8d0] sm:$0xff]
  %v298 = vld [vmem:[%s0 + $0x8d8] sm:$0xff]
  %v299 = vld [vmem:[%s0 + $0x8e0] sm:$0xff]
  %v300 = vld [vmem:[%s0 + $0x8e8] sm:$0xff]
  %v301 = vld [vmem:[%s0 + $0x8f0] sm:$0xff]
  %v302 = vld [vmem:[%s0 + $0x8f8] sm:$0xff]
  %v303 = vpack.c.bf16 %v33, %v15
  %v304 = vpack.c.bf16 %v34, %v16
  %v305 = vpack.c.bf16 %v35, %v17
  %v306 = vpack.c.bf16 %v36, %v18
  %v307 = vpack.c.bf16 %v37, %v19
  %v308 = vpack.c.bf16 %v38, %v20
  %v309 = vpack.c.bf16 %v39, %v21
  %v310 = vpack.c.bf16 %v40, %v22
  %v311 = vpack.c.bf16 %v41, %v23
  %v312 = vpack.c.bf16 %v42, %v24
  %v313 = vpack.c.bf16 %v43, %v25
  %v314 = vpack.c.bf16 %v44, %v26
  %v315 = vpack.c.bf16 %v45, %v27
  %v316 = vpack.c.bf16 %v46, %v28
  %v317 = vpack.c.bf16 %v47, %v29
  %v318 = vpack.c.bf16 %v48, %v30
  %v319 = vpack.c.bf16 %v49, %v31
  %v320 = vpack.c.bf16 %v50, %v32
  %v321 = vpack.c.bf16 %v69, %v51
  %v322 = vpack.c.bf16 %v70, %v52
  %v323 = vpack.c.bf16 %v71, %v53
  %v324 = vpack.c.bf16 %v72, %v54
  %v325 = vpack.c.bf16 %v73, %v55
  %v326 = vpack.c.bf16 %v74, %v56
  %v327 = vpack.c.bf16 %v75, %v57
  %v328 = vpack.c.bf16 %v76, %v58
  %v329 = vpack.c.bf16 %v77, %v59
  %v330 = vpack.c.bf16 %v78, %v60
  %v331 = vpack.c.bf16 %v79, %v61
  %v332 = vpack.c.bf16 %v80, %v62
  %v333 = vpack.c.bf16 %v81, %v63
  %v334 = vpack.c.bf16 %v82, %v64
  %v335 = vpack.c.bf16 %v83, %v65
  %v336 = vpack.c.bf16 %v84, %v66
  %v337 = vpack.c.bf16 %v85, %v67
  %v338 = vpack.c.bf16 %v86, %v68
  %v339 = vpack.c.bf16 %v105, %v87
  %v340 = vpack.c.bf16 %v106, %v88
  %v341 = vpack.c.bf16 %v107, %v89
  %v342 = vpack.c.bf16 %v108, %v90
  %v343 = vpack.c.bf16 %v109, %v91
  %v344 = vpack.c.bf16 %v110, %v92
  %v345 = vpack.c.bf16 %v111, %v93
  %v346 = vpack.c.bf16 %v112, %v94
  %v347 = vpack.c.bf16 %v113, %v95
  %v348 = vpack.c.bf16 %v114, %v96
  %v349 = vpack.c.bf16 %v115, %v97
  %v350 = vpack.c.bf16 %v116, %v98
  %v351 = vpack.c.bf16 %v117, %v99
  %v352 = vpack.c.bf16 %v118, %v100
  %v353 = vpack.c.bf16 %v119, %v101
  %v354 = vpack.c.bf16 %v120, %v102
  %v355 = vpack.c.bf16 %v121, %v103
  %v356 = vpack.c.bf16 %v122, %v104
  %v357 = vpack.c.bf16 %v141, %v123
  %v358 = vpack.c.bf16 %v142, %v124
  %v359 = vpack.c.bf16 %v143, %v125
  %v360 = vpack.c.bf16 %v144, %v126
  %v361 = vpack.c.bf16 %v145, %v127
  %v362 = vpack.c.bf16 %v146, %v128
  %v363 = vpack.c.bf16 %v147, %v129
  %v364 = vpack.c.bf16 %v148, %v130
  %v365 = vpack.c.bf16 %v149, %v131
  %v366 = vpack.c.bf16 %v150, %v132
  %v367 = vpack.c.bf16 %v151, %v133
  %v368 = vpack.c.bf16 %v152, %v134
  %v369 = vpack.c.bf16 %v153, %v135
  %v370 = vpack.c.bf16 %v154, %v136
  %v371 = vpack.c.bf16 %v155, %v137
  %v372 = vpack.c.bf16 %v156, %v138
  %v373 = vpack.c.bf16 %v157, %v139
  %v374 = vpack.c.bf16 %v158, %v140
  %v375 = vpack.c.bf16 %v177, %v159
  %v376 = vpack.c.bf16 %v178, %v160
  %v377 = vpack.c.bf16 %v179, %v161
  %v378 = vpack.c.bf16 %v180, %v162
  %v379 = vpack.c.bf16 %v181, %v163
  %v380 = vpack.c.bf16 %v182, %v164
  %v381 = vpack.c.bf16 %v183, %v165
  %v382 = vpack.c.bf16 %v184, %v166
  %v383 = vpack.c.bf16 %v185, %v167
  %v384 = vpack.c.bf16 %v186, %v168
  %v385 = vpack.c.bf16 %v187, %v169
  %v386 = vpack.c.bf16 %v188, %v170
  %v387 = vpack.c.bf16 %v189, %v171
  %v388 = vpack.c.bf16 %v190, %v172
  %v389 = vpack.c.bf16 %v191, %v173
  %v390 = vpack.c.bf16 %v192, %v174
  %v391 = vpack.c.bf16 %v193, %v175
  %v392 = vpack.c.bf16 %v194, %v176
  %v393 = vpack.c.bf16 %v213, %v195
  %v394 = vpack.c.bf16 %v214, %v196
  %v395 = vpack.c.bf16 %v215, %v197
  %v396 = vpack.c.bf16 %v216, %v198
  %v397 = vpack.c.bf16 %v217, %v199
  %v398 = vpack.c.bf16 %v218, %v200
  %v399 = vpack.c.bf16 %v219, %v201
  %v400 = vpack.c.bf16 %v220, %v202
  %v401 = vpack.c.bf16 %v221, %v203
  %v402 = vpack.c.bf16 %v222, %v204
  %v403 = vpack.c.bf16 %v223, %v205
  %v404 = vpack.c.bf16 %v224, %v206
  %v405 = vpack.c.bf16 %v225, %v207
  %v406 = vpack.c.bf16 %v226, %v208
  %v407 = vpack.c.bf16 %v227, %v209
  %v408 = vpack.c.bf16 %v228, %v210
  %v409 = vpack.c.bf16 %v229, %v211
  %v410 = vpack.c.bf16 %v230, %v212
  %v411 = vpack.c.bf16 %v249, %v231
  %v412 = vpack.c.bf16 %v250, %v232
  %v413 = vpack.c.bf16 %v251, %v233
  %v414 = vpack.c.bf16 %v252, %v234
  %v415 = vpack.c.bf16 %v253, %v235
  %v416 = vpack.c.bf16 %v254, %v236
  %v417 = vpack.c.bf16 %v255, %v237
  %v418 = vpack.c.bf16 %v256, %v238
  %v419 = vpack.c.bf16 %v257, %v239
  %v420 = vpack.c.bf16 %v258, %v240
  %v421 = vpack.c.bf16 %v259, %v241
  %v422 = vpack.c.bf16 %v260, %v242
  %v423 = vpack.c.bf16 %v261, %v243
  %v424 = vpack.c.bf16 %v262, %v244
  %v425 = vpack.c.bf16 %v263, %v245
  %v426 = vpack.c.bf16 %v264, %v246
  %v427 = vpack.c.bf16 %v265, %v247
  %v428 = vpack.c.bf16 %v266, %v248
  %v429 = vpack.c.bf16 %v285, %v267
  %v430 = vpack.c.bf16 %v286, %v268
  %v431 = vpack.c.bf16 %v287, %v269
  %v432 = vpack.c.bf16 %v288, %v270
  %v433 = vpack.c.bf16 %v289, %v271
  %v434 = vpack.c.bf16 %v290, %v272
  %v435 = vpack.c.bf16 %v291, %v273
  %v436 = vpack.c.bf16 %v292, %v274
  %v437 = vpack.c.bf16 %v293, %v275
  %v438 = vpack.c.bf16 %v294, %v276
  %v439 = vpack.c.bf16 %v295, %v277
  %v440 = vpack.c.bf16 %v296, %v278
  %v441 = vpack.c.bf16 %v297, %v279
  %v442 = vpack.c.bf16 %v298, %v280
  %v443 = vpack.c.bf16 %v299, %v281
  %v444 = vpack.c.bf16 %v300, %v282
  %v445 = vpack.c.bf16 %v301, %v283
  %v446 = vpack.c.bf16 %v302, %v284
  %v447 = vld [vmem:[%s1] sm:$0xf]
  %v448 = vld [vmem:[%s1 + $0x4] sm:$0xf]
  %v449 = vld [vmem:[%s1 + $0x8] sm:$0xf]
  %v450 = vld [vmem:[%s1 + $0xc] sm:$0xf]
  %v451 = vld [vmem:[%s1 + $0x10] sm:$0xf]
  %v452 = vld [vmem:[%s1 + $0x14] sm:$0xf]
  %v453 = vld [vmem:[%s1 + $0x18] sm:$0xf]
  %v454 = vld [vmem:[%s1 + $0x1c] sm:$0xf]
  %v455 = vld [vmem:[%s1 + $0x20] sm:$0xf]
  %v456 = vld [vmem:[%s1 + $0x24] sm:$0xf]
  %v457 = vld [vmem:[%s1 + $0x28] sm:$0xf]
  %v458 = vld [vmem:[%s1 + $0x2c] sm:$0xf]
  %v459 = vld [vmem:[%s1 + $0x30] sm:$0xf]
  %v460 = vld [vmem:[%s1 + $0x34] sm:$0xf]
  %v461 = vld [vmem:[%s1 + $0x38] sm:$0xf]
  %v462 = vld [vmem:[%s1 + $0x3c] sm:$0xf]
  %v463 = vld [vmem:[%s1 + $0x40] sm:$0xf]
  %v464 = vld [vmem:[%s1 + $0x44] sm:$0xf]
  %v465 = vld [vmem:[%s1 + $0x48] sm:$0xf]
  %v466 = vld [vmem:[%s1 + $0x4c] sm:$0xf]
  %v467 = vld [vmem:[%s1 + $0x50] sm:$0xf]
  %v468 = vld [vmem:[%s1 + $0x54] sm:$0xf]
  %v469 = vld [vmem:[%s1 + $0x58] sm:$0xf]
  %v470 = vld [vmem:[%s1 + $0x5c] sm:$0xf]
  %v471 = vld [vmem:[%s1 + $0x60] sm:$0xf]
  %v472 = vld [vmem:[%s1 + $0x64] sm:$0xf]
  %v473 = vld [vmem:[%s1 + $0x68] sm:$0xf]
  %v474 = vld [vmem:[%s1 + $0x6c] sm:$0xf]
  %v475 = vld [vmem:[%s1 + $0x70] sm:$0xf]
  %v476 = vld [vmem:[%s1 + $0x74] sm:$0xf]
  %v477 = vld [vmem:[%s1 + $0x78] sm:$0xf]
  %v478 = vld [vmem:[%s1 + $0x7c] sm:$0xf]
  %v479 = vld [vmem:[%s1 + $0x80] sm:$0xf]
  %v480 = vld [vmem:[%s1 + $0x84] sm:$0xf]
  %v481 = vld [vmem:[%s1 + $0x88] sm:$0xf]
  %v482 = vld [vmem:[%s1 + $0x8c] sm:$0xf]
  %v483 = vld [vmem:[%s1 + $0x90] sm:$0xf]
  %v484 = vld [vmem:[%s1 + $0x94] sm:$0xf]
  %v485 = vld [vmem:[%s1 + $0x98] sm:$0xf]
  %v486 = vld [vmem:[%s1 + $0x9c] sm:$0xf]
  %v487 = vld [vmem:[%s1 + $0xa0] sm:$0xf]
  %v488 = vld [vmem:[%s1 + $0xa4] sm:$0xf]
  %v489 = vld [vmem:[%s1 + $0xa8] sm:$0xf]
  %v490 = vld [vmem:[%s1 + $0xac] sm:$0xf]
  %v491 = vld [vmem:[%s1 + $0xb0] sm:$0xf]
  %v492 = vld [vmem:[%s1 + $0xb4] sm:$0xf]
  %v493 = vld [vmem:[%s1 + $0xb8] sm:$0xf]
  %v494 = vld [vmem:[%s1 + $0xbc] sm:$0xf]
  %v495 = vld [vmem:[%s1 + $0xc0] sm:$0xf]
  %v496 = vld [vmem:[%s1 + $0xc4] sm:$0xf]
  %v497 = vld [vmem:[%s1 + $0xc8] sm:$0xf]
  %v498 = vld [vmem:[%s1 + $0xcc] sm:$0xf]
  %v499 = vld [vmem:[%s1 + $0xd0] sm:$0xf]
  %v500 = vld [vmem:[%s1 + $0xd4] sm:$0xf]
  %v501 = vld [vmem:[%s1 + $0xd8] sm:$0xf]
  %v502 = vld [vmem:[%s1 + $0xdc] sm:$0xf]
  %v503 = vld [vmem:[%s1 + $0xe0] sm:$0xf]
  %v504 = vld [vmem:[%s1 + $0xe4] sm:$0xf]
  %v505 = vld [vmem:[%s1 + $0xe8] sm:$0xf]
  %v506 = vld [vmem:[%s1 + $0xec] sm:$0xf]
  %v507 = vld [vmem:[%s1 + $0xf0] sm:$0xf]
  %v508 = vld [vmem:[%s1 + $0xf4] sm:$0xf]
  %v509 = vld [vmem:[%s1 + $0xf8] sm:$0xf]
  %v510 = vld [vmem:[%s1 + $0xfc] sm:$0xf]
  %v511 = vld [vmem:[%s1 + $0x100] sm:$0xf]
  %v512 = vld [vmem:[%s1 + $0x104] sm:$0xf]
  %v513 = vld [vmem:[%s1 + $0x108] sm:$0xf]
  %v514 = vld [vmem:[%s1 + $0x10c] sm:$0xf]
  %v515 = vld [vmem:[%s1 + $0x110] sm:$0xf]
  %v516 = vld [vmem:[%s1 + $0x114] sm:$0xf]
  %v517 = vld [vmem:[%s1 + $0x118] sm:$0xf]
  %v518 = vld [vmem:[%s1 + $0x11c] sm:$0xf]
  %v519 = vld [vmem:[%s1 + $0x120] sm:$0xf]
  %v520 = vld [vmem:[%s1 + $0x124] sm:$0xf]
  %v521 = vld [vmem:[%s1 + $0x128] sm:$0xf]
  %v522 = vld [vmem:[%s1 + $0x12c] sm:$0xf]
  %v523 = vld [vmem:[%s1 + $0x130] sm:$0xf]
  %v524 = vld [vmem:[%s1 + $0x134] sm:$0xf]
  %v525 = vld [vmem:[%s1 + $0x138] sm:$0xf]
  %v526 = vld [vmem:[%s1 + $0x13c] sm:$0xf]
  %v527 = vld [vmem:[%s1 + $0x140] sm:$0xf]
  %v528 = vld [vmem:[%s1 + $0x144] sm:$0xf]
  %v529 = vld [vmem:[%s1 + $0x148] sm:$0xf]
  %v530 = vld [vmem:[%s1 + $0x14c] sm:$0xf]
  %v531 = vld [vmem:[%s1 + $0x150] sm:$0xf]
  %v532 = vld [vmem:[%s1 + $0x154] sm:$0xf]
  %v533 = vld [vmem:[%s1 + $0x158] sm:$0xf]
  %v534 = vld [vmem:[%s1 + $0x15c] sm:$0xf]
  %v535 = vld [vmem:[%s1 + $0x160] sm:$0xf]
  %v536 = vld [vmem:[%s1 + $0x164] sm:$0xf]
  %v537 = vld [vmem:[%s1 + $0x168] sm:$0xf]
  %v538 = vld [vmem:[%s1 + $0x16c] sm:$0xf]
  %v539 = vld [vmem:[%s1 + $0x170] sm:$0xf]
  %v540 = vld [vmem:[%s1 + $0x174] sm:$0xf]
  %v541 = vld [vmem:[%s1 + $0x178] sm:$0xf]
  %v542 = vld [vmem:[%s1 + $0x17c] sm:$0xf]
  %v543 = vld [vmem:[%s1 + $0x180] sm:$0xf]
  %v544 = vld [vmem:[%s1 + $0x184] sm:$0xf]
  %v545 = vld [vmem:[%s1 + $0x188] sm:$0xf]
  %v546 = vld [vmem:[%s1 + $0x18c] sm:$0xf]
  %v547 = vld [vmem:[%s1 + $0x190] sm:$0xf]
  %v548 = vld [vmem:[%s1 + $0x194] sm:$0xf]
  %v549 = vld [vmem:[%s1 + $0x198] sm:$0xf]
  %v550 = vld [vmem:[%s1 + $0x19c] sm:$0xf]
  %v551 = vld [vmem:[%s1 + $0x1a0] sm:$0xf]
  %v552 = vld [vmem:[%s1 + $0x1a4] sm:$0xf]
  %v553 = vld [vmem:[%s1 + $0x1a8] sm:$0xf]
  %v554 = vld [vmem:[%s1 + $0x1ac] sm:$0xf]
  %v555 = vld [vmem:[%s1 + $0x1b0] sm:$0xf]
  %v556 = vld [vmem:[%s1 + $0x1b4] sm:$0xf]
  %v557 = vld [vmem:[%s1 + $0x1b8] sm:$0xf]
  %v558 = vld [vmem:[%s1 + $0x1bc] sm:$0xf]
  %v559 = vld [vmem:[%s1 + $0x1c0] sm:$0xf]
  %v560 = vld [vmem:[%s1 + $0x1c4] sm:$0xf]
  %v561 = vld [vmem:[%s1 + $0x1c8] sm:$0xf]
  %v562 = vld [vmem:[%s1 + $0x1cc] sm:$0xf]
  %v563 = vld [vmem:[%s1 + $0x1d0] sm:$0xf]
  %v564 = vld [vmem:[%s1 + $0x1d4] sm:$0xf]
  %v565 = vld [vmem:[%s1 + $0x1d8] sm:$0xf]
  %v566 = vld [vmem:[%s1 + $0x1dc] sm:$0xf]
  %v567 = vld [vmem:[%s1 + $0x1e0] sm:$0xf]
  %v568 = vld [vmem:[%s1 + $0x1e4] sm:$0xf]
  %v569 = vld [vmem:[%s1 + $0x1e8] sm:$0xf]
  %v570 = vld [vmem:[%s1 + $0x1ec] sm:$0xf]
  %v571 = vld [vmem:[%s1 + $0x1f0] sm:$0xf]
  %v572 = vld [vmem:[%s1 + $0x1f4] sm:$0xf]
  %v573 = vld [vmem:[%s1 + $0x1f8] sm:$0xf]
  %v574 = vld [vmem:[%s1 + $0x1fc] sm:$0xf]
  %v575 = vld [vmem:[%s1 + $0x200] sm:$0xf]
  %v576 = vld [vmem:[%s1 + $0x204] sm:$0xf]
  %v577 = vld [vmem:[%s1 + $0x208] sm:$0xf]
  %v578 = vld [vmem:[%s1 + $0x20c] sm:$0xf]
  %v579 = vld [vmem:[%s1 + $0x210] sm:$0xf]
  %v580 = vld [vmem:[%s1 + $0x214] sm:$0xf]
  %v581 = vld [vmem:[%s1 + $0x218] sm:$0xf]
  %v582 = vld [vmem:[%s1 + $0x21c] sm:$0xf]
  %v583 = vld [vmem:[%s1 + $0x220] sm:$0xf]
  %v584 = vld [vmem:[%s1 + $0x224] sm:$0xf]
  %v585 = vld [vmem:[%s1 + $0x228] sm:$0xf]
  %v586 = vld [vmem:[%s1 + $0x22c] sm:$0xf]
  %v587 = vld [vmem:[%s1 + $0x230] sm:$0xf]
  %v588 = vld [vmem:[%s1 + $0x234] sm:$0xf]
  %v589 = vld [vmem:[%s1 + $0x238] sm:$0xf]
  %v590 = vld [vmem:[%s1 + $0x23c] sm:$0xf]
  %v591 = vld [vmem:[%s1 + $0x240] sm:$0xf]
  %v592 = vld [vmem:[%s1 + $0x244] sm:$0xf]
  %v593 = vld [vmem:[%s1 + $0x248] sm:$0xf]
  %v594 = vld [vmem:[%s1 + $0x24c] sm:$0xf]
  %v595 = vld [vmem:[%s1 + $0x250] sm:$0xf]
  %v596 = vld [vmem:[%s1 + $0x254] sm:$0xf]
  %v597 = vld [vmem:[%s1 + $0x258] sm:$0xf]
  %v598 = vld [vmem:[%s1 + $0x25c] sm:$0xf]
  %v599 = vld [vmem:[%s1 + $0x260] sm:$0xf]
  %v600 = vld [vmem:[%s1 + $0x264] sm:$0xf]
  %v601 = vld [vmem:[%s1 + $0x268] sm:$0xf]
  %v602 = vld [vmem:[%s1 + $0x26c] sm:$0xf]
  %v603 = vld [vmem:[%s1 + $0x270] sm:$0xf]
  %v604 = vld [vmem:[%s1 + $0x274] sm:$0xf]
  %v605 = vld [vmem:[%s1 + $0x278] sm:$0xf]
  %v606 = vld [vmem:[%s1 + $0x27c] sm:$0xf]
  %v607 = vld [vmem:[%s1 + $0x280] sm:$0xf]
  %v608 = vld [vmem:[%s1 + $0x284] sm:$0xf]
  %v609 = vld [vmem:[%s1 + $0x288] sm:$0xf]
  %v610 = vld [vmem:[%s1 + $0x28c] sm:$0xf]
  %v611 = vld [vmem:[%s1 + $0x290] sm:$0xf]
  %v612 = vld [vmem:[%s1 + $0x294] sm:$0xf]
  %v613 = vld [vmem:[%s1 + $0x298] sm:$0xf]
  %v614 = vld [vmem:[%s1 + $0x29c] sm:$0xf]
  %v615 = vld [vmem:[%s1 + $0x2a0] sm:$0xf]
  %v616 = vld [vmem:[%s1 + $0x2a4] sm:$0xf]
  %v617 = vld [vmem:[%s1 + $0x2a8] sm:$0xf]
  %v618 = vld [vmem:[%s1 + $0x2ac] sm:$0xf]
  %v619 = vld [vmem:[%s1 + $0x2b0] sm:$0xf]
  %v620 = vld [vmem:[%s1 + $0x2b4] sm:$0xf]
  %v621 = vld [vmem:[%s1 + $0x2b8] sm:$0xf]
  %v622 = vld [vmem:[%s1 + $0x2bc] sm:$0xf]
  %v623 = vld [vmem:[%s1 + $0x2c0] sm:$0xf]
  %v624 = vld [vmem:[%s1 + $0x2c4] sm:$0xf]
  %v625 = vld [vmem:[%s1 + $0x2c8] sm:$0xf]
  %v626 = vld [vmem:[%s1 + $0x2cc] sm:$0xf]
  %v627 = vld [vmem:[%s1 + $0x2d0] sm:$0xf]
  %v628 = vld [vmem:[%s1 + $0x2d4] sm:$0xf]
  %v629 = vld [vmem:[%s1 + $0x2d8] sm:$0xf]
  %v630 = vld [vmem:[%s1 + $0x2dc] sm:$0xf]
  %v631 = vld [vmem:[%s1 + $0x2e0] sm:$0xf]
  %v632 = vld [vmem:[%s1 + $0x2e4] sm:$0xf]
  %v633 = vld [vmem:[%s1 + $0x2e8] sm:$0xf]
  %v634 = vld [vmem:[%s1 + $0x2ec] sm:$0xf]
  %v635 = vld [vmem:[%s1 + $0x2f0] sm:$0xf]
  %v636 = vld [vmem:[%s1 + $0x2f4] sm:$0xf]
  %v637 = vld [vmem:[%s1 + $0x2f8] sm:$0xf]
  %v638 = vld [vmem:[%s1 + $0x2fc] sm:$0xf]
  %v639 = vld [vmem:[%s1 + $0x300] sm:$0xf]
  %v640 = vld [vmem:[%s1 + $0x304] sm:$0xf]
  %v641 = vld [vmem:[%s1 + $0x308] sm:$0xf]
  %v642 = vld [vmem:[%s1 + $0x30c] sm:$0xf]
  %v643 = vld [vmem:[%s1 + $0x310] sm:$0xf]
  %v644 = vld [vmem:[%s1 + $0x314] sm:$0xf]
  %v645 = vld [vmem:[%s1 + $0x318] sm:$0xf]
  %v646 = vld [vmem:[%s1 + $0x31c] sm:$0xf]
  %v647 = vld [vmem:[%s1 + $0x320] sm:$0xf]
  %v648 = vld [vmem:[%s1 + $0x324] sm:$0xf]
  %v649 = vld [vmem:[%s1 + $0x328] sm:$0xf]
  %v650 = vld [vmem:[%s1 + $0x32c] sm:$0xf]
  %v651 = vld [vmem:[%s1 + $0x330] sm:$0xf]
  %v652 = vld [vmem:[%s1 + $0x334] sm:$0xf]
  %v653 = vld [vmem:[%s1 + $0x338] sm:$0xf]
  %v654 = vld [vmem:[%s1 + $0x33c] sm:$0xf]
  %v655 = vld [vmem:[%s1 + $0x340] sm:$0xf]
  %v656 = vld [vmem:[%s1 + $0x344] sm:$0xf]
  %v657 = vld [vmem:[%s1 + $0x348] sm:$0xf]
  %v658 = vld [vmem:[%s1 + $0x34c] sm:$0xf]
  %v659 = vld [vmem:[%s1 + $0x350] sm:$0xf]
  %v660 = vld [vmem:[%s1 + $0x354] sm:$0xf]
  %v661 = vld [vmem:[%s1 + $0x358] sm:$0xf]
  %v662 = vld [vmem:[%s1 + $0x35c] sm:$0xf]
  %v663 = vld [vmem:[%s1 + $0x360] sm:$0xf]
  %v664 = vld [vmem:[%s1 + $0x364] sm:$0xf]
  %v665 = vld [vmem:[%s1 + $0x368] sm:$0xf]
  %v666 = vld [vmem:[%s1 + $0x36c] sm:$0xf]
  %v667 = vld [vmem:[%s1 + $0x370] sm:$0xf]
  %v668 = vld [vmem:[%s1 + $0x374] sm:$0xf]
  %v669 = vld [vmem:[%s1 + $0x378] sm:$0xf]
  %v670 = vld [vmem:[%s1 + $0x37c] sm:$0xf]
  %v671 = vld [vmem:[%s1 + $0x380] sm:$0xf]
  %v672 = vld [vmem:[%s1 + $0x384] sm:$0xf]
  %v673 = vld [vmem:[%s1 + $0x388] sm:$0xf]
  %v674 = vld [vmem:[%s1 + $0x38c] sm:$0xf]
  %v675 = vld [vmem:[%s1 + $0x390] sm:$0xf]
  %v676 = vld [vmem:[%s1 + $0x394] sm:$0xf]
  %v677 = vld [vmem:[%s1 + $0x398] sm:$0xf]
  %v678 = vld [vmem:[%s1 + $0x39c] sm:$0xf]
  %v679 = vld [vmem:[%s1 + $0x3a0] sm:$0xf]
  %v680 = vld [vmem:[%s1 + $0x3a4] sm:$0xf]
  %v681 = vld [vmem:[%s1 + $0x3a8] sm:$0xf]
  %v682 = vld [vmem:[%s1 + $0x3ac] sm:$0xf]
  %v683 = vld [vmem:[%s1 + $0x3b0] sm:$0xf]
  %v684 = vld [vmem:[%s1 + $0x3b4] sm:$0xf]
  %v685 = vld [vmem:[%s1 + $0x3b8] sm:$0xf]
  %v686 = vld [vmem:[%s1 + $0x3bc] sm:$0xf]
  %v687 = vld [vmem:[%s1 + $0x3c0] sm:$0xf]
  %v688 = vld [vmem:[%s1 + $0x3c4] sm:$0xf]
  %v689 = vld [vmem:[%s1 + $0x3c8] sm:$0xf]
  %v690 = vld [vmem:[%s1 + $0x3cc] sm:$0xf]
  %v691 = vld [vmem:[%s1 + $0x3d0] sm:$0xf]
  %v692 = vld [vmem:[%s1 + $0x3d4] sm:$0xf]
  %v693 = vld [vmem:[%s1 + $0x3d8] sm:$0xf]
  %v694 = vld [vmem:[%s1 + $0x3dc] sm:$0xf]
  %v695 = vld [vmem:[%s1 + $0x3e0] sm:$0xf]
  %v696 = vld [vmem:[%s1 + $0x3e4] sm:$0xf]
  %v697 = vld [vmem:[%s1 + $0x3e8] sm:$0xf]
  %v698 = vld [vmem:[%s1 + $0x3ec] sm:$0xf]
  %v699 = vld [vmem:[%s1 + $0x3f0] sm:$0xf]
  %v700 = vld [vmem:[%s1 + $0x3f4] sm:$0xf]
  %v701 = vld [vmem:[%s1 + $0x3f8] sm:$0xf]
  %v702 = vld [vmem:[%s1 + $0x3fc] sm:$0xf]
  %v703 = vld [vmem:[%s1 + $0x400] sm:$0xf]
  %v704 = vld [vmem:[%s1 + $0x404] sm:$0xf]
  %v705 = vld [vmem:[%s1 + $0x408] sm:$0xf]
  %v706 = vld [vmem:[%s1 + $0x40c] sm:$0xf]
  %v707 = vld [vmem:[%s1 + $0x410] sm:$0xf]
  %v708 = vld [vmem:[%s1 + $0x414] sm:$0xf]
  %v709 = vld [vmem:[%s1 + $0x418] sm:$0xf]
  %v710 = vld [vmem:[%s1 + $0x41c] sm:$0xf]
  %v711 = vld [vmem:[%s1 + $0x420] sm:$0xf]
  %v712 = vld [vmem:[%s1 + $0x424] sm:$0xf]
  %v713 = vld [vmem:[%s1 + $0x428] sm:$0xf]
  %v714 = vld [vmem:[%s1 + $0x42c] sm:$0xf]
  %v715 = vld [vmem:[%s1 + $0x430] sm:$0xf]
  %v716 = vld [vmem:[%s1 + $0x434] sm:$0xf]
  %v717 = vld [vmem:[%s1 + $0x438] sm:$0xf]
  %v718 = vld [vmem:[%s1 + $0x43c] sm:$0xf]
  %v719 = vld [vmem:[%s1 + $0x440] sm:$0xf]
  %v720 = vld [vmem:[%s1 + $0x444] sm:$0xf]
  %v721 = vld [vmem:[%s1 + $0x448] sm:$0xf]
  %v722 = vld [vmem:[%s1 + $0x44c] sm:$0xf]
  %v723 = vld [vmem:[%s1 + $0x450] sm:$0xf]
  %v724 = vld [vmem:[%s1 + $0x454] sm:$0xf]
  %v725 = vld [vmem:[%s1 + $0x458] sm:$0xf]
  %v726 = vld [vmem:[%s1 + $0x45c] sm:$0xf]
  %v727 = vld [vmem:[%s1 + $0x460] sm:$0xf]
  %v728 = vld [vmem:[%s1 + $0x464] sm:$0xf]
  %v729 = vld [vmem:[%s1 + $0x468] sm:$0xf]
  %v730 = vld [vmem:[%s1 + $0x46c] sm:$0xf]
  %v731 = vld [vmem:[%s1 + $0x470] sm:$0xf]
  %v732 = vld [vmem:[%s1 + $0x474] sm:$0xf]
  %v733 = vld [vmem:[%s1 + $0x478] sm:$0xf]
  %v734 = vld [vmem:[%s1 + $0x47c] sm:$0xf]
  %v735 = vld [vmem:[%s2] sm:$0x1]
  %v737 = vlaneseq
  %v738 = vshrl.u32 %v737, 7
  %v739 = vsub.s32 0, %v738
  %v740 = vrot.slane %v735, %v739
  %v1030 = vunpack.c.l.b16 %v447
  %v1031 = vunpack.c.l.b16 %v448
  %v1032 = vunpack.c.l.b16 %v449
  %v1033 = vunpack.c.l.b16 %v450
  %v1034 = vunpack.c.l.b16 %v451
  %v1035 = vunpack.c.l.b16 %v452
  %v1036 = vunpack.c.l.b16 %v453
  %v1037 = vunpack.c.l.b16 %v454
  %v1038 = vunpack.c.l.b16 %v455
  %v1039 = vunpack.c.l.b16 %v456
  %v1040 = vunpack.c.l.b16 %v457
  %v1041 = vunpack.c.l.b16 %v458
  %v1042 = vunpack.c.l.b16 %v459
  %v1043 = vunpack.c.l.b16 %v460
  %v1044 = vunpack.c.l.b16 %v461
  %v1045 = vunpack.c.l.b16 %v462
  %v1046 = vunpack.c.l.b16 %v463
  %v1047 = vunpack.c.l.b16 %v464
  %v1048 = vunpack.c.l.b16 %v465
  %v1049 = vunpack.c.l.b16 %v466
  %v1050 = vunpack.c.l.b16 %v467
  %v1051 = vunpack.c.l.b16 %v468
  %v1052 = vunpack.c.l.b16 %v469
  %v1053 = vunpack.c.l.b16 %v470
  %v1054 = vunpack.c.l.b16 %v471
  %v1055 = vunpack.c.l.b16 %v472
  %v1056 = vunpack.c.l.b16 %v473
  %v1057 = vunpack.c.l.b16 %v474
  %v1058 = vunpack.c.l.b16 %v475
  %v1059 = vunpack.c.l.b16 %v476
  %v1060 = vunpack.c.l.b16 %v477
  %v1061 = vunpack.c.l.b16 %v478
  %v1062 = vunpack.c.l.b16 %v479
  %v1063 = vunpack.c.l.b16 %v480
  %v1064 = vunpack.c.l.b16 %v481
  %v1065 = vunpack.c.l.b16 %v482
  %v1066 = vunpack.c.l.b16 %v483
  %v1067 = vunpack.c.l.b16 %v484
  %v1068 = vunpack.c.l.b16 %v485
  %v1069 = vunpack.c.l.b16 %v486
  %v1070 = vunpack.c.l.b16 %v487
  %v1071 = vunpack.c.l.b16 %v488
  %v1072 = vunpack.c.l.b16 %v489
  %v1073 = vunpack.c.l.b16 %v490
  %v1074 = vunpack.c.l.b16 %v491
  %v1075 = vunpack.c.l.b16 %v492
  %v1076 = vunpack.c.l.b16 %v493
  %v1077 = vunpack.c.l.b16 %v494
  %v1078 = vunpack.c.l.b16 %v495
  %v1079 = vunpack.c.l.b16 %v496
  %v1080 = vunpack.c.l.b16 %v497
  %v1081 = vunpack.c.l.b16 %v498
  %v1082 = vunpack.c.l.b16 %v499
  %v1083 = vunpack.c.l.b16 %v500
  %v1084 = vunpack.c.l.b16 %v501
  %v1085 = vunpack.c.l.b16 %v502
  %v1086 = vunpack.c.l.b16 %v503
  %v1087 = vunpack.c.l.b16 %v504
  %v1088 = vunpack.c.l.b16 %v505
  %v1089 = vunpack.c.l.b16 %v506
  %v1090 = vunpack.c.l.b16 %v507
  %v1091 = vunpack.c.l.b16 %v508
  %v1092 = vunpack.c.l.b16 %v509
  %v1093 = vunpack.c.l.b16 %v510
  %v1094 = vunpack.c.l.b16 %v511
  %v1095 = vunpack.c.l.b16 %v512
  %v1096 = vunpack.c.l.b16 %v513
  %v1097 = vunpack.c.l.b16 %v514
  %v1098 = vunpack.c.l.b16 %v515
  %v1099 = vunpack.c.l.b16 %v516
  %v1100 = vunpack.c.l.b16 %v517
  %v1101 = vunpack.c.l.b16 %v518
  %v1102 = vunpack.c.l.b16 %v519
  %v1103 = vunpack.c.l.b16 %v520
  %v1104 = vunpack.c.l.b16 %v521
  %v1105 = vunpack.c.l.b16 %v522
  %v1106 = vunpack.c.l.b16 %v523
  %v1107 = vunpack.c.l.b16 %v524
  %v1108 = vunpack.c.l.b16 %v525
  %v1109 = vunpack.c.l.b16 %v526
  %v1110 = vunpack.c.l.b16 %v527
  %v1111 = vunpack.c.l.b16 %v528
  %v1112 = vunpack.c.l.b16 %v529
  %v1113 = vunpack.c.l.b16 %v530
  %v1114 = vunpack.c.l.b16 %v531
  %v1115 = vunpack.c.l.b16 %v532
  %v1116 = vunpack.c.l.b16 %v533
  %v1117 = vunpack.c.l.b16 %v534
  %v1118 = vunpack.c.l.b16 %v535
  %v1119 = vunpack.c.l.b16 %v536
  %v1120 = vunpack.c.l.b16 %v537
  %v1121 = vunpack.c.l.b16 %v538
  %v1122 = vunpack.c.l.b16 %v539
  %v1123 = vunpack.c.l.b16 %v540
  %v1124 = vunpack.c.l.b16 %v541
  %v1125 = vunpack.c.l.b16 %v542
  %v1126 = vunpack.c.l.b16 %v543
  %v1127 = vunpack.c.l.b16 %v544
  %v1128 = vunpack.c.l.b16 %v545
  %v1129 = vunpack.c.l.b16 %v546
  %v1130 = vunpack.c.l.b16 %v547
  %v1131 = vunpack.c.l.b16 %v548
  %v1132 = vunpack.c.l.b16 %v549
  %v1133 = vunpack.c.l.b16 %v550
  %v1134 = vunpack.c.l.b16 %v551
  %v1135 = vunpack.c.l.b16 %v552
  %v1136 = vunpack.c.l.b16 %v553
  %v1137 = vunpack.c.l.b16 %v554
  %v1138 = vunpack.c.l.b16 %v555
  %v1139 = vunpack.c.l.b16 %v556
  %v1140 = vunpack.c.l.b16 %v557
  %v1141 = vunpack.c.l.b16 %v558
  %v1142 = vunpack.c.l.b16 %v559
  %v1143 = vunpack.c.l.b16 %v560
  %v1144 = vunpack.c.l.b16 %v561
  %v1145 = vunpack.c.l.b16 %v562
  %v1146 = vunpack.c.l.b16 %v563
  %v1147 = vunpack.c.l.b16 %v564
  %v1148 = vunpack.c.l.b16 %v565
  %v1149 = vunpack.c.l.b16 %v566
  %v1150 = vunpack.c.l.b16 %v567
  %v1151 = vunpack.c.l.b16 %v568
  %v1152 = vunpack.c.l.b16 %v569
  %v1153 = vunpack.c.l.b16 %v570
  %v1154 = vunpack.c.l.b16 %v571
  %v1155 = vunpack.c.l.b16 %v572
  %v1156 = vunpack.c.l.b16 %v573
  %v1157 = vunpack.c.l.b16 %v574
  %v1158 = vunpack.c.l.b16 %v575
  %v1159 = vunpack.c.l.b16 %v576
  %v1160 = vunpack.c.l.b16 %v577
  %v1161 = vunpack.c.l.b16 %v578
  %v1162 = vunpack.c.l.b16 %v579
  %v1163 = vunpack.c.l.b16 %v580
  %v1164 = vunpack.c.l.b16 %v581
  %v1165 = vunpack.c.l.b16 %v582
  %v1166 = vunpack.c.l.b16 %v583
  %v1167 = vunpack.c.l.b16 %v584
  %v1168 = vunpack.c.l.b16 %v585
  %v1169 = vunpack.c.l.b16 %v586
  %v1170 = vunpack.c.l.b16 %v587
  %v1171 = vunpack.c.l.b16 %v588
  %v1172 = vunpack.c.l.b16 %v589
  %v1173 = vunpack.c.l.b16 %v590
  %v1174 = vunpack.c.l.b16 %v591
  %v1175 = vunpack.c.l.b16 %v592
  %v1176 = vunpack.c.l.b16 %v593
  %v1177 = vunpack.c.l.b16 %v594
  %v1178 = vunpack.c.l.b16 %v595
  %v1179 = vunpack.c.l.b16 %v596
  %v1180 = vunpack.c.l.b16 %v597
  %v1181 = vunpack.c.l.b16 %v598
  %v1182 = vunpack.c.l.b16 %v599
  %v1183 = vunpack.c.l.b16 %v600
  %v1184 = vunpack.c.l.b16 %v601
  %v1185 = vunpack.c.l.b16 %v602
  %v1186 = vunpack.c.l.b16 %v603
  %v1187 = vunpack.c.l.b16 %v604
  %v1188 = vunpack.c.l.b16 %v605
  %v1189 = vunpack.c.l.b16 %v606
  %v1190 = vunpack.c.l.b16 %v607
  %v1191 = vunpack.c.l.b16 %v608
  %v1192 = vunpack.c.l.b16 %v609
  %v1193 = vunpack.c.l.b16 %v610
  %v1194 = vunpack.c.l.b16 %v611
  %v1195 = vunpack.c.l.b16 %v612
  %v1196 = vunpack.c.l.b16 %v613
  %v1197 = vunpack.c.l.b16 %v614
  %v1198 = vunpack.c.l.b16 %v615
  %v1199 = vunpack.c.l.b16 %v616
  %v1200 = vunpack.c.l.b16 %v617
  %v1201 = vunpack.c.l.b16 %v618
  %v1202 = vunpack.c.l.b16 %v619
  %v1203 = vunpack.c.l.b16 %v620
  %v1204 = vunpack.c.l.b16 %v621
  %v1205 = vunpack.c.l.b16 %v622
  %v1206 = vunpack.c.l.b16 %v623
  %v1207 = vunpack.c.l.b16 %v624
  %v1208 = vunpack.c.l.b16 %v625
  %v1209 = vunpack.c.l.b16 %v626
  %v1210 = vunpack.c.l.b16 %v627
  %v1211 = vunpack.c.l.b16 %v628
  %v1212 = vunpack.c.l.b16 %v629
  %v1213 = vunpack.c.l.b16 %v630
  %v1214 = vunpack.c.l.b16 %v631
  %v1215 = vunpack.c.l.b16 %v632
  %v1216 = vunpack.c.l.b16 %v633
  %v1217 = vunpack.c.l.b16 %v634
  %v1218 = vunpack.c.l.b16 %v635
  %v1219 = vunpack.c.l.b16 %v636
  %v1220 = vunpack.c.l.b16 %v637
  %v1221 = vunpack.c.l.b16 %v638
  %v1222 = vunpack.c.l.b16 %v639
  %v1223 = vunpack.c.l.b16 %v640
  %v1224 = vunpack.c.l.b16 %v641
  %v1225 = vunpack.c.l.b16 %v642
  %v1226 = vunpack.c.l.b16 %v643
  %v1227 = vunpack.c.l.b16 %v644
  %v1228 = vunpack.c.l.b16 %v645
  %v1229 = vunpack.c.l.b16 %v646
  %v1230 = vunpack.c.l.b16 %v647
  %v1231 = vunpack.c.l.b16 %v648
  %v1232 = vunpack.c.l.b16 %v649
  %v1233 = vunpack.c.l.b16 %v650
  %v1234 = vunpack.c.l.b16 %v651
  %v1235 = vunpack.c.l.b16 %v652
  %v1236 = vunpack.c.l.b16 %v653
  %v1237 = vunpack.c.l.b16 %v654
  %v1238 = vunpack.c.l.b16 %v655
  %v1239 = vunpack.c.l.b16 %v656
  %v1240 = vunpack.c.l.b16 %v657
  %v1241 = vunpack.c.l.b16 %v658
  %v1242 = vunpack.c.l.b16 %v659
  %v1243 = vunpack.c.l.b16 %v660
  %v1244 = vunpack.c.l.b16 %v661
  %v1245 = vunpack.c.l.b16 %v662
  %v1246 = vunpack.c.l.b16 %v663
  %v1247 = vunpack.c.l.b16 %v664
  %v1248 = vunpack.c.l.b16 %v665
  %v1249 = vunpack.c.l.b16 %v666
  %v1250 = vunpack.c.l.b16 %v667
  %v1251 = vunpack.c.l.b16 %v668
  %v1252 = vunpack.c.l.b16 %v669
  %v1253 = vunpack.c.l.b16 %v670
  %v1254 = vunpack.c.l.b16 %v671
  %v1255 = vunpack.c.l.b16 %v672
  %v1256 = vunpack.c.l.b16 %v673
  %v1257 = vunpack.c.l.b16 %v674
  %v1258 = vunpack.c.l.b16 %v675
  %v1259 = vunpack.c.l.b16 %v676
  %v1260 = vunpack.c.l.b16 %v677
  %v1261 = vunpack.c.l.b16 %v678
  %v1262 = vunpack.c.l.b16 %v679
  %v1263 = vunpack.c.l.b16 %v680
  %v1264 = vunpack.c.l.b16 %v681
  %v1265 = vunpack.c.l.b16 %v682
  %v1266 = vunpack.c.l.b16 %v683
  %v1267 = vunpack.c.l.b16 %v684
  %v1268 = vunpack.c.l.b16 %v685
  %v1269 = vunpack.c.l.b16 %v686
  %v1270 = vunpack.c.l.b16 %v687
  %v1271 = vunpack.c.l.b16 %v688
  %v1272 = vunpack.c.l.b16 %v689
  %v1273 = vunpack.c.l.b16 %v690
  %v1274 = vunpack.c.l.b16 %v691
  %v1275 = vunpack.c.l.b16 %v692
  %v1276 = vunpack.c.l.b16 %v693
  %v1277 = vunpack.c.l.b16 %v694
  %v1278 = vunpack.c.l.b16 %v695
  %v1279 = vunpack.c.l.b16 %v696
  %v1280 = vunpack.c.l.b16 %v697
  %v1281 = vunpack.c.l.b16 %v698
  %v1282 = vunpack.c.l.b16 %v699
  %v1283 = vunpack.c.l.b16 %v700
  %v1284 = vunpack.c.l.b16 %v701
  %v1285 = vunpack.c.l.b16 %v702
  %v1286 = vunpack.c.l.b16 %v703
  %v1287 = vunpack.c.l.b16 %v704
  %v1288 = vunpack.c.l.b16 %v705
  %v1289 = vunpack.c.l.b16 %v706
  %v1290 = vunpack.c.l.b16 %v707
  %v1291 = vunpack.c.l.b16 %v708
  %v1292 = vunpack.c.l.b16 %v709
  %v1293 = vunpack.c.l.b16 %v710
  %v1294 = vunpack.c.l.b16 %v711
  %v1295 = vunpack.c.l.b16 %v712
  %v1296 = vunpack.c.l.b16 %v713
  %v1297 = vunpack.c.l.b16 %v714
  %v1298 = vunpack.c.l.b16 %v715
  %v1299 = vunpack.c.l.b16 %v716
  %v1300 = vunpack.c.l.b16 %v717
  %v1301 = vunpack.c.l.b16 %v718
  %v1302 = vunpack.c.l.b16 %v719
  %v1303 = vunpack.c.l.b16 %v720
  %v1304 = vunpack.c.l.b16 %v721
  %v1305 = vunpack.c.l.b16 %v722
  %v1306 = vunpack.c.l.b16 %v723
  %v1307 = vunpack.c.l.b16 %v724
  %v1308 = vunpack.c.l.b16 %v725
  %v1309 = vunpack.c.l.b16 %v726
  %v1310 = vunpack.c.l.b16 %v727
  %v1311 = vunpack.c.l.b16 %v728
  %v1312 = vunpack.c.l.b16 %v729
  %v1313 = vunpack.c.l.b16 %v730
  %v1314 = vunpack.c.l.b16 %v731
  %v1315 = vunpack.c.l.b16 %v732
  %v1316 = vunpack.c.l.b16 %v733
  %v1317 = vunpack.c.l.b16 %v734
  %v1318 = vpack.c.b16 %v1031, %v1030
  %v1319 = vpack.c.b16 %v1033, %v1032
  %v1320 = vpack.c.b16 %v1035, %v1034
  %v1321 = vpack.c.b16 %v1037, %v1036
  %v1322 = vpack.c.b16 %v1039, %v1038
  %v1323 = vpack.c.b16 %v1041, %v1040
  %v1324 = vpack.c.b16 %v1043, %v1042
  %v1325 = vpack.c.b16 %v1045, %v1044
  %v1326 = vpack.c.b16 %v1047, %v1046
  %v1327 = vpack.c.b16 %v1049, %v1048
  %v1328 = vpack.c.b16 %v1051, %v1050
  %v1329 = vpack.c.b16 %v1053, %v1052
  %v1330 = vpack.c.b16 %v1055, %v1054
  %v1331 = vpack.c.b16 %v1057, %v1056
  %v1332 = vpack.c.b16 %v1059, %v1058
  %v1333 = vpack.c.b16 %v1061, %v1060
  %v1334 = vpack.c.b16 %v1063, %v1062
  %v1335 = vpack.c.b16 %v1065, %v1064
  %v1336 = vpack.c.b16 %v1067, %v1066
  %v1337 = vpack.c.b16 %v1069, %v1068
  %v1338 = vpack.c.b16 %v1071, %v1070
  %v1339 = vpack.c.b16 %v1073, %v1072
  %v1340 = vpack.c.b16 %v1075, %v1074
  %v1341 = vpack.c.b16 %v1077, %v1076
  %v1342 = vpack.c.b16 %v1079, %v1078
  %v1343 = vpack.c.b16 %v1081, %v1080
  %v1344 = vpack.c.b16 %v1083, %v1082
  %v1345 = vpack.c.b16 %v1085, %v1084
  %v1346 = vpack.c.b16 %v1087, %v1086
  %v1347 = vpack.c.b16 %v1089, %v1088
  %v1348 = vpack.c.b16 %v1091, %v1090
  %v1349 = vpack.c.b16 %v1093, %v1092
  %v1350 = vpack.c.b16 %v1095, %v1094
  %v1351 = vpack.c.b16 %v1097, %v1096
  %v1352 = vpack.c.b16 %v1099, %v1098
  %v1353 = vpack.c.b16 %v1101, %v1100
  %v1354 = vpack.c.b16 %v1103, %v1102
  %v1355 = vpack.c.b16 %v1105, %v1104
  %v1356 = vpack.c.b16 %v1107, %v1106
  %v1357 = vpack.c.b16 %v1109, %v1108
  %v1358 = vpack.c.b16 %v1111, %v1110
  %v1359 = vpack.c.b16 %v1113, %v1112
  %v1360 = vpack.c.b16 %v1115, %v1114
  %v1361 = vpack.c.b16 %v1117, %v1116
  %v1362 = vpack.c.b16 %v1119, %v1118
  %v1363 = vpack.c.b16 %v1121, %v1120
  %v1364 = vpack.c.b16 %v1123, %v1122
  %v1365 = vpack.c.b16 %v1125, %v1124
  %v1366 = vpack.c.b16 %v1127, %v1126
  %v1367 = vpack.c.b16 %v1129, %v1128
  %v1368 = vpack.c.b16 %v1131, %v1130
  %v1369 = vpack.c.b16 %v1133, %v1132
  %v1370 = vpack.c.b16 %v1135, %v1134
  %v1371 = vpack.c.b16 %v1137, %v1136
  %v1372 = vpack.c.b16 %v1139, %v1138
  %v1373 = vpack.c.b16 %v1141, %v1140
  %v1374 = vpack.c.b16 %v1143, %v1142
  %v1375 = vpack.c.b16 %v1145, %v1144
  %v1376 = vpack.c.b16 %v1147, %v1146
  %v1377 = vpack.c.b16 %v1149, %v1148
  %v1378 = vpack.c.b16 %v1151, %v1150
  %v1379 = vpack.c.b16 %v1153, %v1152
  %v1380 = vpack.c.b16 %v1155, %v1154
  %v1381 = vpack.c.b16 %v1157, %v1156
  %v1382 = vpack.c.b16 %v1159, %v1158
  %v1383 = vpack.c.b16 %v1161, %v1160
  %v1384 = vpack.c.b16 %v1163, %v1162
  %v1385 = vpack.c.b16 %v1165, %v1164
  %v1386 = vpack.c.b16 %v1167, %v1166
  %v1387 = vpack.c.b16 %v1169, %v1168
  %v1388 = vpack.c.b16 %v1171, %v1170
  %v1389 = vpack.c.b16 %v1173, %v1172
  %v1390 = vpack.c.b16 %v1175, %v1174
  %v1391 = vpack.c.b16 %v1177, %v1176
  %v1392 = vpack.c.b16 %v1179, %v1178
  %v1393 = vpack.c.b16 %v1181, %v1180
  %v1394 = vpack.c.b16 %v1183, %v1182
  %v1395 = vpack.c.b16 %v1185, %v1184
  %v1396 = vpack.c.b16 %v1187, %v1186
  %v1397 = vpack.c.b16 %v1189, %v1188
  %v1398 = vpack.c.b16 %v1191, %v1190
  %v1399 = vpack.c.b16 %v1193, %v1192
  %v1400 = vpack.c.b16 %v1195, %v1194
  %v1401 = vpack.c.b16 %v1197, %v1196
  %v1402 = vpack.c.b16 %v1199, %v1198
  %v1403 = vpack.c.b16 %v1201, %v1200
  %v1404 = vpack.c.b16 %v1203, %v1202
  %v1405 = vpack.c.b16 %v1205, %v1204
  %v1406 = vpack.c.b16 %v1207, %v1206
  %v1407 = vpack.c.b16 %v1209, %v1208
  %v1408 = vpack.c.b16 %v1211, %v1210
  %v1409 = vpack.c.b16 %v1213, %v1212
  %v1410 = vpack.c.b16 %v1215, %v1214
  %v1411 = vpack.c.b16 %v1217, %v1216
  %v1412 = vpack.c.b16 %v1219, %v1218
  %v1413 = vpack.c.b16 %v1221, %v1220
  %v1414 = vpack.c.b16 %v1223, %v1222
  %v1415 = vpack.c.b16 %v1225, %v1224
  %v1416 = vpack.c.b16 %v1227, %v1226
  %v1417 = vpack.c.b16 %v1229, %v1228
  %v1418 = vpack.c.b16 %v1231, %v1230
  %v1419 = vpack.c.b16 %v1233, %v1232
  %v1420 = vpack.c.b16 %v1235, %v1234
  %v1421 = vpack.c.b16 %v1237, %v1236
  %v1422 = vpack.c.b16 %v1239, %v1238
  %v1423 = vpack.c.b16 %v1241, %v1240
  %v1424 = vpack.c.b16 %v1243, %v1242
  %v1425 = vpack.c.b16 %v1245, %v1244
  %v1426 = vpack.c.b16 %v1247, %v1246
  %v1427 = vpack.c.b16 %v1249, %v1248
  %v1428 = vpack.c.b16 %v1251, %v1250
  %v1429 = vpack.c.b16 %v1253, %v1252
  %v1430 = vpack.c.b16 %v1255, %v1254
  %v1431 = vpack.c.b16 %v1257, %v1256
  %v1432 = vpack.c.b16 %v1259, %v1258
  %v1433 = vpack.c.b16 %v1261, %v1260
  %v1434 = vpack.c.b16 %v1263, %v1262
  %v1435 = vpack.c.b16 %v1265, %v1264
  %v1436 = vpack.c.b16 %v1267, %v1266
  %v1437 = vpack.c.b16 %v1269, %v1268
  %v1438 = vpack.c.b16 %v1271, %v1270
  %v1439 = vpack.c.b16 %v1273, %v1272
  %v1440 = vpack.c.b16 %v1275, %v1274
  %v1441 = vpack.c.b16 %v1277, %v1276
  %v1442 = vpack.c.b16 %v1279, %v1278
  %v1443 = vpack.c.b16 %v1281, %v1280
  %v1444 = vpack.c.b16 %v1283, %v1282
  %v1445 = vpack.c.b16 %v1285, %v1284
  %v1446 = vpack.c.b16 %v1287, %v1286
  %v1447 = vpack.c.b16 %v1289, %v1288
  %v1448 = vpack.c.b16 %v1291, %v1290
  %v1449 = vpack.c.b16 %v1293, %v1292
  %v1450 = vpack.c.b16 %v1295, %v1294
  %v1451 = vpack.c.b16 %v1297, %v1296
  %v1452 = vpack.c.b16 %v1299, %v1298
  %v1453 = vpack.c.b16 %v1301, %v1300
  %v1454 = vpack.c.b16 %v1303, %v1302
  %v1455 = vpack.c.b16 %v1305, %v1304
  %v1456 = vpack.c.b16 %v1307, %v1306
  %v1457 = vpack.c.b16 %v1309, %v1308
  %v1458 = vpack.c.b16 %v1311, %v1310
  %v1459 = vpack.c.b16 %v1313, %v1312
  %v1460 = vpack.c.b16 %v1315, %v1314
  %v1461 = vpack.c.b16 %v1317, %v1316
  %1606 = vmatprep.subr.bf16.mxu0 0
  %1607 = vmatpush1.bf16.msra.mxu0 %v1318
  %1608 = vmatprep.subr.bf16.mxu0 0
  %1609 = vmatpush1.bf16.msra.mxu0 %v1319
  %1610 = vmatprep.subr.bf16.mxu0 0
  %1611 = vmatpush1.bf16.msra.mxu0 %v1320
  %1612 = vmatprep.subr.bf16.mxu0 0
  %1613 = vmatpush1.bf16.msra.mxu0 %v1321
  %1614 = vmatprep.subr.bf16.mxu0 0
  %1615 = vmatpush1.bf16.msra.mxu0 %v1322
  %1616 = vmatprep.subr.bf16.mxu0 0
  %1617 = vmatpush1.bf16.msra.mxu0 %v1323
  %1618 = vmatprep.subr.bf16.mxu0 0
  %1619 = vmatpush1.bf16.msra.mxu0 %v1324
  %1620 = vmatprep.subr.bf16.mxu0 0
  %1621 = vmatpush1.bf16.msra.mxu0 %v1325
  %1622 = vmatprep.subr.bf16.mxu0 0
  %1623 = vmatpush1.bf16.msra.mxu0 %v1326
  %1624 = vmatprep.subr.bf16.mxu0 0
  %1625 = vmatpush1.bf16.msra.mxu0 %v1327
  %1626 = vmatprep.subr.bf16.mxu0 0
  %1627 = vmatpush1.bf16.msra.mxu0 %v1328
  %1628 = vmatprep.subr.bf16.mxu0 0
  %1629 = vmatpush1.bf16.msra.mxu0 %v1329
  %1630 = vmatprep.subr.bf16.mxu0 0
  %1631 = vmatpush1.bf16.msra.mxu0 %v1330
  %1632 = vmatprep.subr.bf16.mxu0 0
  %1633 = vmatpush1.bf16.msra.mxu0 %v1331
  %1634 = vmatprep.subr.bf16.mxu0 0
  %1635 = vmatpush1.bf16.msra.mxu0 %v1332
  %1636 = vmatprep.subr.bf16.mxu0 0
  %1637 = vmatpush1.bf16.msra.mxu0 %v1333
  %1638 = vmatprep.mubr.bf16.mxu0 %v304
  %1639 = vmatmul.mubr.bf16.gmra.mrb[0].mxu0 %v303
  %v1640 = vpop.f32.mrb[0].mxu0
  %v1641 = vadd.f32 %v740, %v1640
  %v1642 = vpop.f32.mrb[0].mxu0
  %v1643 = vpop.f32.mrb[0].mxu0
  %v1644 = vadd.f32 %v740, %v1643
  %v1645 = vpop.f32.mrb[0].mxu0
  %1646 = vmatprep.mubr.bf16.mxu0 %v322
  %1647 = vmatmul.mubr.bf16.gmra.mrb[0].mxu0 %v321
  %v1648 = vpop.f32.mrb[0].mxu0
  %v1649 = vadd.f32 %v740, %v1648
  %v1650 = vpop.f32.mrb[0].mxu0
  %v1651 = vpop.f32.mrb[0].mxu0
  %v1652 = vadd.f32 %v740, %v1651
  %v1653 = vpop.f32.mrb[0].mxu0
  %1654 = vmatprep.mubr.bf16.mxu0 %v340
  %1655 = vmatmul.mubr.bf16.gmra.mrb[0].mxu0 %v339
  %v1656 = vpop.f32.mrb[0].mxu0
  %v1657 = vadd.f32 %v740, %v1656
  %v1658 = vpop.f32.mrb[0].mxu0
  %v1659 = vpop.f32.mrb[0].mxu0
  %v1660 = vadd.f32 %v740, %v1659
  %v1661 = vpop.f32.mrb[0].mxu0
  %1662 = vmatprep.mubr.bf16.mxu0 %v358
  %1663 = vmatmul.mubr.bf16.gmra.mrb[0].mxu0 %v357
  %v1664 = vpop.f32.mrb[0].mxu0
  %v1665 = vadd.f32 %v740, %v1664
  %v1666 = vpop.f32.mrb[0].mxu0
  %v1667 = vpop.f32.mrb[0].mxu0
  %v1668 = vadd.f32 %v740, %v1667
  %v1669 = vpop.f32.mrb[0].mxu0
  %1670 = vmatprep.mubr.bf16.mxu0 %v376
  %1671 = vmatmul.mubr.bf16.gmra.mrb[0].mxu0 %v375
  %v1672 = vpop.f32.mrb[0].mxu0
  %v1673 = vadd.f32 %v740, %v1672
  %v1674 = vpop.f32.mrb[0].mxu0
  %v1675 = vpop.f32.mrb[0].mxu0
  %v1676 = vadd.f32 %v740, %v1675
  %v1677 = vpop.f32.mrb[0].mxu0
  %1678 = vmatprep.mubr.bf16.mxu0 %v394
  %1679 = vmatmul.mubr.bf16.gmra.mrb[0].mxu0 %v393
  %v1680 = vpop.f32.mrb[0].mxu0
  %v1681 = vadd.f32 %v740, %v1680
  %v1682 = vpop.f32.mrb[0].mxu0
  %v1683 = vpop.f32.mrb[0].mxu0
  %v1684 = vadd.f32 %v740, %v1683
  %v1685 = vpop.f32.mrb[0].mxu0
  %1686 = vmatprep.mubr.bf16.mxu0 %v412
  %1687 = vmatmul.mubr.bf16.gmra.mrb[0].mxu0 %v411
  %v1688 = vpop.f32.mrb[0].mxu0
  %v1689 = vadd.f32 %v740, %v1688
  %v1690 = vpop.f32.mrb[0].mxu0
  %v1691 = vpop.f32.mrb[0].mxu0
  %v1692 = vadd.f32 %v740, %v1691
  %v1693 = vpop.f32.mrb[0].mxu0
  %1694 = vmatprep.mubr.bf16.mxu0 %v430
  %1695 = vmatmul.mubr.bf16.gmra.mrb[0].mxu0 %v429
  %v1696 = vpop.f32.mrb[0].mxu0
  %v1697 = vadd.f32 %v740, %v1696
  %v1698 = vpop.f32.mrb[0].mxu0
  %v1699 = vpop.f32.mrb[0].mxu0
  %v1700 = vadd.f32 %v740, %v1699
  %v1701 = vpop.f32.mrb[0].mxu0
  %1702 = vdwg.mxu0
  %1703 = vmatprep.subr.bf16.mxu0 0
  %1704 = vmatpush1.bf16.msra.mxu0 %v1334
  %1705 = vmatprep.subr.bf16.mxu0 0
  %1706 = vmatpush1.bf16.msra.mxu0 %v1335
  %1707 = vmatprep.subr.bf16.mxu0 0
  %1708 = vmatpush1.bf16.msra.mxu0 %v1336
  %1709 = vmatprep.subr.bf16.mxu0 0
  %1710 = vmatpush1.bf16.msra.mxu0 %v1337
  %1711 = vmatprep.subr.bf16.mxu0 0
  %1712 = vmatpush1.bf16.msra.mxu0 %v1338
  %1713 = vmatprep.subr.bf16.mxu0 0
  %1714 = vmatpush1.bf16.msra.mxu0 %v1339
  %1715 = vmatprep.subr.bf16.mxu0 0
  %1716 = vmatpush1.bf16.msra.mxu0 %v1340
  %1717 = vmatprep.subr.bf16.mxu0 0
  %1718 = vmatpush1.bf16.msra.mxu0 %v1341
  %1719 = vmatprep.subr.bf16.mxu0 0
  %1720 = vmatpush1.bf16.msra.mxu0 %v1342
  %1721 = vmatprep.subr.bf16.mxu0 0
  %1722 = vmatpush1.bf16.msra.mxu0 %v1343
  %1723 = vmatprep.subr.bf16.mxu0 0
  %1724 = vmatpush1.bf16.msra.mxu0 %v1344
  %1725 = vmatprep.subr.bf16.mxu0 0
  %1726 = vmatpush1.bf16.msra.mxu0 %v1345
  %1727 = vmatprep.subr.bf16.mxu0 0
  %1728 = vmatpush1.bf16.msra.mxu0 %v1346
  %1729 = vmatprep.subr.bf16.mxu0 0
  %1730 = vmatpush1.bf16.msra.mxu0 %v1347
  %1731 = vmatprep.subr.bf16.mxu0 0
  %1732 = vmatpush1.bf16.msra.mxu0 %v1348
  %1733 = vmatprep.subr.bf16.mxu0 0
  %1734 = vmatpush1.bf16.msra.mxu0 %v1349
  %1735 = vmatprep.mubr.bf16.mxu0 %v306
  %1736 = vmatmul.mubr.bf16.gmra.mrb[0].mxu0 %v305
  %v1737 = vpop.f32.mrb[0].mxu0
  %v1738 = vadd.f32 %v1641, %v1737
  %v1739 = vpop.f32.mrb[0].mxu0
  %v1740 = vpop.f32.mrb[0].mxu0
  %v1741 = vadd.f32 %v1644, %v1740
  %v1742 = vpop.f32.mrb[0].mxu0
  %1743 = vmatprep.mubr.bf16.mxu0 %v324
  %1744 = vmatmul.mubr.bf16.gmra.mrb[0].mxu0 %v323
  %v1745 = vpop.f32.mrb[0].mxu0
  %v1746 = vadd.f32 %v1649, %v1745
  %v1747 = vpop.f32.mrb[0].mxu0
  %v1748 = vpop.f32.mrb[0].mxu0
  %v1749 = vadd.f32 %v1652, %v1748
  %v1750 = vpop.f32.mrb[0].mxu0
  %1751 = vmatprep.mubr.bf16.mxu0 %v342
  %1752 = vmatmul.mubr.bf16.gmra.mrb[0].mxu0 %v341
  %v1753 = vpop.f32.mrb[0].mxu0
  %v1754 = vadd.f32 %v1657, %v1753
  %v1755 = vpop.f32.mrb[0].mxu0
  %v1756 = vpop.f32.mrb[0].mxu0
  %v1757 = vadd.f32 %v1660, %v1756
  %v1758 = vpop.f32.mrb[0].mxu0
  %1759 = vmatprep.mubr.bf16.mxu0 %v360
  %1760 = vmatmul.mubr.bf16.gmra.mrb[0].mxu0 %v359
  %v1761 = vpop.f32.mrb[0].mxu0
  %v1762 = vadd.f32 %v1665, %v1761
  %v1763 = vpop.f32.mrb[0].mxu0
  %v1764 = vpop.f32.mrb[0].mxu0
  %v1765 = vadd.f32 %v1668, %v1764
  %v1766 = vpop.f32.mrb[0].mxu0
  %1767 = vmatprep.mubr.bf16.mxu0 %v378
  %1768 = vmatmul.mubr.bf16.gmra.mrb[0].mxu0 %v377
  %v1769 = vpop.f32.mrb[0].mxu0
  %v1770 = vadd.f32 %v1673, %v1769
  %v1771 = vpop.f32.mrb[0].mxu0
  %v1772 = vpop.f32.mrb[0].mxu0
  %v1773 = vadd.f32 %v1676, %v1772
  %v1774 = vpop.f32.mrb[0].mxu0
  %1775 = vmatprep.mubr.bf16.mxu0 %v396
  %1776 = vmatmul.mubr.bf16.gmra.mrb[0].mxu0 %v395
  %v1777 = vpop.f32.mrb[0].mxu0
  %v1778 = vadd.f32 %v1681, %v1777
  %v1779 = vpop.f32.mrb[0].mxu0
  %v1780 = vpop.f32.mrb[0].mxu0
  %v1781 = vadd.f32 %v1684, %v1780
  %v1782 = vpop.f32.mrb[0].mxu0
  %1783 = vmatprep.mubr.bf16.mxu0 %v414
  %1784 = vmatmul.mubr.bf16.gmra.mrb[0].mxu0 %v413
  %v1785 = vpop.f32.mrb[0].mxu0
  %v1786 = vadd.f32 %v1689, %v1785
  %v1787 = vpop.f32.mrb[0].mxu0
  %v1788 = vpop.f32.mrb[0].mxu0
  %v1789 = vadd.f32 %v1692, %v1788
  %v1790 = vpop.f32.mrb[0].mxu0
  %1791 = vmatprep.mubr.bf16.mxu0 %v432
  %1792 = vmatmul.mubr.bf16.gmra.mrb[0].mxu0 %v431
  %v1793 = vpop.f32.mrb[0].mxu0
  %v1794 = vadd.f32 %v1697, %v1793
  %v1795 = vpop.f32.mrb[0].mxu0
  %v1796 = vpop.f32.mrb[0].mxu0
  %v1797 = vadd.f32 %v1700, %v1796
  %v1798 = vpop.f32.mrb[0].mxu0
  %1799 = vdwg.mxu0
  %1800 = vmatprep.subr.bf16.mxu0 0
  %1801 = vmatpush1.bf16.msra.mxu0 %v1350
  %1802 = vmatprep.subr.bf16.mxu0 0
  %1803 = vmatpush1.bf16.msra.mxu0 %v1351
  %1804 = vmatprep.subr.bf16.mxu0 0
  %1805 = vmatpush1.bf16.msra.mxu0 %v1352
  %1806 = vmatprep.subr.bf16.mxu0 0
  %1807 = vmatpush1.bf16.msra.mxu0 %v1353
  %1808 = vmatprep.subr.bf16.mxu0 0
  %1809 = vmatpush1.bf16.msra.mxu0 %v1354
  %1810 = vmatprep.subr.bf16.mxu0 0
  %1811 = vmatpush1.bf16.msra.mxu0 %v1355
  %1812 = vmatprep.subr.bf16.mxu0 0
  %1813 = vmatpush1.bf16.msra.mxu0 %v1356
  %1814 = vmatprep.subr.bf16.mxu0 0
  %1815 = vmatpush1.bf16.msra.mxu0 %v1357
  %1816 = vmatprep.subr.bf16.mxu0 0
  %1817 = vmatpush1.bf16.msra.mxu0 %v1358
  %1818 = vmatprep.subr.bf16.mxu0 0
  %1819 = vmatpush1.bf16.msra.mxu0 %v1359
  %1820 = vmatprep.subr.bf16.mxu0 0
  %1821 = vmatpush1.bf16.msra.mxu0 %v1360
  %1822 = vmatprep.subr.bf16.mxu0 0
  %1823 = vmatpush1.bf16.msra.mxu0 %v1361
  %1824 = vmatprep.subr.bf16.mxu0 0
  %1825 = vmatpush1.bf16.msra.mxu0 %v1362
  %1826 = vmatprep.subr.bf16.mxu0 0
  %1827 = vmatpush1.bf16.msra.mxu0 %v1363
  %1828 = vmatprep.subr.bf16.mxu0 0
  %1829 = vmatpush1.bf16.msra.mxu0 %v1364
  %1830 = vmatprep.subr.bf16.mxu0 0
  %1831 = vmatpush1.bf16.msra.mxu0 %v1365
  %1832 = vmatprep.mubr.bf16.mxu0 %v308
  %1833 = vmatmul.mubr.bf16.gmra.mrb[0].mxu0 %v307
  %v1834 = vpop.f32.mrb[0].mxu0
  %v1835 = vadd.f32 %v1738, %v1834
  %v1836 = vpop.f32.mrb[0].mxu0
  %v1837 = vpop.f32.mrb[0].mxu0
  %v1838 = vadd.f32 %v1741, %v1837
  %v1839 = vpop.f32.mrb[0].mxu0
  %1840 = vmatprep.mubr.bf16.mxu0 %v326
  %1841 = vmatmul.mubr.bf16.gmra.mrb[0].mxu0 %v325
  %v1842 = vpop.f32.mrb[0].mxu0
  %v1843 = vadd.f32 %v1746, %v1842
  %v1844 = vpop.f32.mrb[0].mxu0
  %v1845 = vpop.f32.mrb[0].mxu0
  %v1846 = vadd.f32 %v1749, %v1845
  %v1847 = vpop.f32.mrb[0].mxu0
  %1848 = vmatprep.mubr.bf16.mxu0 %v344
  %1849 = vmatmul.mubr.bf16.gmra.mrb[0].mxu0 %v343
  %v1850 = vpop.f32.mrb[0].mxu0
  %v1851 = vadd.f32 %v1754, %v1850
  %v1852 = vpop.f32.mrb[0].mxu0
  %v1853 = vpop.f32.mrb[0].mxu0
  %v1854 = vadd.f32 %v1757, %v1853
  %v1855 = vpop.f32.mrb[0].mxu0
  %1856 = vmatprep.mubr.bf16.mxu0 %v362
  %1857 = vmatmul.mubr.bf16.gmra.mrb[0].mxu0 %v361
  %v1858 = vpop.f32.mrb[0].mxu0
  %v1859 = vadd.f32 %v1762, %v1858
  %v1860 = vpop.f32.mrb[0].mxu0
  %v1861 = vpop.f32.mrb[0].mxu0
  %v1862 = vadd.f32 %v1765, %v1861
  %v1863 = vpop.f32.mrb[0].mxu0
  %1864 = vmatprep.mubr.bf16.mxu0 %v380
  %1865 = vmatmul.mubr.bf16.gmra.mrb[0].mxu0 %v379
  %v1866 = vpop.f32.mrb[0].mxu0
  %v1867 = vadd.f32 %v1770, %v1866
  %v1868 = vpop.f32.mrb[0].mxu0
  %v1869 = vpop.f32.mrb[0].mxu0
  %v1870 = vadd.f32 %v1773, %v1869
  %v1871 = vpop.f32.mrb[0].mxu0
  %1872 = vmatprep.mubr.bf16.mxu0 %v398
  %1873 = vmatmul.mubr.bf16.gmra.mrb[0].mxu0 %v397
  %v1874 = vpop.f32.mrb[0].mxu0
  %v1875 = vadd.f32 %v1778, %v1874
  %v1876 = vpop.f32.mrb[0].mxu0
  %v1877 = vpop.f32.mrb[0].mxu0
  %v1878 = vadd.f32 %v1781, %v1877
  %v1879 = vpop.f32.mrb[0].mxu0
  %1880 = vmatprep.mubr.bf16.mxu0 %v416
  %1881 = vmatmul.mubr.bf16.gmra.mrb[0].mxu0 %v415
  %v1882 = vpop.f32.mrb[0].mxu0
  %v1883 = vadd.f32 %v1786, %v1882
  %v1884 = vpop.f32.mrb[0].mxu0
  %v1885 = vpop.f32.mrb[0].mxu0
  %v1886 = vadd.f32 %v1789, %v1885
  %v1887 = vpop.f32.mrb[0].mxu0
  %1888 = vmatprep.mubr.bf16.mxu0 %v434
  %1889 = vmatmul.mubr.bf16.gmra.mrb[0].mxu0 %v433
  %v1890 = vpop.f32.mrb[0].mxu0
  %v1891 = vadd.f32 %v1794, %v1890
  %v1892 = vpop.f32.mrb[0].mxu0
  %v1893 = vpop.f32.mrb[0].mxu0
  %v1894 = vadd.f32 %v1797, %v1893
  %v1895 = vpop.f32.mrb[0].mxu0
  %1896 = vdwg.mxu0
  %1897 = vmatprep.subr.bf16.mxu0 0
  %1898 = vmatpush1.bf16.msra.mxu0 %v1366
  %1899 = vmatprep.subr.bf16.mxu0 0
  %1900 = vmatpush1.bf16.msra.mxu0 %v1367
  %1901 = vmatprep.subr.bf16.mxu0 0
  %1902 = vmatpush1.bf16.msra.mxu0 %v1368
  %1903 = vmatprep.subr.bf16.mxu0 0
  %1904 = vmatpush1.bf16.msra.mxu0 %v1369
  %1905 = vmatprep.subr.bf16.mxu0 0
  %1906 = vmatpush1.bf16.msra.mxu0 %v1370
  %1907 = vmatprep.subr.bf16.mxu0 0
  %1908 = vmatpush1.bf16.msra.mxu0 %v1371
  %1909 = vmatprep.subr.bf16.mxu0 0
  %1910 = vmatpush1.bf16.msra.mxu0 %v1372
  %1911 = vmatprep.subr.bf16.mxu0 0
  %1912 = vmatpush1.bf16.msra.mxu0 %v1373
  %1913 = vmatprep.subr.bf16.mxu0 0
  %1914 = vmatpush1.bf16.msra.mxu0 %v1374
  %1915 = vmatprep.subr.bf16.mxu0 0
  %1916 = vmatpush1.bf16.msra.mxu0 %v1375
  %1917 = vmatprep.subr.bf16.mxu0 0
  %1918 = vmatpush1.bf16.msra.mxu0 %v1376
  %1919 = vmatprep.subr.bf16.mxu0 0
  %1920 = vmatpush1.bf16.msra.mxu0 %v1377
  %1921 = vmatprep.subr.bf16.mxu0 0
  %1922 = vmatpush1.bf16.msra.mxu0 %v1378
  %1923 = vmatprep.subr.bf16.mxu0 0
  %1924 = vmatpush1.bf16.msra.mxu0 %v1379
  %1925 = vmatprep.subr.bf16.mxu0 0
  %1926 = vmatpush1.bf16.msra.mxu0 %v1380
  %1927 = vmatprep.subr.bf16.mxu0 0
  %1928 = vmatpush1.bf16.msra.mxu0 %v1381
  %1929 = vmatprep.mubr.bf16.mxu0 %v310
  %1930 = vmatmul.mubr.bf16.gmra.mrb[0].mxu0 %v309
  %v1931 = vpop.f32.mrb[0].mxu0
  %v1932 = vadd.f32 %v1835, %v1931
  %v1933 = vpop.f32.mrb[0].mxu0
  %v1934 = vpop.f32.mrb[0].mxu0
  %v1935 = vadd.f32 %v1838, %v1934
  %v1936 = vpop.f32.mrb[0].mxu0
  %1937 = vmatprep.mubr.bf16.mxu0 %v328
  %1938 = vmatmul.mubr.bf16.gmra.mrb[0].mxu0 %v327
  %v1939 = vpop.f32.mrb[0].mxu0
  %v1940 = vadd.f32 %v1843, %v1939
  %v1941 = vpop.f32.mrb[0].mxu0
  %v1942 = vpop.f32.mrb[0].mxu0
  %v1943 = vadd.f32 %v1846, %v1942
  %v1944 = vpop.f32.mrb[0].mxu0
  %1945 = vmatprep.mubr.bf16.mxu0 %v346
  %1946 = vmatmul.mubr.bf16.gmra.mrb[0].mxu0 %v345
  %v1947 = vpop.f32.mrb[0].mxu0
  %v1948 = vadd.f32 %v1851, %v1947
  %v1949 = vpop.f32.mrb[0].mxu0
  %v1950 = vpop.f32.mrb[0].mxu0
  %v1951 = vadd.f32 %v1854, %v1950
  %v1952 = vpop.f32.mrb[0].mxu0
  %1953 = vmatprep.mubr.bf16.mxu0 %v364
  %1954 = vmatmul.mubr.bf16.gmra.mrb[0].mxu0 %v363
  %v1955 = vpop.f32.mrb[0].mxu0
  %v1956 = vadd.f32 %v1859, %v1955
  %v1957 = vpop.f32.mrb[0].mxu0
  %v1958 = vpop.f32.mrb[0].mxu0
  %v1959 = vadd.f32 %v1862, %v1958
  %v1960 = vpop.f32.mrb[0].mxu0
  %1961 = vmatprep.mubr.bf16.mxu0 %v382
  %1962 = vmatmul.mubr.bf16.gmra.mrb[0].mxu0 %v381
  %v1963 = vpop.f32.mrb[0].mxu0
  %v1964 = vadd.f32 %v1867, %v1963
  %v1965 = vpop.f32.mrb[0].mxu0
  %v1966 = vpop.f32.mrb[0].mxu0
  %v1967 = vadd.f32 %v1870, %v1966
  %v1968 = vpop.f32.mrb[0].mxu0
  %1969 = vmatprep.mubr.bf16.mxu0 %v400
  %1970 = vmatmul.mubr.bf16.gmra.mrb[0].mxu0 %v399
  %v1971 = vpop.f32.mrb[0].mxu0
  %v1972 = vadd.f32 %v1875, %v1971
  %v1973 = vpop.f32.mrb[0].mxu0
  %v1974 = vpop.f32.mrb[0].mxu0
  %v1975 = vadd.f32 %v1878, %v1974
  %v1976 = vpop.f32.mrb[0].mxu0
  %1977 = vmatprep.mubr.bf16.mxu0 %v418
  %1978 = vmatmul.mubr.bf16.gmra.mrb[0].mxu0 %v417
  %v1979 = vpop.f32.mrb[0].mxu0
  %v1980 = vadd.f32 %v1883, %v1979
  %v1981 = vpop.f32.mrb[0].mxu0
  %v1982 = vpop.f32.mrb[0].mxu0
  %v1983 = vadd.f32 %v1886, %v1982
  %v1984 = vpop.f32.mrb[0].mxu0
  %1985 = vmatprep.mubr.bf16.mxu0 %v436
  %1986 = vmatmul.mubr.bf16.gmra.mrb[0].mxu0 %v435
  %v1987 = vpop.f32.mrb[0].mxu0
  %v1988 = vadd.f32 %v1891, %v1987
  %v1989 = vpop.f32.mrb[0].mxu0
  %v1990 = vpop.f32.mrb[0].mxu0
  %v1991 = vadd.f32 %v1894, %v1990
  %v1992 = vpop.f32.mrb[0].mxu0
  %1993 = vdwg.mxu0
  %1994 = vmatprep.subr.bf16.mxu0 0
  %1995 = vmatpush1.bf16.msra.mxu0 %v1382
  %1996 = vmatprep.subr.bf16.mxu0 0
  %1997 = vmatpush1.bf16.msra.mxu0 %v1383
  %1998 = vmatprep.subr.bf16.mxu0 0
  %1999 = vmatpush1.bf16.msra.mxu0 %v1384
  %2000 = vmatprep.subr.bf16.mxu0 0
  %2001 = vmatpush1.bf16.msra.mxu0 %v1385
  %2002 = vmatprep.subr.bf16.mxu0 0
  %2003 = vmatpush1.bf16.msra.mxu0 %v1386
  %2004 = vmatprep.subr.bf16.mxu0 0
  %2005 = vmatpush1.bf16.msra.mxu0 %v1387
  %2006 = vmatprep.subr.bf16.mxu0 0
  %2007 = vmatpush1.bf16.msra.mxu0 %v1388
  %2008 = vmatprep.subr.bf16.mxu0 0
  %2009 = vmatpush1.bf16.msra.mxu0 %v1389
  %2010 = vmatprep.subr.bf16.mxu0 0
  %2011 = vmatpush1.bf16.msra.mxu0 %v1390
  %2012 = vmatprep.subr.bf16.mxu0 0
  %2013 = vmatpush1.bf16.msra.mxu0 %v1391
  %2014 = vmatprep.subr.bf16.mxu0 0
  %2015 = vmatpush1.bf16.msra.mxu0 %v1392
  %2016 = vmatprep.subr.bf16.mxu0 0
  %2017 = vmatpush1.bf16.msra.mxu0 %v1393
  %2018 = vmatprep.subr.bf16.mxu0 0
  %2019 = vmatpush1.bf16.msra.mxu0 %v1394
  %2020 = vmatprep.subr.bf16.mxu0 0
  %2021 = vmatpush1.bf16.msra.mxu0 %v1395
  %2022 = vmatprep.subr.bf16.mxu0 0
  %2023 = vmatpush1.bf16.msra.mxu0 %v1396
  %2024 = vmatprep.subr.bf16.mxu0 0
  %2025 = vmatpush1.bf16.msra.mxu0 %v1397
  %2026 = vmatprep.mubr.bf16.mxu0 %v312
  %2027 = vmatmul.mubr.bf16.gmra.mrb[0].mxu0 %v311
  %v2028 = vpop.f32.mrb[0].mxu0
  %v2029 = vadd.f32 %v1932, %v2028
  %v2030 = vpop.f32.mrb[0].mxu0
  %v2031 = vpop.f32.mrb[0].mxu0
  %v2032 = vadd.f32 %v1935, %v2031
  %v2033 = vpop.f32.mrb[0].mxu0
  %2034 = vmatprep.mubr.bf16.mxu0 %v330
  %2035 = vmatmul.mubr.bf16.gmra.mrb[0].mxu0 %v329
  %v2036 = vpop.f32.mrb[0].mxu0
  %v2037 = vadd.f32 %v1940, %v2036
  %v2038 = vpop.f32.mrb[0].mxu0
  %v2039 = vpop.f32.mrb[0].mxu0
  %v2040 = vadd.f32 %v1943, %v2039
  %v2041 = vpop.f32.mrb[0].mxu0
  %2042 = vmatprep.mubr.bf16.mxu0 %v348
  %2043 = vmatmul.mubr.bf16.gmra.mrb[0].mxu0 %v347
  %v2044 = vpop.f32.mrb[0].mxu0
  %v2045 = vadd.f32 %v1948, %v2044
  %v2046 = vpop.f32.mrb[0].mxu0
  %v2047 = vpop.f32.mrb[0].mxu0
  %v2048 = vadd.f32 %v1951, %v2047
  %v2049 = vpop.f32.mrb[0].mxu0
  %2050 = vmatprep.mubr.bf16.mxu0 %v366
  %2051 = vmatmul.mubr.bf16.gmra.mrb[0].mxu0 %v365
  %v2052 = vpop.f32.mrb[0].mxu0
  %v2053 = vadd.f32 %v1956, %v2052
  %v2054 = vpop.f32.mrb[0].mxu0
  %v2055 = vpop.f32.mrb[0].mxu0
  %v2056 = vadd.f32 %v1959, %v2055
  %v2057 = vpop.f32.mrb[0].mxu0
  %2058 = vmatprep.mubr.bf16.mxu0 %v384
  %2059 = vmatmul.mubr.bf16.gmra.mrb[0].mxu0 %v383
  %v2060 = vpop.f32.mrb[0].mxu0
  %v2061 = vadd.f32 %v1964, %v2060
  %v2062 = vpop.f32.mrb[0].mxu0
  %v2063 = vpop.f32.mrb[0].mxu0
  %v2064 = vadd.f32 %v1967, %v2063
  %v2065 = vpop.f32.mrb[0].mxu0
  %2066 = vmatprep.mubr.bf16.mxu0 %v402
  %2067 = vmatmul.mubr.bf16.gmra.mrb[0].mxu0 %v401
  %v2068 = vpop.f32.mrb[0].mxu0
  %v2069 = vadd.f32 %v1972, %v2068
  %v2070 = vpop.f32.mrb[0].mxu0
  %v2071 = vpop.f32.mrb[0].mxu0
  %v2072 = vadd.f32 %v1975, %v2071
  %v2073 = vpop.f32.mrb[0].mxu0
  %2074 = vmatprep.mubr.bf16.mxu0 %v420
  %2075 = vmatmul.mubr.bf16.gmra.mrb[0].mxu0 %v419
  %v2076 = vpop.f32.mrb[0].mxu0
  %v2077 = vadd.f32 %v1980, %v2076
  %v2078 = vpop.f32.mrb[0].mxu0
  %v2079 = vpop.f32.mrb[0].mxu0
  %v2080 = vadd.f32 %v1983, %v2079
  %v2081 = vpop.f32.mrb[0].mxu0
  %2082 = vmatprep.mubr.bf16.mxu0 %v438
  %2083 = vmatmul.mubr.bf16.gmra.mrb[0].mxu0 %v437
  %v2084 = vpop.f32.mrb[0].mxu0
  %v2085 = vadd.f32 %v1988, %v2084
  %v2086 = vpop.f32.mrb[0].mxu0
  %v2087 = vpop.f32.mrb[0].mxu0
  %v2088 = vadd.f32 %v1991, %v2087
  %v2089 = vpop.f32.mrb[0].mxu0
  %2090 = vdwg.mxu0
  %2091 = vmatprep.subr.bf16.mxu0 0
  %2092 = vmatpush1.bf16.msra.mxu0 %v1398
  %2093 = vmatprep.subr.bf16.mxu0 0
  %2094 = vmatpush1.bf16.msra.mxu0 %v1399
  %2095 = vmatprep.subr.bf16.mxu0 0
  %2096 = vmatpush1.bf16.msra.mxu0 %v1400
  %2097 = vmatprep.subr.bf16.mxu0 0
  %2098 = vmatpush1.bf16.msra.mxu0 %v1401
  %2099 = vmatprep.subr.bf16.mxu0 0
  %2100 = vmatpush1.bf16.msra.mxu0 %v1402
  %2101 = vmatprep.subr.bf16.mxu0 0
  %2102 = vmatpush1.bf16.msra.mxu0 %v1403
  %2103 = vmatprep.subr.bf16.mxu0 0
  %2104 = vmatpush1.bf16.msra.mxu0 %v1404
  %2105 = vmatprep.subr.bf16.mxu0 0
  %2106 = vmatpush1.bf16.msra.mxu0 %v1405
  %2107 = vmatprep.subr.bf16.mxu0 0
  %2108 = vmatpush1.bf16.msra.mxu0 %v1406
  %2109 = vmatprep.subr.bf16.mxu0 0
  %2110 = vmatpush1.bf16.msra.mxu0 %v1407
  %2111 = vmatprep.subr.bf16.mxu0 0
  %2112 = vmatpush1.bf16.msra.mxu0 %v1408
  %2113 = vmatprep.subr.bf16.mxu0 0
  %2114 = vmatpush1.bf16.msra.mxu0 %v1409
  %2115 = vmatprep.subr.bf16.mxu0 0
  %2116 = vmatpush1.bf16.msra.mxu0 %v1410
  %2117 = vmatprep.subr.bf16.mxu0 0
  %2118 = vmatpush1.bf16.msra.mxu0 %v1411
  %2119 = vmatprep.subr.bf16.mxu0 0
  %2120 = vmatpush1.bf16.msra.mxu0 %v1412
  %2121 = vmatprep.subr.bf16.mxu0 0
  %2122 = vmatpush1.bf16.msra.mxu0 %v1413
  %2123 = vmatprep.mubr.bf16.mxu0 %v314
  %2124 = vmatmul.mubr.bf16.gmra.mrb[0].mxu0 %v313
  %v2125 = vpop.f32.mrb[0].mxu0
  %v2126 = vadd.f32 %v2029, %v2125
  %v2127 = vpop.f32.mrb[0].mxu0
  %v2128 = vpop.f32.mrb[0].mxu0
  %v2129 = vadd.f32 %v2032, %v2128
  %v2130 = vpop.f32.mrb[0].mxu0
  %2131 = vmatprep.mubr.bf16.mxu0 %v332
  %2132 = vmatmul.mubr.bf16.gmra.mrb[0].mxu0 %v331
  %v2133 = vpop.f32.mrb[0].mxu0
  %v2134 = vadd.f32 %v2037, %v2133
  %v2135 = vpop.f32.mrb[0].mxu0
  %v2136 = vpop.f32.mrb[0].mxu0
  %v2137 = vadd.f32 %v2040, %v2136
  %v2138 = vpop.f32.mrb[0].mxu0
  %2139 = vmatprep.mubr.bf16.mxu0 %v350
  %2140 = vmatmul.mubr.bf16.gmra.mrb[0].mxu0 %v349
  %v2141 = vpop.f32.mrb[0].mxu0
  %v2142 = vadd.f32 %v2045, %v2141
  %v2143 = vpop.f32.mrb[0].mxu0
  %v2144 = vpop.f32.mrb[0].mxu0
  %v2145 = vadd.f32 %v2048, %v2144
  %v2146 = vpop.f32.mrb[0].mxu0
  %2147 = vmatprep.mubr.bf16.mxu0 %v368
  %2148 = vmatmul.mubr.bf16.gmra.mrb[0].mxu0 %v367
  %v2149 = vpop.f32.mrb[0].mxu0
  %v2150 = vadd.f32 %v2053, %v2149
  %v2151 = vpop.f32.mrb[0].mxu0
  %v2152 = vpop.f32.mrb[0].mxu0
  %v2153 = vadd.f32 %v2056, %v2152
  %v2154 = vpop.f32.mrb[0].mxu0
  %2155 = vmatprep.mubr.bf16.mxu0 %v386
  %2156 = vmatmul.mubr.bf16.gmra.mrb[0].mxu0 %v385
  %v2157 = vpop.f32.mrb[0].mxu0
  %v2158 = vadd.f32 %v2061, %v2157
  %v2159 = vpop.f32.mrb[0].mxu0
  %v2160 = vpop.f32.mrb[0].mxu0
  %v2161 = vadd.f32 %v2064, %v2160
  %v2162 = vpop.f32.mrb[0].mxu0
  %2163 = vmatprep.mubr.bf16.mxu0 %v404
  %2164 = vmatmul.mubr.bf16.gmra.mrb[0].mxu0 %v403
  %v2165 = vpop.f32.mrb[0].mxu0
  %v2166 = vadd.f32 %v2069, %v2165
  %v2167 = vpop.f32.mrb[0].mxu0
  %v2168 = vpop.f32.mrb[0].mxu0
  %v2169 = vadd.f32 %v2072, %v2168
  %v2170 = vpop.f32.mrb[0].mxu0
  %2171 = vmatprep.mubr.bf16.mxu0 %v422
  %2172 = vmatmul.mubr.bf16.gmra.mrb[0].mxu0 %v421
  %v2173 = vpop.f32.mrb[0].mxu0
  %v2174 = vadd.f32 %v2077, %v2173
  %v2175 = vpop.f32.mrb[0].mxu0
  %v2176 = vpop.f32.mrb[0].mxu0
  %v2177 = vadd.f32 %v2080, %v2176
  %v2178 = vpop.f32.mrb[0].mxu0
  %2179 = vmatprep.mubr.bf16.mxu0 %v440
  %2180 = vmatmul.mubr.bf16.gmra.mrb[0].mxu0 %v439
  %v2181 = vpop.f32.mrb[0].mxu0
  %v2182 = vadd.f32 %v2085, %v2181
  %v2183 = vpop.f32.mrb[0].mxu0
  %v2184 = vpop.f32.mrb[0].mxu0
  %v2185 = vadd.f32 %v2088, %v2184
  %v2186 = vpop.f32.mrb[0].mxu0
  %2187 = vdwg.mxu0
  %2188 = vmatprep.subr.bf16.mxu0 0
  %2189 = vmatpush1.bf16.msra.mxu0 %v1414
  %2190 = vmatprep.subr.bf16.mxu0 0
  %2191 = vmatpush1.bf16.msra.mxu0 %v1415
  %2192 = vmatprep.subr.bf16.mxu0 0
  %2193 = vmatpush1.bf16.msra.mxu0 %v1416
  %2194 = vmatprep.subr.bf16.mxu0 0
  %2195 = vmatpush1.bf16.msra.mxu0 %v1417
  %2196 = vmatprep.subr.bf16.mxu0 0
  %2197 = vmatpush1.bf16.msra.mxu0 %v1418
  %2198 = vmatprep.subr.bf16.mxu0 0
  %2199 = vmatpush1.bf16.msra.mxu0 %v1419
  %2200 = vmatprep.subr.bf16.mxu0 0
  %2201 = vmatpush1.bf16.msra.mxu0 %v1420
  %2202 = vmatprep.subr.bf16.mxu0 0
  %2203 = vmatpush1.bf16.msra.mxu0 %v1421
  %2204 = vmatprep.subr.bf16.mxu0 0
  %2205 = vmatpush1.bf16.msra.mxu0 %v1422
  %2206 = vmatprep.subr.bf16.mxu0 0
  %2207 = vmatpush1.bf16.msra.mxu0 %v1423
  %2208 = vmatprep.subr.bf16.mxu0 0
  %2209 = vmatpush1.bf16.msra.mxu0 %v1424
  %2210 = vmatprep.subr.bf16.mxu0 0
  %2211 = vmatpush1.bf16.msra.mxu0 %v1425
  %2212 = vmatprep.subr.bf16.mxu0 0
  %2213 = vmatpush1.bf16.msra.mxu0 %v1426
  %2214 = vmatprep.subr.bf16.mxu0 0
  %2215 = vmatpush1.bf16.msra.mxu0 %v1427
  %2216 = vmatprep.subr.bf16.mxu0 0
  %2217 = vmatpush1.bf16.msra.mxu0 %v1428
  %2218 = vmatprep.subr.bf16.mxu0 0
  %2219 = vmatpush1.bf16.msra.mxu0 %v1429
  %2220 = vmatprep.mubr.bf16.mxu0 %v316
  %2221 = vmatmul.mubr.bf16.gmra.mrb[0].mxu0 %v315
  %v2222 = vpop.f32.mrb[0].mxu0
  %v2223 = vadd.f32 %v2126, %v2222
  %v2224 = vpop.f32.mrb[0].mxu0
  %v2225 = vpop.f32.mrb[0].mxu0
  %v2226 = vadd.f32 %v2129, %v2225
  %v2227 = vpop.f32.mrb[0].mxu0
  %2228 = vmatprep.mubr.bf16.mxu0 %v334
  %2229 = vmatmul.mubr.bf16.gmra.mrb[0].mxu0 %v333
  %v2230 = vpop.f32.mrb[0].mxu0
  %v2231 = vadd.f32 %v2134, %v2230
  %v2232 = vpop.f32.mrb[0].mxu0
  %v2233 = vpop.f32.mrb[0].mxu0
  %v2234 = vadd.f32 %v2137, %v2233
  %v2235 = vpop.f32.mrb[0].mxu0
  %2236 = vmatprep.mubr.bf16.mxu0 %v352
  %2237 = vmatmul.mubr.bf16.gmra.mrb[0].mxu0 %v351
  %v2238 = vpop.f32.mrb[0].mxu0
  %v2239 = vadd.f32 %v2142, %v2238
  %v2240 = vpop.f32.mrb[0].mxu0
  %v2241 = vpop.f32.mrb[0].mxu0
  %v2242 = vadd.f32 %v2145, %v2241
  %v2243 = vpop.f32.mrb[0].mxu0
  %2244 = vmatprep.mubr.bf16.mxu0 %v370
  %2245 = vmatmul.mubr.bf16.gmra.mrb[0].mxu0 %v369
  %v2246 = vpop.f32.mrb[0].mxu0
  %v2247 = vadd.f32 %v2150, %v2246
  %v2248 = vpop.f32.mrb[0].mxu0
  %v2249 = vpop.f32.mrb[0].mxu0
  %v2250 = vadd.f32 %v2153, %v2249
  %v2251 = vpop.f32.mrb[0].mxu0
  %2252 = vmatprep.mubr.bf16.mxu0 %v388
  %2253 = vmatmul.mubr.bf16.gmra.mrb[0].mxu0 %v387
  %v2254 = vpop.f32.mrb[0].mxu0
  %v2255 = vadd.f32 %v2158, %v2254
  %v2256 = vpop.f32.mrb[0].mxu0
  %v2257 = vpop.f32.mrb[0].mxu0
  %v2258 = vadd.f32 %v2161, %v2257
  %v2259 = vpop.f32.mrb[0].mxu0
  %2260 = vmatprep.mubr.bf16.mxu0 %v406
  %2261 = vmatmul.mubr.bf16.gmra.mrb[0].mxu0 %v405
  %v2262 = vpop.f32.mrb[0].mxu0
  %v2263 = vadd.f32 %v2166, %v2262
  %v2264 = vpop.f32.mrb[0].mxu0
  %v2265 = vpop.f32.mrb[0].mxu0
  %v2266 = vadd.f32 %v2169, %v2265
  %v2267 = vpop.f32.mrb[0].mxu0
  %2268 = vmatprep.mubr.bf16.mxu0 %v424
  %2269 = vmatmul.mubr.bf16.gmra.mrb[0].mxu0 %v423
  %v2270 = vpop.f32.mrb[0].mxu0
  %v2271 = vadd.f32 %v2174, %v2270
  %v2272 = vpop.f32.mrb[0].mxu0
  %v2273 = vpop.f32.mrb[0].mxu0
  %v2274 = vadd.f32 %v2177, %v2273
  %v2275 = vpop.f32.mrb[0].mxu0
  %2276 = vmatprep.mubr.bf16.mxu0 %v442
  %2277 = vmatmul.mubr.bf16.gmra.mrb[0].mxu0 %v441
  %v2278 = vpop.f32.mrb[0].mxu0
  %v2279 = vadd.f32 %v2182, %v2278
  %v2280 = vpop.f32.mrb[0].mxu0
  %v2281 = vpop.f32.mrb[0].mxu0
  %v2282 = vadd.f32 %v2185, %v2281
  %v2283 = vpop.f32.mrb[0].mxu0
  %2284 = vdwg.mxu0
  %2285 = vmatprep.subr.bf16.mxu0 0
  %2286 = vmatpush1.bf16.msra.mxu0 %v1430
  %2287 = vmatprep.subr.bf16.mxu0 0
  %2288 = vmatpush1.bf16.msra.mxu0 %v1431
  %2289 = vmatprep.subr.bf16.mxu0 0
  %2290 = vmatpush1.bf16.msra.mxu0 %v1432
  %2291 = vmatprep.subr.bf16.mxu0 0
  %2292 = vmatpush1.bf16.msra.mxu0 %v1433
  %2293 = vmatprep.subr.bf16.mxu0 0
  %2294 = vmatpush1.bf16.msra.mxu0 %v1434
  %2295 = vmatprep.subr.bf16.mxu0 0
  %2296 = vmatpush1.bf16.msra.mxu0 %v1435
  %2297 = vmatprep.subr.bf16.mxu0 0
  %2298 = vmatpush1.bf16.msra.mxu0 %v1436
  %2299 = vmatprep.subr.bf16.mxu0 0
  %2300 = vmatpush1.bf16.msra.mxu0 %v1437
  %2301 = vmatprep.subr.bf16.mxu0 0
  %2302 = vmatpush1.bf16.msra.mxu0 %v1438
  %2303 = vmatprep.subr.bf16.mxu0 0
  %2304 = vmatpush1.bf16.msra.mxu0 %v1439
  %2305 = vmatprep.subr.bf16.mxu0 0
  %2306 = vmatpush1.bf16.msra.mxu0 %v1440
  %2307 = vmatprep.subr.bf16.mxu0 0
  %2308 = vmatpush1.bf16.msra.mxu0 %v1441
  %2309 = vmatprep.subr.bf16.mxu0 0
  %2310 = vmatpush1.bf16.msra.mxu0 %v1442
  %2311 = vmatprep.subr.bf16.mxu0 0
  %2312 = vmatpush1.bf16.msra.mxu0 %v1443
  %2313 = vmatprep.subr.bf16.mxu0 0
  %2314 = vmatpush1.bf16.msra.mxu0 %v1444
  %2315 = vmatprep.subr.bf16.mxu0 0
  %2316 = vmatpush1.bf16.msra.mxu0 %v1445
  %2317 = vmatprep.mubr.bf16.mxu0 %v318
  %2318 = vmatmul.mubr.bf16.gmra.mrb[0].mxu0 %v317
  %v2319 = vpop.f32.mrb[0].mxu0
  %v2320 = vadd.f32 %v2223, %v2319
  %v2321 = vpop.f32.mrb[0].mxu0
  %v2322 = vpop.f32.mrb[0].mxu0
  %v2323 = vadd.f32 %v2226, %v2322
  %v2324 = vpop.f32.mrb[0].mxu0
  %2325 = vmatprep.mubr.bf16.mxu0 %v336
  %2326 = vmatmul.mubr.bf16.gmra.mrb[0].mxu0 %v335
  %v2327 = vpop.f32.mrb[0].mxu0
  %v2328 = vadd.f32 %v2231, %v2327
  %v2329 = vpop.f32.mrb[0].mxu0
  %v2330 = vpop.f32.mrb[0].mxu0
  %v2331 = vadd.f32 %v2234, %v2330
  %v2332 = vpop.f32.mrb[0].mxu0
  %2333 = vmatprep.mubr.bf16.mxu0 %v354
  %2334 = vmatmul.mubr.bf16.gmra.mrb[0].mxu0 %v353
  %v2335 = vpop.f32.mrb[0].mxu0
  %v2336 = vadd.f32 %v2239, %v2335
  %v2337 = vpop.f32.mrb[0].mxu0
  %v2338 = vpop.f32.mrb[0].mxu0
  %v2339 = vadd.f32 %v2242, %v2338
  %v2340 = vpop.f32.mrb[0].mxu0
  %2341 = vmatprep.mubr.bf16.mxu0 %v372
  %2342 = vmatmul.mubr.bf16.gmra.mrb[0].mxu0 %v371
  %v2343 = vpop.f32.mrb[0].mxu0
  %v2344 = vadd.f32 %v2247, %v2343
  %v2345 = vpop.f32.mrb[0].mxu0
  %v2346 = vpop.f32.mrb[0].mxu0
  %v2347 = vadd.f32 %v2250, %v2346
  %v2348 = vpop.f32.mrb[0].mxu0
  %2349 = vmatprep.mubr.bf16.mxu0 %v390
  %2350 = vmatmul.mubr.bf16.gmra.mrb[0].mxu0 %v389
  %v2351 = vpop.f32.mrb[0].mxu0
  %v2352 = vadd.f32 %v2255, %v2351
  %v2353 = vpop.f32.mrb[0].mxu0
  %v2354 = vpop.f32.mrb[0].mxu0
  %v2355 = vadd.f32 %v2258, %v2354
  %v2356 = vpop.f32.mrb[0].mxu0
  %2357 = vmatprep.mubr.bf16.mxu0 %v408
  %2358 = vmatmul.mubr.bf16.gmra.mrb[0].mxu0 %v407
  %v2359 = vpop.f32.mrb[0].mxu0
  %v2360 = vadd.f32 %v2263, %v2359
  %v2361 = vpop.f32.mrb[0].mxu0
  %v2362 = vpop.f32.mrb[0].mxu0
  %v2363 = vadd.f32 %v2266, %v2362
  %v2364 = vpop.f32.mrb[0].mxu0
  %2365 = vmatprep.mubr.bf16.mxu0 %v426
  %2366 = vmatmul.mubr.bf16.gmra.mrb[0].mxu0 %v425
  %v2367 = vpop.f32.mrb[0].mxu0
  %v2368 = vadd.f32 %v2271, %v2367
  %v2369 = vpop.f32.mrb[0].mxu0
  %v2370 = vpop.f32.mrb[0].mxu0
  %v2371 = vadd.f32 %v2274, %v2370
  %v2372 = vpop.f32.mrb[0].mxu0
  %2373 = vmatprep.mubr.bf16.mxu0 %v444
  %2374 = vmatmul.mubr.bf16.gmra.mrb[0].mxu0 %v443
  %v2375 = vpop.f32.mrb[0].mxu0
  %v2376 = vadd.f32 %v2279, %v2375
  %v2377 = vpop.f32.mrb[0].mxu0
  %v2378 = vpop.f32.mrb[0].mxu0
  %v2379 = vadd.f32 %v2282, %v2378
  %v2380 = vpop.f32.mrb[0].mxu0
  %2381 = vdwg.mxu0
  %2382 = vmatprep.subr.bf16.mxu0 0
  %2383 = vmatpush1.bf16.msra.mxu0 %v1446
  %2384 = vmatprep.subr.bf16.mxu0 0
  %2385 = vmatpush1.bf16.msra.mxu0 %v1447
  %2386 = vmatprep.subr.bf16.mxu0 0
  %2387 = vmatpush1.bf16.msra.mxu0 %v1448
  %2388 = vmatprep.subr.bf16.mxu0 0
  %2389 = vmatpush1.bf16.msra.mxu0 %v1449
  %2390 = vmatprep.subr.bf16.mxu0 0
  %2391 = vmatpush1.bf16.msra.mxu0 %v1450
  %2392 = vmatprep.subr.bf16.mxu0 0
  %2393 = vmatpush1.bf16.msra.mxu0 %v1451
  %2394 = vmatprep.subr.bf16.mxu0 0
  %2395 = vmatpush1.bf16.msra.mxu0 %v1452
  %2396 = vmatprep.subr.bf16.mxu0 0
  %2397 = vmatpush1.bf16.msra.mxu0 %v1453
  %2398 = vmatprep.subr.bf16.mxu0 0
  %2399 = vmatpush1.bf16.msra.mxu0 %v1454
  %2400 = vmatprep.subr.bf16.mxu0 0
  %2401 = vmatpush1.bf16.msra.mxu0 %v1455
  %2402 = vmatprep.subr.bf16.mxu0 0
  %2403 = vmatpush1.bf16.msra.mxu0 %v1456
  %2404 = vmatprep.subr.bf16.mxu0 0
  %2405 = vmatpush1.bf16.msra.mxu0 %v1457
  %2406 = vmatprep.subr.bf16.mxu0 0
  %2407 = vmatpush1.bf16.msra.mxu0 %v1458
  %2408 = vmatprep.subr.bf16.mxu0 0
  %2409 = vmatpush1.bf16.msra.mxu0 %v1459
  %2410 = vmatprep.subr.bf16.mxu0 0
  %2411 = vmatpush1.bf16.msra.mxu0 %v1460
  %2412 = vmatprep.subr.bf16.mxu0 0
  %2413 = vmatpush1.bf16.msra.mxu0 %v1461
  %2414 = vmatprep.mubr.bf16.mxu0 %v320
  %2415 = vmatmul.mubr.bf16.gmra.mrb[0].mxu0 %v319
  %v2416 = vpop.f32.mrb[0].mxu0
  %v2417 = vadd.f32 %v2320, %v2416
  %v2418 = vpop.f32.mrb[0].mxu0
  %v2419 = vpop.f32.mrb[0].mxu0
  %v2420 = vadd.f32 %v2323, %v2419
  %v2421 = vpop.f32.mrb[0].mxu0
  %2422 = vmatprep.mubr.bf16.mxu0 %v338
  %2423 = vmatmul.mubr.bf16.gmra.mrb[0].mxu0 %v337
  %v2424 = vpop.f32.mrb[0].mxu0
  %v2425 = vadd.f32 %v2328, %v2424
  %v2426 = vpop.f32.mrb[0].mxu0
  %v2427 = vpop.f32.mrb[0].mxu0
  %v2428 = vadd.f32 %v2331, %v2427
  %v2429 = vpop.f32.mrb[0].mxu0
  %2430 = vmatprep.mubr.bf16.mxu0 %v356
  %2431 = vmatmul.mubr.bf16.gmra.mrb[0].mxu0 %v355
  %v2432 = vpop.f32.mrb[0].mxu0
  %v2433 = vadd.f32 %v2336, %v2432
  %v2434 = vpop.f32.mrb[0].mxu0
  %v2435 = vpop.f32.mrb[0].mxu0
  %v2436 = vadd.f32 %v2339, %v2435
  %v2437 = vpop.f32.mrb[0].mxu0
  %2438 = vmatprep.mubr.bf16.mxu0 %v374
  %2439 = vmatmul.mubr.bf16.gmra.mrb[0].mxu0 %v373
  %v2440 = vpop.f32.mrb[0].mxu0
  %v2441 = vadd.f32 %v2344, %v2440
  %v2442 = vpop.f32.mrb[0].mxu0
  %v2443 = vpop.f32.mrb[0].mxu0
  %v2444 = vadd.f32 %v2347, %v2443
  %v2445 = vpop.f32.mrb[0].mxu0
  %2446 = vmatprep.mubr.bf16.mxu0 %v392
  %2447 = vmatmul.mubr.bf16.gmra.mrb[0].mxu0 %v391
  %v2448 = vpop.f32.mrb[0].mxu0
  %v2449 = vadd.f32 %v2352, %v2448
  %v2450 = vpop.f32.mrb[0].mxu0
  %v2451 = vpop.f32.mrb[0].mxu0
  %v2452 = vadd.f32 %v2355, %v2451
  %v2453 = vpop.f32.mrb[0].mxu0
  %2454 = vmatprep.mubr.bf16.mxu0 %v410
  %2455 = vmatmul.mubr.bf16.gmra.mrb[0].mxu0 %v409
  %v2456 = vpop.f32.mrb[0].mxu0
  %v2457 = vadd.f32 %v2360, %v2456
  %v2458 = vpop.f32.mrb[0].mxu0
  %v2459 = vpop.f32.mrb[0].mxu0
  %v2460 = vadd.f32 %v2363, %v2459
  %v2461 = vpop.f32.mrb[0].mxu0
  %2462 = vmatprep.mubr.bf16.mxu0 %v428
  %2463 = vmatmul.mubr.bf16.gmra.mrb[0].mxu0 %v427
  %v2464 = vpop.f32.mrb[0].mxu0
  %v2465 = vadd.f32 %v2368, %v2464
  %v2466 = vpop.f32.mrb[0].mxu0
  %v2467 = vpop.f32.mrb[0].mxu0
  %v2468 = vadd.f32 %v2371, %v2467
  %v2469 = vpop.f32.mrb[0].mxu0
  %2470 = vmatprep.mubr.bf16.mxu0 %v446
  %2471 = vmatmul.mubr.bf16.gmra.mrb[0].mxu0 %v445
  %v2472 = vpop.f32.mrb[0].mxu0
  %v2473 = vadd.f32 %v2376, %v2472
  %v2474 = vpop.f32.mrb[0].mxu0
  %v2475 = vpop.f32.mrb[0].mxu0
  %v2476 = vadd.f32 %v2379, %v2475
  %v2477 = vpop.f32.mrb[0].mxu0
  %2478 = vdwg.mxu0
  %v2479 = vmax.f32 %v2417, 0.0
  %v2480 = vmax.f32 %v2420, 0.0
  %v2481 = vmax.f32 %v2425, 0.0
  %v2482 = vmax.f32 %v2428, 0.0
  %v2483 = vmax.f32 %v2433, 0.0
  %v2484 = vmax.f32 %v2436, 0.0
  %v2485 = vmax.f32 %v2441, 0.0
  %v2486 = vmax.f32 %v2444, 0.0
  %v2487 = vmax.f32 %v2449, 0.0
  %v2488 = vmax.f32 %v2452, 0.0
  %v2489 = vmax.f32 %v2457, 0.0
  %v2490 = vmax.f32 %v2460, 0.0
  %v2491 = vmax.f32 %v2465, 0.0
  %v2492 = vmax.f32 %v2468, 0.0
  %v2493 = vmax.f32 %v2473, 0.0
  %v2494 = vmax.f32 %v2476, 0.0
  %2495 = vst [vmem:[%s3] sm:$0xff] %v2479
  %2496 = vst [vmem:[%s3 + $0x8] sm:$0xff] %v2480
  %2497 = vst [vmem:[%s3 + $0x10] sm:$0xff] %v2481
  %2498 = vst [vmem:[%s3 + $0x18] sm:$0xff] %v2482
  %2499 = vst [vmem:[%s3 + $0x20] sm:$0xff] %v2483
  %2500 = vst [vmem:[%s3 + $0x28] sm:$0xff] %v2484
  %2501 = vst [vmem:[%s3 + $0x30] sm:$0xff] %v2485
  %2502 = vst [vmem:[%s3 + $0x38] sm:$0xff] %v2486
  %2503 = vst [vmem:[%s3 + $0x40] sm:$0xff] %v2487
  %2504 = vst [vmem:[%s3 + $0x48] sm:$0xff] %v2488
  %2505 = vst [vmem:[%s3 + $0x50] sm:$0xff] %v2489
  %2506 = vst [vmem:[%s3 + $0x58] sm:$0xff] %v2490
  %2507 = vst [vmem:[%s3 + $0x60] sm:$0xff] %v2491
  %2508 = vst [vmem:[%s3 + $0x68] sm:$0xff] %v2492
  %2509 = vst [vmem:[%s3 + $0x70] sm:$0xff] %v2493
  %2510 = vst [vmem:[%s3 + $0x78] sm:$0xff] %v2494
  // Predicated region
  $region14: #{seg_discriminator_forward.14} parent=0 // pred_check
    _
  $region15: #{seg_discriminator_forward.14} parent=0 // pred_check_branch
    %2512 = sbr.rel (0) target = $region17
  $region16: #{seg_discriminator_forward.14} parent=0 // pred_region
    _
  $region17: #{seg_discriminator_forward.14} parent=0 // pred_fallthru
    _
  // Predicated region
  $region18: #{seg_discriminator_forward.14} parent=0 // pred_check
    _
  $region19: #{seg_discriminator_forward.14} parent=0 // pred_check_branch
    %2514 = sbr.rel (0) target = $region21
  $region20: #{seg_discriminator_forward.14} parent=0 // pred_region
    _
  $region21: #{seg_discriminator_forward.14} parent=0 // pred_fallthru
    _

// kernel: seg_discriminator_forward.15
$region0: #{seg_discriminator_forward.15}
  #allocation0 [shape = 'u32[]', space=smem, size = 0x4, offset = 0x4, fixed_abs, tag = 'smem constant byte address 0x4 - core index']
  #allocation1 [shape = 'u32[144,128]{1,0:T(1,128)}', space=vmem, size = 0x12000, scoped, tag = 'internal scratch']
  %s0 = inlined_call_operand.vmem [shape: f32[2,2048], index: 0, kind: input, shape index: {}]
  %s1 = inlined_call_operand.vmem [shape: bf16[2048,128], index: 1, kind: input, shape index: {}]
  %s2 = inlined_call_operand.vmem [shape: f32[1,128], index: 2, kind: input, shape index: {}]
  %s3 = inlined_call_operand.vmem [shape: bf16[128,1024], index: 3, kind: input, shape index: {}]
  %s4 = inlined_call_operand.vmem [shape: f32[2,1024], index: 4, kind: output, shape index: {}]
  %s5 = sld [smem:[#allocation0]]
  $region26: #{seg_discriminator_forward.15} parent=0
    _
  %s7 = ssub.s32 1, %s5
  %s8 = scalar_select 0, %s7, %s5
  // Predicated region
  $region2: #{seg_discriminator_forward.15} parent=0 // pred_check
    _
  $region3: #{seg_discriminator_forward.15} parent=0 // pred_check_branch
    %10 = sbr.rel (0) target = $region5
  $region4: #{seg_discriminator_forward.15} parent=0 // pred_region
    _
  $region5: #{seg_discriminator_forward.15} parent=0 // pred_fallthru
    _
  // Predicated region
  $region6: #{seg_discriminator_forward.15} parent=0 // pred_check
    _
  $region7: #{seg_discriminator_forward.15} parent=0 // pred_check_branch
    %12 = sbr.rel (0) target = $region9
  $region8: #{seg_discriminator_forward.15} parent=0 // pred_region
    _
  $region9: #{seg_discriminator_forward.15} parent=0 // pred_fallthru
    _
  // Predicated region
  $region10: #{seg_discriminator_forward.15} parent=0 // pred_check
    _
  $region11: #{seg_discriminator_forward.15} parent=0 // pred_check_branch
    %14 = sbr.rel (0) target = $region13
  $region12: #{seg_discriminator_forward.15} parent=0 // pred_region
    _
  $region13: #{seg_discriminator_forward.15} parent=0 // pred_fallthru
    _
  // Predicated region
  $region14: #{seg_discriminator_forward.15} parent=0 // pred_check
    _
  $region15: #{seg_discriminator_forward.15} parent=0 // pred_check_branch
    %16 = sbr.rel (0) target = $region17
  $region16: #{seg_discriminator_forward.15} parent=0 // pred_region
    _
  $region17: #{seg_discriminator_forward.15} parent=0 // pred_fallthru
    _
  %v18 = vld [vmem:[%s0] sm:$0xff]
  %v19 = vld [vmem:[%s0 + $0x8] sm:$0xff]
  %v20 = vld [vmem:[%s0 + $0x10] sm:$0xff]
  %v21 = vld [vmem:[%s0 + $0x18] sm:$0xff]
  %v26 = vcombine.high %v18, %v18
  %v28 = vunpack.c.l.s4 1983009808
  %v29 = vunpack.c.0.s8 %v28
  %v30 = vlaneseq
  %v31 = vshrl.u32 %v30, 7
  %v32 = vsub.s32 %v29, %v31
  %v33 = vrot.slane %v18, %v32
  %v35 = vunpack.c.l.s4 1983009808
  %v36 = vunpack.c.0.s8 %v35
  %v37 = vlaneseq
  %v38 = vshrl.u32 %v37, 7
  %v39 = vsub.s32 %v36, %v38
  %v40 = vrot.slane %v26, %v39
  %v41 = vcombine.high %v33, %v33
  %v42 = vcombine.high %v40, %v40
  %v43 = vcombine.high %v19, %v19
  %v45 = vunpack.c.l.s4 1983009808
  %v46 = vunpack.c.0.s8 %v45
  %v47 = vlaneseq
  %v48 = vshrl.u32 %v47, 7
  %v49 = vsub.s32 %v46, %v48
  %v50 = vrot.slane %v19, %v49
  %v52 = vunpack.c.l.s4 1983009808
  %v53 = vunpack.c.0.s8 %v52
  %v54 = vlaneseq
  %v55 = vshrl.u32 %v54, 7
  %v56 = vsub.s32 %v53, %v55
  %v57 = vrot.slane %v43, %v56
  %v58 = vcombine.high %v50, %v50
  %v59 = vcombine.high %v57, %v57
  %v60 = vcombine.high %v20, %v20
  %v62 = vunpack.c.l.s4 1983009808
  %v63 = vunpack.c.0.s8 %v62
  %v64 = vlaneseq
  %v65 = vshrl.u32 %v64, 7
  %v66 = vsub.s32 %v63, %v65
  %v67 = vrot.slane %v20, %v66
  %v69 = vunpack.c.l.s4 1983009808
  %v70 = vunpack.c.0.s8 %v69
  %v71 = vlaneseq
  %v72 = vshrl.u32 %v71, 7
  %v73 = vsub.s32 %v70, %v72
  %v74 = vrot.slane %v60, %v73
  %v75 = vcombine.high %v67, %v67
  %v76 = vcombine.high %v74, %v74
  %v77 = vcombine.high %v21, %v21
  %v79 = vunpack.c.l.s4 1983009808
  %v80 = vunpack.c.0.s8 %v79
  %v81 = vlaneseq
  %v82 = vshrl.u32 %v81, 7
  %v83 = vsub.s32 %v80, %v82
  %v84 = vrot.slane %v21, %v83
  %v86 = vunpack.c.l.s4 1983009808
  %v87 = vunpack.c.0.s8 %v86
  %v88 = vlaneseq
  %v89 = vshrl.u32 %v88, 7
  %v90 = vsub.s32 %v87, %v89
  %v91 = vrot.slane %v77, %v90
  %v92 = vcombine.high %v84, %v84
  %v93 = vcombine.high %v91, %v91
  %v110 = vpack.c.bf16 %v33, %v33
  %v111 = vpack.c.bf16 %v41, %v41
  %v112 = vpack.c.bf16 %v40, %v40
  %v113 = vpack.c.bf16 %v42, %v42
  %v114 = vpack.c.bf16 %v50, %v50
  %v115 = vpack.c.bf16 %v58, %v58
  %v116 = vpack.c.bf16 %v57, %v57
  %v117 = vpack.c.bf16 %v59, %v59
  %v118 = vpack.c.bf16 %v67, %v67
  %v119 = vpack.c.bf16 %v75, %v75
  %v120 = vpack.c.bf16 %v74, %v74
  %v121 = vpack.c.bf16 %v76, %v76
  %v122 = vpack.c.bf16 %v84, %v84
  %v123 = vpack.c.bf16 %v92, %v92
  %v124 = vpack.c.bf16 %v91, %v91
  %v125 = vpack.c.bf16 %v93, %v93
  %v126 = vld [vmem:[%s1] sm:$0xf]
  %v127 = vld [vmem:[%s1 + $0x4] sm:$0xf]
  %v128 = vld [vmem:[%s1 + $0x8] sm:$0xf]
  %v129 = vld [vmem:[%s1 + $0xc] sm:$0xf]
  %v130 = vld [vmem:[%s1 + $0x10] sm:$0xf]
  %v131 = vld [vmem:[%s1 + $0x14] sm:$0xf]
  %v132 = vld [vmem:[%s1 + $0x18] sm:$0xf]
  %v133 = vld [vmem:[%s1 + $0x1c] sm:$0xf]
  %v134 = vld [vmem:[%s1 + $0x20] sm:$0xf]
  %v135 = vld [vmem:[%s1 + $0x24] sm:$0xf]
  %v136 = vld [vmem:[%s1 + $0x28] sm:$0xf]
  %v137 = vld [vmem:[%s1 + $0x2c] sm:$0xf]
  %v138 = vld [vmem:[%s1 + $0x30] sm:$0xf]
  %v139 = vld [vmem:[%s1 + $0x34] sm:$0xf]
  %v140 = vld [vmem:[%s1 + $0x38] sm:$0xf]
  %v141 = vld [vmem:[%s1 + $0x3c] sm:$0xf]
  %v142 = vld [vmem:[%s1 + $0x40] sm:$0xf]
  %v143 = vld [vmem:[%s1 + $0x44] sm:$0xf]
  %v144 = vld [vmem:[%s1 + $0x48] sm:$0xf]
  %v145 = vld [vmem:[%s1 + $0x4c] sm:$0xf]
  %v146 = vld [vmem:[%s1 + $0x50] sm:$0xf]
  %v147 = vld [vmem:[%s1 + $0x54] sm:$0xf]
  %v148 = vld [vmem:[%s1 + $0x58] sm:$0xf]
  %v149 = vld [vmem:[%s1 + $0x5c] sm:$0xf]
  %v150 = vld [vmem:[%s1 + $0x60] sm:$0xf]
  %v151 = vld [vmem:[%s1 + $0x64] sm:$0xf]
  %v152 = vld [vmem:[%s1 + $0x68] sm:$0xf]
  %v153 = vld [vmem:[%s1 + $0x6c] sm:$0xf]
  %v154 = vld [vmem:[%s1 + $0x70] sm:$0xf]
  %v155 = vld [vmem:[%s1 + $0x74] sm:$0xf]
  %v156 = vld [vmem:[%s1 + $0x78] sm:$0xf]
  %v157 = vld [vmem:[%s1 + $0x7c] sm:$0xf]
  %v158 = vld [vmem:[%s1 + $0x80] sm:$0xf]
  %v159 = vld [vmem:[%s1 + $0x84] sm:$0xf]
  %v160 = vld [vmem:[%s1 + $0x88] sm:$0xf]
  %v161 = vld [vmem:[%s1 + $0x8c] sm:$0xf]
  %v162 = vld [vmem:[%s1 + $0x90] sm:$0xf]
  %v163 = vld [vmem:[%s1 + $0x94] sm:$0xf]
  %v164 = vld [vmem:[%s1 + $0x98] sm:$0xf]
  %v165 = vld [vmem:[%s1 + $0x9c] sm:$0xf]
  %v166 = vld [vmem:[%s1 + $0xa0] sm:$0xf]
  %v167 = vld [vmem:[%s1 + $0xa4] sm:$0xf]
  %v168 = vld [vmem:[%s1 + $0xa8] sm:$0xf]
  %v169 = vld [vmem:[%s1 + $0xac] sm:$0xf]
  %v170 = vld [vmem:[%s1 + $0xb0] sm:$0xf]
  %v171 = vld [vmem:[%s1 + $0xb4] sm:$0xf]
  %v172 = vld [vmem:[%s1 + $0xb8] sm:$0xf]
  %v173 = vld [vmem:[%s1 + $0xbc] sm:$0xf]
  %v174 = vld [vmem:[%s1 + $0xc0] sm:$0xf]
  %v175 = vld [vmem:[%s1 + $0xc4] sm:$0xf]
  %v176 = vld [vmem:[%s1 + $0xc8] sm:$0xf]
  %v177 = vld [vmem:[%s1 + $0xcc] sm:$0xf]
  %v178 = vld [vmem:[%s1 + $0xd0] sm:$0xf]
  %v179 = vld [vmem:[%s1 + $0xd4] sm:$0xf]
  %v180 = vld [vmem:[%s1 + $0xd8] sm:$0xf]
  %v181 = vld [vmem:[%s1 + $0xdc] sm:$0xf]
  %v182 = vld [vmem:[%s1 + $0xe0] sm:$0xf]
  %v183 = vld [vmem:[%s1 + $0xe4] sm:$0xf]
  %v184 = vld [vmem:[%s1 + $0xe8] sm:$0xf]
  %v185 = vld [vmem:[%s1 + $0xec] sm:$0xf]
  %v186 = vld [vmem:[%s1 + $0xf0] sm:$0xf]
  %v187 = vld [vmem:[%s1 + $0xf4] sm:$0xf]
  %v188 = vld [vmem:[%s1 + $0xf8] sm:$0xf]
  %v189 = vld [vmem:[%s1 + $0xfc] sm:$0xf]
  %v190 = vld [vmem:[%s1 + $0x100] sm:$0xf]
  %v191 = vld [vmem:[%s1 + $0x104] sm:$0xf]
  %v192 = vld [vmem:[%s1 + $0x108] sm:$0xf]
  %v193 = vld [vmem:[%s1 + $0x10c] sm:$0xf]
  %v194 = vld [vmem:[%s1 + $0x110] sm:$0xf]
  %v195 = vld [vmem:[%s1 + $0x114] sm:$0xf]
  %v196 = vld [vmem:[%s1 + $0x118] sm:$0xf]
  %v197 = vld [vmem:[%s1 + $0x11c] sm:$0xf]
  %v198 = vld [vmem:[%s1 + $0x120] sm:$0xf]
  %v199 = vld [vmem:[%s1 + $0x124] sm:$0xf]
  %v200 = vld [vmem:[%s1 + $0x128] sm:$0xf]
  %v201 = vld [vmem:[%s1 + $0x12c] sm:$0xf]
  %v202 = vld [vmem:[%s1 + $0x130] sm:$0xf]
  %v203 = vld [vmem:[%s1 + $0x134] sm:$0xf]
  %v204 = vld [vmem:[%s1 + $0x138] sm:$0xf]
  %v205 = vld [vmem:[%s1 + $0x13c] sm:$0xf]
  %v206 = vld [vmem:[%s1 + $0x140] sm:$0xf]
  %v207 = vld [vmem:[%s1 + $0x144] sm:$0xf]
  %v208 = vld [vmem:[%s1 + $0x148] sm:$0xf]
  %v209 = vld [vmem:[%s1 + $0x14c] sm:$0xf]
  %v210 = vld [vmem:[%s1 + $0x150] sm:$0xf]
  %v211 = vld [vmem:[%s1 + $0x154] sm:$0xf]
  %v212 = vld [vmem:[%s1 + $0x158] sm:$0xf]
  %v213 = vld [vmem:[%s1 + $0x15c] sm:$0xf]
  %v214 = vld [vmem:[%s1 + $0x160] sm:$0xf]
  %v215 = vld [vmem:[%s1 + $0x164] sm:$0xf]
  %v216 = vld [vmem:[%s1 + $0x168] sm:$0xf]
  %v217 = vld [vmem:[%s1 + $0x16c] sm:$0xf]
  %v218 = vld [vmem:[%s1 + $0x170] sm:$0xf]
  %v219 = vld [vmem:[%s1 + $0x174] sm:$0xf]
  %v220 = vld [vmem:[%s1 + $0x178] sm:$0xf]
  %v221 = vld [vmem:[%s1 + $0x17c] sm:$0xf]
  %v222 = vld [vmem:[%s1 + $0x180] sm:$0xf]
  %v223 = vld [vmem:[%s1 + $0x184] sm:$0xf]
  %v224 = vld [vmem:[%s1 + $0x188] sm:$0xf]
  %v225 = vld [vmem:[%s1 + $0x18c] sm:$0xf]
  %v226 = vld [vmem:[%s1 + $0x190] sm:$0xf]
  %v227 = vld [vmem:[%s1 + $0x194] sm:$0xf]
  %v228 = vld [vmem:[%s1 + $0x198] sm:$0xf]
  %v229 = vld [vmem:[%s1 + $0x19c] sm:$0xf]
  %v230 = vld [vmem:[%s1 + $0x1a0] sm:$0xf]
  %v231 = vld [vmem:[%s1 + $0x1a4] sm:$0xf]
  %v232 = vld [vmem:[%s1 + $0x1a8] sm:$0xf]
  %v233 = vld [vmem:[%s1 + $0x1ac] sm:$0xf]
  %v234 = vld [vmem:[%s1 + $0x1b0] sm:$0xf]
  %v235 = vld [vmem:[%s1 + $0x1b4] sm:$0xf]
  %v236 = vld [vmem:[%s1 + $0x1b8] sm:$0xf]
  %v237 = vld [vmem:[%s1 + $0x1bc] sm:$0xf]
  %v238 = vld [vmem:[%s1 + $0x1c0] sm:$0xf]
  %v239 = vld [vmem:[%s1 + $0x1c4] sm:$0xf]
  %v240 = vld [vmem:[%s1 + $0x1c8] sm:$0xf]
  %v241 = vld [vmem:[%s1 + $0x1cc] sm:$0xf]
  %v242 = vld [vmem:[%s1 + $0x1d0] sm:$0xf]
  %v243 = vld [vmem:[%s1 + $0x1d4] sm:$0xf]
  %v244 = vld [vmem:[%s1 + $0x1d8] sm:$0xf]
  %v245 = vld [vmem:[%s1 + $0x1dc] sm:$0xf]
  %v246 = vld [vmem:[%s1 + $0x1e0] sm:$0xf]
  %v247 = vld [vmem:[%s1 + $0x1e4] sm:$0xf]
  %v248 = vld [vmem:[%s1 + $0x1e8] sm:$0xf]
  %v249 = vld [vmem:[%s1 + $0x1ec] sm:$0xf]
  %v250 = vld [vmem:[%s1 + $0x1f0] sm:$0xf]
  %v251 = vld [vmem:[%s1 + $0x1f4] sm:$0xf]
  %v252 = vld [vmem:[%s1 + $0x1f8] sm:$0xf]
  %v253 = vld [vmem:[%s1 + $0x1fc] sm:$0xf]
  %v254 = vld [vmem:[%s1 + $0x200] sm:$0xf]
  %v255 = vld [vmem:[%s1 + $0x204] sm:$0xf]
  %v256 = vld [vmem:[%s1 + $0x208] sm:$0xf]
  %v257 = vld [vmem:[%s1 + $0x20c] sm:$0xf]
  %v258 = vld [vmem:[%s1 + $0x210] sm:$0xf]
  %v259 = vld [vmem:[%s1 + $0x214] sm:$0xf]
  %v260 = vld [vmem:[%s1 + $0x218] sm:$0xf]
  %v261 = vld [vmem:[%s1 + $0x21c] sm:$0xf]
  %v262 = vld [vmem:[%s1 + $0x220] sm:$0xf]
  %v263 = vld [vmem:[%s1 + $0x224] sm:$0xf]
  %v264 = vld [vmem:[%s1 + $0x228] sm:$0xf]
  %v265 = vld [vmem:[%s1 + $0x22c] sm:$0xf]
  %v266 = vld [vmem:[%s1 + $0x230] sm:$0xf]
  %v267 = vld [vmem:[%s1 + $0x234] sm:$0xf]
  %v268 = vld [vmem:[%s1 + $0x238] sm:$0xf]
  %v269 = vld [vmem:[%s1 + $0x23c] sm:$0xf]
  %v270 = vld [vmem:[%s1 + $0x240] sm:$0xf]
  %v271 = vld [vmem:[%s1 + $0x244] sm:$0xf]
  %v272 = vld [vmem:[%s1 + $0x248] sm:$0xf]
  %v273 = vld [vmem:[%s1 + $0x24c] sm:$0xf]
  %v274 = vld [vmem:[%s1 + $0x250] sm:$0xf]
  %v275 = vld [vmem:[%s1 + $0x254] sm:$0xf]
  %v276 = vld [vmem:[%s1 + $0x258] sm:$0xf]
  %v277 = vld [vmem:[%s1 + $0x25c] sm:$0xf]
  %v278 = vld [vmem:[%s1 + $0x260] sm:$0xf]
  %v279 = vld [vmem:[%s1 + $0x264] sm:$0xf]
  %v280 = vld [vmem:[%s1 + $0x268] sm:$0xf]
  %v281 = vld [vmem:[%s1 + $0x26c] sm:$0xf]
  %v282 = vld [vmem:[%s1 + $0x270] sm:$0xf]
  %v283 = vld [vmem:[%s1 + $0x274] sm:$0xf]
  %v284 = vld [vmem:[%s1 + $0x278] sm:$0xf]
  %v285 = vld [vmem:[%s1 + $0x27c] sm:$0xf]
  %v286 = vld [vmem:[%s1 + $0x280] sm:$0xf]
  %v287 = vld [vmem:[%s1 + $0x284] sm:$0xf]
  %v288 = vld [vmem:[%s1 + $0x288] sm:$0xf]
  %v289 = vld [vmem:[%s1 + $0x28c] sm:$0xf]
  %v290 = vld [vmem:[%s1 + $0x290] sm:$0xf]
  %v291 = vld [vmem:[%s1 + $0x294] sm:$0xf]
  %v292 = vld [vmem:[%s1 + $0x298] sm:$0xf]
  %v293 = vld [vmem:[%s1 + $0x29c] sm:$0xf]
  %v294 = vld [vmem:[%s1 + $0x2a0] sm:$0xf]
  %v295 = vld [vmem:[%s1 + $0x2a4] sm:$0xf]
  %v296 = vld [vmem:[%s1 + $0x2a8] sm:$0xf]
  %v297 = vld [vmem:[%s1 + $0x2ac] sm:$0xf]
  %v298 = vld [vmem:[%s1 + $0x2b0] sm:$0xf]
  %v299 = vld [vmem:[%s1 + $0x2b4] sm:$0xf]
  %v300 = vld [vmem:[%s1 + $0x2b8] sm:$0xf]
  %v301 = vld [vmem:[%s1 + $0x2bc] sm:$0xf]
  %v302 = vld [vmem:[%s1 + $0x2c0] sm:$0xf]
  %v303 = vld [vmem:[%s1 + $0x2c4] sm:$0xf]
  %v304 = vld [vmem:[%s1 + $0x2c8] sm:$0xf]
  %v305 = vld [vmem:[%s1 + $0x2cc] sm:$0xf]
  %v306 = vld [vmem:[%s1 + $0x2d0] sm:$0xf]
  %v307 = vld [vmem:[%s1 + $0x2d4] sm:$0xf]
  %v308 = vld [vmem:[%s1 + $0x2d8] sm:$0xf]
  %v309 = vld [vmem:[%s1 + $0x2dc] sm:$0xf]
  %v310 = vld [vmem:[%s1 + $0x2e0] sm:$0xf]
  %v311 = vld [vmem:[%s1 + $0x2e4] sm:$0xf]
  %v312 = vld [vmem:[%s1 + $0x2e8] sm:$0xf]
  %v313 = vld [vmem:[%s1 + $0x2ec] sm:$0xf]
  %v314 = vld [vmem:[%s1 + $0x2f0] sm:$0xf]
  %v315 = vld [vmem:[%s1 + $0x2f4] sm:$0xf]
  %v316 = vld [vmem:[%s1 + $0x2f8] sm:$0xf]
  %v317 = vld [vmem:[%s1 + $0x2fc] sm:$0xf]
  %v318 = vld [vmem:[%s1 + $0x300] sm:$0xf]
  %v319 = vld [vmem:[%s1 + $0x304] sm:$0xf]
  %v320 = vld [vmem:[%s1 + $0x308] sm:$0xf]
  %v321 = vld [vmem:[%s1 + $0x30c] sm:$0xf]
  %v322 = vld [vmem:[%s1 + $0x310] sm:$0xf]
  %v323 = vld [vmem:[%s1 + $0x314] sm:$0xf]
  %v324 = vld [vmem:[%s1 + $0x318] sm:$0xf]
  %v325 = vld [vmem:[%s1 + $0x31c] sm:$0xf]
  %v326 = vld [vmem:[%s1 + $0x320] sm:$0xf]
  %v327 = vld [vmem:[%s1 + $0x324] sm:$0xf]
  %v328 = vld [vmem:[%s1 + $0x328] sm:$0xf]
  %v329 = vld [vmem:[%s1 + $0x32c] sm:$0xf]
  %v330 = vld [vmem:[%s1 + $0x330] sm:$0xf]
  %v331 = vld [vmem:[%s1 + $0x334] sm:$0xf]
  %v332 = vld [vmem:[%s1 + $0x338] sm:$0xf]
  %v333 = vld [vmem:[%s1 + $0x33c] sm:$0xf]
  %v334 = vld [vmem:[%s1 + $0x340] sm:$0xf]
  %v335 = vld [vmem:[%s1 + $0x344] sm:$0xf]
  %v336 = vld [vmem:[%s1 + $0x348] sm:$0xf]
  %v337 = vld [vmem:[%s1 + $0x34c] sm:$0xf]
  %v338 = vld [vmem:[%s1 + $0x350] sm:$0xf]
  %v339 = vld [vmem:[%s1 + $0x354] sm:$0xf]
  %v340 = vld [vmem:[%s1 + $0x358] sm:$0xf]
  %v341 = vld [vmem:[%s1 + $0x35c] sm:$0xf]
  %v342 = vld [vmem:[%s1 + $0x360] sm:$0xf]
  %v343 = vld [vmem:[%s1 + $0x364] sm:$0xf]
  %v344 = vld [vmem:[%s1 + $0x368] sm:$0xf]
  %v345 = vld [vmem:[%s1 + $0x36c] sm:$0xf]
  %v346 = vld [vmem:[%s1 + $0x370] sm:$0xf]
  %v347 = vld [vmem:[%s1 + $0x374] sm:$0xf]
  %v348 = vld [vmem:[%s1 + $0x378] sm:$0xf]
  %v349 = vld [vmem:[%s1 + $0x37c] sm:$0xf]
  %v350 = vld [vmem:[%s1 + $0x380] sm:$0xf]
  %v351 = vld [vmem:[%s1 + $0x384] sm:$0xf]
  %v352 = vld [vmem:[%s1 + $0x388] sm:$0xf]
  %v353 = vld [vmem:[%s1 + $0x38c] sm:$0xf]
  %v354 = vld [vmem:[%s1 + $0x390] sm:$0xf]
  %v355 = vld [vmem:[%s1 + $0x394] sm:$0xf]
  %v356 = vld [vmem:[%s1 + $0x398] sm:$0xf]
  %v357 = vld [vmem:[%s1 + $0x39c] sm:$0xf]
  %v358 = vld [vmem:[%s1 + $0x3a0] sm:$0xf]
  %v359 = vld [vmem:[%s1 + $0x3a4] sm:$0xf]
  %v360 = vld [vmem:[%s1 + $0x3a8] sm:$0xf]
  %v361 = vld [vmem:[%s1 + $0x3ac] sm:$0xf]
  %v362 = vld [vmem:[%s1 + $0x3b0] sm:$0xf]
  %v363 = vld [vmem:[%s1 + $0x3b4] sm:$0xf]
  %v364 = vld [vmem:[%s1 + $0x3b8] sm:$0xf]
  %v365 = vld [vmem:[%s1 + $0x3bc] sm:$0xf]
  %v366 = vld [vmem:[%s1 + $0x3c0] sm:$0xf]
  %v367 = vld [vmem:[%s1 + $0x3c4] sm:$0xf]
  %v368 = vld [vmem:[%s1 + $0x3c8] sm:$0xf]
  %v369 = vld [vmem:[%s1 + $0x3cc] sm:$0xf]
  %v370 = vld [vmem:[%s1 + $0x3d0] sm:$0xf]
  %v371 = vld [vmem:[%s1 + $0x3d4] sm:$0xf]
  %v372 = vld [vmem:[%s1 + $0x3d8] sm:$0xf]
  %v373 = vld [vmem:[%s1 + $0x3dc] sm:$0xf]
  %v374 = vld [vmem:[%s1 + $0x3e0] sm:$0xf]
  %v375 = vld [vmem:[%s1 + $0x3e4] sm:$0xf]
  %v376 = vld [vmem:[%s1 + $0x3e8] sm:$0xf]
  %v377 = vld [vmem:[%s1 + $0x3ec] sm:$0xf]
  %v378 = vld [vmem:[%s1 + $0x3f0] sm:$0xf]
  %v379 = vld [vmem:[%s1 + $0x3f4] sm:$0xf]
  %v380 = vld [vmem:[%s1 + $0x3f8] sm:$0xf]
  %v381 = vld [vmem:[%s1 + $0x3fc] sm:$0xf]
  %v382 = vld [vmem:[%s2] sm:$0x1]
  %v384 = vlaneseq
  %v385 = vshrl.u32 %v384, 7
  %v386 = vsub.s32 0, %v385
  %v387 = vrot.slane %v382, %v386
  %v645 = vunpack.c.l.b16 %v126
  %v646 = vunpack.c.l.b16 %v127
  %v647 = vunpack.c.l.b16 %v128
  %v648 = vunpack.c.l.b16 %v129
  %v649 = vunpack.c.l.b16 %v130
  %v650 = vunpack.c.l.b16 %v131
  %v651 = vunpack.c.l.b16 %v132
  %v652 = vunpack.c.l.b16 %v133
  %v653 = vunpack.c.l.b16 %v134
  %v654 = vunpack.c.l.b16 %v135
  %v655 = vunpack.c.l.b16 %v136
  %v656 = vunpack.c.l.b16 %v137
  %v657 = vunpack.c.l.b16 %v138
  %v658 = vunpack.c.l.b16 %v139
  %v659 = vunpack.c.l.b16 %v140
  %v660 = vunpack.c.l.b16 %v141
  %v661 = vunpack.c.l.b16 %v142
  %v662 = vunpack.c.l.b16 %v143
  %v663 = vunpack.c.l.b16 %v144
  %v664 = vunpack.c.l.b16 %v145
  %v665 = vunpack.c.l.b16 %v146
  %v666 = vunpack.c.l.b16 %v147
  %v667 = vunpack.c.l.b16 %v148
  %v668 = vunpack.c.l.b16 %v149
  %v669 = vunpack.c.l.b16 %v150
  %v670 = vunpack.c.l.b16 %v151
  %v671 = vunpack.c.l.b16 %v152
  %v672 = vunpack.c.l.b16 %v153
  %v673 = vunpack.c.l.b16 %v154
  %v674 = vunpack.c.l.b16 %v155
  %v675 = vunpack.c.l.b16 %v156
  %v676 = vunpack.c.l.b16 %v157
  %v677 = vunpack.c.l.b16 %v158
  %v678 = vunpack.c.l.b16 %v159
  %v679 = vunpack.c.l.b16 %v160
  %v680 = vunpack.c.l.b16 %v161
  %v681 = vunpack.c.l.b16 %v162
  %v682 = vunpack.c.l.b16 %v163
  %v683 = vunpack.c.l.b16 %v164
  %v684 = vunpack.c.l.b16 %v165
  %v685 = vunpack.c.l.b16 %v166
  %v686 = vunpack.c.l.b16 %v167
  %v687 = vunpack.c.l.b16 %v168
  %v688 = vunpack.c.l.b16 %v169
  %v689 = vunpack.c.l.b16 %v170
  %v690 = vunpack.c.l.b16 %v171
  %v691 = vunpack.c.l.b16 %v172
  %v692 = vunpack.c.l.b16 %v173
  %v693 = vunpack.c.l.b16 %v174
  %v694 = vunpack.c.l.b16 %v175
  %v695 = vunpack.c.l.b16 %v176
  %v696 = vunpack.c.l.b16 %v177
  %v697 = vunpack.c.l.b16 %v178
  %v698 = vunpack.c.l.b16 %v179
  %v699 = vunpack.c.l.b16 %v180
  %v700 = vunpack.c.l.b16 %v181
  %v701 = vunpack.c.l.b16 %v182
  %v702 = vunpack.c.l.b16 %v183
  %v703 = vunpack.c.l.b16 %v184
  %v704 = vunpack.c.l.b16 %v185
  %v705 = vunpack.c.l.b16 %v186
  %v706 = vunpack.c.l.b16 %v187
  %v707 = vunpack.c.l.b16 %v188
  %v708 = vunpack.c.l.b16 %v189
  %v709 = vunpack.c.l.b16 %v190
  %v710 = vunpack.c.l.b16 %v191
  %v711 = vunpack.c.l.b16 %v192
  %v712 = vunpack.c.l.b16 %v193
  %v713 = vunpack.c.l.b16 %v194
  %v714 = vunpack.c.l.b16 %v195
  %v715 = vunpack.c.l.b16 %v196
  %v716 = vunpack.c.l.b16 %v197
  %v717 = vunpack.c.l.b16 %v198
  %v718 = vunpack.c.l.b16 %v199
  %v719 = vunpack.c.l.b16 %v200
  %v720 = vunpack.c.l.b16 %v201
  %v721 = vunpack.c.l.b16 %v202
  %v722 = vunpack.c.l.b16 %v203
  %v723 = vunpack.c.l.b16 %v204
  %v724 = vunpack.c.l.b16 %v205
  %v725 = vunpack.c.l.b16 %v206
  %v726 = vunpack.c.l.b16 %v207
  %v727 = vunpack.c.l.b16 %v208
  %v728 = vunpack.c.l.b16 %v209
  %v729 = vunpack.c.l.b16 %v210
  %v730 = vunpack.c.l.b16 %v211
  %v731 = vunpack.c.l.b16 %v212
  %v732 = vunpack.c.l.b16 %v213
  %v733 = vunpack.c.l.b16 %v214
  %v734 = vunpack.c.l.b16 %v215
  %v735 = vunpack.c.l.b16 %v216
  %v736 = vunpack.c.l.b16 %v217
  %v737 = vunpack.c.l.b16 %v218
  %v738 = vunpack.c.l.b16 %v219
  %v739 = vunpack.c.l.b16 %v220
  %v740 = vunpack.c.l.b16 %v221
  %v741 = vunpack.c.l.b16 %v222
  %v742 = vunpack.c.l.b16 %v223
  %v743 = vunpack.c.l.b16 %v224
  %v744 = vunpack.c.l.b16 %v225
  %v745 = vunpack.c.l.b16 %v226
  %v746 = vunpack.c.l.b16 %v227
  %v747 = vunpack.c.l.b16 %v228
  %v748 = vunpack.c.l.b16 %v229
  %v749 = vunpack.c.l.b16 %v230
  %v750 = vunpack.c.l.b16 %v231
  %v751 = vunpack.c.l.b16 %v232
  %v752 = vunpack.c.l.b16 %v233
  %v753 = vunpack.c.l.b16 %v234
  %v754 = vunpack.c.l.b16 %v235
  %v755 = vunpack.c.l.b16 %v236
  %v756 = vunpack.c.l.b16 %v237
  %v757 = vunpack.c.l.b16 %v238
  %v758 = vunpack.c.l.b16 %v239
  %v759 = vunpack.c.l.b16 %v240
  %v760 = vunpack.c.l.b16 %v241
  %v761 = vunpack.c.l.b16 %v242
  %v762 = vunpack.c.l.b16 %v243
  %v763 = vunpack.c.l.b16 %v244
  %v764 = vunpack.c.l.b16 %v245
  %v765 = vunpack.c.l.b16 %v246
  %v766 = vunpack.c.l.b16 %v247
  %v767 = vunpack.c.l.b16 %v248
  %v768 = vunpack.c.l.b16 %v249
  %v769 = vunpack.c.l.b16 %v250
  %v770 = vunpack.c.l.b16 %v251
  %v771 = vunpack.c.l.b16 %v252
  %v772 = vunpack.c.l.b16 %v253
  %v773 = vunpack.c.l.b16 %v254
  %v774 = vunpack.c.l.b16 %v255
  %v775 = vunpack.c.l.b16 %v256
  %v776 = vunpack.c.l.b16 %v257
  %v777 = vunpack.c.l.b16 %v258
  %v778 = vunpack.c.l.b16 %v259
  %v779 = vunpack.c.l.b16 %v260
  %v780 = vunpack.c.l.b16 %v261
  %v781 = vunpack.c.l.b16 %v262
  %v782 = vunpack.c.l.b16 %v263
  %v783 = vunpack.c.l.b16 %v264
  %v784 = vunpack.c.l.b16 %v265
  %v785 = vunpack.c.l.b16 %v266
  %v786 = vunpack.c.l.b16 %v267
  %v787 = vunpack.c.l.b16 %v268
  %v788 = vunpack.c.l.b16 %v269
  %v789 = vunpack.c.l.b16 %v270
  %v790 = vunpack.c.l.b16 %v271
  %v791 = vunpack.c.l.b16 %v272
  %v792 = vunpack.c.l.b16 %v273
  %v793 = vunpack.c.l.b16 %v274
  %v794 = vunpack.c.l.b16 %v275
  %v795 = vunpack.c.l.b16 %v276
  %v796 = vunpack.c.l.b16 %v277
  %v797 = vunpack.c.l.b16 %v278
  %v798 = vunpack.c.l.b16 %v279
  %v799 = vunpack.c.l.b16 %v280
  %v800 = vunpack.c.l.b16 %v281
  %v801 = vunpack.c.l.b16 %v282
  %v802 = vunpack.c.l.b16 %v283
  %v803 = vunpack.c.l.b16 %v284
  %v804 = vunpack.c.l.b16 %v285
  %v805 = vunpack.c.l.b16 %v286
  %v806 = vunpack.c.l.b16 %v287
  %v807 = vunpack.c.l.b16 %v288
  %v808 = vunpack.c.l.b16 %v289
  %v809 = vunpack.c.l.b16 %v290
  %v810 = vunpack.c.l.b16 %v291
  %v811 = vunpack.c.l.b16 %v292
  %v812 = vunpack.c.l.b16 %v293
  %v813 = vunpack.c.l.b16 %v294
  %v814 = vunpack.c.l.b16 %v295
  %v815 = vunpack.c.l.b16 %v296
  %v816 = vunpack.c.l.b16 %v297
  %v817 = vunpack.c.l.b16 %v298
  %v818 = vunpack.c.l.b16 %v299
  %v819 = vunpack.c.l.b16 %v300
  %v820 = vunpack.c.l.b16 %v301
  %v821 = vunpack.c.l.b16 %v302
  %v822 = vunpack.c.l.b16 %v303
  %v823 = vunpack.c.l.b16 %v304
  %v824 = vunpack.c.l.b16 %v305
  %v825 = vunpack.c.l.b16 %v306
  %v826 = vunpack.c.l.b16 %v307
  %v827 = vunpack.c.l.b16 %v308
  %v828 = vunpack.c.l.b16 %v309
  %v829 = vunpack.c.l.b16 %v310
  %v830 = vunpack.c.l.b16 %v311
  %v831 = vunpack.c.l.b16 %v312
  %v832 = vunpack.c.l.b16 %v313
  %v833 = vunpack.c.l.b16 %v314
  %v834 = vunpack.c.l.b16 %v315
  %v835 = vunpack.c.l.b16 %v316
  %v836 = vunpack.c.l.b16 %v317
  %v837 = vunpack.c.l.b16 %v318
  %v838 = vunpack.c.l.b16 %v319
  %v839 = vunpack.c.l.b16 %v320
  %v840 = vunpack.c.l.b16 %v321
  %v841 = vunpack.c.l.b16 %v322
  %v842 = vunpack.c.l.b16 %v323
  %v843 = vunpack.c.l.b16 %v324
  %v844 = vunpack.c.l.b16 %v325
  %v845 = vunpack.c.l.b16 %v326
  %v846 = vunpack.c.l.b16 %v327
  %v847 = vunpack.c.l.b16 %v328
  %v848 = vunpack.c.l.b16 %v329
  %v849 = vunpack.c.l.b16 %v330
  %v850 = vunpack.c.l.b16 %v331
  %v851 = vunpack.c.l.b16 %v332
  %v852 = vunpack.c.l.b16 %v333
  %v853 = vunpack.c.l.b16 %v334
  %v854 = vunpack.c.l.b16 %v335
  %v855 = vunpack.c.l.b16 %v336
  %v856 = vunpack.c.l.b16 %v337
  %v857 = vunpack.c.l.b16 %v338
  %v858 = vunpack.c.l.b16 %v339
  %v859 = vunpack.c.l.b16 %v340
  %v860 = vunpack.c.l.b16 %v341
  %v861 = vunpack.c.l.b16 %v342
  %v862 = vunpack.c.l.b16 %v343
  %v863 = vunpack.c.l.b16 %v344
  %v864 = vunpack.c.l.b16 %v345
  %v865 = vunpack.c.l.b16 %v346
  %v866 = vunpack.c.l.b16 %v347
  %v867 = vunpack.c.l.b16 %v348
  %v868 = vunpack.c.l.b16 %v349
  %v869 = vunpack.c.l.b16 %v350
  %v870 = vunpack.c.l.b16 %v351
  %v871 = vunpack.c.l.b16 %v352
  %v872 = vunpack.c.l.b16 %v353
  %v873 = vunpack.c.l.b16 %v354
  %v874 = vunpack.c.l.b16 %v355
  %v875 = vunpack.c.l.b16 %v356
  %v876 = vunpack.c.l.b16 %v357
  %v877 = vunpack.c.l.b16 %v358
  %v878 = vunpack.c.l.b16 %v359
  %v879 = vunpack.c.l.b16 %v360
  %v880 = vunpack.c.l.b16 %v361
  %v881 = vunpack.c.l.b16 %v362
  %v882 = vunpack.c.l.b16 %v363
  %v883 = vunpack.c.l.b16 %v364
  %v884 = vunpack.c.l.b16 %v365
  %v885 = vunpack.c.l.b16 %v366
  %v886 = vunpack.c.l.b16 %v367
  %v887 = vunpack.c.l.b16 %v368
  %v888 = vunpack.c.l.b16 %v369
  %v889 = vunpack.c.l.b16 %v370
  %v890 = vunpack.c.l.b16 %v371
  %v891 = vunpack.c.l.b16 %v372
  %v892 = vunpack.c.l.b16 %v373
  %v893 = vunpack.c.l.b16 %v374
  %v894 = vunpack.c.l.b16 %v375
  %v895 = vunpack.c.l.b16 %v376
  %v896 = vunpack.c.l.b16 %v377
  %v897 = vunpack.c.l.b16 %v378
  %v898 = vunpack.c.l.b16 %v379
  %v899 = vunpack.c.l.b16 %v380
  %v900 = vunpack.c.l.b16 %v381
  %v901 = vpack.c.b16 %v646, %v645
  %v902 = vpack.c.b16 %v648, %v647
  %v903 = vpack.c.b16 %v650, %v649
  %v904 = vpack.c.b16 %v652, %v651
  %v905 = vpack.c.b16 %v654, %v653
  %v906 = vpack.c.b16 %v656, %v655
  %v907 = vpack.c.b16 %v658, %v657
  %v908 = vpack.c.b16 %v660, %v659
  %v909 = vpack.c.b16 %v662, %v661
  %v910 = vpack.c.b16 %v664, %v663
  %v911 = vpack.c.b16 %v666, %v665
  %v912 = vpack.c.b16 %v668, %v667
  %v913 = vpack.c.b16 %v670, %v669
  %v914 = vpack.c.b16 %v672, %v671
  %v915 = vpack.c.b16 %v674, %v673
  %v916 = vpack.c.b16 %v676, %v675
  %v917 = vpack.c.b16 %v678, %v677
  %v918 = vpack.c.b16 %v680, %v679
  %v919 = vpack.c.b16 %v682, %v681
  %v920 = vpack.c.b16 %v684, %v683
  %v921 = vpack.c.b16 %v686, %v685
  %v922 = vpack.c.b16 %v688, %v687
  %v923 = vpack.c.b16 %v690, %v689
  %v924 = vpack.c.b16 %v692, %v691
  %v925 = vpack.c.b16 %v694, %v693
  %v926 = vpack.c.b16 %v696, %v695
  %v927 = vpack.c.b16 %v698, %v697
  %v928 = vpack.c.b16 %v700, %v699
  %v929 = vpack.c.b16 %v702, %v701
  %v930 = vpack.c.b16 %v704, %v703
  %v931 = vpack.c.b16 %v706, %v705
  %v932 = vpack.c.b16 %v708, %v707
  %v933 = vpack.c.b16 %v710, %v709
  %v934 = vpack.c.b16 %v712, %v711
  %v935 = vpack.c.b16 %v714, %v713
  %v936 = vpack.c.b16 %v716, %v715
  %v937 = vpack.c.b16 %v718, %v717
  %v938 = vpack.c.b16 %v720, %v719
  %v939 = vpack.c.b16 %v722, %v721
  %v940 = vpack.c.b16 %v724, %v723
  %v941 = vpack.c.b16 %v726, %v725
  %v942 = vpack.c.b16 %v728, %v727
  %v943 = vpack.c.b16 %v730, %v729
  %v944 = vpack.c.b16 %v732, %v731
  %v945 = vpack.c.b16 %v734, %v733
  %v946 = vpack.c.b16 %v736, %v735
  %v947 = vpack.c.b16 %v738, %v737
  %v948 = vpack.c.b16 %v740, %v739
  %v949 = vpack.c.b16 %v742, %v741
  %v950 = vpack.c.b16 %v744, %v743
  %v951 = vpack.c.b16 %v746, %v745
  %v952 = vpack.c.b16 %v748, %v747
  %v953 = vpack.c.b16 %v750, %v749
  %v954 = vpack.c.b16 %v752, %v751
  %v955 = vpack.c.b16 %v754, %v753
  %v956 = vpack.c.b16 %v756, %v755
  %v957 = vpack.c.b16 %v758, %v757
  %v958 = vpack.c.b16 %v760, %v759
  %v959 = vpack.c.b16 %v762, %v761
  %v960 = vpack.c.b16 %v764, %v763
  %v961 = vpack.c.b16 %v766, %v765
  %v962 = vpack.c.b16 %v768, %v767
  %v963 = vpack.c.b16 %v770, %v769
  %v964 = vpack.c.b16 %v772, %v771
  %v965 = vpack.c.b16 %v774, %v773
  %v966 = vpack.c.b16 %v776, %v775
  %v967 = vpack.c.b16 %v778, %v777
  %v968 = vpack.c.b16 %v780, %v779
  %v969 = vpack.c.b16 %v782, %v781
  %v970 = vpack.c.b16 %v784, %v783
  %v971 = vpack.c.b16 %v786, %v785
  %v972 = vpack.c.b16 %v788, %v787
  %v973 = vpack.c.b16 %v790, %v789
  %v974 = vpack.c.b16 %v792, %v791
  %v975 = vpack.c.b16 %v794, %v793
  %v976 = vpack.c.b16 %v796, %v795
  %v977 = vpack.c.b16 %v798, %v797
  %v978 = vpack.c.b16 %v800, %v799
  %v979 = vpack.c.b16 %v802, %v801
  %v980 = vpack.c.b16 %v804, %v803
  %v981 = vpack.c.b16 %v806, %v805
  %v982 = vpack.c.b16 %v808, %v807
  %v983 = vpack.c.b16 %v810, %v809
  %v984 = vpack.c.b16 %v812, %v811
  %v985 = vpack.c.b16 %v814, %v813
  %v986 = vpack.c.b16 %v816, %v815
  %v987 = vpack.c.b16 %v818, %v817
  %v988 = vpack.c.b16 %v820, %v819
  %v989 = vpack.c.b16 %v822, %v821
  %v990 = vpack.c.b16 %v824, %v823
  %v991 = vpack.c.b16 %v826, %v825
  %v992 = vpack.c.b16 %v828, %v827
  %v993 = vpack.c.b16 %v830, %v829
  %v994 = vpack.c.b16 %v832, %v831
  %v995 = vpack.c.b16 %v834, %v833
  %v996 = vpack.c.b16 %v836, %v835
  %v997 = vpack.c.b16 %v838, %v837
  %v998 = vpack.c.b16 %v840, %v839
  %v999 = vpack.c.b16 %v842, %v841
  %v1000 = vpack.c.b16 %v844, %v843
  %v1001 = vpack.c.b16 %v846, %v845
  %v1002 = vpack.c.b16 %v848, %v847
  %v1003 = vpack.c.b16 %v850, %v849
  %v1004 = vpack.c.b16 %v852, %v851
  %v1005 = vpack.c.b16 %v854, %v853
  %v1006 = vpack.c.b16 %v856, %v855
  %v1007 = vpack.c.b16 %v858, %v857
  %v1008 = vpack.c.b16 %v860, %v859
  %v1009 = vpack.c.b16 %v862, %v861
  %v1010 = vpack.c.b16 %v864, %v863
  %v1011 = vpack.c.b16 %v866, %v865
  %v1012 = vpack.c.b16 %v868, %v867
  %v1013 = vpack.c.b16 %v870, %v869
  %v1014 = vpack.c.b16 %v872, %v871
  %v1015 = vpack.c.b16 %v874, %v873
  %v1016 = vpack.c.b16 %v876, %v875
  %v1017 = vpack.c.b16 %v878, %v877
  %v1018 = vpack.c.b16 %v880, %v879
  %v1019 = vpack.c.b16 %v882, %v881
  %v1020 = vpack.c.b16 %v884, %v883
  %v1021 = vpack.c.b16 %v886, %v885
  %v1022 = vpack.c.b16 %v888, %v887
  %v1023 = vpack.c.b16 %v890, %v889
  %v1024 = vpack.c.b16 %v892, %v891
  %v1025 = vpack.c.b16 %v894, %v893
  %v1026 = vpack.c.b16 %v896, %v895
  %v1027 = vpack.c.b16 %v898, %v897
  %v1028 = vpack.c.b16 %v900, %v899
  %1157 = vmatprep.subr.bf16.mxu0 0
  %1158 = vmatpush1.bf16.msra.mxu0 %v901
  %1159 = vmatprep.subr.bf16.mxu0 0
  %1160 = vmatpush1.bf16.msra.mxu0 %v902
  %1161 = vmatprep.subr.bf16.mxu0 0
  %1162 = vmatpush1.bf16.msra.mxu0 %v903
  %1163 = vmatprep.subr.bf16.mxu0 0
  %1164 = vmatpush1.bf16.msra.mxu0 %v904
  %1165 = vmatprep.subr.bf16.mxu0 0
  %1166 = vmatpush1.bf16.msra.mxu0 %v905
  %1167 = vmatprep.subr.bf16.mxu0 0
  %1168 = vmatpush1.bf16.msra.mxu0 %v906
  %1169 = vmatprep.subr.bf16.mxu0 0
  %1170 = vmatpush1.bf16.msra.mxu0 %v907
  %1171 = vmatprep.subr.bf16.mxu0 0
  %1172 = vmatpush1.bf16.msra.mxu0 %v908
  %1173 = vmatprep.subr.bf16.mxu0 0
  %1174 = vmatpush1.bf16.msra.mxu0 %v909
  %1175 = vmatprep.subr.bf16.mxu0 0
  %1176 = vmatpush1.bf16.msra.mxu0 %v910
  %1177 = vmatprep.subr.bf16.mxu0 0
  %1178 = vmatpush1.bf16.msra.mxu0 %v911
  %1179 = vmatprep.subr.bf16.mxu0 0
  %1180 = vmatpush1.bf16.msra.mxu0 %v912
  %1181 = vmatprep.subr.bf16.mxu0 0
  %1182 = vmatpush1.bf16.msra.mxu0 %v913
  %1183 = vmatprep.subr.bf16.mxu0 0
  %1184 = vmatpush1.bf16.msra.mxu0 %v914
  %1185 = vmatprep.subr.bf16.mxu0 0
  %1186 = vmatpush1.bf16.msra.mxu0 %v915
  %1187 = vmatprep.subr.bf16.mxu0 0
  %1188 = vmatpush1.bf16.msra.mxu0 %v916
  %1189 = vmatprep.mubr.bf16.mxu0 %v111
  %1190 = vmatmul.mubr.bf16.gmra.mrb[0].mxu0 %v110
  %v1191 = vpop.f32.mrb[0].mxu0
  %v1192 = vadd.f32 %v387, %v1191
  %v1193 = vpop.f32.mrb[0].mxu0
  %v1194 = vpop.f32.mrb[0].mxu0
  %v1195 = vpop.f32.mrb[0].mxu0
  %1196 = vdwg.mxu0
  %1197 = vmatprep.subr.bf16.mxu0 0
  %1198 = vmatpush1.bf16.msra.mxu0 %v917
  %1199 = vmatprep.subr.bf16.mxu0 0
  %1200 = vmatpush1.bf16.msra.mxu0 %v918
  %1201 = vmatprep.subr.bf16.mxu0 0
  %1202 = vmatpush1.bf16.msra.mxu0 %v919
  %1203 = vmatprep.subr.bf16.mxu0 0
  %1204 = vmatpush1.bf16.msra.mxu0 %v920
  %1205 = vmatprep.subr.bf16.mxu0 0
  %1206 = vmatpush1.bf16.msra.mxu0 %v921
  %1207 = vmatprep.subr.bf16.mxu0 0
  %1208 = vmatpush1.bf16.msra.mxu0 %v922
  %1209 = vmatprep.subr.bf16.mxu0 0
  %1210 = vmatpush1.bf16.msra.mxu0 %v923
  %1211 = vmatprep.subr.bf16.mxu0 0
  %1212 = vmatpush1.bf16.msra.mxu0 %v924
  %1213 = vmatprep.subr.bf16.mxu0 0
  %1214 = vmatpush1.bf16.msra.mxu0 %v925
  %1215 = vmatprep.subr.bf16.mxu0 0
  %1216 = vmatpush1.bf16.msra.mxu0 %v926
  %1217 = vmatprep.subr.bf16.mxu0 0
  %1218 = vmatpush1.bf16.msra.mxu0 %v927
  %1219 = vmatprep.subr.bf16.mxu0 0
  %1220 = vmatpush1.bf16.msra.mxu0 %v928
  %1221 = vmatprep.subr.bf16.mxu0 0
  %1222 = vmatpush1.bf16.msra.mxu0 %v929
  %1223 = vmatprep.subr.bf16.mxu0 0
  %1224 = vmatpush1.bf16.msra.mxu0 %v930
  %1225 = vmatprep.subr.bf16.mxu0 0
  %1226 = vmatpush1.bf16.msra.mxu0 %v931
  %1227 = vmatprep.subr.bf16.mxu0 0
  %1228 = vmatpush1.bf16.msra.mxu0 %v932
  %1229 = vmatprep.mubr.bf16.mxu0 %v113
  %1230 = vmatmul.mubr.bf16.gmra.mrb[0].mxu0 %v112
  %v1231 = vpop.f32.mrb[0].mxu0
  %v1232 = vadd.f32 %v1192, %v1231
  %v1233 = vpop.f32.mrb[0].mxu0
  %v1234 = vpop.f32.mrb[0].mxu0
  %v1235 = vpop.f32.mrb[0].mxu0
  %1236 = vdwg.mxu0
  %1237 = vmatprep.subr.bf16.mxu0 0
  %1238 = vmatpush1.bf16.msra.mxu0 %v933
  %1239 = vmatprep.subr.bf16.mxu0 0
  %1240 = vmatpush1.bf16.msra.mxu0 %v934
  %1241 = vmatprep.subr.bf16.mxu0 0
  %1242 = vmatpush1.bf16.msra.mxu0 %v935
  %1243 = vmatprep.subr.bf16.mxu0 0
  %1244 = vmatpush1.bf16.msra.mxu0 %v936
  %1245 = vmatprep.subr.bf16.mxu0 0
  %1246 = vmatpush1.bf16.msra.mxu0 %v937
  %1247 = vmatprep.subr.bf16.mxu0 0
  %1248 = vmatpush1.bf16.msra.mxu0 %v938
  %1249 = vmatprep.subr.bf16.mxu0 0
  %1250 = vmatpush1.bf16.msra.mxu0 %v939
  %1251 = vmatprep.subr.bf16.mxu0 0
  %1252 = vmatpush1.bf16.msra.mxu0 %v940
  %1253 = vmatprep.subr.bf16.mxu0 0
  %1254 = vmatpush1.bf16.msra.mxu0 %v941
  %1255 = vmatprep.subr.bf16.mxu0 0
  %1256 = vmatpush1.bf16.msra.mxu0 %v942
  %1257 = vmatprep.subr.bf16.mxu0 0
  %1258 = vmatpush1.bf16.msra.mxu0 %v943
  %1259 = vmatprep.subr.bf16.mxu0 0
  %1260 = vmatpush1.bf16.msra.mxu0 %v944
  %1261 = vmatprep.subr.bf16.mxu0 0
  %1262 = vmatpush1.bf16.msra.mxu0 %v945
  %1263 = vmatprep.subr.bf16.mxu0 0
  %1264 = vmatpush1.bf16.msra.mxu0 %v946
  %1265 = vmatprep.subr.bf16.mxu0 0
  %1266 = vmatpush1.bf16.msra.mxu0 %v947
  %1267 = vmatprep.subr.bf16.mxu0 0
  %1268 = vmatpush1.bf16.msra.mxu0 %v948
  %1269 = vmatprep.mubr.bf16.mxu0 %v115
  %1270 = vmatmul.mubr.bf16.gmra.mrb[0].mxu0 %v114
  %v1271 = vpop.f32.mrb[0].mxu0
  %v1272 = vadd.f32 %v1232, %v1271
  %v1273 = vpop.f32.mrb[0].mxu0
  %v1274 = vpop.f32.mrb[0].mxu0
  %v1275 = vpop.f32.mrb[0].mxu0
  %1276 = vdwg.mxu0
  %1277 = vmatprep.subr.bf16.mxu0 0
  %1278 = vmatpush1.bf16.msra.mxu0 %v949
  %1279 = vmatprep.subr.bf16.mxu0 0
  %1280 = vmatpush1.bf16.msra.mxu0 %v950
  %1281 = vmatprep.subr.bf16.mxu0 0
  %1282 = vmatpush1.bf16.msra.mxu0 %v951
  %1283 = vmatprep.subr.bf16.mxu0 0
  %1284 = vmatpush1.bf16.msra.mxu0 %v952
  %1285 = vmatprep.subr.bf16.mxu0 0
  %1286 = vmatpush1.bf16.msra.mxu0 %v953
  %1287 = vmatprep.subr.bf16.mxu0 0
  %1288 = vmatpush1.bf16.msra.mxu0 %v954
  %1289 = vmatprep.subr.bf16.mxu0 0
  %1290 = vmatpush1.bf16.msra.mxu0 %v955
  %1291 = vmatprep.subr.bf16.mxu0 0
  %1292 = vmatpush1.bf16.msra.mxu0 %v956
  %1293 = vmatprep.subr.bf16.mxu0 0
  %1294 = vmatpush1.bf16.msra.mxu0 %v957
  %1295 = vmatprep.subr.bf16.mxu0 0
  %1296 = vmatpush1.bf16.msra.mxu0 %v958
  %1297 = vmatprep.subr.bf16.mxu0 0
  %1298 = vmatpush1.bf16.msra.mxu0 %v959
  %1299 = vmatprep.subr.bf16.mxu0 0
  %1300 = vmatpush1.bf16.msra.mxu0 %v960
  %1301 = vmatprep.subr.bf16.mxu0 0
  %1302 = vmatpush1.bf16.msra.mxu0 %v961
  %1303 = vmatprep.subr.bf16.mxu0 0
  %1304 = vmatpush1.bf16.msra.mxu0 %v962
  %1305 = vmatprep.subr.bf16.mxu0 0
  %1306 = vmatpush1.bf16.msra.mxu0 %v963
  %1307 = vmatprep.subr.bf16.mxu0 0
  %1308 = vmatpush1.bf16.msra.mxu0 %v964
  %1309 = vmatprep.mubr.bf16.mxu0 %v117
  %1310 = vmatmul.mubr.bf16.gmra.mrb[0].mxu0 %v116
  %v1311 = vpop.f32.mrb[0].mxu0
  %v1312 = vadd.f32 %v1272, %v1311
  %v1313 = vpop.f32.mrb[0].mxu0
  %v1314 = vpop.f32.mrb[0].mxu0
  %v1315 = vpop.f32.mrb[0].mxu0
  %1316 = vdwg.mxu0
  %1317 = vmatprep.subr.bf16.mxu0 0
  %1318 = vmatpush1.bf16.msra.mxu0 %v965
  %1319 = vmatprep.subr.bf16.mxu0 0
  %1320 = vmatpush1.bf16.msra.mxu0 %v966
  %1321 = vmatprep.subr.bf16.mxu0 0
  %1322 = vmatpush1.bf16.msra.mxu0 %v967
  %1323 = vmatprep.subr.bf16.mxu0 0
  %1324 = vmatpush1.bf16.msra.mxu0 %v968
  %1325 = vmatprep.subr.bf16.mxu0 0
  %1326 = vmatpush1.bf16.msra.mxu0 %v969
  %1327 = vmatprep.subr.bf16.mxu0 0
  %1328 = vmatpush1.bf16.msra.mxu0 %v970
  %1329 = vmatprep.subr.bf16.mxu0 0
  %1330 = vmatpush1.bf16.msra.mxu0 %v971
  %1331 = vmatprep.subr.bf16.mxu0 0
  %1332 = vmatpush1.bf16.msra.mxu0 %v972
  %1333 = vmatprep.subr.bf16.mxu0 0
  %1334 = vmatpush1.bf16.msra.mxu0 %v973
  %1335 = vmatprep.subr.bf16.mxu0 0
  %1336 = vmatpush1.bf16.msra.mxu0 %v974
  %1337 = vmatprep.subr.bf16.mxu0 0
  %1338 = vmatpush1.bf16.msra.mxu0 %v975
  %1339 = vmatprep.subr.bf16.mxu0 0
  %1340 = vmatpush1.bf16.msra.mxu0 %v976
  %1341 = vmatprep.subr.bf16.mxu0 0
  %1342 = vmatpush1.bf16.msra.mxu0 %v977
  %1343 = vmatprep.subr.bf16.mxu0 0
  %1344 = vmatpush1.bf16.msra.mxu0 %v978
  %1345 = vmatprep.subr.bf16.mxu0 0
  %1346 = vmatpush1.bf16.msra.mxu0 %v979
  %1347 = vmatprep.subr.bf16.mxu0 0
  %1348 = vmatpush1.bf16.msra.mxu0 %v980
  %1349 = vmatprep.mubr.bf16.mxu0 %v119
  %1350 = vmatmul.mubr.bf16.gmra.mrb[0].mxu0 %v118
  %v1351 = vpop.f32.mrb[0].mxu0
  %v1352 = vadd.f32 %v1312, %v1351
  %v1353 = vpop.f32.mrb[0].mxu0
  %v1354 = vpop.f32.mrb[0].mxu0
  %v1355 = vpop.f32.mrb[0].mxu0
  %1356 = vdwg.mxu0
  %1357 = vmatprep.subr.bf16.mxu0 0
  %1358 = vmatpush1.bf16.msra.mxu0 %v981
  %1359 = vmatprep.subr.bf16.mxu0 0
  %1360 = vmatpush1.bf16.msra.mxu0 %v982
  %1361 = vmatprep.subr.bf16.mxu0 0
  %1362 = vmatpush1.bf16.msra.mxu0 %v983
  %1363 = vmatprep.subr.bf16.mxu0 0
  %1364 = vmatpush1.bf16.msra.mxu0 %v984
  %1365 = vmatprep.subr.bf16.mxu0 0
  %1366 = vmatpush1.bf16.msra.mxu0 %v985
  %1367 = vmatprep.subr.bf16.mxu0 0
  %1368 = vmatpush1.bf16.msra.mxu0 %v986
  %1369 = vmatprep.subr.bf16.mxu0 0
  %1370 = vmatpush1.bf16.msra.mxu0 %v987
  %1371 = vmatprep.subr.bf16.mxu0 0
  %1372 = vmatpush1.bf16.msra.mxu0 %v988
  %1373 = vmatprep.subr.bf16.mxu0 0
  %1374 = vmatpush1.bf16.msra.mxu0 %v989
  %1375 = vmatprep.subr.bf16.mxu0 0
  %1376 = vmatpush1.bf16.msra.mxu0 %v990
  %1377 = vmatprep.subr.bf16.mxu0 0
  %1378 = vmatpush1.bf16.msra.mxu0 %v991
  %1379 = vmatprep.subr.bf16.mxu0 0
  %1380 = vmatpush1.bf16.msra.mxu0 %v992
  %1381 = vmatprep.subr.bf16.mxu0 0
  %1382 = vmatpush1.bf16.msra.mxu0 %v993
  %1383 = vmatprep.subr.bf16.mxu0 0
  %1384 = vmatpush1.bf16.msra.mxu0 %v994
  %1385 = vmatprep.subr.bf16.mxu0 0
  %1386 = vmatpush1.bf16.msra.mxu0 %v995
  %1387 = vmatprep.subr.bf16.mxu0 0
  %1388 = vmatpush1.bf16.msra.mxu0 %v996
  %1389 = vmatprep.mubr.bf16.mxu0 %v121
  %1390 = vmatmul.mubr.bf16.gmra.mrb[0].mxu0 %v120
  %v1391 = vpop.f32.mrb[0].mxu0
  %v1392 = vadd.f32 %v1352, %v1391
  %v1393 = vpop.f32.mrb[0].mxu0
  %v1394 = vpop.f32.mrb[0].mxu0
  %v1395 = vpop.f32.mrb[0].mxu0
  %1396 = vdwg.mxu0
  %1397 = vmatprep.subr.bf16.mxu0 0
  %1398 = vmatpush1.bf16.msra.mxu0 %v997
  %1399 = vmatprep.subr.bf16.mxu0 0
  %1400 = vmatpush1.bf16.msra.mxu0 %v998
  %1401 = vmatprep.subr.bf16.mxu0 0
  %1402 = vmatpush1.bf16.msra.mxu0 %v999
  %1403 = vmatprep.subr.bf16.mxu0 0
  %1404 = vmatpush1.bf16.msra.mxu0 %v1000
  %1405 = vmatprep.subr.bf16.mxu0 0
  %1406 = vmatpush1.bf16.msra.mxu0 %v1001
  %1407 = vmatprep.subr.bf16.mxu0 0
  %1408 = vmatpush1.bf16.msra.mxu0 %v1002
  %1409 = vmatprep.subr.bf16.mxu0 0
  %1410 = vmatpush1.bf16.msra.mxu0 %v1003
  %1411 = vmatprep.subr.bf16.mxu0 0
  %1412 = vmatpush1.bf16.msra.mxu0 %v1004
  %1413 = vmatprep.subr.bf16.mxu0 0
  %1414 = vmatpush1.bf16.msra.mxu0 %v1005
  %1415 = vmatprep.subr.bf16.mxu0 0
  %1416 = vmatpush1.bf16.msra.mxu0 %v1006
  %1417 = vmatprep.subr.bf16.mxu0 0
  %1418 = vmatpush1.bf16.msra.mxu0 %v1007
  %1419 = vmatprep.subr.bf16.mxu0 0
  %1420 = vmatpush1.bf16.msra.mxu0 %v1008
  %1421 = vmatprep.subr.bf16.mxu0 0
  %1422 = vmatpush1.bf16.msra.mxu0 %v1009
  %1423 = vmatprep.subr.bf16.mxu0 0
  %1424 = vmatpush1.bf16.msra.mxu0 %v1010
  %1425 = vmatprep.subr.bf16.mxu0 0
  %1426 = vmatpush1.bf16.msra.mxu0 %v1011
  %1427 = vmatprep.subr.bf16.mxu0 0
  %1428 = vmatpush1.bf16.msra.mxu0 %v1012
  %1429 = vmatprep.mubr.bf16.mxu0 %v123
  %1430 = vmatmul.mubr.bf16.gmra.mrb[0].mxu0 %v122
  %v1431 = vpop.f32.mrb[0].mxu0
  %v1432 = vadd.f32 %v1392, %v1431
  %v1433 = vpop.f32.mrb[0].mxu0
  %v1434 = vpop.f32.mrb[0].mxu0
  %v1435 = vpop.f32.mrb[0].mxu0
  %1436 = vdwg.mxu0
  %1437 = vmatprep.subr.bf16.mxu0 0
  %1438 = vmatpush1.bf16.msra.mxu0 %v1013
  %1439 = vmatprep.subr.bf16.mxu0 0
  %1440 = vmatpush1.bf16.msra.mxu0 %v1014
  %1441 = vmatprep.subr.bf16.mxu0 0
  %1442 = vmatpush1.bf16.msra.mxu0 %v1015
  %1443 = vmatprep.subr.bf16.mxu0 0
  %1444 = vmatpush1.bf16.msra.mxu0 %v1016
  %1445 = vmatprep.subr.bf16.mxu0 0
  %1446 = vmatpush1.bf16.msra.mxu0 %v1017
  %1447 = vmatprep.subr.bf16.mxu0 0
  %1448 = vmatpush1.bf16.msra.mxu0 %v1018
  %1449 = vmatprep.subr.bf16.mxu0 0
  %1450 = vmatpush1.bf16.msra.mxu0 %v1019
  %1451 = vmatprep.subr.bf16.mxu0 0
  %1452 = vmatpush1.bf16.msra.mxu0 %v1020
  %1453 = vmatprep.subr.bf16.mxu0 0
  %1454 = vmatpush1.bf16.msra.mxu0 %v1021
  %1455 = vmatprep.subr.bf16.mxu0 0
  %1456 = vmatpush1.bf16.msra.mxu0 %v1022
  %1457 = vmatprep.subr.bf16.mxu0 0
  %1458 = vmatpush1.bf16.msra.mxu0 %v1023
  %1459 = vmatprep.subr.bf16.mxu0 0
  %1460 = vmatpush1.bf16.msra.mxu0 %v1024
  %1461 = vmatprep.subr.bf16.mxu0 0
  %1462 = vmatpush1.bf16.msra.mxu0 %v1025
  %1463 = vmatprep.subr.bf16.mxu0 0
  %1464 = vmatpush1.bf16.msra.mxu0 %v1026
  %1465 = vmatprep.subr.bf16.mxu0 0
  %1466 = vmatpush1.bf16.msra.mxu0 %v1027
  %1467 = vmatprep.subr.bf16.mxu0 0
  %1468 = vmatpush1.bf16.msra.mxu0 %v1028
  %1469 = vmatprep.mubr.bf16.mxu0 %v125
  %1470 = vmatmul.mubr.bf16.gmra.mrb[0].mxu0 %v124
  %v1471 = vpop.f32.mrb[0].mxu0
  %v1472 = vadd.f32 %v1432, %v1471
  %v1473 = vpop.f32.mrb[0].mxu0
  %v1474 = vpop.f32.mrb[0].mxu0
  %v1475 = vpop.f32.mrb[0].mxu0
  %1476 = vdwg.mxu0
  %v1477 = vpack.c.bf16 %v1472, %v1472
  %v1478 = vld [vmem:[%s3] sm:$0xff]
  %v1479 = vld [vmem:[%s3 + $0x8] sm:$0xff]
  %v1480 = vld [vmem:[%s3 + $0x10] sm:$0xff]
  %v1481 = vld [vmem:[%s3 + $0x18] sm:$0xff]
  %v1482 = vld [vmem:[%s3 + $0x20] sm:$0xff]
  %v1483 = vld [vmem:[%s3 + $0x28] sm:$0xff]
  %v1484 = vld [vmem:[%s3 + $0x30] sm:$0xff]
  %v1485 = vld [vmem:[%s3 + $0x38] sm:$0xff]
  %v1486 = vld [vmem:[%s3 + $0x40] sm:$0xff]
  %v1487 = vld [vmem:[%s3 + $0x48] sm:$0xff]
  %v1488 = vld [vmem:[%s3 + $0x50] sm:$0xff]
  %v1489 = vld [vmem:[%s3 + $0x58] sm:$0xff]
  %v1490 = vld [vmem:[%s3 + $0x60] sm:$0xff]
  %v1491 = vld [vmem:[%s3 + $0x68] sm:$0xff]
  %v1492 = vld [vmem:[%s3 + $0x70] sm:$0xff]
  %v1493 = vld [vmem:[%s3 + $0x78] sm:$0xff]
  %v1494 = vld [vmem:[%s3 + $0x80] sm:$0xff]
  %v1495 = vld [vmem:[%s3 + $0x88] sm:$0xff]
  %v1496 = vld [vmem:[%s3 + $0x90] sm:$0xff]
  %v1497 = vld [vmem:[%s3 + $0x98] sm:$0xff]
  %v1498 = vld [vmem:[%s3 + $0xa0] sm:$0xff]
  %v1499 = vld [vmem:[%s3 + $0xa8] sm:$0xff]
  %v1500 = vld [vmem:[%s3 + $0xb0] sm:$0xff]
  %v1501 = vld [vmem:[%s3 + $0xb8] sm:$0xff]
  %v1502 = vld [vmem:[%s3 + $0xc0] sm:$0xff]
  %v1503 = vld [vmem:[%s3 + $0xc8] sm:$0xff]
  %v1504 = vld [vmem:[%s3 + $0xd0] sm:$0xff]
  %v1505 = vld [vmem:[%s3 + $0xd8] sm:$0xff]
  %v1506 = vld [vmem:[%s3 + $0xe0] sm:$0xff]
  %v1507 = vld [vmem:[%s3 + $0xe8] sm:$0xff]
  %v1508 = vld [vmem:[%s3 + $0xf0] sm:$0xff]
  %v1509 = vld [vmem:[%s3 + $0xf8] sm:$0xff]
  %v1510 = vld [vmem:[%s3 + $0x100] sm:$0xff]
  %v1511 = vld [vmem:[%s3 + $0x108] sm:$0xff]
  %v1512 = vld [vmem:[%s3 + $0x110] sm:$0xff]
  %v1513 = vld [vmem:[%s3 + $0x118] sm:$0xff]
  %v1514 = vld [vmem:[%s3 + $0x120] sm:$0xff]
  %v1515 = vld [vmem:[%s3 + $0x128] sm:$0xff]
  %v1516 = vld [vmem:[%s3 + $0x130] sm:$0xff]
  %v1517 = vld [vmem:[%s3 + $0x138] sm:$0xff]
  %v1518 = vld [vmem:[%s3 + $0x140] sm:$0xff]
  %v1519 = vld [vmem:[%s3 + $0x148] sm:$0xff]
  %v1520 = vld [vmem:[%s3 + $0x150] sm:$0xff]
  %v1521 = vld [vmem:[%s3 + $0x158] sm:$0xff]
  %v1522 = vld [vmem:[%s3 + $0x160] sm:$0xff]
  %v1523 = vld [vmem:[%s3 + $0x168] sm:$0xff]
  %v1524 = vld [vmem:[%s3 + $0x170] sm:$0xff]
  %v1525 = vld [vmem:[%s3 + $0x178] sm:$0xff]
  %v1526 = vld [vmem:[%s3 + $0x180] sm:$0xff]
  %v1527 = vld [vmem:[%s3 + $0x188] sm:$0xff]
  %v1528 = vld [vmem:[%s3 + $0x190] sm:$0xff]
  %v1529 = vld [vmem:[%s3 + $0x198] sm:$0xff]
  %v1530 = vld [vmem:[%s3 + $0x1a0] sm:$0xff]
  %v1531 = vld [vmem:[%s3 + $0x1a8] sm:$0xff]
  %v1532 = vld [vmem:[%s3 + $0x1b0] sm:$0xff]
  %v1533 = vld [vmem:[%s3 + $0x1b8] sm:$0xff]
  %v1534 = vld [vmem:[%s3 + $0x1c0] sm:$0xff]
  %v1535 = vld [vmem:[%s3 + $0x1c8] sm:$0xff]
  %v1536 = vld [vmem:[%s3 + $0x1d0] sm:$0xff]
  %v1537 = vld [vmem:[%s3 + $0x1d8] sm:$0xff]
  %v1538 = vld [vmem:[%s3 + $0x1e0] sm:$0xff]
  %v1539 = vld [vmem:[%s3 + $0x1e8] sm:$0xff]
  %v1540 = vld [vmem:[%s3 + $0x1f0] sm:$0xff]
  %v1541 = vld [vmem:[%s3 + $0x1f8] sm:$0xff]
  %v1606 = vunpack.c.l.b16 %v1478
  %v1607 = vunpack.c.h.b16 %v1478
  %v1608 = vunpack.c.l.b16 %v1479
  %v1609 = vunpack.c.h.b16 %v1479
  %v1610 = vunpack.c.l.b16 %v1480
  %v1611 = vunpack.c.h.b16 %v1480
  %v1612 = vunpack.c.l.b16 %v1481
  %v1613 = vunpack.c.h.b16 %v1481
  %v1614 = vunpack.c.l.b16 %v1482
  %v1615 = vunpack.c.h.b16 %v1482
  %v1616 = vunpack.c.l.b16 %v1483
  %v1617 = vunpack.c.h.b16 %v1483
  %v1618 = vunpack.c.l.b16 %v1484
  %v1619 = vunpack.c.h.b16 %v1484
  %v1620 = vunpack.c.l.b16 %v1485
  %v1621 = vunpack.c.h.b16 %v1485
  %v1622 = vunpack.c.l.b16 %v1486
  %v1623 = vunpack.c.h.b16 %v1486
  %v1624 = vunpack.c.l.b16 %v1487
  %v1625 = vunpack.c.h.b16 %v1487
  %v1626 = vunpack.c.l.b16 %v1488
  %v1627 = vunpack.c.h.b16 %v1488
  %v1628 = vunpack.c.l.b16 %v1489
  %v1629 = vunpack.c.h.b16 %v1489
  %v1630 = vunpack.c.l.b16 %v1490
  %v1631 = vunpack.c.h.b16 %v1490
  %v1632 = vunpack.c.l.b16 %v1491
  %v1633 = vunpack.c.h.b16 %v1491
  %v1634 = vunpack.c.l.b16 %v1492
  %v1635 = vunpack.c.h.b16 %v1492
  %v1636 = vunpack.c.l.b16 %v1493
  %v1637 = vunpack.c.h.b16 %v1493
  %v1638 = vunpack.c.l.b16 %v1494
  %v1639 = vunpack.c.h.b16 %v1494
  %v1640 = vunpack.c.l.b16 %v1495
  %v1641 = vunpack.c.h.b16 %v1495
  %v1642 = vunpack.c.l.b16 %v1496
  %v1643 = vunpack.c.h.b16 %v1496
  %v1644 = vunpack.c.l.b16 %v1497
  %v1645 = vunpack.c.h.b16 %v1497
  %v1646 = vunpack.c.l.b16 %v1498
  %v1647 = vunpack.c.h.b16 %v1498
  %v1648 = vunpack.c.l.b16 %v1499
  %v1649 = vunpack.c.h.b16 %v1499
  %v1650 = vunpack.c.l.b16 %v1500
  %v1651 = vunpack.c.h.b16 %v1500
  %v1652 = vunpack.c.l.b16 %v1501
  %v1653 = vunpack.c.h.b16 %v1501
  %v1654 = vunpack.c.l.b16 %v1502
  %v1655 = vunpack.c.h.b16 %v1502
  %v1656 = vunpack.c.l.b16 %v1503
  %v1657 = vunpack.c.h.b16 %v1503
  %v1658 = vunpack.c.l.b16 %v1504
  %v1659 = vunpack.c.h.b16 %v1504
  %v1660 = vunpack.c.l.b16 %v1505
  %v1661 = vunpack.c.h.b16 %v1505
  %v1662 = vunpack.c.l.b16 %v1506
  %v1663 = vunpack.c.h.b16 %v1506
  %v1664 = vunpack.c.l.b16 %v1507
  %v1665 = vunpack.c.h.b16 %v1507
  %v1666 = vunpack.c.l.b16 %v1508
  %v1667 = vunpack.c.h.b16 %v1508
  %v1668 = vunpack.c.l.b16 %v1509
  %v1669 = vunpack.c.h.b16 %v1509
  %v1670 = vunpack.c.l.b16 %v1510
  %v1671 = vunpack.c.h.b16 %v1510
  %v1672 = vunpack.c.l.b16 %v1511
  %v1673 = vunpack.c.h.b16 %v1511
  %v1674 = vunpack.c.l.b16 %v1512
  %v1675 = vunpack.c.h.b16 %v1512
  %v1676 = vunpack.c.l.b16 %v1513
  %v1677 = vunpack.c.h.b16 %v1513
  %v1678 = vunpack.c.l.b16 %v1514
  %v1679 = vunpack.c.h.b16 %v1514
  %v1680 = vunpack.c.l.b16 %v1515
  %v1681 = vunpack.c.h.b16 %v1515
  %v1682 = vunpack.c.l.b16 %v1516
  %v1683 = vunpack.c.h.b16 %v1516
  %v1684 = vunpack.c.l.b16 %v1517
  %v1685 = vunpack.c.h.b16 %v1517
  %v1686 = vunpack.c.l.b16 %v1518
  %v1687 = vunpack.c.h.b16 %v1518
  %v1688 = vunpack.c.l.b16 %v1519
  %v1689 = vunpack.c.h.b16 %v1519
  %v1690 = vunpack.c.l.b16 %v1520
  %v1691 = vunpack.c.h.b16 %v1520
  %v1692 = vunpack.c.l.b16 %v1521
  %v1693 = vunpack.c.h.b16 %v1521
  %v1694 = vunpack.c.l.b16 %v1522
  %v1695 = vunpack.c.h.b16 %v1522
  %v1696 = vunpack.c.l.b16 %v1523
  %v1697 = vunpack.c.h.b16 %v1523
  %v1698 = vunpack.c.l.b16 %v1524
  %v1699 = vunpack.c.h.b16 %v1524
  %v1700 = vunpack.c.l.b16 %v1525
  %v1701 = vunpack.c.h.b16 %v1525
  %v1702 = vunpack.c.l.b16 %v1526
  %v1703 = vunpack.c.h.b16 %v1526
  %v1704 = vunpack.c.l.b16 %v1527
  %v1705 = vunpack.c.h.b16 %v1527
  %v1706 = vunpack.c.l.b16 %v1528
  %v1707 = vunpack.c.h.b16 %v1528
  %v1708 = vunpack.c.l.b16 %v1529
  %v1709 = vunpack.c.h.b16 %v1529
  %v1710 = vunpack.c.l.b16 %v1530
  %v1711 = vunpack.c.h.b16 %v1530
  %v1712 = vunpack.c.l.b16 %v1531
  %v1713 = vunpack.c.h.b16 %v1531
  %v1714 = vunpack.c.l.b16 %v1532
  %v1715 = vunpack.c.h.b16 %v1532
  %v1716 = vunpack.c.l.b16 %v1533
  %v1717 = vunpack.c.h.b16 %v1533
  %v1718 = vunpack.c.l.b16 %v1534
  %v1719 = vunpack.c.h.b16 %v1534
  %v1720 = vunpack.c.l.b16 %v1535
  %v1721 = vunpack.c.h.b16 %v1535
  %v1722 = vunpack.c.l.b16 %v1536
  %v1723 = vunpack.c.h.b16 %v1536
  %v1724 = vunpack.c.l.b16 %v1537
  %v1725 = vunpack.c.h.b16 %v1537
  %v1726 = vunpack.c.l.b16 %v1538
  %v1727 = vunpack.c.h.b16 %v1538
  %v1728 = vunpack.c.l.b16 %v1539
  %v1729 = vunpack.c.h.b16 %v1539
  %v1730 = vunpack.c.l.b16 %v1540
  %v1731 = vunpack.c.h.b16 %v1540
  %v1732 = vunpack.c.l.b16 %v1541
  %v1733 = vunpack.c.h.b16 %v1541
  %v1734 = vpack.c.b16 %v1614, %v1606
  %v1735 = vpack.c.b16 %v1615, %v1607
  %v1736 = vpack.c.b16 %v1616, %v1608
  %v1737 = vpack.c.b16 %v1617, %v1609
  %v1738 = vpack.c.b16 %v1618, %v1610
  %v1739 = vpack.c.b16 %v1619, %v1611
  %v1740 = vpack.c.b16 %v1620, %v1612
  %v1741 = vpack.c.b16 %v1621, %v1613
  %v1742 = vpack.c.b16 %v1630, %v1622
  %v1743 = vpack.c.b16 %v1631, %v1623
  %v1744 = vpack.c.b16 %v1632, %v1624
  %v1745 = vpack.c.b16 %v1633, %v1625
  %v1746 = vpack.c.b16 %v1634, %v1626
  %v1747 = vpack.c.b16 %v1635, %v1627
  %v1748 = vpack.c.b16 %v1636, %v1628
  %v1749 = vpack.c.b16 %v1637, %v1629
  %v1750 = vpack.c.b16 %v1646, %v1638
  %v1751 = vpack.c.b16 %v1647, %v1639
  %v1752 = vpack.c.b16 %v1648, %v1640
  %v1753 = vpack.c.b16 %v1649, %v1641
  %v1754 = vpack.c.b16 %v1650, %v1642
  %v1755 = vpack.c.b16 %v1651, %v1643
  %v1756 = vpack.c.b16 %v1652, %v1644
  %v1757 = vpack.c.b16 %v1653, %v1645
  %v1758 = vpack.c.b16 %v1662, %v1654
  %v1759 = vpack.c.b16 %v1663, %v1655
  %v1760 = vpack.c.b16 %v1664, %v1656
  %v1761 = vpack.c.b16 %v1665, %v1657
  %v1762 = vpack.c.b16 %v1666, %v1658
  %v1763 = vpack.c.b16 %v1667, %v1659
  %v1764 = vpack.c.b16 %v1668, %v1660
  %v1765 = vpack.c.b16 %v1669, %v1661
  %v1766 = vpack.c.b16 %v1678, %v1670
  %v1767 = vpack.c.b16 %v1679, %v1671
  %v1768 = vpack.c.b16 %v1680, %v1672
  %v1769 = vpack.c.b16 %v1681, %v1673
  %v1770 = vpack.c.b16 %v1682, %v1674
  %v1771 = vpack.c.b16 %v1683, %v1675
  %v1772 = vpack.c.b16 %v1684, %v1676
  %v1773 = vpack.c.b16 %v1685, %v1677
  %v1774 = vpack.c.b16 %v1694, %v1686
  %v1775 = vpack.c.b16 %v1695, %v1687
  %v1776 = vpack.c.b16 %v1696, %v1688
  %v1777 = vpack.c.b16 %v1697, %v1689
  %v1778 = vpack.c.b16 %v1698, %v1690
  %v1779 = vpack.c.b16 %v1699, %v1691
  %v1780 = vpack.c.b16 %v1700, %v1692
  %v1781 = vpack.c.b16 %v1701, %v1693
  %v1782 = vpack.c.b16 %v1710, %v1702
  %v1783 = vpack.c.b16 %v1711, %v1703
  %v1784 = vpack.c.b16 %v1712, %v1704
  %v1785 = vpack.c.b16 %v1713, %v1705
  %v1786 = vpack.c.b16 %v1714, %v1706
  %v1787 = vpack.c.b16 %v1715, %v1707
  %v1788 = vpack.c.b16 %v1716, %v1708
  %v1789 = vpack.c.b16 %v1717, %v1709
  %v1790 = vpack.c.b16 %v1726, %v1718
  %v1791 = vpack.c.b16 %v1727, %v1719
  %v1792 = vpack.c.b16 %v1728, %v1720
  %v1793 = vpack.c.b16 %v1729, %v1721
  %v1794 = vpack.c.b16 %v1730, %v1722
  %v1795 = vpack.c.b16 %v1731, %v1723
  %v1796 = vpack.c.b16 %v1732, %v1724
  %v1797 = vpack.c.b16 %v1733, %v1725
  %1862 = vmatprep.subr.bf16.mxu0 %v1735
  %1863 = vmatpush1.bf16.msra.mxu0 %v1734
  %1864 = vmatprep.subr.bf16.mxu0 %v1743
  %1865 = vmatpush1.bf16.msra.mxu0 %v1742
  %1866 = vmatprep.subr.bf16.mxu0 %v1751
  %1867 = vmatpush1.bf16.msra.mxu0 %v1750
  %1868 = vmatprep.subr.bf16.mxu0 %v1759
  %1869 = vmatpush1.bf16.msra.mxu0 %v1758
  %1870 = vmatprep.subr.bf16.mxu0 %v1767
  %1871 = vmatpush1.bf16.msra.mxu0 %v1766
  %1872 = vmatprep.subr.bf16.mxu0 %v1775
  %1873 = vmatpush1.bf16.msra.mxu0 %v1774
  %1874 = vmatprep.subr.bf16.mxu0 %v1783
  %1875 = vmatpush1.bf16.msra.mxu0 %v1782
  %1876 = vmatprep.subr.bf16.mxu0 %v1791
  %1877 = vmatpush1.bf16.msra.mxu0 %v1790
  %1878 = vmatprep.subr.bf16.mxu0 0
  %1879 = vmatpush1.bf16.msra.mxu0 0
  %1880 = vmatprep.subr.bf16.mxu0 0
  %1881 = vmatpush1.bf16.msra.mxu0 0
  %1882 = vmatprep.subr.bf16.mxu0 0
  %1883 = vmatpush1.bf16.msra.mxu0 0
  %1884 = vmatprep.subr.bf16.mxu0 0
  %1885 = vmatpush1.bf16.msra.mxu0 0
  %1886 = vmatprep.subr.bf16.mxu0 0
  %1887 = vmatpush1.bf16.msra.mxu0 0
  %1888 = vmatprep.subr.bf16.mxu0 0
  %1889 = vmatpush1.bf16.msra.mxu0 0
  %1890 = vmatprep.subr.bf16.mxu0 0
  %1891 = vmatpush1.bf16.msra.mxu0 0
  %1892 = vmatprep.subr.bf16.mxu0 0
  %1893 = vmatpush1.bf16.msra.mxu0 0
  %1894 = vmatprep.mubr.bf16.mxu0 0
  %1895 = vmatmul.mubr.bf16.gmra.mrb[0].mxu0 %v1477
  %v1896 = vpop.f32.mrb[0].mxu0
  %v1897 = vadd.f32 0.0, %v1896
  %v1898 = vpop.f32.mrb[0].mxu0
  %v1899 = vadd.f32 0.0, %v1898
  %v1900 = vpop.f32.mrb[0].mxu0
  %v1901 = vpop.f32.mrb[0].mxu0
  %1902 = vdwg.mxu0
  %1903 = vmatprep.subr.bf16.mxu0 %v1737
  %1904 = vmatpush1.bf16.msra.mxu0 %v1736
  %1905 = vmatprep.subr.bf16.mxu0 %v1745
  %1906 = vmatpush1.bf16.msra.mxu0 %v1744
  %1907 = vmatprep.subr.bf16.mxu0 %v1753
  %1908 = vmatpush1.bf16.msra.mxu0 %v1752
  %1909 = vmatprep.subr.bf16.mxu0 %v1761
  %1910 = vmatpush1.bf16.msra.mxu0 %v1760
  %1911 = vmatprep.subr.bf16.mxu0 %v1769
  %1912 = vmatpush1.bf16.msra.mxu0 %v1768
  %1913 = vmatprep.subr.bf16.mxu0 %v1777
  %1914 = vmatpush1.bf16.msra.mxu0 %v1776
  %1915 = vmatprep.subr.bf16.mxu0 %v1785
  %1916 = vmatpush1.bf16.msra.mxu0 %v1784
  %1917 = vmatprep.subr.bf16.mxu0 %v1793
  %1918 = vmatpush1.bf16.msra.mxu0 %v1792
  %1919 = vmatprep.subr.bf16.mxu0 0
  %1920 = vmatpush1.bf16.msra.mxu0 0
  %1921 = vmatprep.subr.bf16.mxu0 0
  %1922 = vmatpush1.bf16.msra.mxu0 0
  %1923 = vmatprep.subr.bf16.mxu0 0
  %1924 = vmatpush1.bf16.msra.mxu0 0
  %1925 = vmatprep.subr.bf16.mxu0 0
  %1926 = vmatpush1.bf16.msra.mxu0 0
  %1927 = vmatprep.subr.bf16.mxu0 0
  %1928 = vmatpush1.bf16.msra.mxu0 0
  %1929 = vmatprep.subr.bf16.mxu0 0
  %1930 = vmatpush1.bf16.msra.mxu0 0
  %1931 = vmatprep.subr.bf16.mxu0 0
  %1932 = vmatpush1.bf16.msra.mxu0 0
  %1933 = vmatprep.subr.bf16.mxu0 0
  %1934 = vmatpush1.bf16.msra.mxu0 0
  %1935 = vmatprep.mubr.bf16.mxu0 0
  %1936 = vmatmul.mubr.bf16.gmra.mrb[0].mxu0 %v1477
  %v1937 = vpop.f32.mrb[0].mxu0
  %v1938 = vadd.f32 0.0, %v1937
  %v1939 = vpop.f32.mrb[0].mxu0
  %v1940 = vadd.f32 0.0, %v1939
  %v1941 = vpop.f32.mrb[0].mxu0
  %v1942 = vpop.f32.mrb[0].mxu0
  %1943 = vdwg.mxu0
  %1944 = vmatprep.subr.bf16.mxu0 %v1739
  %1945 = vmatpush1.bf16.msra.mxu0 %v1738
  %1946 = vmatprep.subr.bf16.mxu0 %v1747
  %1947 = vmatpush1.bf16.msra.mxu0 %v1746
  %1948 = vmatprep.subr.bf16.mxu0 %v1755
  %1949 = vmatpush1.bf16.msra.mxu0 %v1754
  %1950 = vmatprep.subr.bf16.mxu0 %v1763
  %1951 = vmatpush1.bf16.msra.mxu0 %v1762
  %1952 = vmatprep.subr.bf16.mxu0 %v1771
  %1953 = vmatpush1.bf16.msra.mxu0 %v1770
  %1954 = vmatprep.subr.bf16.mxu0 %v1779
  %1955 = vmatpush1.bf16.msra.mxu0 %v1778
  %1956 = vmatprep.subr.bf16.mxu0 %v1787
  %1957 = vmatpush1.bf16.msra.mxu0 %v1786
  %1958 = vmatprep.subr.bf16.mxu0 %v1795
  %1959 = vmatpush1.bf16.msra.mxu0 %v1794
  %1960 = vmatprep.subr.bf16.mxu0 0
  %1961 = vmatpush1.bf16.msra.mxu0 0
  %1962 = vmatprep.subr.bf16.mxu0 0
  %1963 = vmatpush1.bf16.msra.mxu0 0
  %1964 = vmatprep.subr.bf16.mxu0 0
  %1965 = vmatpush1.bf16.msra.mxu0 0
  %1966 = vmatprep.subr.bf16.mxu0 0
  %1967 = vmatpush1.bf16.msra.mxu0 0
  %1968 = vmatprep.subr.bf16.mxu0 0
  %1969 = vmatpush1.bf16.msra.mxu0 0
  %1970 = vmatprep.subr.bf16.mxu0 0
  %1971 = vmatpush1.bf16.msra.mxu0 0
  %1972 = vmatprep.subr.bf16.mxu0 0
  %1973 = vmatpush1.bf16.msra.mxu0 0
  %1974 = vmatprep.subr.bf16.mxu0 0
  %1975 = vmatpush1.bf16.msra.mxu0 0
  %1976 = vmatprep.mubr.bf16.mxu0 0
  %1977 = vmatmul.mubr.bf16.gmra.mrb[0].mxu0 %v1477
  %v1978 = vpop.f32.mrb[0].mxu0
  %v1979 = vadd.f32 0.0, %v1978
  %v1980 = vpop.f32.mrb[0].mxu0
  %v1981 = vadd.f32 0.0, %v1980
  %v1982 = vpop.f32.mrb[0].mxu0
  %v1983 = vpop.f32.mrb[0].mxu0
  %1984 = vdwg.mxu0
  %1985 = vmatprep.subr.bf16.mxu0 %v1741
  %1986 = vmatpush1.bf16.msra.mxu0 %v1740
  %1987 = vmatprep.subr.bf16.mxu0 %v1749
  %1988 = vmatpush1.bf16.msra.mxu0 %v1748
  %1989 = vmatprep.subr.bf16.mxu0 %v1757
  %1990 = vmatpush1.bf16.msra.mxu0 %v1756
  %1991 = vmatprep.subr.bf16.mxu0 %v1765
  %1992 = vmatpush1.bf16.msra.mxu0 %v1764
  %1993 = vmatprep.subr.bf16.mxu0 %v1773
  %1994 = vmatpush1.bf16.msra.mxu0 %v1772
  %1995 = vmatprep.subr.bf16.mxu0 %v1781
  %1996 = vmatpush1.bf16.msra.mxu0 %v1780
  %1997 = vmatprep.subr.bf16.mxu0 %v1789
  %1998 = vmatpush1.bf16.msra.mxu0 %v1788
  %1999 = vmatprep.subr.bf16.mxu0 %v1797
  %2000 = vmatpush1.bf16.msra.mxu0 %v1796
  %2001 = vmatprep.subr.bf16.mxu0 0
  %2002 = vmatpush1.bf16.msra.mxu0 0
  %2003 = vmatprep.subr.bf16.mxu0 0
  %2004 = vmatpush1.bf16.msra.mxu0 0
  %2005 = vmatprep.subr.bf16.mxu0 0
  %2006 = vmatpush1.bf16.msra.mxu0 0
  %2007 = vmatprep.subr.bf16.mxu0 0
  %2008 = vmatpush1.bf16.msra.mxu0 0
  %2009 = vmatprep.subr.bf16.mxu0 0
  %2010 = vmatpush1.bf16.msra.mxu0 0
  %2011 = vmatprep.subr.bf16.mxu0 0
  %2012 = vmatpush1.bf16.msra.mxu0 0
  %2013 = vmatprep.subr.bf16.mxu0 0
  %2014 = vmatpush1.bf16.msra.mxu0 0
  %2015 = vmatprep.subr.bf16.mxu0 0
  %2016 = vmatpush1.bf16.msra.mxu0 0
  %2017 = vmatprep.mubr.bf16.mxu0 0
  %2018 = vmatmul.mubr.bf16.gmra.mrb[0].mxu0 %v1477
  %v2019 = vpop.f32.mrb[0].mxu0
  %v2020 = vadd.f32 0.0, %v2019
  %v2021 = vpop.f32.mrb[0].mxu0
  %v2022 = vadd.f32 0.0, %v2021
  %v2023 = vpop.f32.mrb[0].mxu0
  %v2024 = vpop.f32.mrb[0].mxu0
  %2025 = vdwg.mxu0
  %v2026 = vmul.f32 %v1897, 0.5
  %v2027 = vmul.f32 %v1899, 0.5
  %v2028 = vmul.f32 %v1938, 0.5
  %v2029 = vmul.f32 %v1940, 0.5
  %v2030 = vmul.f32 %v1979, 0.5
  %v2031 = vmul.f32 %v1981, 0.5
  %v2032 = vmul.f32 %v2020, 0.5
  %v2033 = vmul.f32 %v2022, 0.5
  %v2034 = vtanh.pop %v2026
  %v2035 = vtanh.pop %v2027
  %v2036 = vtanh.pop %v2028
  %v2037 = vtanh.pop %v2029
  %v2038 = vtanh.pop %v2030
  %v2039 = vtanh.pop %v2031
  %v2040 = vtanh.pop %v2032
  %v2041 = vtanh.pop %v2033
  %v2042 = vadd.f32 %v2034, 1.0
  %v2043 = vadd.f32 %v2035, 1.0
  %v2044 = vadd.f32 %v2036, 1.0
  %v2045 = vadd.f32 %v2037, 1.0
  %v2046 = vadd.f32 %v2038, 1.0
  %v2047 = vadd.f32 %v2039, 1.0
  %v2048 = vadd.f32 %v2040, 1.0
  %v2049 = vadd.f32 %v2041, 1.0
  %v2050 = vmul.f32 %v2042, 0.5
  %v2051 = vmul.f32 %v2043, 0.5
  %v2052 = vmul.f32 %v2044, 0.5
  %v2053 = vmul.f32 %v2045, 0.5
  %v2054 = vmul.f32 %v2046, 0.5
  %v2055 = vmul.f32 %v2047, 0.5
  %v2056 = vmul.f32 %v2048, 0.5
  %v2057 = vmul.f32 %v2049, 0.5
  %v2066 = vcombine.low %v2050, %v2051
  %v2067 = vcombine.low %v2052, %v2053
  %v2069 = vunpack.c.l.s4 1983009808
  %v2070 = vunpack.c.0.s8 %v2069
  %v2071 = vlaneseq
  %v2072 = vshrl.u32 %v2071, 7
  %v2073 = vsub.s32 %v2070, %v2072
  %v2074 = vrot.slane %v2066, %v2073
  %v2076 = vunpack.c.l.s4 1983009808
  %v2077 = vunpack.c.0.s8 %v2076
  %v2078 = vlaneseq
  %v2079 = vshrl.u32 %v2078, 7
  %v2080 = vsub.s32 %v2077, %v2079
  %v2081 = vrot.slane %v2067, %v2080
  %v2082 = vcombine.low %v2074, %v2081
  %v2083 = vcombine.low %v2054, %v2055
  %v2084 = vcombine.low %v2056, %v2057
  %v2086 = vunpack.c.l.s4 1983009808
  %v2087 = vunpack.c.0.s8 %v2086
  %v2088 = vlaneseq
  %v2089 = vshrl.u32 %v2088, 7
  %v2090 = vsub.s32 %v2087, %v2089
  %v2091 = vrot.slane %v2083, %v2090
  %v2093 = vunpack.c.l.s4 1983009808
  %v2094 = vunpack.c.0.s8 %v2093
  %v2095 = vlaneseq
  %v2096 = vshrl.u32 %v2095, 7
  %v2097 = vsub.s32 %v2094, %v2096
  %v2098 = vrot.slane %v2084, %v2097
  %v2099 = vcombine.low %v2091, %v2098
  %2102 = vst [vmem:[%s4] sm:$0xff] %v2082
  %2103 = vst [vmem:[%s4 + $0x8] sm:$0xff] %v2099
  // Predicated region
  $region18: #{seg_discriminator_forward.15} parent=0 // pred_check
    _
  $region19: #{seg_discriminator_forward.15} parent=0 // pred_check_branch
    %2105 = sbr.rel (0) target = $region21
  $region20: #{seg_discriminator_forward.15} parent=0 // pred_region
    _
  $region21: #{seg_discriminator_forward.15} parent=0 // pred_fallthru
    _
  // Predicated region
  $region22: #{seg_discriminator_forward.15} parent=0 // pred_check
    _
  $region23: #{seg_discriminator_forward.15} parent=0 // pred_check_branch
    %2107 = sbr.rel (0) target = $region25
  $region24: #{seg_discriminator_forward.15} parent=0 // pred_region
    _
  $region25: #{seg_discriminator_forward.15} parent=0 // pred_fallthru
    _

</llo_original>
